<compile_context>
chip_gen: v6e
topology: v6e:2x2x1
jax: 0.10.0
libtpu: 0.0.40
codegen_flags: <defaults>
</compile_context>

<pallas_src>
import functools
import math

import jax
import jax.numpy as jnp
from jax.experimental import pallas as pl
from jax.experimental.pallas import tpu as pltpu

_MIB = 1024 * 1024


def _sublane_align(dtype):
    """Second-minor tile alignment required by the dtype's sublane packing."""
    itemsize = jnp.dtype(dtype).itemsize
    return max(8, 32 // max(itemsize, 1))      # f32 -> 8, bf16 -> 16, int8 -> 32


def _pick_tile(n, target, align=8):
    """Largest divisor of n that is <= target and a multiple of `align`
    (falls back to the full dimension, which is always a legal block)."""
    t = min(n, target)
    for cand in range(t, 0, -1):
        if n % cand == 0 and (cand % align == 0 or cand == n):
            return cand
    return n


def _tile_targets():
    """Generation-dependent (TL, TS, TR) tile targets."""
    kind = ""
    try:
        kind = jax.devices()[0].device_kind.lower()
    except Exception:       # pragma: no cover - defensive
        pass
    if "v5" in kind:
        # v5e: 128-wide MXU M face already filled by TL=128; big TS amortizes
        # per-step overhead (scoped VMEM limit is raised explicitly below).
        return 128, 512, 256
    if "v7" in kind:
        # v7x: 256x256 MXU but only 64 MiB physical VMEM -> moderate tiles.
        return 256, 256, 256
    # v6e (and default): 256x256 MXU, 128 MiB VMEM.
    return 256, 512, 512


def _const_spec(shape):
    """Constant-index-map block, single-buffered (resident weights/scales)."""
    nd = len(shape)
    idx = lambda i, _n=nd: (0,) * _n
    try:
        return pl.BlockSpec(shape, idx, pipeline_mode=pl.Buffered(1))
    except TypeError:       # older jax without pipeline_mode: fall back
        return pl.BlockSpec(shape, idx)


# ---------------------------------------------------------------------------
# Kernel 1: flash-style multi-head attention on lane-dense (row, H*E) tiles.
# ---------------------------------------------------------------------------
def _flash_attn_kernel(q_ref, k_ref, v_ref, o_ref, m_ref, l_ref, acc_ref, *,
                       scale, n_heads, head_dim):
    # q_ref: (TL, H*E)  k_ref/v_ref: (TS, H*E)  o_ref: (TL, H*E)
    # scratch: m/l (H, TL, 1) f32, acc (H, TL, E) f32
    si = pl.program_id(2)

    @pl.when(si == 0)
    def _init():
        m_ref[...] = jnp.full(m_ref.shape, -jnp.inf, dtype=m_ref.dtype)
        l_ref[...] = jnp.zeros(l_ref.shape, dtype=l_ref.dtype)
        acc_ref[...] = jnp.zeros(acc_ref.shape, dtype=acc_ref.dtype)

    # Softmax scale folded into Q: H*TL*E mults/step instead of H*TL*TS.
    q = q_ref[...].astype(jnp.float32) * scale
    k = k_ref[...]
    v = v_ref[...]
    in_dt = k.dtype

    for h in range(n_heads):                    # static loop: per-head 2D MXU
        lo, hi = h * head_dim, (h + 1) * head_dim
        q_h = q[:, lo:hi].astype(in_dt)                      # (TL, E)
        k_h = k[:, lo:hi]                                    # (TS, E)
        v_h = v[:, lo:hi]                                    # (TS, E)

        s = jnp.dot(q_h, k_h.T,
                    preferred_element_type=jnp.float32)      # (TL, TS)

        m_prev = m_ref[h]                                    # (TL, 1)
        m_new = jnp.maximum(m_prev, jnp.max(s, axis=-1, keepdims=True))
        alpha = jnp.exp(m_prev - m_new)
        p = jnp.exp(s - m_new)                               # (TL, TS)
        l_ref[h] = alpha * l_ref[h] + jnp.sum(p, axis=-1, keepdims=True)
        acc_ref[h] = alpha * acc_ref[h] + jnp.dot(
            p.astype(in_dt), v_h, preferred_element_type=jnp.float32)
        m_ref[h] = m_new

    @pl.when(si == pl.num_programs(2) - 1)
    def _finalize():
        outs = []
        for h in range(n_heads):
            l_h = l_ref[h]                                   # (TL, 1)
            inv = pl.reciprocal(l_h, approx=True)            # EUP slot
            inv = inv * (2.0 - l_h * inv)                    # 1 Newton step
            outs.append(acc_ref[h] * inv)                    # (TL, E) f32
        # Single lane-dense (TL, H*E) store (no per-head masked stores).
        o_ref[...] = jnp.concatenate(outs, axis=-1).astype(o_ref.dtype)


def _flash_attention(q, k, v, scale, n_heads, out_dtype, tl_target, ts_target):
    """q: (B, L, H*E), k/v: (B, S, H*E) -> (B, L, H*E).  No glue transposes."""
    B, L, hidden = q.shape
    _, S, _ = k.shape
    E = hidden // n_heads
    align = _sublane_align(q.dtype)
    TL = _pick_tile(L, tl_target, align)
    TS = _pick_tile(S, ts_target, align)

    # Derive the VMEM limit from actual double-buffered block + scratch sizes.
    isz = jnp.dtype(q.dtype).itemsize
    osz = jnp.dtype(out_dtype).itemsize
    blk_bytes = (TL * hidden + 2 * TS * hidden) * isz + TL * hidden * osz
    scratch_bytes = n_heads * TL * (max(E, 128) + 2 * 128) * 4
    vmem_limit = int(min(max(2 * blk_bytes + scratch_bytes + 16 * _MIB,
                             32 * _MIB), 96 * _MIB))

    return pl.pallas_call(
        functools.partial(_flash_attn_kernel, scale=float(scale),
                          n_heads=n_heads, head_dim=E),
        out_shape=jax.ShapeDtypeStruct((B, L, hidden), out_dtype),
        grid=(B, L // TL, S // TS),
        in_specs=[
            pl.BlockSpec((None, TL, hidden), lambda b, li, si: (b, li, 0)),
            pl.BlockSpec((None, TS, hidden), lambda b, li, si: (b, si, 0)),
            pl.BlockSpec((None, TS, hidden), lambda b, li, si: (b, si, 0)),
        ],
        out_specs=pl.BlockSpec((None, TL, hidden),
                               lambda b, li, si: (b, li, 0)),
        scratch_shapes=[
            pltpu.VMEM((n_heads, TL, 1), jnp.float32),    # running max
            pltpu.VMEM((n_heads, TL, 1), jnp.float32),    # running denom
            pltpu.VMEM((n_heads, TL, E), jnp.float32),    # running numerator
        ],
        compiler_params=pltpu.CompilerParams(
            dimension_semantics=("parallel", "parallel", "arbitrary"),
            vmem_limit_bytes=vmem_limit),
    )(q, k, v)


# ---------------------------------------------------------------------------
# Kernel 2: fused project_out + BN1 + conv1(k=1)+GELU + conv2(k=1) + res + BN2
# ---------------------------------------------------------------------------
def _erf_approx(x):
    # Abramowitz & Stegun 7.1.26, max abs error ~1.5e-7; exp + VPU ops only.
    a1, a2, a3, a4, a5 = (0.254829592, -0.284496736, 1.421413741,
                          -1.453152027, 1.061405429)
    p = 0.3275911
    ax = jnp.abs(x)
    t = 1.0 / (1.0 + p * ax)
    poly = ((((a5 * t + a4) * t + a3) * t + a2) * t + a1) * t
    y = 1.0 - poly * jnp.exp(-ax * ax)
    return jnp.where(x >= 0, y, -y)


def _gelu(x):
    # Exact (erf-based) GELU, matching torch nn.GELU() default.
    return 0.5 * x * (1.0 + _erf_approx(x * (1.0 / math.sqrt(2.0))))


def _post_kernel(a_ref, wo_ref, bo_ref, s1_ref, t1_ref, w1_ref, b1_ref,
                 w2_ref, b2_ref, s2_ref, t2_ref, o_ref):
    a = a_ref[...]                                               # (TR, hidden)
    # project_out
    v = jnp.dot(a, wo_ref[...],
                preferred_element_type=jnp.float32) + bo_ref[...]
    # BatchNorm1 (eval) folded to per-channel scale/shift
    x = v * s1_ref[...] + t1_ref[...]
    # conv1 (kernel_size=1) + exact GELU; dropout == identity (eval)
    h = jnp.dot(x.astype(w1_ref.dtype), w1_ref[...],
                preferred_element_type=jnp.float32) + b1_ref[...]
    h = _gelu(h)
    # conv2 (kernel_size=1); dropout == identity (eval)
    y = jnp.dot(h.astype(w2_ref.dtype), w2_ref[...],
                preferred_element_type=jnp.float32) + b2_ref[...]
    # residual + BatchNorm2 (eval)
    o_ref[...] = ((x + y) * s2_ref[...] + t2_ref[...]).astype(o_ref.dtype)


def _post_block(attn, w_o, b_o, s1, t1, w_c1, b_c1, w_c2, b_c2, s2, t2,
                out_dtype, tr_target):
    R, hidden = attn.shape
    d_model = w_o.shape[1]
    d_ff = w_c1.shape[1]
    TR = _pick_tile(R, tr_target, _sublane_align(attn.dtype))

    # VMEM limit derived from resident (single-buffered) weights, the
    # double-buffered activation/output tiles and the f32 intermediates.
    wsz = jnp.dtype(w_o.dtype).itemsize
    w_bytes = (hidden * d_model + d_model * d_ff + d_ff * d_model) * wsz
    act_bytes = 2 * (TR * hidden * jnp.dtype(attn.dtype).itemsize
                     + TR * d_model * jnp.dtype(out_dtype).itemsize)
    inter_bytes = 2 * TR * max(d_ff, 128) * 4 + 2 * TR * max(d_model, 128) * 4
    vmem_limit = int(min(max(w_bytes + act_bytes + inter_bytes + 16 * _MIB,
                             32 * _MIB), 96 * _MIB))

    return pl.pallas_call(
        _post_kernel,
        out_shape=jax.ShapeDtypeStruct((R, d_model), out_dtype),
        grid=(R // TR,),
        in_specs=[
            pl.BlockSpec((TR, hidden), lambda i: (i, 0)),
            _const_spec((hidden, d_model)), _const_spec((1, d_model)),
            _const_spec((1, d_model)), _const_spec((1, d_model)),
            _const_spec((d_model, d_ff)), _const_spec((1, d_ff)),
            _const_spec((d_ff, d_model)), _const_spec((1, d_model)),
            _const_spec((1, d_model)), _const_spec((1, d_model)),
        ],
        out_specs=pl.BlockSpec((TR, d_model), lambda i: (i, 0)),
        compiler_params=pltpu.CompilerParams(
            dimension_semantics=("parallel",),
            vmem_limit_bytes=vmem_limit),
    )(attn, w_o, b_o, s1, t1, w_c1, b_c1, w_c2, b_c2, s2, t2)


# ---------------------------------------------------------------------------
# Full forward (eval mode)
# ---------------------------------------------------------------------------
def full_attention_full_t2v(queries, keys, values, params, n_heads,
                            scale=None, bn_eps=1e-5, mxu_dtype=None):
    """queries: (B, L, d_model), keys/values: (B, S, d_model) -> (B, L, d_model).
    Matches FullAttention_Full_t2v.forward in eval mode.  Pass
    mxu_dtype=jnp.bfloat16 to feed the MXU bf16 inputs (f32 accumulation)."""
    B, L, d_model = queries.shape
    _, S, _ = keys.shape
    H = n_heads
    E = d_model // H
    hidden = H * E
    tl_t, ts_t, tr_t = _tile_targets()
    cdt = mxu_dtype if mxu_dtype is not None else queries.dtype

    # --- input projections (plain XLA GEMMs); NO transposes afterwards ---
    q = (queries @ params['w_q'] + params['b_q']).astype(cdt)   # (B, L, H*E)
    k = (keys @ params['w_k'] + params['b_k']).astype(cdt)      # (B, S, H*E)
    v = (values @ params['w_v'] + params['b_v']).astype(cdt)    # (B, S, H*E)

    sc = scale if scale is not None else 1.0 / math.sqrt(E)

    # --- flash attention (Pallas), lane-dense (B, L, hidden) output ---
    attn = _flash_attention(q, k, v, sc, H, cdt, tl_t, ts_t)

    # --- BatchNorm (eval) folded to per-channel scale/shift (f32) ---
    s1 = params['bn1_g'] / jnp.sqrt(params['bn1_rv'] + bn_eps)
    t1 = params['bn1_b'] - params['bn1_rm'] * s1
    s2 = params['bn2_g'] / jnp.sqrt(params['bn2_rv'] + bn_eps)
    t2 = params['bn2_b'] - params['bn2_rm'] * s2

    # --- fused post-attention block (Pallas) ---
    out = _post_block(
        attn.reshape(B * L, hidden),
        params['w_o'].astype(cdt), params['b_o'].reshape(1, -1),
        s1.reshape(1, -1), t1.reshape(1, -1),
        params['w_c1'].astype(cdt), params['b_c1'].reshape(1, -1),
        params['w_c2'].astype(cdt), params['b_c2'].reshape(1, -1),
        s2.reshape(1, -1), t2.reshape(1, -1),
        queries.dtype, tr_t)
    return out.reshape(B, L, d_model)


# ---------------------------------------------------------------------------
# Pure-JAX reference (mirrors the PyTorch forward, eval mode) for validation.
# ---------------------------------------------------------------------------
def _reference(queries, keys, values, params, n_heads, scale=None,
               bn_eps=1e-5):
    B, L, d_model = queries.shape
    _, S, _ = keys.shape
    H = n_heads
    E = d_model // H
    q = (queries @ params['w_q'] + params['b_q']).reshape(B, L, H, E)
    k = (keys @ params['w_k'] + params['b_k']).reshape(B, S, H, E)
    v = (values @ params['w_v'] + params['b_v']).reshape(B, S, H, E)
    sc = scale if scale is not None else 1.0 / math.sqrt(E)
    scores = jnp.einsum('blhe,bshe->bhls', q, k)
    A = jax.nn.softmax(sc * scores, axis=-1)
    V = jnp.einsum('bhls,bshd->blhd', A, v).reshape(B, L, H * E)
    V = V @ params['w_o'] + params['b_o']
    x = ((V - params['bn1_rm']) / jnp.sqrt(params['bn1_rv'] + bn_eps)
         * params['bn1_g'] + params['bn1_b'])
    h = jax.nn.gelu(x @ params['w_c1'] + params['b_c1'], approximate=False)
    y = h @ params['w_c2'] + params['b_c2']
    out = ((x + y - params['bn2_rm']) / jnp.sqrt(params['bn2_rv'] + bn_eps)
           * params['bn2_g'] + params['bn2_b'])
    return out


if __name__ == "__main__":
    # "highest" only for this f32 validation run (applies equally to kernel
    # glue and reference).  Production: bf16 MXU inputs + default precision.
    jax.config.update("jax_default_matmul_precision", "highest")

    B, L, S = 2, 8, 8
    d_model, n_heads, d_ff = 32, 4, 64
    hidden = n_heads * (d_model // n_heads)

    key = jax.random.PRNGKey(0)
    ks = jax.random.split(key, 24)

    def nrm(k, shape, s=1.0):
        return s * jax.random.normal(k, shape, dtype=jnp.float32)

    queries = nrm(ks[0], (B, L, d_model))
    keys_in = nrm(ks[1], (B, S, d_model))
    values_in = nrm(ks[2], (B, S, d_model))

    ws = 1.0 / math.sqrt(d_model)
    params = dict(
        w_q=nrm(ks[3], (d_model, hidden), ws), b_q=nrm(ks[4], (hidden,), 0.1),
        w_k=nrm(ks[5], (d_model, hidden), ws), b_k=nrm(ks[6], (hidden,), 0.1),
        w_v=nrm(ks[7], (d_model, hidden), ws), b_v=nrm(ks[8], (hidden,), 0.1),
        w_o=nrm(ks[9], (hidden, d_model), ws), b_o=nrm(ks[10], (d_model,), 0.1),
        w_c1=nrm(ks[11], (d_model, d_ff), ws), b_c1=nrm(ks[12], (d_ff,), 0.1),
        w_c2=nrm(ks[13], (d_ff, d_model), 1.0 / math.sqrt(d_ff)),
        b_c2=nrm(ks[14], (d_model,), 0.1),
        bn1_g=1.0 + 0.1 * jax.random.normal(ks[15], (d_model,), jnp.float32),
        bn1_b=nrm(ks[16], (d_model,), 0.1),
        bn1_rm=nrm(ks[17], (d_model,), 0.1),
        bn1_rv=jax.random.uniform(ks[18], (d_model,), jnp.float32, 0.5, 1.5),
        bn2_g=1.0 + 0.1 * jax.random.normal(ks[19], (d_model,), jnp.float32),
        bn2_b=nrm(ks[20], (d_model,), 0.1),
        bn2_rm=nrm(ks[21], (d_model,), 0.1),
        bn2_rv=jax.random.uniform(ks[22], (d_model,), jnp.float32, 0.5, 1.5),
    )

    fwd = jax.jit(functools.partial(full_attention_full_t2v, n_heads=n_heads))
    out = jax.block_until_ready(fwd(queries, keys_in, values_in, params))

    ref = _reference(queries, keys_in, values_in, params, n_heads)
    assert out.shape == (B, L, d_model)
    err = float(jnp.max(jnp.abs(out - ref)))
    # Tolerance covers the erf polynomial (~1.5e-7) and the Newton-refined
    # approx reciprocal in the flash finalize.
    assert jnp.allclose(out, ref, atol=2e-3, rtol=2e-3), (
        f"mismatch vs reference: max abs err {err}")

    print("KERNEL_OK")
</pallas_src>

<mosaic_0001>
module attributes {stable_mosaic.version = 11 : i64} {
  func.func @_flash_attn_kernel(%arg0: i32, %arg1: i32, %arg2: i32, %arg3: memref<1x8x32xf32, #tpu.memory_space<vmem>>, %arg4: memref<1x8x32xf32, #tpu.memory_space<vmem>>, %arg5: memref<1x8x32xf32, #tpu.memory_space<vmem>>, %arg6: memref<1x8x32xf32, #tpu.memory_space<vmem>>, %arg7: memref<4x8x1xf32, #tpu.memory_space<vmem>>, %arg8: memref<4x8x1xf32, #tpu.memory_space<vmem>>, %arg9: memref<4x8x8xf32, #tpu.memory_space<vmem>>) attributes {dimension_semantics = [#tpu.dimension_semantics<parallel>, #tpu.dimension_semantics<parallel>, #tpu.dimension_semantics<arbitrary>], iteration_bounds = array<i64: 2, 1, 1>, scalar_prefetch = 0 : i64, scratch_operands = 3 : i64, tpu.core_type = #tpu.core_type<tc>, window_params = [{transform_indices = @transform_0, window_bounds = array<i64: 1, 8, 32>}, {transform_indices = @transform_1, window_bounds = array<i64: 1, 8, 32>}, {transform_indices = @transform_2, window_bounds = array<i64: 1, 8, 32>}, {transform_indices = @transform_3, window_bounds = array<i64: 1, 8, 32>}]} {
    %c0_i32 = arith.constant 0 : i32
    %0 = arith.cmpi eq, %arg2, %c0_i32 : i32
    %1 = arith.extui %0 : i1 to i32
    %c0_i32_0 = arith.constant 0 : i32
    %2 = arith.cmpi ne, %1, %c0_i32_0 : i32
    scf.if %2 {
      %cst_96 = arith.constant 0xFF800000 : f32
      %158 = vector.broadcast %cst_96 : f32 to vector<4x8x1xf32>
      %c0_97 = arith.constant 0 : index
      %c0_98 = arith.constant 0 : index
      %c0_99 = arith.constant 0 : index
      %159 = vector.load %arg7[%c0_97, %c0_98, %c0_99] : memref<4x8x1xf32, #tpu.memory_space<vmem>>, vector<4x8x1xf32>
      tpu.vector_store %arg7[%c0_97, %c0_98, %c0_99], %158 {strides = array<i32>} : memref<4x8x1xf32, #tpu.memory_space<vmem>>, vector<4x8x1xf32>,
      %cst_100 = arith.constant 0.000000e+00 : f32
      %160 = vector.broadcast %cst_100 : f32 to vector<4x8x1xf32>
      %c0_101 = arith.constant 0 : index
      %c0_102 = arith.constant 0 : index
      %c0_103 = arith.constant 0 : index
      %161 = vector.load %arg8[%c0_101, %c0_102, %c0_103] : memref<4x8x1xf32, #tpu.memory_space<vmem>>, vector<4x8x1xf32>
      tpu.vector_store %arg8[%c0_101, %c0_102, %c0_103], %160 {strides = array<i32>} : memref<4x8x1xf32, #tpu.memory_space<vmem>>, vector<4x8x1xf32>,
      %cst_104 = arith.constant 0.000000e+00 : f32
      %162 = vector.broadcast %cst_104 : f32 to vector<4x8x8xf32>
      %c0_105 = arith.constant 0 : index
      %c0_106 = arith.constant 0 : index
      %c0_107 = arith.constant 0 : index
      %163 = vector.load %arg9[%c0_105, %c0_106, %c0_107] : memref<4x8x8xf32, #tpu.memory_space<vmem>>, vector<4x8x8xf32>
      tpu.vector_store %arg9[%c0_105, %c0_106, %c0_107], %162 {strides = array<i32>} : memref<4x8x8xf32, #tpu.memory_space<vmem>>, vector<4x8x8xf32>,
    } else {
    }
    %c0 = arith.constant 0 : index
    %c0_1 = arith.constant 0 : index
    %c0_2 = arith.constant 0 : index
    %3 = vector.load %arg3[%c0, %c0_1, %c0_2] : memref<1x8x32xf32, #tpu.memory_space<vmem>>, vector<1x8x32xf32>
    %4 = vector.shape_cast %3 : vector<1x8x32xf32> to vector<8x32xf32>
    %cst = arith.constant 0.353553385 : f32
    %5 = vector.broadcast %cst : f32 to vector<8x32xf32>
    %6 = arith.mulf %4, %5 : vector<8x32xf32>
    %c0_3 = arith.constant 0 : index
    %c0_4 = arith.constant 0 : index
    %c0_5 = arith.constant 0 : index
    %7 = vector.load %arg4[%c0_3, %c0_4, %c0_5] : memref<1x8x32xf32, #tpu.memory_space<vmem>>, vector<1x8x32xf32>
    %8 = vector.shape_cast %7 : vector<1x8x32xf32> to vector<8x32xf32>
    %c0_6 = arith.constant 0 : index
    %c0_7 = arith.constant 0 : index
    %c0_8 = arith.constant 0 : index
    %9 = vector.load %arg5[%c0_6, %c0_7, %c0_8] : memref<1x8x32xf32, #tpu.memory_space<vmem>>, vector<1x8x32xf32>
    %10 = vector.shape_cast %9 : vector<1x8x32xf32> to vector<8x32xf32>
    %11 = vector.extract_strided_slice %6 {offsets = [0, 0], sizes = [8, 8], strides = [1, 1]} : vector<8x32xf32> to vector<8x8xf32>
    %12 = vector.extract_strided_slice %8 {offsets = [0, 0], sizes = [8, 8], strides = [1, 1]} : vector<8x32xf32> to vector<8x8xf32>
    %13 = vector.extract_strided_slice %10 {offsets = [0, 0], sizes = [8, 8], strides = [1, 1]} : vector<8x32xf32> to vector<8x8xf32>
    %14 = tpu.transpose %12, [1, 0] : vector<8x8xf32> -> vector<8x8xf32>
    %cst_9 = arith.constant dense<0.000000e+00> : vector<8x8xf32>
    %15 = tpu.matmul %11, %14, %cst_9 {dimension_numbers = #tpu.dot_dimension_numbers<[1], [0], [0], [1], [0, 0, 1, 1], [], []>, precision = #tpu.contract_precision<fp32>} : vector<8x8xf32>, vector<8x8xf32>, vector<8x8xf32> -> vector<8x8xf32>
    %c0_10 = arith.constant 0 : index
    %c0_11 = arith.constant 0 : index
    %c0_12 = arith.constant 0 : index
    %16 = vector.load %arg7[%c0_10, %c0_11, %c0_12] : memref<4x8x1xf32, #tpu.memory_space<vmem>>, vector<1x8x1xf32>
    %17 = vector.shape_cast %16 : vector<1x8x1xf32> to vector<8x1xf32>
    %cst_13 = arith.constant dense<0xFF800000> : vector<8xf32>
    %18 = vector.multi_reduction <maximumf>, %15, %cst_13 [1] : vector<8x8xf32> to vector<8xf32>
    %19 = vector.shape_cast %18 : vector<8xf32> to vector<8x1xf32>
    %20 = arith.maximumf %17, %19 : vector<8x1xf32>
    %21 = arith.subf %17, %20 : vector<8x1xf32>
    %22 = math.exp %21 : vector<8x1xf32>
    %23 = vector.broadcast %20 : vector<8x1xf32> to vector<8x8xf32>
    %24 = arith.subf %15, %23 : vector<8x8xf32>
    %25 = math.exp %24 : vector<8x8xf32>
    %c0_14 = arith.constant 0 : index
    %c0_15 = arith.constant 0 : index
    %c0_16 = arith.constant 0 : index
    %26 = vector.load %arg8[%c0_14, %c0_15, %c0_16] : memref<4x8x1xf32, #tpu.memory_space<vmem>>, vector<1x8x1xf32>
    %27 = vector.shape_cast %26 : vector<1x8x1xf32> to vector<8x1xf32>
    %28 = arith.mulf %22, %27 : vector<8x1xf32>
    %cst_17 = arith.constant dense<0.000000e+00> : vector<8xf32>
    %29 = vector.multi_reduction <add>, %25, %cst_17 [1] : vector<8x8xf32> to vector<8xf32>
    %30 = vector.shape_cast %29 : vector<8xf32> to vector<8x1xf32>
    %31 = arith.addf %28, %30 : vector<8x1xf32>
    %c0_18 = arith.constant 0 : index
    %c0_19 = arith.constant 0 : index
    %c0_20 = arith.constant 0 : index
    %32 = vector.load %arg8[%c0_18, %c0_19, %c0_20] : memref<4x8x1xf32, #tpu.memory_space<vmem>>, vector<1x8x1xf32>
    %33 = vector.shape_cast %32 : vector<1x8x1xf32> to vector<8x1xf32>
    %34 = vector.shape_cast %31 : vector<8x1xf32> to vector<1x8x1xf32>
    tpu.vector_store %arg8[%c0_18, %c0_19, %c0_20], %34 {strides = array<i32>} : memref<4x8x1xf32, #tpu.memory_space<vmem>>, vector<1x8x1xf32>,
    %c0_21 = arith.constant 0 : index
    %c0_22 = arith.constant 0 : index
    %c0_23 = arith.constant 0 : index
    %35 = vector.load %arg9[%c0_21, %c0_22, %c0_23] : memref<4x8x8xf32, #tpu.memory_space<vmem>>, vector<1x8x8xf32>
    %36 = vector.shape_cast %35 : vector<1x8x8xf32> to vector<8x8xf32>
    %37 = vector.broadcast %22 : vector<8x1xf32> to vector<8x8xf32>
    %38 = arith.mulf %37, %36 : vector<8x8xf32>
    %cst_24 = arith.constant dense<0.000000e+00> : vector<8x8xf32>
    %39 = tpu.matmul %25, %13, %cst_24 {dimension_numbers = #tpu.dot_dimension_numbers<[1], [0], [0], [1], [0, 0, 1, 1], [], []>, precision = #tpu.contract_precision<fp32>} : vector<8x8xf32>, vector<8x8xf32>, vector<8x8xf32> -> vector<8x8xf32>
    %40 = arith.addf %38, %39 : vector<8x8xf32>
    %c0_25 = arith.constant 0 : index
    %c0_26 = arith.constant 0 : index
    %c0_27 = arith.constant 0 : index
    %41 = vector.load %arg9[%c0_25, %c0_26, %c0_27] : memref<4x8x8xf32, #tpu.memory_space<vmem>>, vector<1x8x8xf32>
    %42 = vector.shape_cast %41 : vector<1x8x8xf32> to vector<8x8xf32>
    %43 = vector.shape_cast %40 : vector<8x8xf32> to vector<1x8x8xf32>
    tpu.vector_store %arg9[%c0_25, %c0_26, %c0_27], %43 {strides = array<i32>} : memref<4x8x8xf32, #tpu.memory_space<vmem>>, vector<1x8x8xf32>,
    %c0_28 = arith.constant 0 : index
    %c0_29 = arith.constant 0 : index
    %c0_30 = arith.constant 0 : index
    %44 = vector.load %arg7[%c0_28, %c0_29, %c0_30] : memref<4x8x1xf32, #tpu.memory_space<vmem>>, vector<1x8x1xf32>
    %45 = vector.shape_cast %44 : vector<1x8x1xf32> to vector<8x1xf32>
    %46 = vector.shape_cast %20 : vector<8x1xf32> to vector<1x8x1xf32>
    tpu.vector_store %arg7[%c0_28, %c0_29, %c0_30], %46 {strides = array<i32>} : memref<4x8x1xf32, #tpu.memory_space<vmem>>, vector<1x8x1xf32>,
    %47 = vector.extract_strided_slice %6 {offsets = [0, 8], sizes = [8, 8], strides = [1, 1]} : vector<8x32xf32> to vector<8x8xf32>
    %48 = vector.extract_strided_slice %8 {offsets = [0, 8], sizes = [8, 8], strides = [1, 1]} : vector<8x32xf32> to vector<8x8xf32>
    %49 = vector.extract_strided_slice %10 {offsets = [0, 8], sizes = [8, 8], strides = [1, 1]} : vector<8x32xf32> to vector<8x8xf32>
    %50 = tpu.transpose %48, [1, 0] : vector<8x8xf32> -> vector<8x8xf32>
    %cst_31 = arith.constant dense<0.000000e+00> : vector<8x8xf32>
    %51 = tpu.matmul %47, %50, %cst_31 {dimension_numbers = #tpu.dot_dimension_numbers<[1], [0], [0], [1], [0, 0, 1, 1], [], []>, precision = #tpu.contract_precision<fp32>} : vector<8x8xf32>, vector<8x8xf32>, vector<8x8xf32> -> vector<8x8xf32>
    %c1 = arith.constant 1 : index
    %c0_32 = arith.constant 0 : index
    %c0_33 = arith.constant 0 : index
    %52 = vector.load %arg7[%c1, %c0_32, %c0_33] : memref<4x8x1xf32, #tpu.memory_space<vmem>>, vector<1x8x1xf32>
    %53 = vector.shape_cast %52 : vector<1x8x1xf32> to vector<8x1xf32>
    %cst_34 = arith.constant dense<0xFF800000> : vector<8xf32>
    %54 = vector.multi_reduction <maximumf>, %51, %cst_34 [1] : vector<8x8xf32> to vector<8xf32>
    %55 = vector.shape_cast %54 : vector<8xf32> to vector<8x1xf32>
    %56 = arith.maximumf %53, %55 : vector<8x1xf32>
    %57 = arith.subf %53, %56 : vector<8x1xf32>
    %58 = math.exp %57 : vector<8x1xf32>
    %59 = vector.broadcast %56 : vector<8x1xf32> to vector<8x8xf32>
    %60 = arith.subf %51, %59 : vector<8x8xf32>
    %61 = math.exp %60 : vector<8x8xf32>
    %c1_35 = arith.constant 1 : index
    %c0_36 = arith.constant 0 : index
    %c0_37 = arith.constant 0 : index
    %62 = vector.load %arg8[%c1_35, %c0_36, %c0_37] : memref<4x8x1xf32, #tpu.memory_space<vmem>>, vector<1x8x1xf32>
    %63 = vector.shape_cast %62 : vector<1x8x1xf32> to vector<8x1xf32>
    %64 = arith.mulf %58, %63 : vector<8x1xf32>
    %cst_38 = arith.constant dense<0.000000e+00> : vector<8xf32>
    %65 = vector.multi_reduction <add>, %61, %cst_38 [1] : vector<8x8xf32> to vector<8xf32>
    %66 = vector.shape_cast %65 : vector<8xf32> to vector<8x1xf32>
    %67 = arith.addf %64, %66 : vector<8x1xf32>
    %c1_39 = arith.constant 1 : index
    %c0_40 = arith.constant 0 : index
    %c0_41 = arith.constant 0 : index
    %68 = vector.load %arg8[%c1_39, %c0_40, %c0_41] : memref<4x8x1xf32, #tpu.memory_space<vmem>>, vector<1x8x1xf32>
    %69 = vector.shape_cast %68 : vector<1x8x1xf32> to vector<8x1xf32>
    %70 = vector.shape_cast %67 : vector<8x1xf32> to vector<1x8x1xf32>
    tpu.vector_store %arg8[%c1_39, %c0_40, %c0_41], %70 {strides = array<i32>} : memref<4x8x1xf32, #tpu.memory_space<vmem>>, vector<1x8x1xf32>,
    %c1_42 = arith.constant 1 : index
    %c0_43 = arith.constant 0 : index
    %c0_44 = arith.constant 0 : index
    %71 = vector.load %arg9[%c1_42, %c0_43, %c0_44] : memref<4x8x8xf32, #tpu.memory_space<vmem>>, vector<1x8x8xf32>
    %72 = vector.shape_cast %71 : vector<1x8x8xf32> to vector<8x8xf32>
    %73 = vector.broadcast %58 : vector<8x1xf32> to vector<8x8xf32>
    %74 = arith.mulf %73, %72 : vector<8x8xf32>
    %cst_45 = arith.constant dense<0.000000e+00> : vector<8x8xf32>
    %75 = tpu.matmul %61, %49, %cst_45 {dimension_numbers = #tpu.dot_dimension_numbers<[1], [0], [0], [1], [0, 0, 1, 1], [], []>, precision = #tpu.contract_precision<fp32>} : vector<8x8xf32>, vector<8x8xf32>, vector<8x8xf32> -> vector<8x8xf32>
    %76 = arith.addf %74, %75 : vector<8x8xf32>
    %c1_46 = arith.constant 1 : index
    %c0_47 = arith.constant 0 : index
    %c0_48 = arith.constant 0 : index
    %77 = vector.load %arg9[%c1_46, %c0_47, %c0_48] : memref<4x8x8xf32, #tpu.memory_space<vmem>>, vector<1x8x8xf32>
    %78 = vector.shape_cast %77 : vector<1x8x8xf32> to vector<8x8xf32>
    %79 = vector.shape_cast %76 : vector<8x8xf32> to vector<1x8x8xf32>
    tpu.vector_store %arg9[%c1_46, %c0_47, %c0_48], %79 {strides = array<i32>} : memref<4x8x8xf32, #tpu.memory_space<vmem>>, vector<1x8x8xf32>,
    %c1_49 = arith.constant 1 : index
    %c0_50 = arith.constant 0 : index
    %c0_51 = arith.constant 0 : index
    %80 = vector.load %arg7[%c1_49, %c0_50, %c0_51] : memref<4x8x1xf32, #tpu.memory_space<vmem>>, vector<1x8x1xf32>
    %81 = vector.shape_cast %80 : vector<1x8x1xf32> to vector<8x1xf32>
    %82 = vector.shape_cast %56 : vector<8x1xf32> to vector<1x8x1xf32>
    tpu.vector_store %arg7[%c1_49, %c0_50, %c0_51], %82 {strides = array<i32>} : memref<4x8x1xf32, #tpu.memory_space<vmem>>, vector<1x8x1xf32>,
    %83 = vector.extract_strided_slice %6 {offsets = [0, 16], sizes = [8, 8], strides = [1, 1]} : vector<8x32xf32> to vector<8x8xf32>
    %84 = vector.extract_strided_slice %8 {offsets = [0, 16], sizes = [8, 8], strides = [1, 1]} : vector<8x32xf32> to vector<8x8xf32>
    %85 = vector.extract_strided_slice %10 {offsets = [0, 16], sizes = [8, 8], strides = [1, 1]} : vector<8x32xf32> to vector<8x8xf32>
    %86 = tpu.transpose %84, [1, 0] : vector<8x8xf32> -> vector<8x8xf32>
    %cst_52 = arith.constant dense<0.000000e+00> : vector<8x8xf32>
    %87 = tpu.matmul %83, %86, %cst_52 {dimension_numbers = #tpu.dot_dimension_numbers<[1], [0], [0], [1], [0, 0, 1, 1], [], []>, precision = #tpu.contract_precision<fp32>} : vector<8x8xf32>, vector<8x8xf32>, vector<8x8xf32> -> vector<8x8xf32>
    %c2 = arith.constant 2 : index
    %c0_53 = arith.constant 0 : index
    %c0_54 = arith.constant 0 : index
    %88 = vector.load %arg7[%c2, %c0_53, %c0_54] : memref<4x8x1xf32, #tpu.memory_space<vmem>>, vector<1x8x1xf32>
    %89 = vector.shape_cast %88 : vector<1x8x1xf32> to vector<8x1xf32>
    %cst_55 = arith.constant dense<0xFF800000> : vector<8xf32>
    %90 = vector.multi_reduction <maximumf>, %87, %cst_55 [1] : vector<8x8xf32> to vector<8xf32>
    %91 = vector.shape_cast %90 : vector<8xf32> to vector<8x1xf32>
    %92 = arith.maximumf %89, %91 : vector<8x1xf32>
    %93 = arith.subf %89, %92 : vector<8x1xf32>
    %94 = math.exp %93 : vector<8x1xf32>
    %95 = vector.broadcast %92 : vector<8x1xf32> to vector<8x8xf32>
    %96 = arith.subf %87, %95 : vector<8x8xf32>
    %97 = math.exp %96 : vector<8x8xf32>
    %c2_56 = arith.constant 2 : index
    %c0_57 = arith.constant 0 : index
    %c0_58 = arith.constant 0 : index
    %98 = vector.load %arg8[%c2_56, %c0_57, %c0_58] : memref<4x8x1xf32, #tpu.memory_space<vmem>>, vector<1x8x1xf32>
    %99 = vector.shape_cast %98 : vector<1x8x1xf32> to vector<8x1xf32>
    %100 = arith.mulf %94, %99 : vector<8x1xf32>
    %cst_59 = arith.constant dense<0.000000e+00> : vector<8xf32>
    %101 = vector.multi_reduction <add>, %97, %cst_59 [1] : vector<8x8xf32> to vector<8xf32>
    %102 = vector.shape_cast %101 : vector<8xf32> to vector<8x1xf32>
    %103 = arith.addf %100, %102 : vector<8x1xf32>
    %c2_60 = arith.constant 2 : index
    %c0_61 = arith.constant 0 : index
    %c0_62 = arith.constant 0 : index
    %104 = vector.load %arg8[%c2_60, %c0_61, %c0_62] : memref<4x8x1xf32, #tpu.memory_space<vmem>>, vector<1x8x1xf32>
    %105 = vector.shape_cast %104 : vector<1x8x1xf32> to vector<8x1xf32>
    %106 = vector.shape_cast %103 : vector<8x1xf32> to vector<1x8x1xf32>
    tpu.vector_store %arg8[%c2_60, %c0_61, %c0_62], %106 {strides = array<i32>} : memref<4x8x1xf32, #tpu.memory_space<vmem>>, vector<1x8x1xf32>,
    %c2_63 = arith.constant 2 : index
    %c0_64 = arith.constant 0 : index
    %c0_65 = arith.constant 0 : index
    %107 = vector.load %arg9[%c2_63, %c0_64, %c0_65] : memref<4x8x8xf32, #tpu.memory_space<vmem>>, vector<1x8x8xf32>
    %108 = vector.shape_cast %107 : vector<1x8x8xf32> to vector<8x8xf32>
    %109 = vector.broadcast %94 : vector<8x1xf32> to vector<8x8xf32>
    %110 = arith.mulf %109, %108 : vector<8x8xf32>
    %cst_66 = arith.constant dense<0.000000e+00> : vector<8x8xf32>
    %111 = tpu.matmul %97, %85, %cst_66 {dimension_numbers = #tpu.dot_dimension_numbers<[1], [0], [0], [1], [0, 0, 1, 1], [], []>, precision = #tpu.contract_precision<fp32>} : vector<8x8xf32>, vector<8x8xf32>, vector<8x8xf32> -> vector<8x8xf32>
    %112 = arith.addf %110, %111 : vector<8x8xf32>
    %c2_67 = arith.constant 2 : index
    %c0_68 = arith.constant 0 : index
    %c0_69 = arith.constant 0 : index
    %113 = vector.load %arg9[%c2_67, %c0_68, %c0_69] : memref<4x8x8xf32, #tpu.memory_space<vmem>>, vector<1x8x8xf32>
    %114 = vector.shape_cast %113 : vector<1x8x8xf32> to vector<8x8xf32>
    %115 = vector.shape_cast %112 : vector<8x8xf32> to vector<1x8x8xf32>
    tpu.vector_store %arg9[%c2_67, %c0_68, %c0_69], %115 {strides = array<i32>} : memref<4x8x8xf32, #tpu.memory_space<vmem>>, vector<1x8x8xf32>,
    %c2_70 = arith.constant 2 : index
    %c0_71 = arith.constant 0 : index
    %c0_72 = arith.constant 0 : index
    %116 = vector.load %arg7[%c2_70, %c0_71, %c0_72] : memref<4x8x1xf32, #tpu.memory_space<vmem>>, vector<1x8x1xf32>
    %117 = vector.shape_cast %116 : vector<1x8x1xf32> to vector<8x1xf32>
    %118 = vector.shape_cast %92 : vector<8x1xf32> to vector<1x8x1xf32>
    tpu.vector_store %arg7[%c2_70, %c0_71, %c0_72], %118 {strides = array<i32>} : memref<4x8x1xf32, #tpu.memory_space<vmem>>, vector<1x8x1xf32>,
    %119 = vector.extract_strided_slice %6 {offsets = [0, 24], sizes = [8, 8], strides = [1, 1]} : vector<8x32xf32> to vector<8x8xf32>
    %120 = vector.extract_strided_slice %8 {offsets = [0, 24], sizes = [8, 8], strides = [1, 1]} : vector<8x32xf32> to vector<8x8xf32>
    %121 = vector.extract_strided_slice %10 {offsets = [0, 24], sizes = [8, 8], strides = [1, 1]} : vector<8x32xf32> to vector<8x8xf32>
    %122 = tpu.transpose %120, [1, 0] : vector<8x8xf32> -> vector<8x8xf32>
    %cst_73 = arith.constant dense<0.000000e+00> : vector<8x8xf32>
    %123 = tpu.matmul %119, %122, %cst_73 {dimension_numbers = #tpu.dot_dimension_numbers<[1], [0], [0], [1], [0, 0, 1, 1], [], []>, precision = #tpu.contract_precision<fp32>} : vector<8x8xf32>, vector<8x8xf32>, vector<8x8xf32> -> vector<8x8xf32>
    %c3 = arith.constant 3 : index
    %c0_74 = arith.constant 0 : index
    %c0_75 = arith.constant 0 : index
    %124 = vector.load %arg7[%c3, %c0_74, %c0_75] : memref<4x8x1xf32, #tpu.memory_space<vmem>>, vector<1x8x1xf32>
    %125 = vector.shape_cast %124 : vector<1x8x1xf32> to vector<8x1xf32>
    %cst_76 = arith.constant dense<0xFF800000> : vector<8xf32>
    %126 = vector.multi_reduction <maximumf>, %123, %cst_76 [1] : vector<8x8xf32> to vector<8xf32>
    %127 = vector.shape_cast %126 : vector<8xf32> to vector<8x1xf32>
    %128 = arith.maximumf %125, %127 : vector<8x1xf32>
    %129 = arith.subf %125, %128 : vector<8x1xf32>
    %130 = math.exp %129 : vector<8x1xf32>
    %131 = vector.broadcast %128 : vector<8x1xf32> to vector<8x8xf32>
    %132 = arith.subf %123, %131 : vector<8x8xf32>
    %133 = math.exp %132 : vector<8x8xf32>
    %c3_77 = arith.constant 3 : index
    %c0_78 = arith.constant 0 : index
    %c0_79 = arith.constant 0 : index
    %134 = vector.load %arg8[%c3_77, %c0_78, %c0_79] : memref<4x8x1xf32, #tpu.memory_space<vmem>>, vector<1x8x1xf32>
    %135 = vector.shape_cast %134 : vector<1x8x1xf32> to vector<8x1xf32>
    %136 = arith.mulf %130, %135 : vector<8x1xf32>
    %cst_80 = arith.constant dense<0.000000e+00> : vector<8xf32>
    %137 = vector.multi_reduction <add>, %133, %cst_80 [1] : vector<8x8xf32> to vector<8xf32>
    %138 = vector.shape_cast %137 : vector<8xf32> to vector<8x1xf32>
    %139 = arith.addf %136, %138 : vector<8x1xf32>
    %c3_81 = arith.constant 3 : index
    %c0_82 = arith.constant 0 : index
    %c0_83 = arith.constant 0 : index
    %140 = vector.load %arg8[%c3_81, %c0_82, %c0_83] : memref<4x8x1xf32, #tpu.memory_space<vmem>>, vector<1x8x1xf32>
    %141 = vector.shape_cast %140 : vector<1x8x1xf32> to vector<8x1xf32>
    %142 = vector.shape_cast %139 : vector<8x1xf32> to vector<1x8x1xf32>
    tpu.vector_store %arg8[%c3_81, %c0_82, %c0_83], %142 {strides = array<i32>} : memref<4x8x1xf32, #tpu.memory_space<vmem>>, vector<1x8x1xf32>,
    %c3_84 = arith.constant 3 : index
    %c0_85 = arith.constant 0 : index
    %c0_86 = arith.constant 0 : index
    %143 = vector.load %arg9[%c3_84, %c0_85, %c0_86] : memref<4x8x8xf32, #tpu.memory_space<vmem>>, vector<1x8x8xf32>
    %144 = vector.shape_cast %143 : vector<1x8x8xf32> to vector<8x8xf32>
    %145 = vector.broadcast %130 : vector<8x1xf32> to vector<8x8xf32>
    %146 = arith.mulf %145, %144 : vector<8x8xf32>
    %cst_87 = arith.constant dense<0.000000e+00> : vector<8x8xf32>
    %147 = tpu.matmul %133, %121, %cst_87 {dimension_numbers = #tpu.dot_dimension_numbers<[1], [0], [0], [1], [0, 0, 1, 1], [], []>, precision = #tpu.contract_precision<fp32>} : vector<8x8xf32>, vector<8x8xf32>, vector<8x8xf32> -> vector<8x8xf32>
    %148 = arith.addf %146, %147 : vector<8x8xf32>
    %c3_88 = arith.constant 3 : index
    %c0_89 = arith.constant 0 : index
    %c0_90 = arith.constant 0 : index
    %149 = vector.load %arg9[%c3_88, %c0_89, %c0_90] : memref<4x8x8xf32, #tpu.memory_space<vmem>>, vector<1x8x8xf32>
    %150 = vector.shape_cast %149 : vector<1x8x8xf32> to vector<8x8xf32>
    %151 = vector.shape_cast %148 : vector<8x8xf32> to vector<1x8x8xf32>
    tpu.vector_store %arg9[%c3_88, %c0_89, %c0_90], %151 {strides = array<i32>} : memref<4x8x8xf32, #tpu.memory_space<vmem>>, vector<1x8x8xf32>,
    %c3_91 = arith.constant 3 : index
    %c0_92 = arith.constant 0 : index
    %c0_93 = arith.constant 0 : index
    %152 = vector.load %arg7[%c3_91, %c0_92, %c0_93] : memref<4x8x1xf32, #tpu.memory_space<vmem>>, vector<1x8x1xf32>
    %153 = vector.shape_cast %152 : vector<1x8x1xf32> to vector<8x1xf32>
    %154 = vector.shape_cast %128 : vector<8x1xf32> to vector<1x8x1xf32>
    tpu.vector_store %arg7[%c3_91, %c0_92, %c0_93], %154 {strides = array<i32>} : memref<4x8x1xf32, #tpu.memory_space<vmem>>, vector<1x8x1xf32>,
    %c0_i32_94 = arith.constant 0 : i32
    %155 = arith.cmpi eq, %arg2, %c0_i32_94 : i32
    %156 = arith.extui %155 : i1 to i32
    %c0_i32_95 = arith.constant 0 : i32
    %157 = arith.cmpi ne, %156, %c0_i32_95 : i32
    scf.if %157 {
      %c0_96 = arith.constant 0 : index
      %c0_97 = arith.constant 0 : index
      %c0_98 = arith.constant 0 : index
      %158 = vector.load %arg8[%c0_96, %c0_97, %c0_98] : memref<4x8x1xf32, #tpu.memory_space<vmem>>, vector<1x8x1xf32>
      %159 = vector.shape_cast %158 : vector<1x8x1xf32> to vector<8x1xf32>
      %160 = tpu.reciprocal %159 {approx = true} : vector<8x1xf32> -> vector<8x1xf32>
      %161 = arith.mulf %159, %160 : vector<8x1xf32>
      %cst_99 = arith.constant 2.000000e+00 : f32
      %162 = vector.broadcast %cst_99 : f32 to vector<8x1xf32>
      %163 = arith.subf %162, %161 : vector<8x1xf32>
      %164 = arith.mulf %160, %163 : vector<8x1xf32>
      %c0_100 = arith.constant 0 : index
      %c0_101 = arith.constant 0 : index
      %c0_102 = arith.constant 0 : index
      %165 = vector.load %arg9[%c0_100, %c0_101, %c0_102] : memref<4x8x8xf32, #tpu.memory_space<vmem>>, vector<1x8x8xf32>
      %166 = vector.shape_cast %165 : vector<1x8x8xf32> to vector<8x8xf32>
      %167 = vector.broadcast %164 : vector<8x1xf32> to vector<8x8xf32>
      %168 = arith.mulf %166, %167 : vector<8x8xf32>
      %c1_103 = arith.constant 1 : index
      %c0_104 = arith.constant 0 : index
      %c0_105 = arith.constant 0 : index
      %169 = vector.load %arg8[%c1_103, %c0_104, %c0_105] : memref<4x8x1xf32, #tpu.memory_space<vmem>>, vector<1x8x1xf32>
      %170 = vector.shape_cast %169 : vector<1x8x1xf32> to vector<8x1xf32>
      %171 = tpu.reciprocal %170 {approx = true} : vector<8x1xf32> -> vector<8x1xf32>
      %172 = arith.mulf %170, %171 : vector<8x1xf32>
      %cst_106 = arith.constant 2.000000e+00 : f32
      %173 = vector.broadcast %cst_106 : f32 to vector<8x1xf32>
      %174 = arith.subf %173, %172 : vector<8x1xf32>
      %175 = arith.mulf %171, %174 : vector<8x1xf32>
      %c1_107 = arith.constant 1 : index
      %c0_108 = arith.constant 0 : index
      %c0_109 = arith.constant 0 : index
      %176 = vector.load %arg9[%c1_107, %c0_108, %c0_109] : memref<4x8x8xf32, #tpu.memory_space<vmem>>, vector<1x8x8xf32>
      %177 = vector.shape_cast %176 : vector<1x8x8xf32> to vector<8x8xf32>
      %178 = vector.broadcast %175 : vector<8x1xf32> to vector<8x8xf32>
      %179 = arith.mulf %177, %178 : vector<8x8xf32>
      %c2_110 = arith.constant 2 : index
      %c0_111 = arith.constant 0 : index
      %c0_112 = arith.constant 0 : index
      %180 = vector.load %arg8[%c2_110, %c0_111, %c0_112] : memref<4x8x1xf32, #tpu.memory_space<vmem>>, vector<1x8x1xf32>
      %181 = vector.shape_cast %180 : vector<1x8x1xf32> to vector<8x1xf32>
      %182 = tpu.reciprocal %181 {approx = true} : vector<8x1xf32> -> vector<8x1xf32>
      %183 = arith.mulf %181, %182 : vector<8x1xf32>
      %cst_113 = arith.constant 2.000000e+00 : f32
      %184 = vector.broadcast %cst_113 : f32 to vector<8x1xf32>
      %185 = arith.subf %184, %183 : vector<8x1xf32>
      %186 = arith.mulf %182, %185 : vector<8x1xf32>
      %c2_114 = arith.constant 2 : index
      %c0_115 = arith.constant 0 : index
      %c0_116 = arith.constant 0 : index
      %187 = vector.load %arg9[%c2_114, %c0_115, %c0_116] : memref<4x8x8xf32, #tpu.memory_space<vmem>>, vector<1x8x8xf32>
      %188 = vector.shape_cast %187 : vector<1x8x8xf32> to vector<8x8xf32>
      %189 = vector.broadcast %186 : vector<8x1xf32> to vector<8x8xf32>
      %190 = arith.mulf %188, %189 : vector<8x8xf32>
      %c3_117 = arith.constant 3 : index
      %c0_118 = arith.constant 0 : index
      %c0_119 = arith.constant 0 : index
      %191 = vector.load %arg8[%c3_117, %c0_118, %c0_119] : memref<4x8x1xf32, #tpu.memory_space<vmem>>, vector<1x8x1xf32>
      %192 = vector.shape_cast %191 : vector<1x8x1xf32> to vector<8x1xf32>
      %193 = tpu.reciprocal %192 {approx = true} : vector<8x1xf32> -> vector<8x1xf32>
      %194 = arith.mulf %192, %193 : vector<8x1xf32>
      %cst_120 = arith.constant 2.000000e+00 : f32
      %195 = vector.broadcast %cst_120 : f32 to vector<8x1xf32>
      %196 = arith.subf %195, %194 : vector<8x1xf32>
      %197 = arith.mulf %193, %196 : vector<8x1xf32>
      %c3_121 = arith.constant 3 : index
      %c0_122 = arith.constant 0 : index
      %c0_123 = arith.constant 0 : index
      %198 = vector.load %arg9[%c3_121, %c0_122, %c0_123] : memref<4x8x8xf32, #tpu.memory_space<vmem>>, vector<1x8x8xf32>
      %199 = vector.shape_cast %198 : vector<1x8x8xf32> to vector<8x8xf32>
      %200 = vector.broadcast %197 : vector<8x1xf32> to vector<8x8xf32>
      %201 = arith.mulf %199, %200 : vector<8x8xf32>
      %202 = tpu.concatenate %168, %179, %190, %201 in 1 : vector<8x8xf32>, vector<8x8xf32>, vector<8x8xf32>, vector<8x8xf32> -> vector<8x32xf32>
      %c0_124 = arith.constant 0 : index
      %c0_125 = arith.constant 0 : index
      %c0_126 = arith.constant 0 : index
      %203 = vector.load %arg6[%c0_124, %c0_125, %c0_126] : memref<1x8x32xf32, #tpu.memory_space<vmem>>, vector<1x8x32xf32>
      %204 = vector.shape_cast %203 : vector<1x8x32xf32> to vector<8x32xf32>
      %205 = vector.shape_cast %202 : vector<8x32xf32> to vector<1x8x32xf32>
      tpu.vector_store %arg6[%c0_124, %c0_125, %c0_126], %205 {strides = array<i32>} : memref<1x8x32xf32, #tpu.memory_space<vmem>>, vector<1x8x32xf32>,
    } else {
    }
    return
  }
  func.func @transform_0(%arg0: i32, %arg1: i32, %arg2: i32) -> (i32, i32, i32) {
    %c0_i32 = arith.constant 0 : i32
    %c0_i32_0 = arith.constant 0 : i32
    return %arg0, %arg1, %c0_i32 : i32, i32, i32
  }
  func.func @transform_1(%arg0: i32, %arg1: i32, %arg2: i32) -> (i32, i32, i32) {
    %c0_i32 = arith.constant 0 : i32
    %c0_i32_0 = arith.constant 0 : i32
    return %arg0, %arg2, %c0_i32 : i32, i32, i32
  }
  func.func @transform_2(%arg0: i32, %arg1: i32, %arg2: i32) -> (i32, i32, i32) {
    %c0_i32 = arith.constant 0 : i32
    %c0_i32_0 = arith.constant 0 : i32
    return %arg0, %arg2, %c0_i32 : i32, i32, i32
  }
  func.func @transform_3(%arg0: i32, %arg1: i32, %arg2: i32) -> (i32, i32, i32) {
    %c0_i32 = arith.constant 0 : i32
    %c0_i32_0 = arith.constant 0 : i32
    return %arg0, %arg1, %c0_i32 : i32, i32, i32
  }
}

module attributes {stable_mosaic.version = 11 : i64} {
  func.func @_post_kernel(%arg0: i32, %arg1: memref<16x32xf32, #tpu.memory_space<vmem>>, %arg2: memref<32x32xf32, #tpu.memory_space<vmem>>, %arg3: memref<1x32xf32, #tpu.memory_space<vmem>>, %arg4: memref<1x32xf32, #tpu.memory_space<vmem>>, %arg5: memref<1x32xf32, #tpu.memory_space<vmem>>, %arg6: memref<32x64xf32, #tpu.memory_space<vmem>>, %arg7: memref<1x64xf32, #tpu.memory_space<vmem>>, %arg8: memref<64x32xf32, #tpu.memory_space<vmem>>, %arg9: memref<1x32xf32, #tpu.memory_space<vmem>>, %arg10: memref<1x32xf32, #tpu.memory_space<vmem>>, %arg11: memref<1x32xf32, #tpu.memory_space<vmem>>, %arg12: memref<16x32xf32, #tpu.memory_space<vmem>>) attributes {dimension_semantics = [#tpu.dimension_semantics<parallel>], iteration_bounds = array<i64: 1>, scalar_prefetch = 0 : i64, scratch_operands = 0 : i64, tpu.core_type = #tpu.core_type<tc>, window_params = [{transform_indices = @transform_0, window_bounds = array<i64: 16, 32>}, {pipeline_mode = #tpu.pipeline_mode<synchronous>, transform_indices = @transform_1, window_bounds = array<i64: 32, 32>}, {pipeline_mode = #tpu.pipeline_mode<synchronous>, transform_indices = @transform_2, window_bounds = array<i64: 1, 32>}, {pipeline_mode = #tpu.pipeline_mode<synchronous>, transform_indices = @transform_3, window_bounds = array<i64: 1, 32>}, {pipeline_mode = #tpu.pipeline_mode<synchronous>, transform_indices = @transform_4, window_bounds = array<i64: 1, 32>}, {pipeline_mode = #tpu.pipeline_mode<synchronous>, transform_indices = @transform_5, window_bounds = array<i64: 32, 64>}, {pipeline_mode = #tpu.pipeline_mode<synchronous>, transform_indices = @transform_6, window_bounds = array<i64: 1, 64>}, {pipeline_mode = #tpu.pipeline_mode<synchronous>, transform_indices = @transform_7, window_bounds = array<i64: 64, 32>}, {pipeline_mode = #tpu.pipeline_mode<synchronous>, transform_indices = @transform_8, window_bounds = array<i64: 1, 32>}, {pipeline_mode = #tpu.pipeline_mode<synchronous>, transform_indices = @transform_9, window_bounds = array<i64: 1, 32>}, {pipeline_mode = #tpu.pipeline_mode<synchronous>, transform_indices = @transform_10, window_bounds = array<i64: 1, 32>}, {transform_indices = @transform_11, window_bounds = array<i64: 16, 32>}]} {
    %c0 = arith.constant 0 : index
    %c0_0 = arith.constant 0 : index
    %0 = vector.load %arg1[%c0, %c0_0] : memref<16x32xf32, #tpu.memory_space<vmem>>, vector<16x32xf32>
    %c0_1 = arith.constant 0 : index
    %c0_2 = arith.constant 0 : index
    %1 = vector.load %arg2[%c0_1, %c0_2] : memref<32x32xf32, #tpu.memory_space<vmem>>, vector<32x32xf32>
    %cst = arith.constant dense<0.000000e+00> : vector<16x32xf32>
    %2 = tpu.matmul %0, %1, %cst {dimension_numbers = #tpu.dot_dimension_numbers<[1], [0], [0], [1], [0, 0, 1, 1], [], []>, precision = #tpu.contract_precision<fp32>} : vector<16x32xf32>, vector<32x32xf32>, vector<16x32xf32> -> vector<16x32xf32>
    %c0_3 = arith.constant 0 : index
    %c0_4 = arith.constant 0 : index
    %3 = vector.load %arg3[%c0_3, %c0_4] : memref<1x32xf32, #tpu.memory_space<vmem>>, vector<1x32xf32>
    %4 = vector.broadcast %3 : vector<1x32xf32> to vector<16x32xf32>
    %5 = arith.addf %2, %4 : vector<16x32xf32>
    %c0_5 = arith.constant 0 : index
    %c0_6 = arith.constant 0 : index
    %6 = vector.load %arg4[%c0_5, %c0_6] : memref<1x32xf32, #tpu.memory_space<vmem>>, vector<1x32xf32>
    %7 = vector.broadcast %6 : vector<1x32xf32> to vector<16x32xf32>
    %8 = arith.mulf %5, %7 : vector<16x32xf32>
    %c0_7 = arith.constant 0 : index
    %c0_8 = arith.constant 0 : index
    %9 = vector.load %arg5[%c0_7, %c0_8] : memref<1x32xf32, #tpu.memory_space<vmem>>, vector<1x32xf32>
    %10 = vector.broadcast %9 : vector<1x32xf32> to vector<16x32xf32>
    %11 = arith.addf %8, %10 : vector<16x32xf32>
    %c0_9 = arith.constant 0 : index
    %c0_10 = arith.constant 0 : index
    %12 = vector.load %arg6[%c0_9, %c0_10] : memref<32x64xf32, #tpu.memory_space<vmem>>, vector<32x64xf32>
    %cst_11 = arith.constant dense<0.000000e+00> : vector<16x64xf32>
    %13 = tpu.matmul %11, %12, %cst_11 {dimension_numbers = #tpu.dot_dimension_numbers<[1], [0], [0], [1], [0, 0, 1, 1], [], []>, precision = #tpu.contract_precision<fp32>} : vector<16x32xf32>, vector<32x64xf32>, vector<16x64xf32> -> vector<16x64xf32>
    %c0_12 = arith.constant 0 : index
    %c0_13 = arith.constant 0 : index
    %14 = vector.load %arg7[%c0_12, %c0_13] : memref<1x64xf32, #tpu.memory_space<vmem>>, vector<1x64xf32>
    %15 = vector.broadcast %14 : vector<1x64xf32> to vector<16x64xf32>
    %16 = arith.addf %13, %15 : vector<16x64xf32>
    %cst_14 = arith.constant 5.000000e-01 : f32
    %17 = vector.broadcast %cst_14 : f32 to vector<16x64xf32>
    %18 = arith.mulf %17, %16 : vector<16x64xf32>
    %cst_15 = arith.constant 0.707106769 : f32
    %19 = vector.broadcast %cst_15 : f32 to vector<16x64xf32>
    %20 = arith.mulf %16, %19 : vector<16x64xf32>
    %21 = math.absf %20 : vector<16x64xf32>
    %cst_16 = arith.constant 0.327591091 : f32
    %22 = vector.broadcast %cst_16 : f32 to vector<16x64xf32>
    %23 = arith.mulf %22, %21 : vector<16x64xf32>
    %cst_17 = arith.constant 1.000000e+00 : f32
    %24 = vector.broadcast %cst_17 : f32 to vector<16x64xf32>
    %25 = arith.addf %24, %23 : vector<16x64xf32>
    %cst_18 = arith.constant 1.000000e+00 : f32
    %26 = vector.broadcast %cst_18 : f32 to vector<16x64xf32>
    %27 = arith.divf %26, %25 : vector<16x64xf32>
    %cst_19 = arith.constant 1.06140542 : f32
    %28 = vector.broadcast %cst_19 : f32 to vector<16x64xf32>
    %29 = arith.mulf %28, %27 : vector<16x64xf32>
    %cst_20 = arith.constant -1.45315206 : f32
    %30 = vector.broadcast %cst_20 : f32 to vector<16x64xf32>
    %31 = arith.addf %29, %30 : vector<16x64xf32>
    %32 = arith.mulf %31, %27 : vector<16x64xf32>
    %cst_21 = arith.constant 1.42141378 : f32
    %33 = vector.broadcast %cst_21 : f32 to vector<16x64xf32>
    %34 = arith.addf %32, %33 : vector<16x64xf32>
    %35 = arith.mulf %34, %27 : vector<16x64xf32>
    %cst_22 = arith.constant -0.284496725 : f32
    %36 = vector.broadcast %cst_22 : f32 to vector<16x64xf32>
    %37 = arith.addf %35, %36 : vector<16x64xf32>
    %38 = arith.mulf %37, %27 : vector<16x64xf32>
    %cst_23 = arith.constant 0.254829586 : f32
    %39 = vector.broadcast %cst_23 : f32 to vector<16x64xf32>
    %40 = arith.addf %38, %39 : vector<16x64xf32>
    %41 = arith.mulf %40, %27 : vector<16x64xf32>
    %cst_24 = arith.constant 0.000000e+00 : f32
    %42 = vector.broadcast %cst_24 : f32 to vector<16x64xf32>
    %43 = arith.subf %42, %21 : vector<16x64xf32>
    %44 = arith.mulf %43, %21 : vector<16x64xf32>
    %45 = math.exp %44 : vector<16x64xf32>
    %46 = arith.mulf %41, %45 : vector<16x64xf32>
    %cst_25 = arith.constant 1.000000e+00 : f32
    %47 = vector.broadcast %cst_25 : f32 to vector<16x64xf32>
    %48 = arith.subf %47, %46 : vector<16x64xf32>
    %cst_26 = arith.constant 0.000000e+00 : f32
    %49 = vector.broadcast %cst_26 : f32 to vector<16x64xf32>
    %50 = arith.cmpf oge, %20, %49 : vector<16x64xf32>
    %cst_27 = arith.constant 0.000000e+00 : f32
    %51 = vector.broadcast %cst_27 : f32 to vector<16x64xf32>
    %52 = arith.subf %51, %48 : vector<16x64xf32>
    %53 = arith.select %50, %48, %52 : vector<16x64xi1>, vector<16x64xf32>
    %cst_28 = arith.constant 1.000000e+00 : f32
    %54 = vector.broadcast %cst_28 : f32 to vector<16x64xf32>
    %55 = arith.addf %54, %53 : vector<16x64xf32>
    %56 = arith.mulf %18, %55 : vector<16x64xf32>
    %c0_29 = arith.constant 0 : index
    %c0_30 = arith.constant 0 : index
    %57 = vector.load %arg8[%c0_29, %c0_30] : memref<64x32xf32, #tpu.memory_space<vmem>>, vector<64x32xf32>
    %cst_31 = arith.constant dense<0.000000e+00> : vector<16x32xf32>
    %58 = tpu.matmul %56, %57, %cst_31 {dimension_numbers = #tpu.dot_dimension_numbers<[1], [0], [0], [1], [0, 0, 1, 1], [], []>, precision = #tpu.contract_precision<fp32>} : vector<16x64xf32>, vector<64x32xf32>, vector<16x32xf32> -> vector<16x32xf32>
    %c0_32 = arith.constant 0 : index
    %c0_33 = arith.constant 0 : index
    %59 = vector.load %arg9[%c0_32, %c0_33] : memref<1x32xf32, #tpu.memory_space<vmem>>, vector<1x32xf32>
    %60 = vector.broadcast %59 : vector<1x32xf32> to vector<16x32xf32>
    %61 = arith.addf %58, %60 : vector<16x32xf32>
    %62 = arith.addf %11, %61 : vector<16x32xf32>
    %c0_34 = arith.constant 0 : index
    %c0_35 = arith.constant 0 : index
    %63 = vector.load %arg10[%c0_34, %c0_35] : memref<1x32xf32, #tpu.memory_space<vmem>>, vector<1x32xf32>
    %64 = vector.broadcast %63 : vector<1x32xf32> to vector<16x32xf32>
    %65 = arith.mulf %62, %64 : vector<16x32xf32>
    %c0_36 = arith.constant 0 : index
    %c0_37 = arith.constant 0 : index
    %66 = vector.load %arg11[%c0_36, %c0_37] : memref<1x32xf32, #tpu.memory_space<vmem>>, vector<1x32xf32>
    %67 = vector.broadcast %66 : vector<1x32xf32> to vector<16x32xf32>
    %68 = arith.addf %65, %67 : vector<16x32xf32>
    %c0_38 = arith.constant 0 : index
    %c0_39 = arith.constant 0 : index
    %69 = vector.load %arg12[%c0_38, %c0_39] : memref<16x32xf32, #tpu.memory_space<vmem>>, vector<16x32xf32>
    tpu.vector_store %arg12[%c0_38, %c0_39], %68 {strides = array<i32>} : memref<16x32xf32, #tpu.memory_space<vmem>>, vector<16x32xf32>,
    return
  }
  func.func @transform_0(%arg0: i32) -> (i32, i32) {
    %c0_i32 = arith.constant 0 : i32
    %c0_i32_0 = arith.constant 0 : i32
    return %arg0, %c0_i32 : i32, i32
  }
  func.func @transform_1(%arg0: i32) -> (i32, i32) {
    %c0_i32 = arith.constant 0 : i32
    %c0_i32_0 = arith.constant 0 : i32
    %c0_i32_1 = arith.constant 0 : i32
    return %c0_i32, %c0_i32_0 : i32, i32
  }
  func.func @transform_2(%arg0: i32) -> (i32, i32) {
    %c0_i32 = arith.constant 0 : i32
    %c0_i32_0 = arith.constant 0 : i32
    %c0_i32_1 = arith.constant 0 : i32
    return %c0_i32, %c0_i32_0 : i32, i32
  }
  func.func @transform_3(%arg0: i32) -> (i32, i32) {
    %c0_i32 = arith.constant 0 : i32
    %c0_i32_0 = arith.constant 0 : i32
    %c0_i32_1 = arith.constant 0 : i32
    return %c0_i32, %c0_i32_0 : i32, i32
  }
  func.func @transform_4(%arg0: i32) -> (i32, i32) {
    %c0_i32 = arith.constant 0 : i32
    %c0_i32_0 = arith.constant 0 : i32
    %c0_i32_1 = arith.constant 0 : i32
    return %c0_i32, %c0_i32_0 : i32, i32
  }
  func.func @transform_5(%arg0: i32) -> (i32, i32) {
    %c0_i32 = arith.constant 0 : i32
    %c0_i32_0 = arith.constant 0 : i32
    %c0_i32_1 = arith.constant 0 : i32
    return %c0_i32, %c0_i32_0 : i32, i32
  }
  func.func @transform_6(%arg0: i32) -> (i32, i32) {
    %c0_i32 = arith.constant 0 : i32
    %c0_i32_0 = arith.constant 0 : i32
    %c0_i32_1 = arith.constant 0 : i32
    return %c0_i32, %c0_i32_0 : i32, i32
  }
  func.func @transform_7(%arg0: i32) -> (i32, i32) {
    %c0_i32 = arith.constant 0 : i32
    %c0_i32_0 = arith.constant 0 : i32
    %c0_i32_1 = arith.constant 0 : i32
    return %c0_i32, %c0_i32_0 : i32, i32
  }
  func.func @transform_8(%arg0: i32) -> (i32, i32) {
    %c0_i32 = arith.constant 0 : i32
    %c0_i32_0 = arith.constant 0 : i32
    %c0_i32_1 = arith.constant 0 : i32
    return %c0_i32, %c0_i32_0 : i32, i32
  }
  func.func @transform_9(%arg0: i32) -> (i32, i32) {
    %c0_i32 = arith.constant 0 : i32
    %c0_i32_0 = arith.constant 0 : i32
    %c0_i32_1 = arith.constant 0 : i32
    return %c0_i32, %c0_i32_0 : i32, i32
  }
  func.func @transform_10(%arg0: i32) -> (i32, i32) {
    %c0_i32 = arith.constant 0 : i32
    %c0_i32_0 = arith.constant 0 : i32
    %c0_i32_1 = arith.constant 0 : i32
    return %c0_i32, %c0_i32_0 : i32, i32
  }
  func.func @transform_11(%arg0: i32) -> (i32, i32) {
    %c0_i32 = arith.constant 0 : i32
    %c0_i32_0 = arith.constant 0 : i32
    return %arg0, %c0_i32 : i32, i32
  }
}

</mosaic_0001>

<llo_original>
// kernel: full_attention_full_t2v.3
$region0: #{full_attention_full_t2v.3}
  #allocation0 [shape = 'u32[]', space=smem, size = 0x4, offset = 0x4, fixed_abs, tag = 'smem constant byte address 0x4 - core index']
  #allocation1 [shape = 'u32[144,128]{1,0:T(1,128)}', space=vmem, size = 0x12000, scoped, tag = 'internal scratch']
  %s0 = inlined_call_operand.vmem [shape: f32[16,32], index: 0, kind: input, shape index: {}]
  %s1 = inlined_call_operand.vmem [shape: f32[32,32], index: 1, kind: input, shape index: {}]
  %s2 = inlined_call_operand.vmem [shape: f32[1,32], index: 2, kind: input, shape index: {}]
  %s3 = inlined_call_operand.vmem [shape: f32[1,32], index: 3, kind: input, shape index: {}]
  %s4 = inlined_call_operand.vmem [shape: f32[1,32], index: 4, kind: input, shape index: {}]
  %s5 = inlined_call_operand.vmem [shape: f32[32,64], index: 5, kind: input, shape index: {}]
  %s6 = inlined_call_operand.vmem [shape: f32[1,64], index: 6, kind: input, shape index: {}]
  %s7 = inlined_call_operand.vmem [shape: f32[64,32], index: 7, kind: input, shape index: {}]
  %s8 = inlined_call_operand.vmem [shape: f32[1,32], index: 8, kind: input, shape index: {}]
  %s9 = inlined_call_operand.vmem [shape: f32[1,32], index: 9, kind: input, shape index: {}]
  %s10 = inlined_call_operand.vmem [shape: f32[1,32], index: 10, kind: input, shape index: {}]
  %s11 = inlined_call_operand.hbm [shape: f32[16,32], index: 11, kind: output, shape index: {}]
  %s12 = sld [smem:[#allocation0]]
  $region54: #{full_attention_full_t2v.3} parent=0
    _
  %s14 = ssub.s32 1, %s12
  %s15 = scalar_select 0, %s14, %s12
  $region1: #{full_attention_full_t2v.3} parent=0
    #allocation2 [shape = 'u8[8192]{0}', space=vmem, size = 0x2000, scoped, tag = 'output window, operand 0, single buffered']
    #allocation3 [shape = 's32[1]{0}', space=sflag, size = 0x4, scoped, tag = 'scoped memory for full_attention_full_t2v.3']
    %16 = vsyncpa [#allocation3], 0
    // Predicated region
    $region2: #{full_attention_full_t2v.3} parent=1 // pred_check
      _
    $region3: #{full_attention_full_t2v.3} parent=1 // pred_check_branch
      %18 = sbr.rel (0) target = $region5
    $region4: #{full_attention_full_t2v.3} parent=1 // pred_region
      _
    $region5: #{full_attention_full_t2v.3} parent=1 // pred_fallthru
      _
    // Predicated region
    $region6: #{full_attention_full_t2v.3} parent=1 // pred_check
      _
    $region7: #{full_attention_full_t2v.3} parent=1 // pred_check_branch
      %20 = sbr.rel (0) target = $region9
    $region8: #{full_attention_full_t2v.3} parent=1 // pred_region
      _
    $region9: #{full_attention_full_t2v.3} parent=1 // pred_fallthru
      _
    // Predicated region
    $region10: #{full_attention_full_t2v.3} parent=1 // pred_check
      _
    $region11: #{full_attention_full_t2v.3} parent=1 // pred_check_branch
      %22 = sbr.rel (0) target = $region13
    $region12: #{full_attention_full_t2v.3} parent=1 // pred_region
      _
    $region13: #{full_attention_full_t2v.3} parent=1 // pred_fallthru
      _
    // Predicated region
    $region14: #{full_attention_full_t2v.3} parent=1 // pred_check
      _
    $region15: #{full_attention_full_t2v.3} parent=1 // pred_check_branch
      %24 = sbr.rel (0) target = $region17
    $region16: #{full_attention_full_t2v.3} parent=1 // pred_region
      _
    $region17: #{full_attention_full_t2v.3} parent=1 // pred_fallthru
      _
    // Predicated region
    $region18: #{full_attention_full_t2v.3} parent=1 // pred_check
      _
    $region19: #{full_attention_full_t2v.3} parent=1 // pred_check_branch
      %26 = sbr.rel (0) target = $region21
    $region20: #{full_attention_full_t2v.3} parent=1 // pred_region
      _
    $region21: #{full_attention_full_t2v.3} parent=1 // pred_fallthru
      _
    // Predicated region
    $region22: #{full_attention_full_t2v.3} parent=1 // pred_check
      _
    $region23: #{full_attention_full_t2v.3} parent=1 // pred_check_branch
      %28 = sbr.rel (0) target = $region25
    $region24: #{full_attention_full_t2v.3} parent=1 // pred_region
      _
    $region25: #{full_attention_full_t2v.3} parent=1 // pred_fallthru
      _
    // Predicated region
    $region26: #{full_attention_full_t2v.3} parent=1 // pred_check
      _
    $region27: #{full_attention_full_t2v.3} parent=1 // pred_check_branch
      %30 = sbr.rel (0) target = $region29
    $region28: #{full_attention_full_t2v.3} parent=1 // pred_region
      _
    $region29: #{full_attention_full_t2v.3} parent=1 // pred_fallthru
      _
    // Predicated region
    $region30: #{full_attention_full_t2v.3} parent=1 // pred_check
      _
    $region31: #{full_attention_full_t2v.3} parent=1 // pred_check_branch
      %32 = sbr.rel (0) target = $region33
    $region32: #{full_attention_full_t2v.3} parent=1 // pred_region
      _
    $region33: #{full_attention_full_t2v.3} parent=1 // pred_fallthru
      _
    // Predicated region
    $region34: #{full_attention_full_t2v.3} parent=1 // pred_check
      _
    $region35: #{full_attention_full_t2v.3} parent=1 // pred_check_branch
      %34 = sbr.rel (0) target = $region37
    $region36: #{full_attention_full_t2v.3} parent=1 // pred_region
      _
    $region37: #{full_attention_full_t2v.3} parent=1 // pred_fallthru
      _
    // Predicated region
    $region38: #{full_attention_full_t2v.3} parent=1 // pred_check
      _
    $region39: #{full_attention_full_t2v.3} parent=1 // pred_check_branch
      %36 = sbr.rel (0) target = $region41
    $region40: #{full_attention_full_t2v.3} parent=1 // pred_region
      _
    $region41: #{full_attention_full_t2v.3} parent=1 // pred_fallthru
      _
    // Predicated region
    $region42: #{full_attention_full_t2v.3} parent=1 // pred_check
      _
    $region43: #{full_attention_full_t2v.3} parent=1 // pred_check_branch
      %38 = sbr.rel (0) target = $region45
    $region44: #{full_attention_full_t2v.3} parent=1 // pred_region
      _
    $region45: #{full_attention_full_t2v.3} parent=1 // pred_fallthru
      _
    %v39 = vld [vmem:[%s0] sm:$0xff]
    %v40 = vld [vmem:[%s0 + $0x8] sm:$0xff]
    %v41 = vld [vmem:[%s1] sm:$0xff]
    %v42 = vld [vmem:[%s1 + $0x8] sm:$0xff]
    %v43 = vld [vmem:[%s1 + $0x10] sm:$0xff]
    %v44 = vld [vmem:[%s1 + $0x18] sm:$0xff]
    %v45 = vld [vmem:[%s2] sm:$0x1]
    %v47 = vlaneseq
    %v48 = vshrl.u32 %v47, 7
    %v49 = vsub.s32 0, %v48
    %v50 = vrot.slane %v45, %v49
    %vm52 = vcmask 261120
    %v54 = vsel %vm52, %v39, 0
    %v57 = vsel %vm52, %v40, 0
    %59 = vmatprep.subr.mxu0 0.0
    %60 = vmatpush1.msra.mxu0 0.0
    %61 = vmatprep.subr.mxu0 0.0
    %62 = vmatpush1.msra.mxu0 0.0
    %63 = vmatprep.subr.mxu0 0.0
    %64 = vmatpush1.msra.mxu0 0.0
    %65 = vmatprep.subr.mxu0 0.0
    %66 = vmatpush1.msra.mxu0 0.0
    %67 = vmatprep.subr.mxu0 0.0
    %68 = vmatpush1.msra.mxu0 0.0
    %69 = vmatprep.subr.mxu0 0.0
    %70 = vmatpush1.msra.mxu0 0.0
    %71 = vmatprep.subr.mxu0 0.0
    %72 = vmatpush1.msra.mxu0 0.0
    %73 = vmatprep.subr.mxu0 0.0
    %74 = vmatpush1.msra.mxu0 0.0
    %75 = vmatprep.subr.mxu0 0.0
    %76 = vmatpush1.msra.mxu0 0.0
    %77 = vmatprep.subr.mxu0 0.0
    %78 = vmatpush1.msra.mxu0 0.0
    %79 = vmatprep.subr.mxu0 0.0
    %80 = vmatpush1.msra.mxu0 0.0
    %81 = vmatprep.subr.mxu0 0.0
    %82 = vmatpush1.msra.mxu0 0.0
    %83 = vmatprep.subr.mxu0 0.0
    %v84 = vand.u32 %v44, 4294901760
    %85 = vmatpush1.msra.mxu0 %v84
    %86 = vmatprep.subr.mxu0 0.0
    %v87 = vand.u32 %v43, 4294901760
    %88 = vmatpush1.msra.mxu0 %v87
    %89 = vmatprep.subr.mxu0 0.0
    %v90 = vand.u32 %v42, 4294901760
    %91 = vmatpush1.msra.mxu0 %v90
    %92 = vmatprep.subr.mxu0 0.0
    %v93 = vand.u32 %v41, 4294901760
    %94 = vmatpush1.msra.mxu0 %v93
    %95 = vmatprep.subr.mxu0 0.0
    %96 = vmatpush2.msra.mxu0 0.0
    %97 = vmatprep.subr.mxu0 0.0
    %98 = vmatpush2.msra.mxu0 0.0
    %99 = vmatprep.subr.mxu0 0.0
    %100 = vmatpush2.msra.mxu0 0.0
    %101 = vmatprep.subr.mxu0 0.0
    %102 = vmatpush2.msra.mxu0 0.0
    %103 = vmatprep.subr.mxu0 0.0
    %104 = vmatpush2.msra.mxu0 0.0
    %105 = vmatprep.subr.mxu0 0.0
    %106 = vmatpush2.msra.mxu0 0.0
    %107 = vmatprep.subr.mxu0 0.0
    %108 = vmatpush2.msra.mxu0 0.0
    %109 = vmatprep.subr.mxu0 0.0
    %110 = vmatpush2.msra.mxu0 0.0
    %111 = vmatprep.subr.mxu0 0.0
    %112 = vmatpush2.msra.mxu0 0.0
    %113 = vmatprep.subr.mxu0 0.0
    %114 = vmatpush2.msra.mxu0 0.0
    %115 = vmatprep.subr.mxu0 0.0
    %116 = vmatpush2.msra.mxu0 0.0
    %117 = vmatprep.subr.mxu0 0.0
    %118 = vmatpush2.msra.mxu0 0.0
    %119 = vmatprep.subr.mxu0 0.0
    %120 = vmatpush2.msra.mxu0 0.0
    %121 = vmatprep.subr.mxu0 0.0
    %122 = vmatpush2.msra.mxu0 0.0
    %123 = vmatprep.subr.mxu0 0.0
    %124 = vmatpush2.msra.mxu0 0.0
    %125 = vmatprep.subr.mxu0 0.0
    %126 = vmatpush2.msra.mxu0 0.0
    %127 = vmatprep.mubr.f32.mxu0 0.0
    %v128 = vand.u32 %v54, 4294901760
    %v129 = vsub.f32 %v54, %v128
    %v130 = vand.u32 %v129, 4294901760
    %v131 = vsub.f32 %v129, %v130
    %v132 = vand.u32 %v131, 4294901760
    %133 = vmatmul.mubr.f32.gmra.mxu0 %v132
    %v134 = vpop.f32.mrf.mxu0
    %v135 = vadd.f32 %v50, %v134
    %v136 = vpop.f32.mrf.mxu0
    %137 = vmatprep.mubr.f32.mxu0 0.0
    %v138 = vand.u32 %v57, 4294901760
    %v139 = vsub.f32 %v57, %v138
    %v140 = vand.u32 %v139, 4294901760
    %v141 = vsub.f32 %v139, %v140
    %v142 = vand.u32 %v141, 4294901760
    %143 = vmatmul.mubr.f32.gmra.mxu0 %v142
    %v144 = vpop.f32.mrf.mxu0
    %v145 = vadd.f32 %v50, %v144
    %v146 = vpop.f32.mrf.mxu0
    %147 = vdwg.mxu0
    %148 = vmatprep.subr.mxu0 0.0
    %149 = vmatpush1.msra.mxu0 0.0
    %150 = vmatprep.subr.mxu0 0.0
    %151 = vmatpush1.msra.mxu0 0.0
    %152 = vmatprep.subr.mxu0 0.0
    %153 = vmatpush1.msra.mxu0 0.0
    %154 = vmatprep.subr.mxu0 0.0
    %155 = vmatpush1.msra.mxu0 0.0
    %156 = vmatprep.subr.mxu0 0.0
    %157 = vmatpush1.msra.mxu0 0.0
    %158 = vmatprep.subr.mxu0 0.0
    %159 = vmatpush1.msra.mxu0 0.0
    %160 = vmatprep.subr.mxu0 0.0
    %161 = vmatpush1.msra.mxu0 0.0
    %162 = vmatprep.subr.mxu0 0.0
    %163 = vmatpush1.msra.mxu0 0.0
    %164 = vmatprep.subr.mxu0 0.0
    %165 = vmatpush1.msra.mxu0 0.0
    %166 = vmatprep.subr.mxu0 0.0
    %167 = vmatpush1.msra.mxu0 0.0
    %168 = vmatprep.subr.mxu0 0.0
    %169 = vmatpush1.msra.mxu0 0.0
    %170 = vmatprep.subr.mxu0 0.0
    %171 = vmatpush1.msra.mxu0 0.0
    %172 = vmatprep.subr.mxu0 0.0
    %v173 = vand.u32 %v44, 4294901760
    %v174 = vsub.f32 %v44, %v173
    %v175 = vand.u32 %v174, 4294901760
    %v176 = vsub.f32 %v174, %v175
    %v177 = vand.u32 %v176, 4294901760
    %178 = vmatpush1.msra.mxu0 %v177
    %179 = vmatprep.subr.mxu0 0.0
    %v180 = vand.u32 %v43, 4294901760
    %v181 = vsub.f32 %v43, %v180
    %v182 = vand.u32 %v181, 4294901760
    %v183 = vsub.f32 %v181, %v182
    %v184 = vand.u32 %v183, 4294901760
    %185 = vmatpush1.msra.mxu0 %v184
    %186 = vmatprep.subr.mxu0 0.0
    %v187 = vand.u32 %v42, 4294901760
    %v188 = vsub.f32 %v42, %v187
    %v189 = vand.u32 %v188, 4294901760
    %v190 = vsub.f32 %v188, %v189
    %v191 = vand.u32 %v190, 4294901760
    %192 = vmatpush1.msra.mxu0 %v191
    %193 = vmatprep.subr.mxu0 0.0
    %v194 = vand.u32 %v41, 4294901760
    %v195 = vsub.f32 %v41, %v194
    %v196 = vand.u32 %v195, 4294901760
    %v197 = vsub.f32 %v195, %v196
    %v198 = vand.u32 %v197, 4294901760
    %199 = vmatpush1.msra.mxu0 %v198
    %200 = vmatprep.subr.mxu0 0.0
    %201 = vmatpush2.msra.mxu0 0.0
    %202 = vmatprep.subr.mxu0 0.0
    %203 = vmatpush2.msra.mxu0 0.0
    %204 = vmatprep.subr.mxu0 0.0
    %205 = vmatpush2.msra.mxu0 0.0
    %206 = vmatprep.subr.mxu0 0.0
    %207 = vmatpush2.msra.mxu0 0.0
    %208 = vmatprep.subr.mxu0 0.0
    %209 = vmatpush2.msra.mxu0 0.0
    %210 = vmatprep.subr.mxu0 0.0
    %211 = vmatpush2.msra.mxu0 0.0
    %212 = vmatprep.subr.mxu0 0.0
    %213 = vmatpush2.msra.mxu0 0.0
    %214 = vmatprep.subr.mxu0 0.0
    %215 = vmatpush2.msra.mxu0 0.0
    %216 = vmatprep.subr.mxu0 0.0
    %217 = vmatpush2.msra.mxu0 0.0
    %218 = vmatprep.subr.mxu0 0.0
    %219 = vmatpush2.msra.mxu0 0.0
    %220 = vmatprep.subr.mxu0 0.0
    %221 = vmatpush2.msra.mxu0 0.0
    %222 = vmatprep.subr.mxu0 0.0
    %223 = vmatpush2.msra.mxu0 0.0
    %224 = vmatprep.subr.mxu0 0.0
    %225 = vmatpush2.msra.mxu0 0.0
    %226 = vmatprep.subr.mxu0 0.0
    %227 = vmatpush2.msra.mxu0 0.0
    %228 = vmatprep.subr.mxu0 0.0
    %229 = vmatpush2.msra.mxu0 0.0
    %230 = vmatprep.subr.mxu0 0.0
    %231 = vmatpush2.msra.mxu0 0.0
    %232 = vmatprep.mubr.f32.mxu0 0.0
    %v233 = vand.u32 %v54, 4294901760
    %234 = vmatmul.mubr.f32.gmra.mxu0 %v233
    %v235 = vpop.f32.mrf.mxu0
    %v236 = vadd.f32 %v135, %v235
    %v237 = vpop.f32.mrf.mxu0
    %238 = vmatprep.mubr.f32.mxu0 0.0
    %v239 = vand.u32 %v57, 4294901760
    %240 = vmatmul.mubr.f32.gmra.mxu0 %v239
    %v241 = vpop.f32.mrf.mxu0
    %v242 = vadd.f32 %v145, %v241
    %v243 = vpop.f32.mrf.mxu0
    %244 = vdwg.mxu0
    %245 = vmatprep.subr.mxu0 0.0
    %246 = vmatpush1.msra.mxu0 0.0
    %247 = vmatprep.subr.mxu0 0.0
    %248 = vmatpush1.msra.mxu0 0.0
    %249 = vmatprep.subr.mxu0 0.0
    %250 = vmatpush1.msra.mxu0 0.0
    %251 = vmatprep.subr.mxu0 0.0
    %252 = vmatpush1.msra.mxu0 0.0
    %253 = vmatprep.subr.mxu0 0.0
    %254 = vmatpush1.msra.mxu0 0.0
    %255 = vmatprep.subr.mxu0 0.0
    %256 = vmatpush1.msra.mxu0 0.0
    %257 = vmatprep.subr.mxu0 0.0
    %258 = vmatpush1.msra.mxu0 0.0
    %259 = vmatprep.subr.mxu0 0.0
    %260 = vmatpush1.msra.mxu0 0.0
    %261 = vmatprep.subr.mxu0 0.0
    %262 = vmatpush1.msra.mxu0 0.0
    %263 = vmatprep.subr.mxu0 0.0
    %264 = vmatpush1.msra.mxu0 0.0
    %265 = vmatprep.subr.mxu0 0.0
    %266 = vmatpush1.msra.mxu0 0.0
    %267 = vmatprep.subr.mxu0 0.0
    %268 = vmatpush1.msra.mxu0 0.0
    %269 = vmatprep.subr.mxu0 0.0
    %v270 = vand.u32 %v44, 4294901760
    %v271 = vsub.f32 %v44, %v270
    %272 = vmatpush1.msra.mxu0 %v271
    %273 = vmatprep.subr.mxu0 0.0
    %v274 = vand.u32 %v43, 4294901760
    %v275 = vsub.f32 %v43, %v274
    %276 = vmatpush1.msra.mxu0 %v275
    %277 = vmatprep.subr.mxu0 0.0
    %v278 = vand.u32 %v42, 4294901760
    %v279 = vsub.f32 %v42, %v278
    %280 = vmatpush1.msra.mxu0 %v279
    %281 = vmatprep.subr.mxu0 0.0
    %v282 = vand.u32 %v41, 4294901760
    %v283 = vsub.f32 %v41, %v282
    %284 = vmatpush1.msra.mxu0 %v283
    %285 = vmatprep.subr.mxu0 0.0
    %286 = vmatpush2.msra.mxu0 0.0
    %287 = vmatprep.subr.mxu0 0.0
    %288 = vmatpush2.msra.mxu0 0.0
    %289 = vmatprep.subr.mxu0 0.0
    %290 = vmatpush2.msra.mxu0 0.0
    %291 = vmatprep.subr.mxu0 0.0
    %292 = vmatpush2.msra.mxu0 0.0
    %293 = vmatprep.subr.mxu0 0.0
    %294 = vmatpush2.msra.mxu0 0.0
    %295 = vmatprep.subr.mxu0 0.0
    %296 = vmatpush2.msra.mxu0 0.0
    %297 = vmatprep.subr.mxu0 0.0
    %298 = vmatpush2.msra.mxu0 0.0
    %299 = vmatprep.subr.mxu0 0.0
    %300 = vmatpush2.msra.mxu0 0.0
    %301 = vmatprep.subr.mxu0 0.0
    %302 = vmatpush2.msra.mxu0 0.0
    %303 = vmatprep.subr.mxu0 0.0
    %304 = vmatpush2.msra.mxu0 0.0
    %305 = vmatprep.subr.mxu0 0.0
    %306 = vmatpush2.msra.mxu0 0.0
    %307 = vmatprep.subr.mxu0 0.0
    %308 = vmatpush2.msra.mxu0 0.0
    %309 = vmatprep.subr.mxu0 0.0
    %310 = vmatpush2.msra.mxu0 0.0
    %311 = vmatprep.subr.mxu0 0.0
    %312 = vmatpush2.msra.mxu0 0.0
    %313 = vmatprep.subr.mxu0 0.0
    %314 = vmatpush2.msra.mxu0 0.0
    %315 = vmatprep.subr.mxu0 0.0
    %316 = vmatpush2.msra.mxu0 0.0
    %317 = vmatprep.mubr.f32.mxu0 0.0
    %v318 = vand.u32 %v54, 4294901760
    %v319 = vsub.f32 %v54, %v318
    %320 = vmatmul.mubr.f32.gmra.mxu0 %v319
    %v321 = vpop.f32.mrf.mxu0
    %v322 = vadd.f32 %v236, %v321
    %v323 = vpop.f32.mrf.mxu0
    %324 = vmatprep.mubr.f32.mxu0 0.0
    %v325 = vand.u32 %v57, 4294901760
    %v326 = vsub.f32 %v57, %v325
    %327 = vmatmul.mubr.f32.gmra.mxu0 %v326
    %v328 = vpop.f32.mrf.mxu0
    %v329 = vadd.f32 %v242, %v328
    %v330 = vpop.f32.mrf.mxu0
    %331 = vdwg.mxu0
    %332 = vmatprep.subr.mxu0 0.0
    %333 = vmatpush1.msra.mxu0 0.0
    %334 = vmatprep.subr.mxu0 0.0
    %335 = vmatpush1.msra.mxu0 0.0
    %336 = vmatprep.subr.mxu0 0.0
    %337 = vmatpush1.msra.mxu0 0.0
    %338 = vmatprep.subr.mxu0 0.0
    %339 = vmatpush1.msra.mxu0 0.0
    %340 = vmatprep.subr.mxu0 0.0
    %341 = vmatpush1.msra.mxu0 0.0
    %342 = vmatprep.subr.mxu0 0.0
    %343 = vmatpush1.msra.mxu0 0.0
    %344 = vmatprep.subr.mxu0 0.0
    %345 = vmatpush1.msra.mxu0 0.0
    %346 = vmatprep.subr.mxu0 0.0
    %347 = vmatpush1.msra.mxu0 0.0
    %348 = vmatprep.subr.mxu0 0.0
    %349 = vmatpush1.msra.mxu0 0.0
    %350 = vmatprep.subr.mxu0 0.0
    %351 = vmatpush1.msra.mxu0 0.0
    %352 = vmatprep.subr.mxu0 0.0
    %353 = vmatpush1.msra.mxu0 0.0
    %354 = vmatprep.subr.mxu0 0.0
    %355 = vmatpush1.msra.mxu0 0.0
    %356 = vmatprep.subr.mxu0 0.0
    %v357 = vand.u32 %v44, 4294901760
    %358 = vmatpush1.msra.mxu0 %v357
    %359 = vmatprep.subr.mxu0 0.0
    %v360 = vand.u32 %v43, 4294901760
    %361 = vmatpush1.msra.mxu0 %v360
    %362 = vmatprep.subr.mxu0 0.0
    %v363 = vand.u32 %v42, 4294901760
    %364 = vmatpush1.msra.mxu0 %v363
    %365 = vmatprep.subr.mxu0 0.0
    %v366 = vand.u32 %v41, 4294901760
    %367 = vmatpush1.msra.mxu0 %v366
    %368 = vmatprep.subr.mxu0 0.0
    %369 = vmatpush2.msra.mxu0 0.0
    %370 = vmatprep.subr.mxu0 0.0
    %371 = vmatpush2.msra.mxu0 0.0
    %372 = vmatprep.subr.mxu0 0.0
    %373 = vmatpush2.msra.mxu0 0.0
    %374 = vmatprep.subr.mxu0 0.0
    %375 = vmatpush2.msra.mxu0 0.0
    %376 = vmatprep.subr.mxu0 0.0
    %377 = vmatpush2.msra.mxu0 0.0
    %378 = vmatprep.subr.mxu0 0.0
    %379 = vmatpush2.msra.mxu0 0.0
    %380 = vmatprep.subr.mxu0 0.0
    %381 = vmatpush2.msra.mxu0 0.0
    %382 = vmatprep.subr.mxu0 0.0
    %383 = vmatpush2.msra.mxu0 0.0
    %384 = vmatprep.subr.mxu0 0.0
    %385 = vmatpush2.msra.mxu0 0.0
    %386 = vmatprep.subr.mxu0 0.0
    %387 = vmatpush2.msra.mxu0 0.0
    %388 = vmatprep.subr.mxu0 0.0
    %389 = vmatpush2.msra.mxu0 0.0
    %390 = vmatprep.subr.mxu0 0.0
    %391 = vmatpush2.msra.mxu0 0.0
    %392 = vmatprep.subr.mxu0 0.0
    %393 = vmatpush2.msra.mxu0 0.0
    %394 = vmatprep.subr.mxu0 0.0
    %395 = vmatpush2.msra.mxu0 0.0
    %396 = vmatprep.subr.mxu0 0.0
    %397 = vmatpush2.msra.mxu0 0.0
    %398 = vmatprep.subr.mxu0 0.0
    %399 = vmatpush2.msra.mxu0 0.0
    %400 = vmatprep.mubr.f32.mxu0 0.0
    %v401 = vand.u32 %v54, 4294901760
    %v402 = vsub.f32 %v54, %v401
    %v403 = vand.u32 %v402, 4294901760
    %404 = vmatmul.mubr.f32.gmra.mxu0 %v403
    %v405 = vpop.f32.mrf.mxu0
    %v406 = vadd.f32 %v322, %v405
    %v407 = vpop.f32.mrf.mxu0
    %408 = vmatprep.mubr.f32.mxu0 0.0
    %v409 = vand.u32 %v57, 4294901760
    %v410 = vsub.f32 %v57, %v409
    %v411 = vand.u32 %v410, 4294901760
    %412 = vmatmul.mubr.f32.gmra.mxu0 %v411
    %v413 = vpop.f32.mrf.mxu0
    %v414 = vadd.f32 %v329, %v413
    %v415 = vpop.f32.mrf.mxu0
    %416 = vdwg.mxu0
    %417 = vmatprep.subr.mxu0 0.0
    %418 = vmatpush1.msra.mxu0 0.0
    %419 = vmatprep.subr.mxu0 0.0
    %420 = vmatpush1.msra.mxu0 0.0
    %421 = vmatprep.subr.mxu0 0.0
    %422 = vmatpush1.msra.mxu0 0.0
    %423 = vmatprep.subr.mxu0 0.0
    %424 = vmatpush1.msra.mxu0 0.0
    %425 = vmatprep.subr.mxu0 0.0
    %426 = vmatpush1.msra.mxu0 0.0
    %427 = vmatprep.subr.mxu0 0.0
    %428 = vmatpush1.msra.mxu0 0.0
    %429 = vmatprep.subr.mxu0 0.0
    %430 = vmatpush1.msra.mxu0 0.0
    %431 = vmatprep.subr.mxu0 0.0
    %432 = vmatpush1.msra.mxu0 0.0
    %433 = vmatprep.subr.mxu0 0.0
    %434 = vmatpush1.msra.mxu0 0.0
    %435 = vmatprep.subr.mxu0 0.0
    %436 = vmatpush1.msra.mxu0 0.0
    %437 = vmatprep.subr.mxu0 0.0
    %438 = vmatpush1.msra.mxu0 0.0
    %439 = vmatprep.subr.mxu0 0.0
    %440 = vmatpush1.msra.mxu0 0.0
    %441 = vmatprep.subr.mxu0 0.0
    %v442 = vand.u32 %v44, 4294901760
    %v443 = vsub.f32 %v44, %v442
    %v444 = vand.u32 %v443, 4294901760
    %445 = vmatpush1.msra.mxu0 %v444
    %446 = vmatprep.subr.mxu0 0.0
    %v447 = vand.u32 %v43, 4294901760
    %v448 = vsub.f32 %v43, %v447
    %v449 = vand.u32 %v448, 4294901760
    %450 = vmatpush1.msra.mxu0 %v449
    %451 = vmatprep.subr.mxu0 0.0
    %v452 = vand.u32 %v42, 4294901760
    %v453 = vsub.f32 %v42, %v452
    %v454 = vand.u32 %v453, 4294901760
    %455 = vmatpush1.msra.mxu0 %v454
    %456 = vmatprep.subr.mxu0 0.0
    %v457 = vand.u32 %v41, 4294901760
    %v458 = vsub.f32 %v41, %v457
    %v459 = vand.u32 %v458, 4294901760
    %460 = vmatpush1.msra.mxu0 %v459
    %461 = vmatprep.subr.mxu0 0.0
    %462 = vmatpush2.msra.mxu0 0.0
    %463 = vmatprep.subr.mxu0 0.0
    %464 = vmatpush2.msra.mxu0 0.0
    %465 = vmatprep.subr.mxu0 0.0
    %466 = vmatpush2.msra.mxu0 0.0
    %467 = vmatprep.subr.mxu0 0.0
    %468 = vmatpush2.msra.mxu0 0.0
    %469 = vmatprep.subr.mxu0 0.0
    %470 = vmatpush2.msra.mxu0 0.0
    %471 = vmatprep.subr.mxu0 0.0
    %472 = vmatpush2.msra.mxu0 0.0
    %473 = vmatprep.subr.mxu0 0.0
    %474 = vmatpush2.msra.mxu0 0.0
    %475 = vmatprep.subr.mxu0 0.0
    %476 = vmatpush2.msra.mxu0 0.0
    %477 = vmatprep.subr.mxu0 0.0
    %478 = vmatpush2.msra.mxu0 0.0
    %479 = vmatprep.subr.mxu0 0.0
    %480 = vmatpush2.msra.mxu0 0.0
    %481 = vmatprep.subr.mxu0 0.0
    %482 = vmatpush2.msra.mxu0 0.0
    %483 = vmatprep.subr.mxu0 0.0
    %484 = vmatpush2.msra.mxu0 0.0
    %485 = vmatprep.subr.mxu0 0.0
    %486 = vmatpush2.msra.mxu0 0.0
    %487 = vmatprep.subr.mxu0 0.0
    %488 = vmatpush2.msra.mxu0 0.0
    %489 = vmatprep.subr.mxu0 0.0
    %490 = vmatpush2.msra.mxu0 0.0
    %491 = vmatprep.subr.mxu0 0.0
    %492 = vmatpush2.msra.mxu0 0.0
    %493 = vmatprep.mubr.f32.mxu0 0.0
    %v494 = vand.u32 %v54, 4294901760
    %495 = vmatmul.mubr.f32.gmra.mxu0 %v494
    %v496 = vpop.f32.mrf.mxu0
    %v497 = vadd.f32 %v406, %v496
    %v498 = vpop.f32.mrf.mxu0
    %499 = vmatprep.mubr.f32.mxu0 0.0
    %v500 = vand.u32 %v57, 4294901760
    %501 = vmatmul.mubr.f32.gmra.mxu0 %v500
    %v502 = vpop.f32.mrf.mxu0
    %v503 = vadd.f32 %v414, %v502
    %v504 = vpop.f32.mrf.mxu0
    %505 = vdwg.mxu0
    %506 = vmatprep.subr.mxu0 0.0
    %507 = vmatpush1.msra.mxu0 0.0
    %508 = vmatprep.subr.mxu0 0.0
    %509 = vmatpush1.msra.mxu0 0.0
    %510 = vmatprep.subr.mxu0 0.0
    %511 = vmatpush1.msra.mxu0 0.0
    %512 = vmatprep.subr.mxu0 0.0
    %513 = vmatpush1.msra.mxu0 0.0
    %514 = vmatprep.subr.mxu0 0.0
    %515 = vmatpush1.msra.mxu0 0.0
    %516 = vmatprep.subr.mxu0 0.0
    %517 = vmatpush1.msra.mxu0 0.0
    %518 = vmatprep.subr.mxu0 0.0
    %519 = vmatpush1.msra.mxu0 0.0
    %520 = vmatprep.subr.mxu0 0.0
    %521 = vmatpush1.msra.mxu0 0.0
    %522 = vmatprep.subr.mxu0 0.0
    %523 = vmatpush1.msra.mxu0 0.0
    %524 = vmatprep.subr.mxu0 0.0
    %525 = vmatpush1.msra.mxu0 0.0
    %526 = vmatprep.subr.mxu0 0.0
    %527 = vmatpush1.msra.mxu0 0.0
    %528 = vmatprep.subr.mxu0 0.0
    %529 = vmatpush1.msra.mxu0 0.0
    %530 = vmatprep.subr.mxu0 0.0
    %v531 = vand.u32 %v44, 4294901760
    %532 = vmatpush1.msra.mxu0 %v531
    %533 = vmatprep.subr.mxu0 0.0
    %v534 = vand.u32 %v43, 4294901760
    %535 = vmatpush1.msra.mxu0 %v534
    %536 = vmatprep.subr.mxu0 0.0
    %v537 = vand.u32 %v42, 4294901760
    %538 = vmatpush1.msra.mxu0 %v537
    %539 = vmatprep.subr.mxu0 0.0
    %v540 = vand.u32 %v41, 4294901760
    %541 = vmatpush1.msra.mxu0 %v540
    %542 = vmatprep.subr.mxu0 0.0
    %543 = vmatpush2.msra.mxu0 0.0
    %544 = vmatprep.subr.mxu0 0.0
    %545 = vmatpush2.msra.mxu0 0.0
    %546 = vmatprep.subr.mxu0 0.0
    %547 = vmatpush2.msra.mxu0 0.0
    %548 = vmatprep.subr.mxu0 0.0
    %549 = vmatpush2.msra.mxu0 0.0
    %550 = vmatprep.subr.mxu0 0.0
    %551 = vmatpush2.msra.mxu0 0.0
    %552 = vmatprep.subr.mxu0 0.0
    %553 = vmatpush2.msra.mxu0 0.0
    %554 = vmatprep.subr.mxu0 0.0
    %555 = vmatpush2.msra.mxu0 0.0
    %556 = vmatprep.subr.mxu0 0.0
    %557 = vmatpush2.msra.mxu0 0.0
    %558 = vmatprep.subr.mxu0 0.0
    %559 = vmatpush2.msra.mxu0 0.0
    %560 = vmatprep.subr.mxu0 0.0
    %561 = vmatpush2.msra.mxu0 0.0
    %562 = vmatprep.subr.mxu0 0.0
    %563 = vmatpush2.msra.mxu0 0.0
    %564 = vmatprep.subr.mxu0 0.0
    %565 = vmatpush2.msra.mxu0 0.0
    %566 = vmatprep.subr.mxu0 0.0
    %567 = vmatpush2.msra.mxu0 0.0
    %568 = vmatprep.subr.mxu0 0.0
    %569 = vmatpush2.msra.mxu0 0.0
    %570 = vmatprep.subr.mxu0 0.0
    %571 = vmatpush2.msra.mxu0 0.0
    %572 = vmatprep.subr.mxu0 0.0
    %573 = vmatpush2.msra.mxu0 0.0
    %574 = vmatprep.mubr.f32.mxu0 0.0
    %v575 = vand.u32 %v54, 4294901760
    %576 = vmatmul.mubr.f32.gmra.mxu0 %v575
    %v577 = vpop.f32.mrf.mxu0
    %v578 = vadd.f32 %v497, %v577
    %v579 = vpop.f32.mrf.mxu0
    %580 = vmatprep.mubr.f32.mxu0 0.0
    %v581 = vand.u32 %v57, 4294901760
    %582 = vmatmul.mubr.f32.gmra.mxu0 %v581
    %v583 = vpop.f32.mrf.mxu0
    %v584 = vadd.f32 %v503, %v583
    %v585 = vpop.f32.mrf.mxu0
    %586 = vdwg.mxu0
    %v587 = vld [vmem:[%s3] sm:$0x1]
    %v589 = vlaneseq
    %v590 = vshrl.u32 %v589, 7
    %v591 = vsub.s32 0, %v590
    %v592 = vrot.slane %v587, %v591
    %v594 = vmul.f32 %v578, %v592
    %v595 = vmul.f32 %v584, %v592
    %v596 = vld [vmem:[%s4] sm:$0x1]
    %v598 = vlaneseq
    %v599 = vshrl.u32 %v598, 7
    %v600 = vsub.s32 0, %v599
    %v601 = vrot.slane %v596, %v600
    %v603 = vadd.f32 %v594, %v601
    %v604 = vadd.f32 %v595, %v601
    %v605 = vld [vmem:[%s5] sm:$0xff]
    %v606 = vld [vmem:[%s5 + $0x8] sm:$0xff]
    %v607 = vld [vmem:[%s5 + $0x10] sm:$0xff]
    %v608 = vld [vmem:[%s5 + $0x18] sm:$0xff]
    %v609 = vld [vmem:[%s6] sm:$0x1]
    %v611 = vlaneseq
    %v612 = vshrl.u32 %v611, 7
    %v613 = vsub.s32 0, %v612
    %v614 = vrot.slane %v609, %v613
    %v617 = vsel %vm52, %v603, 0
    %v620 = vsel %vm52, %v604, 0
    %622 = vmatprep.subr.mxu0 0.0
    %623 = vmatpush1.msra.mxu0 0.0
    %624 = vmatprep.subr.mxu0 0.0
    %625 = vmatpush1.msra.mxu0 0.0
    %626 = vmatprep.subr.mxu0 0.0
    %627 = vmatpush1.msra.mxu0 0.0
    %628 = vmatprep.subr.mxu0 0.0
    %629 = vmatpush1.msra.mxu0 0.0
    %630 = vmatprep.subr.mxu0 0.0
    %631 = vmatpush1.msra.mxu0 0.0
    %632 = vmatprep.subr.mxu0 0.0
    %633 = vmatpush1.msra.mxu0 0.0
    %634 = vmatprep.subr.mxu0 0.0
    %635 = vmatpush1.msra.mxu0 0.0
    %636 = vmatprep.subr.mxu0 0.0
    %637 = vmatpush1.msra.mxu0 0.0
    %638 = vmatprep.subr.mxu0 0.0
    %639 = vmatpush1.msra.mxu0 0.0
    %640 = vmatprep.subr.mxu0 0.0
    %641 = vmatpush1.msra.mxu0 0.0
    %642 = vmatprep.subr.mxu0 0.0
    %643 = vmatpush1.msra.mxu0 0.0
    %644 = vmatprep.subr.mxu0 0.0
    %645 = vmatpush1.msra.mxu0 0.0
    %646 = vmatprep.subr.mxu0 0.0
    %v647 = vand.u32 %v608, 4294901760
    %648 = vmatpush1.msra.mxu0 %v647
    %649 = vmatprep.subr.mxu0 0.0
    %v650 = vand.u32 %v607, 4294901760
    %651 = vmatpush1.msra.mxu0 %v650
    %652 = vmatprep.subr.mxu0 0.0
    %v653 = vand.u32 %v606, 4294901760
    %654 = vmatpush1.msra.mxu0 %v653
    %655 = vmatprep.subr.mxu0 0.0
    %v656 = vand.u32 %v605, 4294901760
    %657 = vmatpush1.msra.mxu0 %v656
    %658 = vmatprep.subr.mxu0 0.0
    %659 = vmatpush2.msra.mxu0 0.0
    %660 = vmatprep.subr.mxu0 0.0
    %661 = vmatpush2.msra.mxu0 0.0
    %662 = vmatprep.subr.mxu0 0.0
    %663 = vmatpush2.msra.mxu0 0.0
    %664 = vmatprep.subr.mxu0 0.0
    %665 = vmatpush2.msra.mxu0 0.0
    %666 = vmatprep.subr.mxu0 0.0
    %667 = vmatpush2.msra.mxu0 0.0
    %668 = vmatprep.subr.mxu0 0.0
    %669 = vmatpush2.msra.mxu0 0.0
    %670 = vmatprep.subr.mxu0 0.0
    %671 = vmatpush2.msra.mxu0 0.0
    %672 = vmatprep.subr.mxu0 0.0
    %673 = vmatpush2.msra.mxu0 0.0
    %674 = vmatprep.subr.mxu0 0.0
    %675 = vmatpush2.msra.mxu0 0.0
    %676 = vmatprep.subr.mxu0 0.0
    %677 = vmatpush2.msra.mxu0 0.0
    %678 = vmatprep.subr.mxu0 0.0
    %679 = vmatpush2.msra.mxu0 0.0
    %680 = vmatprep.subr.mxu0 0.0
    %681 = vmatpush2.msra.mxu0 0.0
    %682 = vmatprep.subr.mxu0 0.0
    %683 = vmatpush2.msra.mxu0 0.0
    %684 = vmatprep.subr.mxu0 0.0
    %685 = vmatpush2.msra.mxu0 0.0
    %686 = vmatprep.subr.mxu0 0.0
    %687 = vmatpush2.msra.mxu0 0.0
    %688 = vmatprep.subr.mxu0 0.0
    %689 = vmatpush2.msra.mxu0 0.0
    %690 = vmatprep.mubr.f32.mxu0 0.0
    %v691 = vand.u32 %v617, 4294901760
    %v692 = vsub.f32 %v617, %v691
    %v693 = vand.u32 %v692, 4294901760
    %v694 = vsub.f32 %v692, %v693
    %v695 = vand.u32 %v694, 4294901760
    %696 = vmatmul.mubr.f32.gmra.mxu0 %v695
    %v697 = vpop.f32.mrf.mxu0
    %v698 = vadd.f32 %v614, %v697
    %v699 = vpop.f32.mrf.mxu0
    %700 = vmatprep.mubr.f32.mxu0 0.0
    %v701 = vand.u32 %v620, 4294901760
    %v702 = vsub.f32 %v620, %v701
    %v703 = vand.u32 %v702, 4294901760
    %v704 = vsub.f32 %v702, %v703
    %v705 = vand.u32 %v704, 4294901760
    %706 = vmatmul.mubr.f32.gmra.mxu0 %v705
    %v707 = vpop.f32.mrf.mxu0
    %v708 = vadd.f32 %v614, %v707
    %v709 = vpop.f32.mrf.mxu0
    %710 = vdwg.mxu0
    %711 = vmatprep.subr.mxu0 0.0
    %712 = vmatpush1.msra.mxu0 0.0
    %713 = vmatprep.subr.mxu0 0.0
    %714 = vmatpush1.msra.mxu0 0.0
    %715 = vmatprep.subr.mxu0 0.0
    %716 = vmatpush1.msra.mxu0 0.0
    %717 = vmatprep.subr.mxu0 0.0
    %718 = vmatpush1.msra.mxu0 0.0
    %719 = vmatprep.subr.mxu0 0.0
    %720 = vmatpush1.msra.mxu0 0.0
    %721 = vmatprep.subr.mxu0 0.0
    %722 = vmatpush1.msra.mxu0 0.0
    %723 = vmatprep.subr.mxu0 0.0
    %724 = vmatpush1.msra.mxu0 0.0
    %725 = vmatprep.subr.mxu0 0.0
    %726 = vmatpush1.msra.mxu0 0.0
    %727 = vmatprep.subr.mxu0 0.0
    %728 = vmatpush1.msra.mxu0 0.0
    %729 = vmatprep.subr.mxu0 0.0
    %730 = vmatpush1.msra.mxu0 0.0
    %731 = vmatprep.subr.mxu0 0.0
    %732 = vmatpush1.msra.mxu0 0.0
    %733 = vmatprep.subr.mxu0 0.0
    %734 = vmatpush1.msra.mxu0 0.0
    %735 = vmatprep.subr.mxu0 0.0
    %v736 = vand.u32 %v608, 4294901760
    %v737 = vsub.f32 %v608, %v736
    %v738 = vand.u32 %v737, 4294901760
    %v739 = vsub.f32 %v737, %v738
    %v740 = vand.u32 %v739, 4294901760
    %741 = vmatpush1.msra.mxu0 %v740
    %742 = vmatprep.subr.mxu0 0.0
    %v743 = vand.u32 %v607, 4294901760
    %v744 = vsub.f32 %v607, %v743
    %v745 = vand.u32 %v744, 4294901760
    %v746 = vsub.f32 %v744, %v745
    %v747 = vand.u32 %v746, 4294901760
    %748 = vmatpush1.msra.mxu0 %v747
    %749 = vmatprep.subr.mxu0 0.0
    %v750 = vand.u32 %v606, 4294901760
    %v751 = vsub.f32 %v606, %v750
    %v752 = vand.u32 %v751, 4294901760
    %v753 = vsub.f32 %v751, %v752
    %v754 = vand.u32 %v753, 4294901760
    %755 = vmatpush1.msra.mxu0 %v754
    %756 = vmatprep.subr.mxu0 0.0
    %v757 = vand.u32 %v605, 4294901760
    %v758 = vsub.f32 %v605, %v757
    %v759 = vand.u32 %v758, 4294901760
    %v760 = vsub.f32 %v758, %v759
    %v761 = vand.u32 %v760, 4294901760
    %762 = vmatpush1.msra.mxu0 %v761
    %763 = vmatprep.subr.mxu0 0.0
    %764 = vmatpush2.msra.mxu0 0.0
    %765 = vmatprep.subr.mxu0 0.0
    %766 = vmatpush2.msra.mxu0 0.0
    %767 = vmatprep.subr.mxu0 0.0
    %768 = vmatpush2.msra.mxu0 0.0
    %769 = vmatprep.subr.mxu0 0.0
    %770 = vmatpush2.msra.mxu0 0.0
    %771 = vmatprep.subr.mxu0 0.0
    %772 = vmatpush2.msra.mxu0 0.0
    %773 = vmatprep.subr.mxu0 0.0
    %774 = vmatpush2.msra.mxu0 0.0
    %775 = vmatprep.subr.mxu0 0.0
    %776 = vmatpush2.msra.mxu0 0.0
    %777 = vmatprep.subr.mxu0 0.0
    %778 = vmatpush2.msra.mxu0 0.0
    %779 = vmatprep.subr.mxu0 0.0
    %780 = vmatpush2.msra.mxu0 0.0
    %781 = vmatprep.subr.mxu0 0.0
    %782 = vmatpush2.msra.mxu0 0.0
    %783 = vmatprep.subr.mxu0 0.0
    %784 = vmatpush2.msra.mxu0 0.0
    %785 = vmatprep.subr.mxu0 0.0
    %786 = vmatpush2.msra.mxu0 0.0
    %787 = vmatprep.subr.mxu0 0.0
    %788 = vmatpush2.msra.mxu0 0.0
    %789 = vmatprep.subr.mxu0 0.0
    %790 = vmatpush2.msra.mxu0 0.0
    %791 = vmatprep.subr.mxu0 0.0
    %792 = vmatpush2.msra.mxu0 0.0
    %793 = vmatprep.subr.mxu0 0.0
    %794 = vmatpush2.msra.mxu0 0.0
    %795 = vmatprep.mubr.f32.mxu0 0.0
    %v796 = vand.u32 %v617, 4294901760
    %797 = vmatmul.mubr.f32.gmra.mxu0 %v796
    %v798 = vpop.f32.mrf.mxu0
    %v799 = vadd.f32 %v698, %v798
    %v800 = vpop.f32.mrf.mxu0
    %801 = vmatprep.mubr.f32.mxu0 0.0
    %v802 = vand.u32 %v620, 4294901760
    %803 = vmatmul.mubr.f32.gmra.mxu0 %v802
    %v804 = vpop.f32.mrf.mxu0
    %v805 = vadd.f32 %v708, %v804
    %v806 = vpop.f32.mrf.mxu0
    %807 = vdwg.mxu0
    %808 = vmatprep.subr.mxu0 0.0
    %809 = vmatpush1.msra.mxu0 0.0
    %810 = vmatprep.subr.mxu0 0.0
    %811 = vmatpush1.msra.mxu0 0.0
    %812 = vmatprep.subr.mxu0 0.0
    %813 = vmatpush1.msra.mxu0 0.0
    %814 = vmatprep.subr.mxu0 0.0
    %815 = vmatpush1.msra.mxu0 0.0
    %816 = vmatprep.subr.mxu0 0.0
    %817 = vmatpush1.msra.mxu0 0.0
    %818 = vmatprep.subr.mxu0 0.0
    %819 = vmatpush1.msra.mxu0 0.0
    %820 = vmatprep.subr.mxu0 0.0
    %821 = vmatpush1.msra.mxu0 0.0
    %822 = vmatprep.subr.mxu0 0.0
    %823 = vmatpush1.msra.mxu0 0.0
    %824 = vmatprep.subr.mxu0 0.0
    %825 = vmatpush1.msra.mxu0 0.0
    %826 = vmatprep.subr.mxu0 0.0
    %827 = vmatpush1.msra.mxu0 0.0
    %828 = vmatprep.subr.mxu0 0.0
    %829 = vmatpush1.msra.mxu0 0.0
    %830 = vmatprep.subr.mxu0 0.0
    %831 = vmatpush1.msra.mxu0 0.0
    %832 = vmatprep.subr.mxu0 0.0
    %v833 = vand.u32 %v608, 4294901760
    %v834 = vsub.f32 %v608, %v833
    %835 = vmatpush1.msra.mxu0 %v834
    %836 = vmatprep.subr.mxu0 0.0
    %v837 = vand.u32 %v607, 4294901760
    %v838 = vsub.f32 %v607, %v837
    %839 = vmatpush1.msra.mxu0 %v838
    %840 = vmatprep.subr.mxu0 0.0
    %v841 = vand.u32 %v606, 4294901760
    %v842 = vsub.f32 %v606, %v841
    %843 = vmatpush1.msra.mxu0 %v842
    %844 = vmatprep.subr.mxu0 0.0
    %v845 = vand.u32 %v605, 4294901760
    %v846 = vsub.f32 %v605, %v845
    %847 = vmatpush1.msra.mxu0 %v846
    %848 = vmatprep.subr.mxu0 0.0
    %849 = vmatpush2.msra.mxu0 0.0
    %850 = vmatprep.subr.mxu0 0.0
    %851 = vmatpush2.msra.mxu0 0.0
    %852 = vmatprep.subr.mxu0 0.0
    %853 = vmatpush2.msra.mxu0 0.0
    %854 = vmatprep.subr.mxu0 0.0
    %855 = vmatpush2.msra.mxu0 0.0
    %856 = vmatprep.subr.mxu0 0.0
    %857 = vmatpush2.msra.mxu0 0.0
    %858 = vmatprep.subr.mxu0 0.0
    %859 = vmatpush2.msra.mxu0 0.0
    %860 = vmatprep.subr.mxu0 0.0
    %861 = vmatpush2.msra.mxu0 0.0
    %862 = vmatprep.subr.mxu0 0.0
    %863 = vmatpush2.msra.mxu0 0.0
    %864 = vmatprep.subr.mxu0 0.0
    %865 = vmatpush2.msra.mxu0 0.0
    %866 = vmatprep.subr.mxu0 0.0
    %867 = vmatpush2.msra.mxu0 0.0
    %868 = vmatprep.subr.mxu0 0.0
    %869 = vmatpush2.msra.mxu0 0.0
    %870 = vmatprep.subr.mxu0 0.0
    %871 = vmatpush2.msra.mxu0 0.0
    %872 = vmatprep.subr.mxu0 0.0
    %873 = vmatpush2.msra.mxu0 0.0
    %874 = vmatprep.subr.mxu0 0.0
    %875 = vmatpush2.msra.mxu0 0.0
    %876 = vmatprep.subr.mxu0 0.0
    %877 = vmatpush2.msra.mxu0 0.0
    %878 = vmatprep.subr.mxu0 0.0
    %879 = vmatpush2.msra.mxu0 0.0
    %880 = vmatprep.mubr.f32.mxu0 0.0
    %v881 = vand.u32 %v617, 4294901760
    %v882 = vsub.f32 %v617, %v881
    %883 = vmatmul.mubr.f32.gmra.mxu0 %v882
    %v884 = vpop.f32.mrf.mxu0
    %v885 = vadd.f32 %v799, %v884
    %v886 = vpop.f32.mrf.mxu0
    %887 = vmatprep.mubr.f32.mxu0 0.0
    %v888 = vand.u32 %v620, 4294901760
    %v889 = vsub.f32 %v620, %v888
    %890 = vmatmul.mubr.f32.gmra.mxu0 %v889
    %v891 = vpop.f32.mrf.mxu0
    %v892 = vadd.f32 %v805, %v891
    %v893 = vpop.f32.mrf.mxu0
    %894 = vdwg.mxu0
    %895 = vmatprep.subr.mxu0 0.0
    %896 = vmatpush1.msra.mxu0 0.0
    %897 = vmatprep.subr.mxu0 0.0
    %898 = vmatpush1.msra.mxu0 0.0
    %899 = vmatprep.subr.mxu0 0.0
    %900 = vmatpush1.msra.mxu0 0.0
    %901 = vmatprep.subr.mxu0 0.0
    %902 = vmatpush1.msra.mxu0 0.0
    %903 = vmatprep.subr.mxu0 0.0
    %904 = vmatpush1.msra.mxu0 0.0
    %905 = vmatprep.subr.mxu0 0.0
    %906 = vmatpush1.msra.mxu0 0.0
    %907 = vmatprep.subr.mxu0 0.0
    %908 = vmatpush1.msra.mxu0 0.0
    %909 = vmatprep.subr.mxu0 0.0
    %910 = vmatpush1.msra.mxu0 0.0
    %911 = vmatprep.subr.mxu0 0.0
    %912 = vmatpush1.msra.mxu0 0.0
    %913 = vmatprep.subr.mxu0 0.0
    %914 = vmatpush1.msra.mxu0 0.0
    %915 = vmatprep.subr.mxu0 0.0
    %916 = vmatpush1.msra.mxu0 0.0
    %917 = vmatprep.subr.mxu0 0.0
    %918 = vmatpush1.msra.mxu0 0.0
    %919 = vmatprep.subr.mxu0 0.0
    %v920 = vand.u32 %v608, 4294901760
    %921 = vmatpush1.msra.mxu0 %v920
    %922 = vmatprep.subr.mxu0 0.0
    %v923 = vand.u32 %v607, 4294901760
    %924 = vmatpush1.msra.mxu0 %v923
    %925 = vmatprep.subr.mxu0 0.0
    %v926 = vand.u32 %v606, 4294901760
    %927 = vmatpush1.msra.mxu0 %v926
    %928 = vmatprep.subr.mxu0 0.0
    %v929 = vand.u32 %v605, 4294901760
    %930 = vmatpush1.msra.mxu0 %v929
    %931 = vmatprep.subr.mxu0 0.0
    %932 = vmatpush2.msra.mxu0 0.0
    %933 = vmatprep.subr.mxu0 0.0
    %934 = vmatpush2.msra.mxu0 0.0
    %935 = vmatprep.subr.mxu0 0.0
    %936 = vmatpush2.msra.mxu0 0.0
    %937 = vmatprep.subr.mxu0 0.0
    %938 = vmatpush2.msra.mxu0 0.0
    %939 = vmatprep.subr.mxu0 0.0
    %940 = vmatpush2.msra.mxu0 0.0
    %941 = vmatprep.subr.mxu0 0.0
    %942 = vmatpush2.msra.mxu0 0.0
    %943 = vmatprep.subr.mxu0 0.0
    %944 = vmatpush2.msra.mxu0 0.0
    %945 = vmatprep.subr.mxu0 0.0
    %946 = vmatpush2.msra.mxu0 0.0
    %947 = vmatprep.subr.mxu0 0.0
    %948 = vmatpush2.msra.mxu0 0.0
    %949 = vmatprep.subr.mxu0 0.0
    %950 = vmatpush2.msra.mxu0 0.0
    %951 = vmatprep.subr.mxu0 0.0
    %952 = vmatpush2.msra.mxu0 0.0
    %953 = vmatprep.subr.mxu0 0.0
    %954 = vmatpush2.msra.mxu0 0.0
    %955 = vmatprep.subr.mxu0 0.0
    %956 = vmatpush2.msra.mxu0 0.0
    %957 = vmatprep.subr.mxu0 0.0
    %958 = vmatpush2.msra.mxu0 0.0
    %959 = vmatprep.subr.mxu0 0.0
    %960 = vmatpush2.msra.mxu0 0.0
    %961 = vmatprep.subr.mxu0 0.0
    %962 = vmatpush2.msra.mxu0 0.0
    %963 = vmatprep.mubr.f32.mxu0 0.0
    %v964 = vand.u32 %v617, 4294901760
    %v965 = vsub.f32 %v617, %v964
    %v966 = vand.u32 %v965, 4294901760
    %967 = vmatmul.mubr.f32.gmra.mxu0 %v966
    %v968 = vpop.f32.mrf.mxu0
    %v969 = vadd.f32 %v885, %v968
    %v970 = vpop.f32.mrf.mxu0
    %971 = vmatprep.mubr.f32.mxu0 0.0
    %v972 = vand.u32 %v620, 4294901760
    %v973 = vsub.f32 %v620, %v972
    %v974 = vand.u32 %v973, 4294901760
    %975 = vmatmul.mubr.f32.gmra.mxu0 %v974
    %v976 = vpop.f32.mrf.mxu0
    %v977 = vadd.f32 %v892, %v976
    %v978 = vpop.f32.mrf.mxu0
    %979 = vdwg.mxu0
    %980 = vmatprep.subr.mxu0 0.0
    %981 = vmatpush1.msra.mxu0 0.0
    %982 = vmatprep.subr.mxu0 0.0
    %983 = vmatpush1.msra.mxu0 0.0
    %984 = vmatprep.subr.mxu0 0.0
    %985 = vmatpush1.msra.mxu0 0.0
    %986 = vmatprep.subr.mxu0 0.0
    %987 = vmatpush1.msra.mxu0 0.0
    %988 = vmatprep.subr.mxu0 0.0
    %989 = vmatpush1.msra.mxu0 0.0
    %990 = vmatprep.subr.mxu0 0.0
    %991 = vmatpush1.msra.mxu0 0.0
    %992 = vmatprep.subr.mxu0 0.0
    %993 = vmatpush1.msra.mxu0 0.0
    %994 = vmatprep.subr.mxu0 0.0
    %995 = vmatpush1.msra.mxu0 0.0
    %996 = vmatprep.subr.mxu0 0.0
    %997 = vmatpush1.msra.mxu0 0.0
    %998 = vmatprep.subr.mxu0 0.0
    %999 = vmatpush1.msra.mxu0 0.0
    %1000 = vmatprep.subr.mxu0 0.0
    %1001 = vmatpush1.msra.mxu0 0.0
    %1002 = vmatprep.subr.mxu0 0.0
    %1003 = vmatpush1.msra.mxu0 0.0
    %1004 = vmatprep.subr.mxu0 0.0
    %v1005 = vand.u32 %v608, 4294901760
    %v1006 = vsub.f32 %v608, %v1005
    %v1007 = vand.u32 %v1006, 4294901760
    %1008 = vmatpush1.msra.mxu0 %v1007
    %1009 = vmatprep.subr.mxu0 0.0
    %v1010 = vand.u32 %v607, 4294901760
    %v1011 = vsub.f32 %v607, %v1010
    %v1012 = vand.u32 %v1011, 4294901760
    %1013 = vmatpush1.msra.mxu0 %v1012
    %1014 = vmatprep.subr.mxu0 0.0
    %v1015 = vand.u32 %v606, 4294901760
    %v1016 = vsub.f32 %v606, %v1015
    %v1017 = vand.u32 %v1016, 4294901760
    %1018 = vmatpush1.msra.mxu0 %v1017
    %1019 = vmatprep.subr.mxu0 0.0
    %v1020 = vand.u32 %v605, 4294901760
    %v1021 = vsub.f32 %v605, %v1020
    %v1022 = vand.u32 %v1021, 4294901760
    %1023 = vmatpush1.msra.mxu0 %v1022
    %1024 = vmatprep.subr.mxu0 0.0
    %1025 = vmatpush2.msra.mxu0 0.0
    %1026 = vmatprep.subr.mxu0 0.0
    %1027 = vmatpush2.msra.mxu0 0.0
    %1028 = vmatprep.subr.mxu0 0.0
    %1029 = vmatpush2.msra.mxu0 0.0
    %1030 = vmatprep.subr.mxu0 0.0
    %1031 = vmatpush2.msra.mxu0 0.0
    %1032 = vmatprep.subr.mxu0 0.0
    %1033 = vmatpush2.msra.mxu0 0.0
    %1034 = vmatprep.subr.mxu0 0.0
    %1035 = vmatpush2.msra.mxu0 0.0
    %1036 = vmatprep.subr.mxu0 0.0
    %1037 = vmatpush2.msra.mxu0 0.0
    %1038 = vmatprep.subr.mxu0 0.0
    %1039 = vmatpush2.msra.mxu0 0.0
    %1040 = vmatprep.subr.mxu0 0.0
    %1041 = vmatpush2.msra.mxu0 0.0
    %1042 = vmatprep.subr.mxu0 0.0
    %1043 = vmatpush2.msra.mxu0 0.0
    %1044 = vmatprep.subr.mxu0 0.0
    %1045 = vmatpush2.msra.mxu0 0.0
    %1046 = vmatprep.subr.mxu0 0.0
    %1047 = vmatpush2.msra.mxu0 0.0
    %1048 = vmatprep.subr.mxu0 0.0
    %1049 = vmatpush2.msra.mxu0 0.0
    %1050 = vmatprep.subr.mxu0 0.0
    %1051 = vmatpush2.msra.mxu0 0.0
    %1052 = vmatprep.subr.mxu0 0.0
    %1053 = vmatpush2.msra.mxu0 0.0
    %1054 = vmatprep.subr.mxu0 0.0
    %1055 = vmatpush2.msra.mxu0 0.0
    %1056 = vmatprep.mubr.f32.mxu0 0.0
    %v1057 = vand.u32 %v617, 4294901760
    %1058 = vmatmul.mubr.f32.gmra.mxu0 %v1057
    %v1059 = vpop.f32.mrf.mxu0
    %v1060 = vadd.f32 %v969, %v1059
    %v1061 = vpop.f32.mrf.mxu0
    %1062 = vmatprep.mubr.f32.mxu0 0.0
    %v1063 = vand.u32 %v620, 4294901760
    %1064 = vmatmul.mubr.f32.gmra.mxu0 %v1063
    %v1065 = vpop.f32.mrf.mxu0
    %v1066 = vadd.f32 %v977, %v1065
    %v1067 = vpop.f32.mrf.mxu0
    %1068 = vdwg.mxu0
    %1069 = vmatprep.subr.mxu0 0.0
    %1070 = vmatpush1.msra.mxu0 0.0
    %1071 = vmatprep.subr.mxu0 0.0
    %1072 = vmatpush1.msra.mxu0 0.0
    %1073 = vmatprep.subr.mxu0 0.0
    %1074 = vmatpush1.msra.mxu0 0.0
    %1075 = vmatprep.subr.mxu0 0.0
    %1076 = vmatpush1.msra.mxu0 0.0
    %1077 = vmatprep.subr.mxu0 0.0
    %1078 = vmatpush1.msra.mxu0 0.0
    %1079 = vmatprep.subr.mxu0 0.0
    %1080 = vmatpush1.msra.mxu0 0.0
    %1081 = vmatprep.subr.mxu0 0.0
    %1082 = vmatpush1.msra.mxu0 0.0
    %1083 = vmatprep.subr.mxu0 0.0
    %1084 = vmatpush1.msra.mxu0 0.0
    %1085 = vmatprep.subr.mxu0 0.0
    %1086 = vmatpush1.msra.mxu0 0.0
    %1087 = vmatprep.subr.mxu0 0.0
    %1088 = vmatpush1.msra.mxu0 0.0
    %1089 = vmatprep.subr.mxu0 0.0
    %1090 = vmatpush1.msra.mxu0 0.0
    %1091 = vmatprep.subr.mxu0 0.0
    %1092 = vmatpush1.msra.mxu0 0.0
    %1093 = vmatprep.subr.mxu0 0.0
    %v1094 = vand.u32 %v608, 4294901760
    %1095 = vmatpush1.msra.mxu0 %v1094
    %1096 = vmatprep.subr.mxu0 0.0
    %v1097 = vand.u32 %v607, 4294901760
    %1098 = vmatpush1.msra.mxu0 %v1097
    %1099 = vmatprep.subr.mxu0 0.0
    %v1100 = vand.u32 %v606, 4294901760
    %1101 = vmatpush1.msra.mxu0 %v1100
    %1102 = vmatprep.subr.mxu0 0.0
    %v1103 = vand.u32 %v605, 4294901760
    %1104 = vmatpush1.msra.mxu0 %v1103
    %1105 = vmatprep.subr.mxu0 0.0
    %1106 = vmatpush2.msra.mxu0 0.0
    %1107 = vmatprep.subr.mxu0 0.0
    %1108 = vmatpush2.msra.mxu0 0.0
    %1109 = vmatprep.subr.mxu0 0.0
    %1110 = vmatpush2.msra.mxu0 0.0
    %1111 = vmatprep.subr.mxu0 0.0
    %1112 = vmatpush2.msra.mxu0 0.0
    %1113 = vmatprep.subr.mxu0 0.0
    %1114 = vmatpush2.msra.mxu0 0.0
    %1115 = vmatprep.subr.mxu0 0.0
    %1116 = vmatpush2.msra.mxu0 0.0
    %1117 = vmatprep.subr.mxu0 0.0
    %1118 = vmatpush2.msra.mxu0 0.0
    %1119 = vmatprep.subr.mxu0 0.0
    %1120 = vmatpush2.msra.mxu0 0.0
    %1121 = vmatprep.subr.mxu0 0.0
    %1122 = vmatpush2.msra.mxu0 0.0
    %1123 = vmatprep.subr.mxu0 0.0
    %1124 = vmatpush2.msra.mxu0 0.0
    %1125 = vmatprep.subr.mxu0 0.0
    %1126 = vmatpush2.msra.mxu0 0.0
    %1127 = vmatprep.subr.mxu0 0.0
    %1128 = vmatpush2.msra.mxu0 0.0
    %1129 = vmatprep.subr.mxu0 0.0
    %1130 = vmatpush2.msra.mxu0 0.0
    %1131 = vmatprep.subr.mxu0 0.0
    %1132 = vmatpush2.msra.mxu0 0.0
    %1133 = vmatprep.subr.mxu0 0.0
    %1134 = vmatpush2.msra.mxu0 0.0
    %1135 = vmatprep.subr.mxu0 0.0
    %1136 = vmatpush2.msra.mxu0 0.0
    %1137 = vmatprep.mubr.f32.mxu0 0.0
    %v1138 = vand.u32 %v617, 4294901760
    %1139 = vmatmul.mubr.f32.gmra.mxu0 %v1138
    %v1140 = vpop.f32.mrf.mxu0
    %v1141 = vadd.f32 %v1060, %v1140
    %v1142 = vpop.f32.mrf.mxu0
    %1143 = vmatprep.mubr.f32.mxu0 0.0
    %v1144 = vand.u32 %v620, 4294901760
    %1145 = vmatmul.mubr.f32.gmra.mxu0 %v1144
    %v1146 = vpop.f32.mrf.mxu0
    %v1147 = vadd.f32 %v1066, %v1146
    %v1148 = vpop.f32.mrf.mxu0
    %1149 = vdwg.mxu0
    %v1150 = vmul.f32 %v1141, 0.5
    %v1151 = vmul.f32 %v1147, 0.5
    %v1152 = vmul.f32 %v1141, 0.70710677
    %v1153 = vmul.f32 %v1147, 0.70710677
    %v1154 = vand.u32 2147483647, %v1152
    %v1155 = vand.u32 2147483647, %v1153
    %v1156 = vmul.f32 %v1154, 0.3275911
    %v1157 = vmul.f32 %v1155, 0.3275911
    %v1158 = vadd.f32 %v1156, 1.0
    %v1159 = vadd.f32 %v1157, 1.0
    %v1160 = vrcp.pop %v1158
    %v1161 = vmul.f32 1.0, %v1160
    %v1162 = vrcp.pop %v1159
    %v1163 = vmul.f32 1.0, %v1162
    %v1164 = vmul.f32 %v1161, 1.0614054
    %v1165 = vmul.f32 %v1163, 1.0614054
    %v1166 = vadd.f32 %v1164, -1.4531521
    %v1167 = vadd.f32 %v1165, -1.4531521
    %v1168 = vmul.f32 %v1166, %v1161
    %v1169 = vmul.f32 %v1167, %v1163
    %v1170 = vadd.f32 %v1168, 1.4214138
    %v1171 = vadd.f32 %v1169, 1.4214138
    %v1172 = vmul.f32 %v1170, %v1161
    %v1173 = vmul.f32 %v1171, %v1163
    %v1174 = vadd.f32 %v1172, -0.28449672
    %v1175 = vadd.f32 %v1173, -0.28449672
    %v1176 = vmul.f32 %v1174, %v1161
    %v1177 = vmul.f32 %v1175, %v1163
    %v1178 = vadd.f32 %v1176, 0.2548296
    %v1179 = vadd.f32 %v1177, 0.2548296
    %v1180 = vmul.f32 %v1178, %v1161
    %v1181 = vmul.f32 %v1179, %v1163
    %v1182 = vsub.f32 0.0, %v1154
    %v1183 = vsub.f32 0.0, %v1155
    %v1184 = vmul.f32 %v1182, %v1154
    %v1185 = vmul.f32 %v1183, %v1155
    %v1186 = vmul.f32 %v1184, 1.442695
    %v1187 = vpow.pop %v1186
    %v1188 = vmul.f32 %v1185, 1.442695
    %v1189 = vpow.pop %v1188
    %v1190 = vmul.f32 %v1180, %v1187
    %v1191 = vmul.f32 %v1181, %v1189
    %v1192 = vsub.f32 1.0, %v1190
    %v1193 = vsub.f32 1.0, %v1191
    %vm1194 = vcmp.ge.f32.partialorder %v1152, 0.0
    %vm1195 = vcmp.ge.f32.partialorder %v1153, 0.0
    %v1196 = vsub.f32 0.0, %v1192
    %v1197 = vsub.f32 0.0, %v1193
    %v1198 = vsel %vm1194, %v1192, %v1196
    %v1199 = vsel %vm1195, %v1193, %v1197
    %v1200 = vadd.f32 %v1198, 1.0
    %v1201 = vadd.f32 %v1199, 1.0
    %v1202 = vmul.f32 %v1150, %v1200
    %v1203 = vmul.f32 %v1151, %v1201
    %v1204 = vld [vmem:[%s7] sm:$0xff]
    %v1205 = vld [vmem:[%s7 + $0x8] sm:$0xff]
    %v1206 = vld [vmem:[%s7 + $0x10] sm:$0xff]
    %v1207 = vld [vmem:[%s7 + $0x18] sm:$0xff]
    %v1208 = vld [vmem:[%s7 + $0x20] sm:$0xff]
    %v1209 = vld [vmem:[%s7 + $0x28] sm:$0xff]
    %v1210 = vld [vmem:[%s7 + $0x30] sm:$0xff]
    %v1211 = vld [vmem:[%s7 + $0x38] sm:$0xff]
    %v1212 = vld [vmem:[%s8] sm:$0x1]
    %v1214 = vlaneseq
    %v1215 = vshrl.u32 %v1214, 7
    %v1216 = vsub.s32 0, %v1215
    %v1217 = vrot.slane %v1212, %v1216
    %vm1219 = vcmask 523264
    %v1221 = vsel %vm1219, %v1202, 0
    %v1224 = vsel %vm1219, %v1203, 0
    %1226 = vmatprep.subr.mxu0 0.0
    %1227 = vmatpush1.msra.mxu0 0.0
    %1228 = vmatprep.subr.mxu0 0.0
    %1229 = vmatpush1.msra.mxu0 0.0
    %1230 = vmatprep.subr.mxu0 0.0
    %1231 = vmatpush1.msra.mxu0 0.0
    %1232 = vmatprep.subr.mxu0 0.0
    %1233 = vmatpush1.msra.mxu0 0.0
    %1234 = vmatprep.subr.mxu0 0.0
    %1235 = vmatpush1.msra.mxu0 0.0
    %1236 = vmatprep.subr.mxu0 0.0
    %1237 = vmatpush1.msra.mxu0 0.0
    %1238 = vmatprep.subr.mxu0 0.0
    %1239 = vmatpush1.msra.mxu0 0.0
    %1240 = vmatprep.subr.mxu0 0.0
    %1241 = vmatpush1.msra.mxu0 0.0
    %1242 = vmatprep.subr.mxu0 0.0
    %v1243 = vand.u32 %v1211, 4294901760
    %1244 = vmatpush1.msra.mxu0 %v1243
    %1245 = vmatprep.subr.mxu0 0.0
    %v1246 = vand.u32 %v1210, 4294901760
    %1247 = vmatpush1.msra.mxu0 %v1246
    %1248 = vmatprep.subr.mxu0 0.0
    %v1249 = vand.u32 %v1209, 4294901760
    %1250 = vmatpush1.msra.mxu0 %v1249
    %1251 = vmatprep.subr.mxu0 0.0
    %v1252 = vand.u32 %v1208, 4294901760
    %1253 = vmatpush1.msra.mxu0 %v1252
    %1254 = vmatprep.subr.mxu0 0.0
    %v1255 = vand.u32 %v1207, 4294901760
    %1256 = vmatpush1.msra.mxu0 %v1255
    %1257 = vmatprep.subr.mxu0 0.0
    %v1258 = vand.u32 %v1206, 4294901760
    %1259 = vmatpush1.msra.mxu0 %v1258
    %1260 = vmatprep.subr.mxu0 0.0
    %v1261 = vand.u32 %v1205, 4294901760
    %1262 = vmatpush1.msra.mxu0 %v1261
    %1263 = vmatprep.subr.mxu0 0.0
    %v1264 = vand.u32 %v1204, 4294901760
    %1265 = vmatpush1.msra.mxu0 %v1264
    %1266 = vmatprep.subr.mxu0 0.0
    %1267 = vmatpush2.msra.mxu0 0.0
    %1268 = vmatprep.subr.mxu0 0.0
    %1269 = vmatpush2.msra.mxu0 0.0
    %1270 = vmatprep.subr.mxu0 0.0
    %1271 = vmatpush2.msra.mxu0 0.0
    %1272 = vmatprep.subr.mxu0 0.0
    %1273 = vmatpush2.msra.mxu0 0.0
    %1274 = vmatprep.subr.mxu0 0.0
    %1275 = vmatpush2.msra.mxu0 0.0
    %1276 = vmatprep.subr.mxu0 0.0
    %1277 = vmatpush2.msra.mxu0 0.0
    %1278 = vmatprep.subr.mxu0 0.0
    %1279 = vmatpush2.msra.mxu0 0.0
    %1280 = vmatprep.subr.mxu0 0.0
    %1281 = vmatpush2.msra.mxu0 0.0
    %1282 = vmatprep.subr.mxu0 0.0
    %1283 = vmatpush2.msra.mxu0 0.0
    %1284 = vmatprep.subr.mxu0 0.0
    %1285 = vmatpush2.msra.mxu0 0.0
    %1286 = vmatprep.subr.mxu0 0.0
    %1287 = vmatpush2.msra.mxu0 0.0
    %1288 = vmatprep.subr.mxu0 0.0
    %1289 = vmatpush2.msra.mxu0 0.0
    %1290 = vmatprep.subr.mxu0 0.0
    %1291 = vmatpush2.msra.mxu0 0.0
    %1292 = vmatprep.subr.mxu0 0.0
    %1293 = vmatpush2.msra.mxu0 0.0
    %1294 = vmatprep.subr.mxu0 0.0
    %1295 = vmatpush2.msra.mxu0 0.0
    %1296 = vmatprep.subr.mxu0 0.0
    %1297 = vmatpush2.msra.mxu0 0.0
    %1298 = vmatprep.mubr.f32.mxu0 0.0
    %v1299 = vand.u32 %v1221, 4294901760
    %v1300 = vsub.f32 %v1221, %v1299
    %v1301 = vand.u32 %v1300, 4294901760
    %v1302 = vsub.f32 %v1300, %v1301
    %v1303 = vand.u32 %v1302, 4294901760
    %1304 = vmatmul.mubr.f32.gmra.mxu0 %v1303
    %v1305 = vpop.f32.mrf.mxu0
    %v1306 = vadd.f32 %v1217, %v1305
    %v1307 = vpop.f32.mrf.mxu0
    %1308 = vmatprep.mubr.f32.mxu0 0.0
    %v1309 = vand.u32 %v1224, 4294901760
    %v1310 = vsub.f32 %v1224, %v1309
    %v1311 = vand.u32 %v1310, 4294901760
    %v1312 = vsub.f32 %v1310, %v1311
    %v1313 = vand.u32 %v1312, 4294901760
    %1314 = vmatmul.mubr.f32.gmra.mxu0 %v1313
    %v1315 = vpop.f32.mrf.mxu0
    %v1316 = vadd.f32 %v1217, %v1315
    %v1317 = vpop.f32.mrf.mxu0
    %1318 = vdwg.mxu0
    %1319 = vmatprep.subr.mxu0 0.0
    %1320 = vmatpush1.msra.mxu0 0.0
    %1321 = vmatprep.subr.mxu0 0.0
    %1322 = vmatpush1.msra.mxu0 0.0
    %1323 = vmatprep.subr.mxu0 0.0
    %1324 = vmatpush1.msra.mxu0 0.0
    %1325 = vmatprep.subr.mxu0 0.0
    %1326 = vmatpush1.msra.mxu0 0.0
    %1327 = vmatprep.subr.mxu0 0.0
    %1328 = vmatpush1.msra.mxu0 0.0
    %1329 = vmatprep.subr.mxu0 0.0
    %1330 = vmatpush1.msra.mxu0 0.0
    %1331 = vmatprep.subr.mxu0 0.0
    %1332 = vmatpush1.msra.mxu0 0.0
    %1333 = vmatprep.subr.mxu0 0.0
    %1334 = vmatpush1.msra.mxu0 0.0
    %1335 = vmatprep.subr.mxu0 0.0
    %v1336 = vand.u32 %v1211, 4294901760
    %v1337 = vsub.f32 %v1211, %v1336
    %v1338 = vand.u32 %v1337, 4294901760
    %v1339 = vsub.f32 %v1337, %v1338
    %v1340 = vand.u32 %v1339, 4294901760
    %1341 = vmatpush1.msra.mxu0 %v1340
    %1342 = vmatprep.subr.mxu0 0.0
    %v1343 = vand.u32 %v1210, 4294901760
    %v1344 = vsub.f32 %v1210, %v1343
    %v1345 = vand.u32 %v1344, 4294901760
    %v1346 = vsub.f32 %v1344, %v1345
    %v1347 = vand.u32 %v1346, 4294901760
    %1348 = vmatpush1.msra.mxu0 %v1347
    %1349 = vmatprep.subr.mxu0 0.0
    %v1350 = vand.u32 %v1209, 4294901760
    %v1351 = vsub.f32 %v1209, %v1350
    %v1352 = vand.u32 %v1351, 4294901760
    %v1353 = vsub.f32 %v1351, %v1352
    %v1354 = vand.u32 %v1353, 4294901760
    %1355 = vmatpush1.msra.mxu0 %v1354
    %1356 = vmatprep.subr.mxu0 0.0
    %v1357 = vand.u32 %v1208, 4294901760
    %v1358 = vsub.f32 %v1208, %v1357
    %v1359 = vand.u32 %v1358, 4294901760
    %v1360 = vsub.f32 %v1358, %v1359
    %v1361 = vand.u32 %v1360, 4294901760
    %1362 = vmatpush1.msra.mxu0 %v1361
    %1363 = vmatprep.subr.mxu0 0.0
    %v1364 = vand.u32 %v1207, 4294901760
    %v1365 = vsub.f32 %v1207, %v1364
    %v1366 = vand.u32 %v1365, 4294901760
    %v1367 = vsub.f32 %v1365, %v1366
    %v1368 = vand.u32 %v1367, 4294901760
    %1369 = vmatpush1.msra.mxu0 %v1368
    %1370 = vmatprep.subr.mxu0 0.0
    %v1371 = vand.u32 %v1206, 4294901760
    %v1372 = vsub.f32 %v1206, %v1371
    %v1373 = vand.u32 %v1372, 4294901760
    %v1374 = vsub.f32 %v1372, %v1373
    %v1375 = vand.u32 %v1374, 4294901760
    %1376 = vmatpush1.msra.mxu0 %v1375
    %1377 = vmatprep.subr.mxu0 0.0
    %v1378 = vand.u32 %v1205, 4294901760
    %v1379 = vsub.f32 %v1205, %v1378
    %v1380 = vand.u32 %v1379, 4294901760
    %v1381 = vsub.f32 %v1379, %v1380
    %v1382 = vand.u32 %v1381, 4294901760
    %1383 = vmatpush1.msra.mxu0 %v1382
    %1384 = vmatprep.subr.mxu0 0.0
    %v1385 = vand.u32 %v1204, 4294901760
    %v1386 = vsub.f32 %v1204, %v1385
    %v1387 = vand.u32 %v1386, 4294901760
    %v1388 = vsub.f32 %v1386, %v1387
    %v1389 = vand.u32 %v1388, 4294901760
    %1390 = vmatpush1.msra.mxu0 %v1389
    %1391 = vmatprep.subr.mxu0 0.0
    %1392 = vmatpush2.msra.mxu0 0.0
    %1393 = vmatprep.subr.mxu0 0.0
    %1394 = vmatpush2.msra.mxu0 0.0
    %1395 = vmatprep.subr.mxu0 0.0
    %1396 = vmatpush2.msra.mxu0 0.0
    %1397 = vmatprep.subr.mxu0 0.0
    %1398 = vmatpush2.msra.mxu0 0.0
    %1399 = vmatprep.subr.mxu0 0.0
    %1400 = vmatpush2.msra.mxu0 0.0
    %1401 = vmatprep.subr.mxu0 0.0
    %1402 = vmatpush2.msra.mxu0 0.0
    %1403 = vmatprep.subr.mxu0 0.0
    %1404 = vmatpush2.msra.mxu0 0.0
    %1405 = vmatprep.subr.mxu0 0.0
    %1406 = vmatpush2.msra.mxu0 0.0
    %1407 = vmatprep.subr.mxu0 0.0
    %1408 = vmatpush2.msra.mxu0 0.0
    %1409 = vmatprep.subr.mxu0 0.0
    %1410 = vmatpush2.msra.mxu0 0.0
    %1411 = vmatprep.subr.mxu0 0.0
    %1412 = vmatpush2.msra.mxu0 0.0
    %1413 = vmatprep.subr.mxu0 0.0
    %1414 = vmatpush2.msra.mxu0 0.0
    %1415 = vmatprep.subr.mxu0 0.0
    %1416 = vmatpush2.msra.mxu0 0.0
    %1417 = vmatprep.subr.mxu0 0.0
    %1418 = vmatpush2.msra.mxu0 0.0
    %1419 = vmatprep.subr.mxu0 0.0
    %1420 = vmatpush2.msra.mxu0 0.0
    %1421 = vmatprep.subr.mxu0 0.0
    %1422 = vmatpush2.msra.mxu0 0.0
    %1423 = vmatprep.mubr.f32.mxu0 0.0
    %v1424 = vand.u32 %v1221, 4294901760
    %1425 = vmatmul.mubr.f32.gmra.mxu0 %v1424
    %v1426 = vpop.f32.mrf.mxu0
    %v1427 = vadd.f32 %v1306, %v1426
    %v1428 = vpop.f32.mrf.mxu0
    %1429 = vmatprep.mubr.f32.mxu0 0.0
    %v1430 = vand.u32 %v1224, 4294901760
    %1431 = vmatmul.mubr.f32.gmra.mxu0 %v1430
    %v1432 = vpop.f32.mrf.mxu0
    %v1433 = vadd.f32 %v1316, %v1432
    %v1434 = vpop.f32.mrf.mxu0
    %1435 = vdwg.mxu0
    %1436 = vmatprep.subr.mxu0 0.0
    %1437 = vmatpush1.msra.mxu0 0.0
    %1438 = vmatprep.subr.mxu0 0.0
    %1439 = vmatpush1.msra.mxu0 0.0
    %1440 = vmatprep.subr.mxu0 0.0
    %1441 = vmatpush1.msra.mxu0 0.0
    %1442 = vmatprep.subr.mxu0 0.0
    %1443 = vmatpush1.msra.mxu0 0.0
    %1444 = vmatprep.subr.mxu0 0.0
    %1445 = vmatpush1.msra.mxu0 0.0
    %1446 = vmatprep.subr.mxu0 0.0
    %1447 = vmatpush1.msra.mxu0 0.0
    %1448 = vmatprep.subr.mxu0 0.0
    %1449 = vmatpush1.msra.mxu0 0.0
    %1450 = vmatprep.subr.mxu0 0.0
    %1451 = vmatpush1.msra.mxu0 0.0
    %1452 = vmatprep.subr.mxu0 0.0
    %v1453 = vand.u32 %v1211, 4294901760
    %v1454 = vsub.f32 %v1211, %v1453
    %1455 = vmatpush1.msra.mxu0 %v1454
    %1456 = vmatprep.subr.mxu0 0.0
    %v1457 = vand.u32 %v1210, 4294901760
    %v1458 = vsub.f32 %v1210, %v1457
    %1459 = vmatpush1.msra.mxu0 %v1458
    %1460 = vmatprep.subr.mxu0 0.0
    %v1461 = vand.u32 %v1209, 4294901760
    %v1462 = vsub.f32 %v1209, %v1461
    %1463 = vmatpush1.msra.mxu0 %v1462
    %1464 = vmatprep.subr.mxu0 0.0
    %v1465 = vand.u32 %v1208, 4294901760
    %v1466 = vsub.f32 %v1208, %v1465
    %1467 = vmatpush1.msra.mxu0 %v1466
    %1468 = vmatprep.subr.mxu0 0.0
    %v1469 = vand.u32 %v1207, 4294901760
    %v1470 = vsub.f32 %v1207, %v1469
    %1471 = vmatpush1.msra.mxu0 %v1470
    %1472 = vmatprep.subr.mxu0 0.0
    %v1473 = vand.u32 %v1206, 4294901760
    %v1474 = vsub.f32 %v1206, %v1473
    %1475 = vmatpush1.msra.mxu0 %v1474
    %1476 = vmatprep.subr.mxu0 0.0
    %v1477 = vand.u32 %v1205, 4294901760
    %v1478 = vsub.f32 %v1205, %v1477
    %1479 = vmatpush1.msra.mxu0 %v1478
    %1480 = vmatprep.subr.mxu0 0.0
    %v1481 = vand.u32 %v1204, 4294901760
    %v1482 = vsub.f32 %v1204, %v1481
    %1483 = vmatpush1.msra.mxu0 %v1482
    %1484 = vmatprep.subr.mxu0 0.0
    %1485 = vmatpush2.msra.mxu0 0.0
    %1486 = vmatprep.subr.mxu0 0.0
    %1487 = vmatpush2.msra.mxu0 0.0
    %1488 = vmatprep.subr.mxu0 0.0
    %1489 = vmatpush2.msra.mxu0 0.0
    %1490 = vmatprep.subr.mxu0 0.0
    %1491 = vmatpush2.msra.mxu0 0.0
    %1492 = vmatprep.subr.mxu0 0.0
    %1493 = vmatpush2.msra.mxu0 0.0
    %1494 = vmatprep.subr.mxu0 0.0
    %1495 = vmatpush2.msra.mxu0 0.0
    %1496 = vmatprep.subr.mxu0 0.0
    %1497 = vmatpush2.msra.mxu0 0.0
    %1498 = vmatprep.subr.mxu0 0.0
    %1499 = vmatpush2.msra.mxu0 0.0
    %1500 = vmatprep.subr.mxu0 0.0
    %1501 = vmatpush2.msra.mxu0 0.0
    %1502 = vmatprep.subr.mxu0 0.0
    %1503 = vmatpush2.msra.mxu0 0.0
    %1504 = vmatprep.subr.mxu0 0.0
    %1505 = vmatpush2.msra.mxu0 0.0
    %1506 = vmatprep.subr.mxu0 0.0
    %1507 = vmatpush2.msra.mxu0 0.0
    %1508 = vmatprep.subr.mxu0 0.0
    %1509 = vmatpush2.msra.mxu0 0.0
    %1510 = vmatprep.subr.mxu0 0.0
    %1511 = vmatpush2.msra.mxu0 0.0
    %1512 = vmatprep.subr.mxu0 0.0
    %1513 = vmatpush2.msra.mxu0 0.0
    %1514 = vmatprep.subr.mxu0 0.0
    %1515 = vmatpush2.msra.mxu0 0.0
    %1516 = vmatprep.mubr.f32.mxu0 0.0
    %v1517 = vand.u32 %v1221, 4294901760
    %v1518 = vsub.f32 %v1221, %v1517
    %1519 = vmatmul.mubr.f32.gmra.mxu0 %v1518
    %v1520 = vpop.f32.mrf.mxu0
    %v1521 = vadd.f32 %v1427, %v1520
    %v1522 = vpop.f32.mrf.mxu0
    %1523 = vmatprep.mubr.f32.mxu0 0.0
    %v1524 = vand.u32 %v1224, 4294901760
    %v1525 = vsub.f32 %v1224, %v1524
    %1526 = vmatmul.mubr.f32.gmra.mxu0 %v1525
    %v1527 = vpop.f32.mrf.mxu0
    %v1528 = vadd.f32 %v1433, %v1527
    %v1529 = vpop.f32.mrf.mxu0
    %1530 = vdwg.mxu0
    %1531 = vmatprep.subr.mxu0 0.0
    %1532 = vmatpush1.msra.mxu0 0.0
    %1533 = vmatprep.subr.mxu0 0.0
    %1534 = vmatpush1.msra.mxu0 0.0
    %1535 = vmatprep.subr.mxu0 0.0
    %1536 = vmatpush1.msra.mxu0 0.0
    %1537 = vmatprep.subr.mxu0 0.0
    %1538 = vmatpush1.msra.mxu0 0.0
    %1539 = vmatprep.subr.mxu0 0.0
    %1540 = vmatpush1.msra.mxu0 0.0
    %1541 = vmatprep.subr.mxu0 0.0
    %1542 = vmatpush1.msra.mxu0 0.0
    %1543 = vmatprep.subr.mxu0 0.0
    %1544 = vmatpush1.msra.mxu0 0.0
    %1545 = vmatprep.subr.mxu0 0.0
    %1546 = vmatpush1.msra.mxu0 0.0
    %1547 = vmatprep.subr.mxu0 0.0
    %v1548 = vand.u32 %v1211, 4294901760
    %1549 = vmatpush1.msra.mxu0 %v1548
    %1550 = vmatprep.subr.mxu0 0.0
    %v1551 = vand.u32 %v1210, 4294901760
    %1552 = vmatpush1.msra.mxu0 %v1551
    %1553 = vmatprep.subr.mxu0 0.0
    %v1554 = vand.u32 %v1209, 4294901760
    %1555 = vmatpush1.msra.mxu0 %v1554
    %1556 = vmatprep.subr.mxu0 0.0
    %v1557 = vand.u32 %v1208, 4294901760
    %1558 = vmatpush1.msra.mxu0 %v1557
    %1559 = vmatprep.subr.mxu0 0.0
    %v1560 = vand.u32 %v1207, 4294901760
    %1561 = vmatpush1.msra.mxu0 %v1560
    %1562 = vmatprep.subr.mxu0 0.0
    %v1563 = vand.u32 %v1206, 4294901760
    %1564 = vmatpush1.msra.mxu0 %v1563
    %1565 = vmatprep.subr.mxu0 0.0
    %v1566 = vand.u32 %v1205, 4294901760
    %1567 = vmatpush1.msra.mxu0 %v1566
    %1568 = vmatprep.subr.mxu0 0.0
    %v1569 = vand.u32 %v1204, 4294901760
    %1570 = vmatpush1.msra.mxu0 %v1569
    %1571 = vmatprep.subr.mxu0 0.0
    %1572 = vmatpush2.msra.mxu0 0.0
    %1573 = vmatprep.subr.mxu0 0.0
    %1574 = vmatpush2.msra.mxu0 0.0
    %1575 = vmatprep.subr.mxu0 0.0
    %1576 = vmatpush2.msra.mxu0 0.0
    %1577 = vmatprep.subr.mxu0 0.0
    %1578 = vmatpush2.msra.mxu0 0.0
    %1579 = vmatprep.subr.mxu0 0.0
    %1580 = vmatpush2.msra.mxu0 0.0
    %1581 = vmatprep.subr.mxu0 0.0
    %1582 = vmatpush2.msra.mxu0 0.0
    %1583 = vmatprep.subr.mxu0 0.0
    %1584 = vmatpush2.msra.mxu0 0.0
    %1585 = vmatprep.subr.mxu0 0.0
    %1586 = vmatpush2.msra.mxu0 0.0
    %1587 = vmatprep.subr.mxu0 0.0
    %1588 = vmatpush2.msra.mxu0 0.0
    %1589 = vmatprep.subr.mxu0 0.0
    %1590 = vmatpush2.msra.mxu0 0.0
    %1591 = vmatprep.subr.mxu0 0.0
    %1592 = vmatpush2.msra.mxu0 0.0
    %1593 = vmatprep.subr.mxu0 0.0
    %1594 = vmatpush2.msra.mxu0 0.0
    %1595 = vmatprep.subr.mxu0 0.0
    %1596 = vmatpush2.msra.mxu0 0.0
    %1597 = vmatprep.subr.mxu0 0.0
    %1598 = vmatpush2.msra.mxu0 0.0
    %1599 = vmatprep.subr.mxu0 0.0
    %1600 = vmatpush2.msra.mxu0 0.0
    %1601 = vmatprep.subr.mxu0 0.0
    %1602 = vmatpush2.msra.mxu0 0.0
    %1603 = vmatprep.mubr.f32.mxu0 0.0
    %v1604 = vand.u32 %v1221, 4294901760
    %v1605 = vsub.f32 %v1221, %v1604
    %v1606 = vand.u32 %v1605, 4294901760
    %1607 = vmatmul.mubr.f32.gmra.mxu0 %v1606
    %v1608 = vpop.f32.mrf.mxu0
    %v1609 = vadd.f32 %v1521, %v1608
    %v1610 = vpop.f32.mrf.mxu0
    %1611 = vmatprep.mubr.f32.mxu0 0.0
    %v1612 = vand.u32 %v1224, 4294901760
    %v1613 = vsub.f32 %v1224, %v1612
    %v1614 = vand.u32 %v1613, 4294901760
    %1615 = vmatmul.mubr.f32.gmra.mxu0 %v1614
    %v1616 = vpop.f32.mrf.mxu0
    %v1617 = vadd.f32 %v1528, %v1616
    %v1618 = vpop.f32.mrf.mxu0
    %1619 = vdwg.mxu0
    %1620 = vmatprep.subr.mxu0 0.0
    %1621 = vmatpush1.msra.mxu0 0.0
    %1622 = vmatprep.subr.mxu0 0.0
    %1623 = vmatpush1.msra.mxu0 0.0
    %1624 = vmatprep.subr.mxu0 0.0
    %1625 = vmatpush1.msra.mxu0 0.0
    %1626 = vmatprep.subr.mxu0 0.0
    %1627 = vmatpush1.msra.mxu0 0.0
    %1628 = vmatprep.subr.mxu0 0.0
    %1629 = vmatpush1.msra.mxu0 0.0
    %1630 = vmatprep.subr.mxu0 0.0
    %1631 = vmatpush1.msra.mxu0 0.0
    %1632 = vmatprep.subr.mxu0 0.0
    %1633 = vmatpush1.msra.mxu0 0.0
    %1634 = vmatprep.subr.mxu0 0.0
    %1635 = vmatpush1.msra.mxu0 0.0
    %1636 = vmatprep.subr.mxu0 0.0
    %v1637 = vand.u32 %v1211, 4294901760
    %v1638 = vsub.f32 %v1211, %v1637
    %v1639 = vand.u32 %v1638, 4294901760
    %1640 = vmatpush1.msra.mxu0 %v1639
    %1641 = vmatprep.subr.mxu0 0.0
    %v1642 = vand.u32 %v1210, 4294901760
    %v1643 = vsub.f32 %v1210, %v1642
    %v1644 = vand.u32 %v1643, 4294901760
    %1645 = vmatpush1.msra.mxu0 %v1644
    %1646 = vmatprep.subr.mxu0 0.0
    %v1647 = vand.u32 %v1209, 4294901760
    %v1648 = vsub.f32 %v1209, %v1647
    %v1649 = vand.u32 %v1648, 4294901760
    %1650 = vmatpush1.msra.mxu0 %v1649
    %1651 = vmatprep.subr.mxu0 0.0
    %v1652 = vand.u32 %v1208, 4294901760
    %v1653 = vsub.f32 %v1208, %v1652
    %v1654 = vand.u32 %v1653, 4294901760
    %1655 = vmatpush1.msra.mxu0 %v1654
    %1656 = vmatprep.subr.mxu0 0.0
    %v1657 = vand.u32 %v1207, 4294901760
    %v1658 = vsub.f32 %v1207, %v1657
    %v1659 = vand.u32 %v1658, 4294901760
    %1660 = vmatpush1.msra.mxu0 %v1659
    %1661 = vmatprep.subr.mxu0 0.0
    %v1662 = vand.u32 %v1206, 4294901760
    %v1663 = vsub.f32 %v1206, %v1662
    %v1664 = vand.u32 %v1663, 4294901760
    %1665 = vmatpush1.msra.mxu0 %v1664
    %1666 = vmatprep.subr.mxu0 0.0
    %v1667 = vand.u32 %v1205, 4294901760
    %v1668 = vsub.f32 %v1205, %v1667
    %v1669 = vand.u32 %v1668, 4294901760
    %1670 = vmatpush1.msra.mxu0 %v1669
    %1671 = vmatprep.subr.mxu0 0.0
    %v1672 = vand.u32 %v1204, 4294901760
    %v1673 = vsub.f32 %v1204, %v1672
    %v1674 = vand.u32 %v1673, 4294901760
    %1675 = vmatpush1.msra.mxu0 %v1674
    %1676 = vmatprep.subr.mxu0 0.0
    %1677 = vmatpush2.msra.mxu0 0.0
    %1678 = vmatprep.subr.mxu0 0.0
    %1679 = vmatpush2.msra.mxu0 0.0
    %1680 = vmatprep.subr.mxu0 0.0
    %1681 = vmatpush2.msra.mxu0 0.0
    %1682 = vmatprep.subr.mxu0 0.0
    %1683 = vmatpush2.msra.mxu0 0.0
    %1684 = vmatprep.subr.mxu0 0.0
    %1685 = vmatpush2.msra.mxu0 0.0
    %1686 = vmatprep.subr.mxu0 0.0
    %1687 = vmatpush2.msra.mxu0 0.0
    %1688 = vmatprep.subr.mxu0 0.0
    %1689 = vmatpush2.msra.mxu0 0.0
    %1690 = vmatprep.subr.mxu0 0.0
    %1691 = vmatpush2.msra.mxu0 0.0
    %1692 = vmatprep.subr.mxu0 0.0
    %1693 = vmatpush2.msra.mxu0 0.0
    %1694 = vmatprep.subr.mxu0 0.0
    %1695 = vmatpush2.msra.mxu0 0.0
    %1696 = vmatprep.subr.mxu0 0.0
    %1697 = vmatpush2.msra.mxu0 0.0
    %1698 = vmatprep.subr.mxu0 0.0
    %1699 = vmatpush2.msra.mxu0 0.0
    %1700 = vmatprep.subr.mxu0 0.0
    %1701 = vmatpush2.msra.mxu0 0.0
    %1702 = vmatprep.subr.mxu0 0.0
    %1703 = vmatpush2.msra.mxu0 0.0
    %1704 = vmatprep.subr.mxu0 0.0
    %1705 = vmatpush2.msra.mxu0 0.0
    %1706 = vmatprep.subr.mxu0 0.0
    %1707 = vmatpush2.msra.mxu0 0.0
    %1708 = vmatprep.mubr.f32.mxu0 0.0
    %v1709 = vand.u32 %v1221, 4294901760
    %1710 = vmatmul.mubr.f32.gmra.mxu0 %v1709
    %v1711 = vpop.f32.mrf.mxu0
    %v1712 = vadd.f32 %v1609, %v1711
    %v1713 = vpop.f32.mrf.mxu0
    %1714 = vmatprep.mubr.f32.mxu0 0.0
    %v1715 = vand.u32 %v1224, 4294901760
    %1716 = vmatmul.mubr.f32.gmra.mxu0 %v1715
    %v1717 = vpop.f32.mrf.mxu0
    %v1718 = vadd.f32 %v1617, %v1717
    %v1719 = vpop.f32.mrf.mxu0
    %1720 = vdwg.mxu0
    %1721 = vmatprep.subr.mxu0 0.0
    %1722 = vmatpush1.msra.mxu0 0.0
    %1723 = vmatprep.subr.mxu0 0.0
    %1724 = vmatpush1.msra.mxu0 0.0
    %1725 = vmatprep.subr.mxu0 0.0
    %1726 = vmatpush1.msra.mxu0 0.0
    %1727 = vmatprep.subr.mxu0 0.0
    %1728 = vmatpush1.msra.mxu0 0.0
    %1729 = vmatprep.subr.mxu0 0.0
    %1730 = vmatpush1.msra.mxu0 0.0
    %1731 = vmatprep.subr.mxu0 0.0
    %1732 = vmatpush1.msra.mxu0 0.0
    %1733 = vmatprep.subr.mxu0 0.0
    %1734 = vmatpush1.msra.mxu0 0.0
    %1735 = vmatprep.subr.mxu0 0.0
    %1736 = vmatpush1.msra.mxu0 0.0
    %1737 = vmatprep.subr.mxu0 0.0
    %v1738 = vand.u32 %v1211, 4294901760
    %1739 = vmatpush1.msra.mxu0 %v1738
    %1740 = vmatprep.subr.mxu0 0.0
    %v1741 = vand.u32 %v1210, 4294901760
    %1742 = vmatpush1.msra.mxu0 %v1741
    %1743 = vmatprep.subr.mxu0 0.0
    %v1744 = vand.u32 %v1209, 4294901760
    %1745 = vmatpush1.msra.mxu0 %v1744
    %1746 = vmatprep.subr.mxu0 0.0
    %v1747 = vand.u32 %v1208, 4294901760
    %1748 = vmatpush1.msra.mxu0 %v1747
    %1749 = vmatprep.subr.mxu0 0.0
    %v1750 = vand.u32 %v1207, 4294901760
    %1751 = vmatpush1.msra.mxu0 %v1750
    %1752 = vmatprep.subr.mxu0 0.0
    %v1753 = vand.u32 %v1206, 4294901760
    %1754 = vmatpush1.msra.mxu0 %v1753
    %1755 = vmatprep.subr.mxu0 0.0
    %v1756 = vand.u32 %v1205, 4294901760
    %1757 = vmatpush1.msra.mxu0 %v1756
    %1758 = vmatprep.subr.mxu0 0.0
    %v1759 = vand.u32 %v1204, 4294901760
    %1760 = vmatpush1.msra.mxu0 %v1759
    %1761 = vmatprep.subr.mxu0 0.0
    %1762 = vmatpush2.msra.mxu0 0.0
    %1763 = vmatprep.subr.mxu0 0.0
    %1764 = vmatpush2.msra.mxu0 0.0
    %1765 = vmatprep.subr.mxu0 0.0
    %1766 = vmatpush2.msra.mxu0 0.0
    %1767 = vmatprep.subr.mxu0 0.0
    %1768 = vmatpush2.msra.mxu0 0.0
    %1769 = vmatprep.subr.mxu0 0.0
    %1770 = vmatpush2.msra.mxu0 0.0
    %1771 = vmatprep.subr.mxu0 0.0
    %1772 = vmatpush2.msra.mxu0 0.0
    %1773 = vmatprep.subr.mxu0 0.0
    %1774 = vmatpush2.msra.mxu0 0.0
    %1775 = vmatprep.subr.mxu0 0.0
    %1776 = vmatpush2.msra.mxu0 0.0
    %1777 = vmatprep.subr.mxu0 0.0
    %1778 = vmatpush2.msra.mxu0 0.0
    %1779 = vmatprep.subr.mxu0 0.0
    %1780 = vmatpush2.msra.mxu0 0.0
    %1781 = vmatprep.subr.mxu0 0.0
    %1782 = vmatpush2.msra.mxu0 0.0
    %1783 = vmatprep.subr.mxu0 0.0
    %1784 = vmatpush2.msra.mxu0 0.0
    %1785 = vmatprep.subr.mxu0 0.0
    %1786 = vmatpush2.msra.mxu0 0.0
    %1787 = vmatprep.subr.mxu0 0.0
    %1788 = vmatpush2.msra.mxu0 0.0
    %1789 = vmatprep.subr.mxu0 0.0
    %1790 = vmatpush2.msra.mxu0 0.0
    %1791 = vmatprep.subr.mxu0 0.0
    %1792 = vmatpush2.msra.mxu0 0.0
    %1793 = vmatprep.mubr.f32.mxu0 0.0
    %v1794 = vand.u32 %v1221, 4294901760
    %1795 = vmatmul.mubr.f32.gmra.mxu0 %v1794
    %v1796 = vpop.f32.mrf.mxu0
    %v1797 = vadd.f32 %v1712, %v1796
    %v1798 = vpop.f32.mrf.mxu0
    %1799 = vmatprep.mubr.f32.mxu0 0.0
    %v1800 = vand.u32 %v1224, 4294901760
    %1801 = vmatmul.mubr.f32.gmra.mxu0 %v1800
    %v1802 = vpop.f32.mrf.mxu0
    %v1803 = vadd.f32 %v1718, %v1802
    %v1804 = vpop.f32.mrf.mxu0
    %1805 = vdwg.mxu0
    %v1806 = vadd.f32 %v603, %v1797
    %v1807 = vadd.f32 %v604, %v1803
    %v1808 = vld [vmem:[%s9] sm:$0x1]
    %v1810 = vlaneseq
    %v1811 = vshrl.u32 %v1810, 7
    %v1812 = vsub.s32 0, %v1811
    %v1813 = vrot.slane %v1808, %v1812
    %v1815 = vmul.f32 %v1806, %v1813
    %v1816 = vmul.f32 %v1807, %v1813
    %v1817 = vld [vmem:[%s10] sm:$0x1]
    %v1819 = vlaneseq
    %v1820 = vshrl.u32 %v1819, 7
    %v1821 = vsub.s32 0, %v1820
    %v1822 = vrot.slane %v1817, %v1821
    %v1824 = vadd.f32 %v1815, %v1822
    %v1825 = vadd.f32 %v1816, %v1822
    %1826 = vst.msk [vmem:[#allocation2] sm:$0xff] %vm52, %v1824
    %1827 = vst.msk [vmem:[#allocation2 + $0x8] sm:$0xff] %vm52, %v1825
    // Predicated region
    $region46: #{full_attention_full_t2v.3} parent=1 // pred_check
      _
    $region47: #{full_attention_full_t2v.3} parent=1 // pred_check_branch
      %1829 = sbr.rel (0) target = $region49
    $region48: #{full_attention_full_t2v.3} parent=1 // pred_region
      %s1831 = ssub.s32 256, 256
      %1832 = vsyncadd [#allocation3], %s1831
      %s1833 = sshll.u32 [#allocation2], 4
      %s1834 = int_to_ptr.vmem [resolvable:$true] %s1833
      %1839 = dma.vmem_to_hbm [thread:$0]  %s1834, 256, %s11, [#allocation3], 128, 128, 8
    $region49: #{full_attention_full_t2v.3} parent=1 // pred_fallthru
      _
    // Predicated region
    $region50: #{full_attention_full_t2v.3} parent=1 // pred_check
      _
    $region51: #{full_attention_full_t2v.3} parent=1 // pred_check_branch
      %1841 = sbr.rel (0) target = $region53
    $region52: #{full_attention_full_t2v.3} parent=1 // pred_region
      %1842 = dma.done [#allocation3], 256
    $region53: #{full_attention_full_t2v.3} parent=1 // pred_fallthru
      _
    %1843 = vsyncpa [#allocation3], 1

// kernel: full_attention_full_t2v.2
$region0: #{full_attention_full_t2v.2}
  #allocation0 [shape = 'u32[]', space=smem, size = 0x4, offset = 0x4, fixed_abs, tag = 'smem constant byte address 0x4 - core index']
  #allocation1 [shape = 'u32[144,128]{1,0:T(1,128)}', space=vmem, size = 0x12000, scoped, tag = 'internal scratch']
  #allocation2 [shape = 'f32[4,8,1]{2,1,0:T(8,128)}', space=vmem, size = 0x4000, scoped, tag = 'scratch operand']
  #allocation3 [shape = 'f32[4,8,1]{2,1,0:T(8,128)}', space=vmem, size = 0x4000, scoped, tag = 'scratch operand']
  #allocation4 [shape = 'f32[4,8,8]{2,1,0:T(8,128)}', space=vmem, size = 0x4000, scoped, tag = 'scratch operand']
  %s0 = inlined_call_operand.vmem [shape: f32[2,8,32], index: 0, kind: input, shape index: {}]
  %s1 = inlined_call_operand.vmem [shape: f32[2,8,32], index: 1, kind: input, shape index: {}]
  %s2 = inlined_call_operand.vmem [shape: f32[2,8,32], index: 2, kind: input, shape index: {}]
  %s3 = inlined_call_operand.vmem [shape: f32[2,8,32], index: 3, kind: output, shape index: {}]
  %s4 = sld [smem:[#allocation0]]
  $region53: #{full_attention_full_t2v.2} parent=0
    _
  %s6 = ssub.s32 1, %s4
  %s7 = scalar_select 0, %s6, %s4
  loop: start=0, step=1, limit=4
  $region2: #{full_attention_full_t2v.2} parent=0 // loop_pre_header
    _
  $region3: #{full_attention_full_t2v.2} parent=0 // loop_header
    %s9 = sphi 0, %s13
    %p10 = scmp.ge.s32.totalorder %s9, 4
    %s16 = sphi 0, %s35
    %s17 = sphi 0, %s31
    %s18 = sphi 0, %s27
    %s19 = sphi 0, %s16
    %s20 = sphi 0, %s17
    %s21 = sphi 0, %s18
    %s22 = sphi 0, %s19
    %s23 = sphi 0, %s20
    %s24 = sphi 0, %s21
    %s40 = sphi 0, %s42
    %s43 = sphi 0, %s40
    %s44 = sphi 0, %s43
    %s60 = sphi 0, %s44
    %s68 = sphi 0, %s70
    %s71 = sphi 0, %s68
    %s72 = sphi 0, %s71
    %s88 = sphi 0, %s72
    %s96 = sphi 0, %s98
    %s99 = sphi 0, %s96
    %s100 = sphi 0, %s99
    %s116 = sphi 0, %s100
    %s124 = sphi 0, %s126
    %s127 = sphi 0, %s124
    %s128 = sphi 0, %s127
    %s144 = sphi 0, %s128
  $region4: #{full_attention_full_t2v.2} parent=0 // loop_header_branch
    %12 = sbr.rel (%p10) target = $region8
  $region5: #{full_attention_full_t2v.2} parent=0 // loop_body
    %s14 = ssub.s32 %s9, 1
    %s15 = ssub.s32 %s9, 2
    %s25 = sadd.s32 1, %s18
    %p26 = scmp.ge.s32.totalorder %s25, 1
    %s27 = scalar_select %p26, 0, %s25
    %s28 = sadd.s32 1, %s17
    %s29 = scalar_select %p26, %s28, %s17
    %p30 = scmp.ge.s32.totalorder %s29, 1
    %s31 = scalar_select %p30, 0, %s29
    %s32 = sadd.s32 1, %s16
    %s33 = scalar_select %p30, %s32, %s16
    %p34 = scmp.ge.s32.totalorder %s33, 2
    %s35 = scalar_select %p34, 0, %s33
    %s36 = ssub.s32 %s16, %s35
    %s37 = ssub.s32 %s17, %s31
    %s38 = sor.u32 %s36, %s37
    %p39 = scmp.eq.s32.totalorder %s38, 0
    %s41 = sadd.s32 %s40, 1
    %s42 = scalar_select %p39, %s40, %s41
    %p45 = pneg %p39
    %p46 = scmp.eq.s32.totalorder %s9, 1
    %p47 = por %p45, %p46
    %p48 = scmp.ne.s32.totalorder %s40, %s43
    %p49 = scmp.eq.s32.totalorder %s9, 0
    %p50 = por %p48, %p49
    %p51 = scmp.ne.s32.totalorder %s40, %s43
    %p52 = scmp.eq.s32.totalorder %s14, 1
    %p53 = por %p51, %p52
    %p54 = scmp.ne.s32.totalorder %s43, %s44
    %p55 = scmp.eq.s32.totalorder %s14, 0
    %p56 = por %p54, %p55
    %p57 = scmp.ne.s32.totalorder %s43, %s44
    %p58 = scmp.eq.s32.totalorder %s15, 1
    %p59 = por %p57, %p58
    %p61 = scmp.ne.s32.totalorder %s44, %s60
    %p62 = scmp.eq.s32.totalorder %s15, 0
    %p63 = por %p61, %p62
    %s64 = ssub.s32 %s16, %s35
    %s65 = ssub.s32 %s18, %s27
    %s66 = sor.u32 %s64, %s65
    %p67 = scmp.eq.s32.totalorder %s66, 0
    %s69 = sadd.s32 %s68, 1
    %s70 = scalar_select %p67, %s68, %s69
    %p73 = pneg %p67
    %p74 = scmp.eq.s32.totalorder %s9, 1
    %p75 = por %p73, %p74
    %p76 = scmp.ne.s32.totalorder %s68, %s71
    %p77 = scmp.eq.s32.totalorder %s9, 0
    %p78 = por %p76, %p77
    %p79 = scmp.ne.s32.totalorder %s68, %s71
    %p80 = scmp.eq.s32.totalorder %s14, 1
    %p81 = por %p79, %p80
    %p82 = scmp.ne.s32.totalorder %s71, %s72
    %p83 = scmp.eq.s32.totalorder %s14, 0
    %p84 = por %p82, %p83
    %p85 = scmp.ne.s32.totalorder %s71, %s72
    %p86 = scmp.eq.s32.totalorder %s15, 1
    %p87 = por %p85, %p86
    %p89 = scmp.ne.s32.totalorder %s72, %s88
    %p90 = scmp.eq.s32.totalorder %s15, 0
    %p91 = por %p89, %p90
    %s92 = ssub.s32 %s16, %s35
    %s93 = ssub.s32 %s18, %s27
    %s94 = sor.u32 %s92, %s93
    %p95 = scmp.eq.s32.totalorder %s94, 0
    %s97 = sadd.s32 %s96, 1
    %s98 = scalar_select %p95, %s96, %s97
    %p101 = pneg %p95
    %p102 = scmp.eq.s32.totalorder %s9, 1
    %p103 = por %p101, %p102
    %p104 = scmp.ne.s32.totalorder %s96, %s99
    %p105 = scmp.eq.s32.totalorder %s9, 0
    %p106 = por %p104, %p105
    %p107 = scmp.ne.s32.totalorder %s96, %s99
    %p108 = scmp.eq.s32.totalorder %s14, 1
    %p109 = por %p107, %p108
    %p110 = scmp.ne.s32.totalorder %s99, %s100
    %p111 = scmp.eq.s32.totalorder %s14, 0
    %p112 = por %p110, %p111
    %p113 = scmp.ne.s32.totalorder %s99, %s100
    %p114 = scmp.eq.s32.totalorder %s15, 1
    %p115 = por %p113, %p114
    %p117 = scmp.ne.s32.totalorder %s100, %s116
    %p118 = scmp.eq.s32.totalorder %s15, 0
    %p119 = por %p117, %p118
    %s120 = ssub.s32 %s16, %s35
    %s121 = ssub.s32 %s17, %s31
    %s122 = sor.u32 %s120, %s121
    %p123 = scmp.eq.s32.totalorder %s122, 0
    %s125 = sadd.s32 %s124, 1
    %s126 = scalar_select %p123, %s124, %s125
    %p129 = pneg %p123
    %p130 = scmp.eq.s32.totalorder %s9, 1
    %p131 = por %p129, %p130
    %p132 = scmp.ne.s32.totalorder %s124, %s127
    %p133 = scmp.eq.s32.totalorder %s9, 0
    %p134 = por %p132, %p133
    %p135 = scmp.ne.s32.totalorder %s124, %s127
    %p136 = scmp.eq.s32.totalorder %s14, 1
    %p137 = por %p135, %p136
    %p138 = scmp.ne.s32.totalorder %s127, %s128
    %p139 = scmp.eq.s32.totalorder %s14, 0
    %p140 = por %p138, %p139
    %p141 = scmp.ne.s32.totalorder %s127, %s128
    %p142 = scmp.eq.s32.totalorder %s15, 1
    %p143 = por %p141, %p142
    %p145 = scmp.ne.s32.totalorder %s128, %s144
    %p146 = scmp.eq.s32.totalorder %s15, 0
    %p147 = por %p145, %p146
    %p148 = scmp.le.s32.totalorder 1, %s9
    %p149 = scmp.lt.s32.totalorder %s9, 3
    %p150 = pnand %p148, %p149
    %p151 = pneg %p150
    // Predicated region
    $region9: #{full_attention_full_t2v.2} parent=5 // pred_check
      _
    $region10: #{full_attention_full_t2v.2} parent=5 // pred_check_branch
      %153 = sbr.rel (%p150) target = $region12
    $region11: #{full_attention_full_t2v.2} parent=5 // pred_region
      %s154 = ssub.s32 %s9, 1
    $region12: #{full_attention_full_t2v.2} parent=5 // pred_fallthru
      _
    %p155 = scmp.lt.s32.totalorder %s9, 2
    // Predicated region
    $region13: #{full_attention_full_t2v.2} parent=5 // pred_check
      %p156 = pneg %p155
    $region14: #{full_attention_full_t2v.2} parent=5 // pred_check_branch
      %158 = sbr.rel (%p156) target = $region16
    $region15: #{full_attention_full_t2v.2} parent=5 // pred_region
      // Predicated region
      $region17: #{full_attention_full_t2v.2} parent=15 // pred_check
        %p159 = pneg %p50
      $region18: #{full_attention_full_t2v.2} parent=15 // pred_check_branch
        %161 = sbr.rel (%p159) target = $region20
      $region19: #{full_attention_full_t2v.2} parent=15 // pred_region
        %p162 = scmp.lt.s32.totalorder %s16, 1
        %s163 = scalar_select %p162, %s16, 1
        %p164 = scmp.lt.s32.totalorder %s17, 0
        %s165 = scalar_select %p164, %s17, 0
        %s166 = sadd.s32 %s165, %s163
        %s167 = smul.addr %s166, 8
        %s168 = scalar_lea.vmem %s0, %s167
      $region20: #{full_attention_full_t2v.2} parent=15 // pred_fallthru
        _
      // Predicated region
      $region21: #{full_attention_full_t2v.2} parent=15 // pred_check
        %p169 = pneg %p78
      $region22: #{full_attention_full_t2v.2} parent=15 // pred_check_branch
        %171 = sbr.rel (%p169) target = $region24
      $region23: #{full_attention_full_t2v.2} parent=15 // pred_region
        %p172 = scmp.lt.s32.totalorder %s16, 1
        %s173 = scalar_select %p172, %s16, 1
        %p174 = scmp.lt.s32.totalorder %s18, 0
        %s175 = scalar_select %p174, %s18, 0
        %s176 = sadd.s32 %s175, %s173
        %s177 = smul.addr %s176, 8
        %s178 = scalar_lea.vmem %s1, %s177
      $region24: #{full_attention_full_t2v.2} parent=15 // pred_fallthru
        _
      // Predicated region
      $region25: #{full_attention_full_t2v.2} parent=15 // pred_check
        %p179 = pneg %p106
      $region26: #{full_attention_full_t2v.2} parent=15 // pred_check_branch
        %181 = sbr.rel (%p179) target = $region28
      $region27: #{full_attention_full_t2v.2} parent=15 // pred_region
        %p182 = scmp.lt.s32.totalorder %s16, 1
        %s183 = scalar_select %p182, %s16, 1
        %p184 = scmp.lt.s32.totalorder %s18, 0
        %s185 = scalar_select %p184, %s18, 0
        %s186 = sadd.s32 %s185, %s183
        %s187 = smul.addr %s186, 8
        %s188 = scalar_lea.vmem %s2, %s187
      $region28: #{full_attention_full_t2v.2} parent=15 // pred_fallthru
        _
    $region16: #{full_attention_full_t2v.2} parent=5 // pred_fallthru
      _
    %p189 = scmp.le.s32.totalorder 1, %s9
    %p190 = scmp.lt.s32.totalorder %s9, 3
    %p191 = pnand %p189, %p190
    %p192 = pneg %p191
    // Predicated region
    $region29: #{full_attention_full_t2v.2} parent=5 // pred_check
      _
    $region30: #{full_attention_full_t2v.2} parent=5 // pred_check_branch
      %194 = sbr.rel (%p191) target = $region32
    $region31: #{full_attention_full_t2v.2} parent=5 // pred_region
      %s195 = ssub.s32 %s9, 1
      %p196 = scmp.lt.s32.totalorder %s19, 1
      %s197 = scalar_select %p196, %s19, 1
      %p198 = scmp.lt.s32.totalorder %s20, 0
      %s199 = scalar_select %p198, %s20, 0
      %s200 = sadd.s32 %s199, %s197
      %s201 = smul.addr %s200, 8
      %s202 = scalar_lea.vmem %s0, %s201
      %p203 = pneg %p56
      %p204 = pneg %p53
      %p205 = scmp.lt.s32.totalorder %s19, 1
      %s206 = scalar_select %p205, %s19, 1
      %p207 = scmp.lt.s32.totalorder %s21, 0
      %s208 = scalar_select %p207, %s21, 0
      %s209 = sadd.s32 %s208, %s206
      %s210 = smul.addr %s209, 8
      %s211 = scalar_lea.vmem %s1, %s210
      %p212 = pneg %p84
      %p213 = pneg %p81
      %p214 = scmp.lt.s32.totalorder %s19, 1
      %s215 = scalar_select %p214, %s19, 1
      %p216 = scmp.lt.s32.totalorder %s21, 0
      %s217 = scalar_select %p216, %s21, 0
      %s218 = sadd.s32 %s217, %s215
      %s219 = smul.addr %s218, 8
      %s220 = scalar_lea.vmem %s2, %s219
      %p221 = pneg %p112
      %p222 = pneg %p109
      %p223 = pneg %p140
      %p224 = pneg %p137
      %p225 = scmp.lt.s32.totalorder %s19, 1
      %s226 = scalar_select %p225, %s19, 1
      %p227 = scmp.lt.s32.totalorder %s20, 0
      %s228 = scalar_select %p227, %s20, 0
      %s229 = sadd.s32 %s228, %s226
      %s230 = smul.addr %s229, 8
      %s231 = scalar_lea.vmem %s3, %s230
      %p232 = scmp.lt.s32.totalorder %s19, 1
      %s233 = scalar_select %p232, %s19, 1
      %p234 = scmp.lt.s32.totalorder %s20, 0
      %s235 = scalar_select %p234, %s20, 0
      %s236 = sadd.s32 %s235, %s233
      %s237 = smul.addr %s236, 8
      %s238 = scalar_lea.vmem %s0, %s237
      %p239 = scmp.lt.s32.totalorder %s19, 1
      %s240 = scalar_select %p239, %s19, 1
      %p241 = scmp.lt.s32.totalorder %s21, 0
      %s242 = scalar_select %p241, %s21, 0
      %s243 = sadd.s32 %s242, %s240
      %s244 = smul.addr %s243, 8
      %s245 = scalar_lea.vmem %s1, %s244
      %p246 = scmp.lt.s32.totalorder %s19, 1
      %s247 = scalar_select %p246, %s19, 1
      %p248 = scmp.lt.s32.totalorder %s21, 0
      %s249 = scalar_select %p248, %s21, 0
      %s250 = sadd.s32 %s249, %s247
      %s251 = smul.addr %s250, 8
      %s252 = scalar_lea.vmem %s2, %s251
      %p253 = scmp.lt.s32.totalorder %s19, 1
      %s254 = scalar_select %p253, %s19, 1
      %p255 = scmp.lt.s32.totalorder %s20, 0
      %s256 = scalar_select %p255, %s20, 0
      %s257 = sadd.s32 %s256, %s254
      %s258 = smul.addr %s257, 8
      %s259 = scalar_lea.vmem %s3, %s258
      %p260 = scmp.eq.s32.totalorder %s21, 0
      // Predicated region
      $region33: #{full_attention_full_t2v.2} parent=31 // pred_check
        %p261 = pneg %p260
      $region34: #{full_attention_full_t2v.2} parent=31 // pred_check_branch
        %263 = sbr.rel (%p261) target = $region36
      $region35: #{full_attention_full_t2v.2} parent=31 // pred_region
        %vm264 = vcmask 7168
        %265 = vst.msk [vmem:[#allocation2] sm:$0xff] %vm264, -inf
        %266 = vst.msk [vmem:[#allocation2 + $0x8] sm:$0xff] %vm264, -inf
        %267 = vst.msk [vmem:[#allocation2 + $0x10] sm:$0xff] %vm264, -inf
        %268 = vst.msk [vmem:[#allocation2 + $0x18] sm:$0xff] %vm264, -inf
        %269 = vst.msk [vmem:[#allocation3] sm:$0xff] %vm264, 0.0
        %270 = vst.msk [vmem:[#allocation3 + $0x8] sm:$0xff] %vm264, 0.0
        %271 = vst.msk [vmem:[#allocation3 + $0x10] sm:$0xff] %vm264, 0.0
        %272 = vst.msk [vmem:[#allocation3 + $0x18] sm:$0xff] %vm264, 0.0
        %vm273 = vcmask 64512
        %274 = vst.msk [vmem:[#allocation4] sm:$0xff] %vm273, 0.0
        %275 = vst.msk [vmem:[#allocation4 + $0x8] sm:$0xff] %vm273, 0.0
        %276 = vst.msk [vmem:[#allocation4 + $0x10] sm:$0xff] %vm273, 0.0
        %277 = vst.msk [vmem:[#allocation4 + $0x18] sm:$0xff] %vm273, 0.0
      $region36: #{full_attention_full_t2v.2} parent=31 // pred_fallthru
        _
      %v278 = vld [vmem:[%s238] sm:$0xff]
      %v279 = vmul.f32 %v278, 0.35355338
      %v280 = vld [vmem:[%s245] sm:$0xff]
      %v281 = vld [vmem:[%s252] sm:$0xff]
      %vm282 = vcmask 64512
      %v284 = vsel %vm282, %v279, 0
      %v287 = vsel %vm282, %v280, 0
      %289 = vmatprep.subr.mxu0 0.0
      %290 = vmatpush1.xpose.msra.mxu0 0.0
      %291 = vmatprep.subr.mxu0 0.0
      %292 = vmatpush1.xpose.msra.mxu0 0.0
      %293 = vmatprep.subr.mxu0 0.0
      %294 = vmatpush1.xpose.msra.mxu0 0.0
      %295 = vmatprep.subr.mxu0 0.0
      %296 = vmatpush1.xpose.msra.mxu0 0.0
      %297 = vmatprep.subr.mxu0 0.0
      %298 = vmatpush1.xpose.msra.mxu0 0.0
      %299 = vmatprep.subr.mxu0 0.0
      %300 = vmatpush1.xpose.msra.mxu0 0.0
      %301 = vmatprep.subr.mxu0 0.0
      %302 = vmatpush1.xpose.msra.mxu0 0.0
      %303 = vmatprep.subr.mxu0 0.0
      %304 = vmatpush1.xpose.msra.mxu0 0.0
      %305 = vmatprep.subr.mxu0 0.0
      %306 = vmatpush1.xpose.msra.mxu0 0.0
      %307 = vmatprep.subr.mxu0 0.0
      %308 = vmatpush1.xpose.msra.mxu0 0.0
      %309 = vmatprep.subr.mxu0 0.0
      %310 = vmatpush1.xpose.msra.mxu0 0.0
      %311 = vmatprep.subr.mxu0 0.0
      %312 = vmatpush1.xpose.msra.mxu0 0.0
      %313 = vmatprep.subr.mxu0 0.0
      %314 = vmatpush1.xpose.msra.mxu0 0.0
      %315 = vmatprep.subr.mxu0 0.0
      %316 = vmatpush1.xpose.msra.mxu0 0.0
      %317 = vmatprep.subr.mxu0 0.0
      %318 = vmatpush1.xpose.msra.mxu0 0.0
      %319 = vmatprep.subr.mxu0 0.0
      %v320 = vand.u32 %v287, 4294901760
      %321 = vmatpush1.xpose.msra.mxu0 %v320
      %322 = vmatprep.subr.mxu0 0.0
      %323 = vmatpush2.xpose.msra.mxu0 0.0
      %324 = vmatprep.subr.mxu0 0.0
      %325 = vmatpush2.xpose.msra.mxu0 0.0
      %326 = vmatprep.subr.mxu0 0.0
      %327 = vmatpush2.xpose.msra.mxu0 0.0
      %328 = vmatprep.subr.mxu0 0.0
      %329 = vmatpush2.xpose.msra.mxu0 0.0
      %330 = vmatprep.subr.mxu0 0.0
      %331 = vmatpush2.xpose.msra.mxu0 0.0
      %332 = vmatprep.subr.mxu0 0.0
      %333 = vmatpush2.xpose.msra.mxu0 0.0
      %334 = vmatprep.subr.mxu0 0.0
      %335 = vmatpush2.xpose.msra.mxu0 0.0
      %336 = vmatprep.subr.mxu0 0.0
      %337 = vmatpush2.xpose.msra.mxu0 0.0
      %338 = vmatprep.subr.mxu0 0.0
      %339 = vmatpush2.xpose.msra.mxu0 0.0
      %340 = vmatprep.subr.mxu0 0.0
      %341 = vmatpush2.xpose.msra.mxu0 0.0
      %342 = vmatprep.subr.mxu0 0.0
      %343 = vmatpush2.xpose.msra.mxu0 0.0
      %344 = vmatprep.subr.mxu0 0.0
      %345 = vmatpush2.xpose.msra.mxu0 0.0
      %346 = vmatprep.subr.mxu0 0.0
      %347 = vmatpush2.xpose.msra.mxu0 0.0
      %348 = vmatprep.subr.mxu0 0.0
      %349 = vmatpush2.xpose.msra.mxu0 0.0
      %350 = vmatprep.subr.mxu0 0.0
      %351 = vmatpush2.xpose.msra.mxu0 0.0
      %352 = vmatprep.subr.mxu0 0.0
      %353 = vmatpush2.xpose.msra.mxu0 0.0
      %354 = vmatprep.mubr.f32.mxu0 0.0
      %v355 = vand.u32 %v284, 4294901760
      %v356 = vsub.f32 %v284, %v355
      %v357 = vand.u32 %v356, 4294901760
      %v358 = vsub.f32 %v356, %v357
      %v359 = vand.u32 %v358, 4294901760
      %360 = vmatmul.mubr.f32.gmra.mxu0 %v359
      %v361 = vpop.f32.mrf.mxu0
      %v362 = vadd.f32 0.0, %v361
      %v363 = vpop.f32.mrf.mxu0
      %364 = vdwg.mxu0
      %365 = vmatprep.subr.mxu0 0.0
      %366 = vmatpush1.xpose.msra.mxu0 0.0
      %367 = vmatprep.subr.mxu0 0.0
      %368 = vmatpush1.xpose.msra.mxu0 0.0
      %369 = vmatprep.subr.mxu0 0.0
      %370 = vmatpush1.xpose.msra.mxu0 0.0
      %371 = vmatprep.subr.mxu0 0.0
      %372 = vmatpush1.xpose.msra.mxu0 0.0
      %373 = vmatprep.subr.mxu0 0.0
      %374 = vmatpush1.xpose.msra.mxu0 0.0
      %375 = vmatprep.subr.mxu0 0.0
      %376 = vmatpush1.xpose.msra.mxu0 0.0
      %377 = vmatprep.subr.mxu0 0.0
      %378 = vmatpush1.xpose.msra.mxu0 0.0
      %379 = vmatprep.subr.mxu0 0.0
      %380 = vmatpush1.xpose.msra.mxu0 0.0
      %381 = vmatprep.subr.mxu0 0.0
      %382 = vmatpush1.xpose.msra.mxu0 0.0
      %383 = vmatprep.subr.mxu0 0.0
      %384 = vmatpush1.xpose.msra.mxu0 0.0
      %385 = vmatprep.subr.mxu0 0.0
      %386 = vmatpush1.xpose.msra.mxu0 0.0
      %387 = vmatprep.subr.mxu0 0.0
      %388 = vmatpush1.xpose.msra.mxu0 0.0
      %389 = vmatprep.subr.mxu0 0.0
      %390 = vmatpush1.xpose.msra.mxu0 0.0
      %391 = vmatprep.subr.mxu0 0.0
      %392 = vmatpush1.xpose.msra.mxu0 0.0
      %393 = vmatprep.subr.mxu0 0.0
      %394 = vmatpush1.xpose.msra.mxu0 0.0
      %395 = vmatprep.subr.mxu0 0.0
      %v396 = vand.u32 %v287, 4294901760
      %v397 = vsub.f32 %v287, %v396
      %v398 = vand.u32 %v397, 4294901760
      %v399 = vsub.f32 %v397, %v398
      %v400 = vand.u32 %v399, 4294901760
      %401 = vmatpush1.xpose.msra.mxu0 %v400
      %402 = vmatprep.subr.mxu0 0.0
      %403 = vmatpush2.xpose.msra.mxu0 0.0
      %404 = vmatprep.subr.mxu0 0.0
      %405 = vmatpush2.xpose.msra.mxu0 0.0
      %406 = vmatprep.subr.mxu0 0.0
      %407 = vmatpush2.xpose.msra.mxu0 0.0
      %408 = vmatprep.subr.mxu0 0.0
      %409 = vmatpush2.xpose.msra.mxu0 0.0
      %410 = vmatprep.subr.mxu0 0.0
      %411 = vmatpush2.xpose.msra.mxu0 0.0
      %412 = vmatprep.subr.mxu0 0.0
      %413 = vmatpush2.xpose.msra.mxu0 0.0
      %414 = vmatprep.subr.mxu0 0.0
      %415 = vmatpush2.xpose.msra.mxu0 0.0
      %416 = vmatprep.subr.mxu0 0.0
      %417 = vmatpush2.xpose.msra.mxu0 0.0
      %418 = vmatprep.subr.mxu0 0.0
      %419 = vmatpush2.xpose.msra.mxu0 0.0
      %420 = vmatprep.subr.mxu0 0.0
      %421 = vmatpush2.xpose.msra.mxu0 0.0
      %422 = vmatprep.subr.mxu0 0.0
      %423 = vmatpush2.xpose.msra.mxu0 0.0
      %424 = vmatprep.subr.mxu0 0.0
      %425 = vmatpush2.xpose.msra.mxu0 0.0
      %426 = vmatprep.subr.mxu0 0.0
      %427 = vmatpush2.xpose.msra.mxu0 0.0
      %428 = vmatprep.subr.mxu0 0.0
      %429 = vmatpush2.xpose.msra.mxu0 0.0
      %430 = vmatprep.subr.mxu0 0.0
      %431 = vmatpush2.xpose.msra.mxu0 0.0
      %432 = vmatprep.subr.mxu0 0.0
      %433 = vmatpush2.xpose.msra.mxu0 0.0
      %434 = vmatprep.mubr.f32.mxu0 0.0
      %v435 = vand.u32 %v284, 4294901760
      %436 = vmatmul.mubr.f32.gmra.mxu0 %v435
      %v437 = vpop.f32.mrf.mxu0
      %v438 = vadd.f32 %v362, %v437
      %v439 = vpop.f32.mrf.mxu0
      %440 = vdwg.mxu0
      %441 = vmatprep.subr.mxu0 0.0
      %442 = vmatpush1.xpose.msra.mxu0 0.0
      %443 = vmatprep.subr.mxu0 0.0
      %444 = vmatpush1.xpose.msra.mxu0 0.0
      %445 = vmatprep.subr.mxu0 0.0
      %446 = vmatpush1.xpose.msra.mxu0 0.0
      %447 = vmatprep.subr.mxu0 0.0
      %448 = vmatpush1.xpose.msra.mxu0 0.0
      %449 = vmatprep.subr.mxu0 0.0
      %450 = vmatpush1.xpose.msra.mxu0 0.0
      %451 = vmatprep.subr.mxu0 0.0
      %452 = vmatpush1.xpose.msra.mxu0 0.0
      %453 = vmatprep.subr.mxu0 0.0
      %454 = vmatpush1.xpose.msra.mxu0 0.0
      %455 = vmatprep.subr.mxu0 0.0
      %456 = vmatpush1.xpose.msra.mxu0 0.0
      %457 = vmatprep.subr.mxu0 0.0
      %458 = vmatpush1.xpose.msra.mxu0 0.0
      %459 = vmatprep.subr.mxu0 0.0
      %460 = vmatpush1.xpose.msra.mxu0 0.0
      %461 = vmatprep.subr.mxu0 0.0
      %462 = vmatpush1.xpose.msra.mxu0 0.0
      %463 = vmatprep.subr.mxu0 0.0
      %464 = vmatpush1.xpose.msra.mxu0 0.0
      %465 = vmatprep.subr.mxu0 0.0
      %466 = vmatpush1.xpose.msra.mxu0 0.0
      %467 = vmatprep.subr.mxu0 0.0
      %468 = vmatpush1.xpose.msra.mxu0 0.0
      %469 = vmatprep.subr.mxu0 0.0
      %470 = vmatpush1.xpose.msra.mxu0 0.0
      %471 = vmatprep.subr.mxu0 0.0
      %v472 = vand.u32 %v287, 4294901760
      %v473 = vsub.f32 %v287, %v472
      %474 = vmatpush1.xpose.msra.mxu0 %v473
      %475 = vmatprep.subr.mxu0 0.0
      %476 = vmatpush2.xpose.msra.mxu0 0.0
      %477 = vmatprep.subr.mxu0 0.0
      %478 = vmatpush2.xpose.msra.mxu0 0.0
      %479 = vmatprep.subr.mxu0 0.0
      %480 = vmatpush2.xpose.msra.mxu0 0.0
      %481 = vmatprep.subr.mxu0 0.0
      %482 = vmatpush2.xpose.msra.mxu0 0.0
      %483 = vmatprep.subr.mxu0 0.0
      %484 = vmatpush2.xpose.msra.mxu0 0.0
      %485 = vmatprep.subr.mxu0 0.0
      %486 = vmatpush2.xpose.msra.mxu0 0.0
      %487 = vmatprep.subr.mxu0 0.0
      %488 = vmatpush2.xpose.msra.mxu0 0.0
      %489 = vmatprep.subr.mxu0 0.0
      %490 = vmatpush2.xpose.msra.mxu0 0.0
      %491 = vmatprep.subr.mxu0 0.0
      %492 = vmatpush2.xpose.msra.mxu0 0.0
      %493 = vmatprep.subr.mxu0 0.0
      %494 = vmatpush2.xpose.msra.mxu0 0.0
      %495 = vmatprep.subr.mxu0 0.0
      %496 = vmatpush2.xpose.msra.mxu0 0.0
      %497 = vmatprep.subr.mxu0 0.0
      %498 = vmatpush2.xpose.msra.mxu0 0.0
      %499 = vmatprep.subr.mxu0 0.0
      %500 = vmatpush2.xpose.msra.mxu0 0.0
      %501 = vmatprep.subr.mxu0 0.0
      %502 = vmatpush2.xpose.msra.mxu0 0.0
      %503 = vmatprep.subr.mxu0 0.0
      %504 = vmatpush2.xpose.msra.mxu0 0.0
      %505 = vmatprep.subr.mxu0 0.0
      %506 = vmatpush2.xpose.msra.mxu0 0.0
      %507 = vmatprep.mubr.f32.mxu0 0.0
      %v508 = vand.u32 %v284, 4294901760
      %v509 = vsub.f32 %v284, %v508
      %510 = vmatmul.mubr.f32.gmra.mxu0 %v509
      %v511 = vpop.f32.mrf.mxu0
      %v512 = vadd.f32 %v438, %v511
      %v513 = vpop.f32.mrf.mxu0
      %514 = vdwg.mxu0
      %515 = vmatprep.subr.mxu0 0.0
      %516 = vmatpush1.xpose.msra.mxu0 0.0
      %517 = vmatprep.subr.mxu0 0.0
      %518 = vmatpush1.xpose.msra.mxu0 0.0
      %519 = vmatprep.subr.mxu0 0.0
      %520 = vmatpush1.xpose.msra.mxu0 0.0
      %521 = vmatprep.subr.mxu0 0.0
      %522 = vmatpush1.xpose.msra.mxu0 0.0
      %523 = vmatprep.subr.mxu0 0.0
      %524 = vmatpush1.xpose.msra.mxu0 0.0
      %525 = vmatprep.subr.mxu0 0.0
      %526 = vmatpush1.xpose.msra.mxu0 0.0
      %527 = vmatprep.subr.mxu0 0.0
      %528 = vmatpush1.xpose.msra.mxu0 0.0
      %529 = vmatprep.subr.mxu0 0.0
      %530 = vmatpush1.xpose.msra.mxu0 0.0
      %531 = vmatprep.subr.mxu0 0.0
      %532 = vmatpush1.xpose.msra.mxu0 0.0
      %533 = vmatprep.subr.mxu0 0.0
      %534 = vmatpush1.xpose.msra.mxu0 0.0
      %535 = vmatprep.subr.mxu0 0.0
      %536 = vmatpush1.xpose.msra.mxu0 0.0
      %537 = vmatprep.subr.mxu0 0.0
      %538 = vmatpush1.xpose.msra.mxu0 0.0
      %539 = vmatprep.subr.mxu0 0.0
      %540 = vmatpush1.xpose.msra.mxu0 0.0
      %541 = vmatprep.subr.mxu0 0.0
      %542 = vmatpush1.xpose.msra.mxu0 0.0
      %543 = vmatprep.subr.mxu0 0.0
      %544 = vmatpush1.xpose.msra.mxu0 0.0
      %545 = vmatprep.subr.mxu0 0.0
      %v546 = vand.u32 %v287, 4294901760
      %547 = vmatpush1.xpose.msra.mxu0 %v546
      %548 = vmatprep.subr.mxu0 0.0
      %549 = vmatpush2.xpose.msra.mxu0 0.0
      %550 = vmatprep.subr.mxu0 0.0
      %551 = vmatpush2.xpose.msra.mxu0 0.0
      %552 = vmatprep.subr.mxu0 0.0
      %553 = vmatpush2.xpose.msra.mxu0 0.0
      %554 = vmatprep.subr.mxu0 0.0
      %555 = vmatpush2.xpose.msra.mxu0 0.0
      %556 = vmatprep.subr.mxu0 0.0
      %557 = vmatpush2.xpose.msra.mxu0 0.0
      %558 = vmatprep.subr.mxu0 0.0
      %559 = vmatpush2.xpose.msra.mxu0 0.0
      %560 = vmatprep.subr.mxu0 0.0
      %561 = vmatpush2.xpose.msra.mxu0 0.0
      %562 = vmatprep.subr.mxu0 0.0
      %563 = vmatpush2.xpose.msra.mxu0 0.0
      %564 = vmatprep.subr.mxu0 0.0
      %565 = vmatpush2.xpose.msra.mxu0 0.0
      %566 = vmatprep.subr.mxu0 0.0
      %567 = vmatpush2.xpose.msra.mxu0 0.0
      %568 = vmatprep.subr.mxu0 0.0
      %569 = vmatpush2.xpose.msra.mxu0 0.0
      %570 = vmatprep.subr.mxu0 0.0
      %571 = vmatpush2.xpose.msra.mxu0 0.0
      %572 = vmatprep.subr.mxu0 0.0
      %573 = vmatpush2.xpose.msra.mxu0 0.0
      %574 = vmatprep.subr.mxu0 0.0
      %575 = vmatpush2.xpose.msra.mxu0 0.0
      %576 = vmatprep.subr.mxu0 0.0
      %577 = vmatpush2.xpose.msra.mxu0 0.0
      %578 = vmatprep.subr.mxu0 0.0
      %579 = vmatpush2.xpose.msra.mxu0 0.0
      %580 = vmatprep.mubr.f32.mxu0 0.0
      %v581 = vand.u32 %v284, 4294901760
      %v582 = vsub.f32 %v284, %v581
      %v583 = vand.u32 %v582, 4294901760
      %584 = vmatmul.mubr.f32.gmra.mxu0 %v583
      %v585 = vpop.f32.mrf.mxu0
      %v586 = vadd.f32 %v512, %v585
      %v587 = vpop.f32.mrf.mxu0
      %588 = vdwg.mxu0
      %589 = vmatprep.subr.mxu0 0.0
      %590 = vmatpush1.xpose.msra.mxu0 0.0
      %591 = vmatprep.subr.mxu0 0.0
      %592 = vmatpush1.xpose.msra.mxu0 0.0
      %593 = vmatprep.subr.mxu0 0.0
      %594 = vmatpush1.xpose.msra.mxu0 0.0
      %595 = vmatprep.subr.mxu0 0.0
      %596 = vmatpush1.xpose.msra.mxu0 0.0
      %597 = vmatprep.subr.mxu0 0.0
      %598 = vmatpush1.xpose.msra.mxu0 0.0
      %599 = vmatprep.subr.mxu0 0.0
      %600 = vmatpush1.xpose.msra.mxu0 0.0
      %601 = vmatprep.subr.mxu0 0.0
      %602 = vmatpush1.xpose.msra.mxu0 0.0
      %603 = vmatprep.subr.mxu0 0.0
      %604 = vmatpush1.xpose.msra.mxu0 0.0
      %605 = vmatprep.subr.mxu0 0.0
      %606 = vmatpush1.xpose.msra.mxu0 0.0
      %607 = vmatprep.subr.mxu0 0.0
      %608 = vmatpush1.xpose.msra.mxu0 0.0
      %609 = vmatprep.subr.mxu0 0.0
      %610 = vmatpush1.xpose.msra.mxu0 0.0
      %611 = vmatprep.subr.mxu0 0.0
      %612 = vmatpush1.xpose.msra.mxu0 0.0
      %613 = vmatprep.subr.mxu0 0.0
      %614 = vmatpush1.xpose.msra.mxu0 0.0
      %615 = vmatprep.subr.mxu0 0.0
      %616 = vmatpush1.xpose.msra.mxu0 0.0
      %617 = vmatprep.subr.mxu0 0.0
      %618 = vmatpush1.xpose.msra.mxu0 0.0
      %619 = vmatprep.subr.mxu0 0.0
      %v620 = vand.u32 %v287, 4294901760
      %v621 = vsub.f32 %v287, %v620
      %v622 = vand.u32 %v621, 4294901760
      %623 = vmatpush1.xpose.msra.mxu0 %v622
      %624 = vmatprep.subr.mxu0 0.0
      %625 = vmatpush2.xpose.msra.mxu0 0.0
      %626 = vmatprep.subr.mxu0 0.0
      %627 = vmatpush2.xpose.msra.mxu0 0.0
      %628 = vmatprep.subr.mxu0 0.0
      %629 = vmatpush2.xpose.msra.mxu0 0.0
      %630 = vmatprep.subr.mxu0 0.0
      %631 = vmatpush2.xpose.msra.mxu0 0.0
      %632 = vmatprep.subr.mxu0 0.0
      %633 = vmatpush2.xpose.msra.mxu0 0.0
      %634 = vmatprep.subr.mxu0 0.0
      %635 = vmatpush2.xpose.msra.mxu0 0.0
      %636 = vmatprep.subr.mxu0 0.0
      %637 = vmatpush2.xpose.msra.mxu0 0.0
      %638 = vmatprep.subr.mxu0 0.0
      %639 = vmatpush2.xpose.msra.mxu0 0.0
      %640 = vmatprep.subr.mxu0 0.0
      %641 = vmatpush2.xpose.msra.mxu0 0.0
      %642 = vmatprep.subr.mxu0 0.0
      %643 = vmatpush2.xpose.msra.mxu0 0.0
      %644 = vmatprep.subr.mxu0 0.0
      %645 = vmatpush2.xpose.msra.mxu0 0.0
      %646 = vmatprep.subr.mxu0 0.0
      %647 = vmatpush2.xpose.msra.mxu0 0.0
      %648 = vmatprep.subr.mxu0 0.0
      %649 = vmatpush2.xpose.msra.mxu0 0.0
      %650 = vmatprep.subr.mxu0 0.0
      %651 = vmatpush2.xpose.msra.mxu0 0.0
      %652 = vmatprep.subr.mxu0 0.0
      %653 = vmatpush2.xpose.msra.mxu0 0.0
      %654 = vmatprep.subr.mxu0 0.0
      %655 = vmatpush2.xpose.msra.mxu0 0.0
      %656 = vmatprep.mubr.f32.mxu0 0.0
      %v657 = vand.u32 %v284, 4294901760
      %658 = vmatmul.mubr.f32.gmra.mxu0 %v657
      %v659 = vpop.f32.mrf.mxu0
      %v660 = vadd.f32 %v586, %v659
      %v661 = vpop.f32.mrf.mxu0
      %662 = vdwg.mxu0
      %663 = vmatprep.subr.mxu0 0.0
      %664 = vmatpush1.xpose.msra.mxu0 0.0
      %665 = vmatprep.subr.mxu0 0.0
      %666 = vmatpush1.xpose.msra.mxu0 0.0
      %667 = vmatprep.subr.mxu0 0.0
      %668 = vmatpush1.xpose.msra.mxu0 0.0
      %669 = vmatprep.subr.mxu0 0.0
      %670 = vmatpush1.xpose.msra.mxu0 0.0
      %671 = vmatprep.subr.mxu0 0.0
      %672 = vmatpush1.xpose.msra.mxu0 0.0
      %673 = vmatprep.subr.mxu0 0.0
      %674 = vmatpush1.xpose.msra.mxu0 0.0
      %675 = vmatprep.subr.mxu0 0.0
      %676 = vmatpush1.xpose.msra.mxu0 0.0
      %677 = vmatprep.subr.mxu0 0.0
      %678 = vmatpush1.xpose.msra.mxu0 0.0
      %679 = vmatprep.subr.mxu0 0.0
      %680 = vmatpush1.xpose.msra.mxu0 0.0
      %681 = vmatprep.subr.mxu0 0.0
      %682 = vmatpush1.xpose.msra.mxu0 0.0
      %683 = vmatprep.subr.mxu0 0.0
      %684 = vmatpush1.xpose.msra.mxu0 0.0
      %685 = vmatprep.subr.mxu0 0.0
      %686 = vmatpush1.xpose.msra.mxu0 0.0
      %687 = vmatprep.subr.mxu0 0.0
      %688 = vmatpush1.xpose.msra.mxu0 0.0
      %689 = vmatprep.subr.mxu0 0.0
      %690 = vmatpush1.xpose.msra.mxu0 0.0
      %691 = vmatprep.subr.mxu0 0.0
      %692 = vmatpush1.xpose.msra.mxu0 0.0
      %693 = vmatprep.subr.mxu0 0.0
      %v694 = vand.u32 %v287, 4294901760
      %695 = vmatpush1.xpose.msra.mxu0 %v694
      %696 = vmatprep.subr.mxu0 0.0
      %697 = vmatpush2.xpose.msra.mxu0 0.0
      %698 = vmatprep.subr.mxu0 0.0
      %699 = vmatpush2.xpose.msra.mxu0 0.0
      %700 = vmatprep.subr.mxu0 0.0
      %701 = vmatpush2.xpose.msra.mxu0 0.0
      %702 = vmatprep.subr.mxu0 0.0
      %703 = vmatpush2.xpose.msra.mxu0 0.0
      %704 = vmatprep.subr.mxu0 0.0
      %705 = vmatpush2.xpose.msra.mxu0 0.0
      %706 = vmatprep.subr.mxu0 0.0
      %707 = vmatpush2.xpose.msra.mxu0 0.0
      %708 = vmatprep.subr.mxu0 0.0
      %709 = vmatpush2.xpose.msra.mxu0 0.0
      %710 = vmatprep.subr.mxu0 0.0
      %711 = vmatpush2.xpose.msra.mxu0 0.0
      %712 = vmatprep.subr.mxu0 0.0
      %713 = vmatpush2.xpose.msra.mxu0 0.0
      %714 = vmatprep.subr.mxu0 0.0
      %715 = vmatpush2.xpose.msra.mxu0 0.0
      %716 = vmatprep.subr.mxu0 0.0
      %717 = vmatpush2.xpose.msra.mxu0 0.0
      %718 = vmatprep.subr.mxu0 0.0
      %719 = vmatpush2.xpose.msra.mxu0 0.0
      %720 = vmatprep.subr.mxu0 0.0
      %721 = vmatpush2.xpose.msra.mxu0 0.0
      %722 = vmatprep.subr.mxu0 0.0
      %723 = vmatpush2.xpose.msra.mxu0 0.0
      %724 = vmatprep.subr.mxu0 0.0
      %725 = vmatpush2.xpose.msra.mxu0 0.0
      %726 = vmatprep.subr.mxu0 0.0
      %727 = vmatpush2.xpose.msra.mxu0 0.0
      %728 = vmatprep.mubr.f32.mxu0 0.0
      %v729 = vand.u32 %v284, 4294901760
      %730 = vmatmul.mubr.f32.gmra.mxu0 %v729
      %v731 = vpop.f32.mrf.mxu0
      %v732 = vadd.f32 %v660, %v731
      %v733 = vpop.f32.mrf.mxu0
      %734 = vdwg.mxu0
      %v735 = vld [vmem:[#allocation2] sm:$0xff]
      %v736 = vsel %vm282, %v732, -inf
      %737 = vmax.xlane.f32.xlu0 %v736
      %v738 = vpop.xlane.xlu0 %737
      %v739 = vmax.f32 %v735, %v738
      %v740 = vsub.f32 %v735, %v739
      %v741 = vmul.f32 %v740, 1.442695
      %v742 = vpow.pop %v741
      %744 = vset.pattern.permute.xlu0 0
      %745 = vperm.xlu0 %744, %v739
      %v746 = vpop.permute.xlu0 %745
      %v748 = vsub.f32 %v732, %v746
      %v749 = vmul.f32 %v748, 1.442695
      %v750 = vpow.pop %v749
      %v751 = vld [vmem:[#allocation3] sm:$0xff]
      %v752 = vmul.f32 %v742, %v751
      %v753 = vsel %vm282, %v750, 0.0
      %754 = vadd.xlane.f32.xlu0 %v753
      %v755 = vpop.xlane.xlu0 %754
      %v756 = vadd.f32 %v752, %v755
      %vm757 = vcmask 7168
      %758 = vst.msk [vmem:[#allocation3] sm:$0xff] %vm757, %v756
      %v759 = vld [vmem:[#allocation4] sm:$0xff]
      %761 = vset.pattern.permute.xlu0 0
      %762 = vperm.xlu0 %761, %v742
      %v763 = vpop.permute.xlu0 %762
      %v765 = vmul.f32 %v763, %v759
      %v767 = vsel %vm282, %v750, 0
      %769 = vmatprep.subr.mxu0 0.0
      %770 = vmatpush1.msra.mxu0 0.0
      %771 = vmatprep.subr.mxu0 0.0
      %772 = vmatpush1.msra.mxu0 0.0
      %773 = vmatprep.subr.mxu0 0.0
      %774 = vmatpush1.msra.mxu0 0.0
      %775 = vmatprep.subr.mxu0 0.0
      %776 = vmatpush1.msra.mxu0 0.0
      %777 = vmatprep.subr.mxu0 0.0
      %778 = vmatpush1.msra.mxu0 0.0
      %779 = vmatprep.subr.mxu0 0.0
      %780 = vmatpush1.msra.mxu0 0.0
      %781 = vmatprep.subr.mxu0 0.0
      %782 = vmatpush1.msra.mxu0 0.0
      %783 = vmatprep.subr.mxu0 0.0
      %784 = vmatpush1.msra.mxu0 0.0
      %785 = vmatprep.subr.mxu0 0.0
      %786 = vmatpush1.msra.mxu0 0.0
      %787 = vmatprep.subr.mxu0 0.0
      %788 = vmatpush1.msra.mxu0 0.0
      %789 = vmatprep.subr.mxu0 0.0
      %790 = vmatpush1.msra.mxu0 0.0
      %791 = vmatprep.subr.mxu0 0.0
      %792 = vmatpush1.msra.mxu0 0.0
      %793 = vmatprep.subr.mxu0 0.0
      %794 = vmatpush1.msra.mxu0 0.0
      %795 = vmatprep.subr.mxu0 0.0
      %796 = vmatpush1.msra.mxu0 0.0
      %797 = vmatprep.subr.mxu0 0.0
      %798 = vmatpush1.msra.mxu0 0.0
      %799 = vmatprep.subr.mxu0 0.0
      %v800 = vand.u32 %v281, 4294901760
      %801 = vmatpush1.msra.mxu0 %v800
      %802 = vmatprep.subr.mxu0 0.0
      %803 = vmatpush2.msra.mxu0 0.0
      %804 = vmatprep.subr.mxu0 0.0
      %805 = vmatpush2.msra.mxu0 0.0
      %806 = vmatprep.subr.mxu0 0.0
      %807 = vmatpush2.msra.mxu0 0.0
      %808 = vmatprep.subr.mxu0 0.0
      %809 = vmatpush2.msra.mxu0 0.0
      %810 = vmatprep.subr.mxu0 0.0
      %811 = vmatpush2.msra.mxu0 0.0
      %812 = vmatprep.subr.mxu0 0.0
      %813 = vmatpush2.msra.mxu0 0.0
      %814 = vmatprep.subr.mxu0 0.0
      %815 = vmatpush2.msra.mxu0 0.0
      %816 = vmatprep.subr.mxu0 0.0
      %817 = vmatpush2.msra.mxu0 0.0
      %818 = vmatprep.subr.mxu0 0.0
      %819 = vmatpush2.msra.mxu0 0.0
      %820 = vmatprep.subr.mxu0 0.0
      %821 = vmatpush2.msra.mxu0 0.0
      %822 = vmatprep.subr.mxu0 0.0
      %823 = vmatpush2.msra.mxu0 0.0
      %824 = vmatprep.subr.mxu0 0.0
      %825 = vmatpush2.msra.mxu0 0.0
      %826 = vmatprep.subr.mxu0 0.0
      %827 = vmatpush2.msra.mxu0 0.0
      %828 = vmatprep.subr.mxu0 0.0
      %829 = vmatpush2.msra.mxu0 0.0
      %830 = vmatprep.subr.mxu0 0.0
      %831 = vmatpush2.msra.mxu0 0.0
      %832 = vmatprep.subr.mxu0 0.0
      %833 = vmatpush2.msra.mxu0 0.0
      %834 = vmatprep.mubr.f32.mxu0 0.0
      %v835 = vand.u32 %v767, 4294901760
      %v836 = vsub.f32 %v767, %v835
      %v837 = vand.u32 %v836, 4294901760
      %v838 = vsub.f32 %v836, %v837
      %v839 = vand.u32 %v838, 4294901760
      %840 = vmatmul.mubr.f32.gmra.mxu0 %v839
      %v841 = vpop.f32.mrf.mxu0
      %v842 = vadd.f32 0.0, %v841
      %v843 = vpop.f32.mrf.mxu0
      %844 = vdwg.mxu0
      %845 = vmatprep.subr.mxu0 0.0
      %846 = vmatpush1.msra.mxu0 0.0
      %847 = vmatprep.subr.mxu0 0.0
      %848 = vmatpush1.msra.mxu0 0.0
      %849 = vmatprep.subr.mxu0 0.0
      %850 = vmatpush1.msra.mxu0 0.0
      %851 = vmatprep.subr.mxu0 0.0
      %852 = vmatpush1.msra.mxu0 0.0
      %853 = vmatprep.subr.mxu0 0.0
      %854 = vmatpush1.msra.mxu0 0.0
      %855 = vmatprep.subr.mxu0 0.0
      %856 = vmatpush1.msra.mxu0 0.0
      %857 = vmatprep.subr.mxu0 0.0
      %858 = vmatpush1.msra.mxu0 0.0
      %859 = vmatprep.subr.mxu0 0.0
      %860 = vmatpush1.msra.mxu0 0.0
      %861 = vmatprep.subr.mxu0 0.0
      %862 = vmatpush1.msra.mxu0 0.0
      %863 = vmatprep.subr.mxu0 0.0
      %864 = vmatpush1.msra.mxu0 0.0
      %865 = vmatprep.subr.mxu0 0.0
      %866 = vmatpush1.msra.mxu0 0.0
      %867 = vmatprep.subr.mxu0 0.0
      %868 = vmatpush1.msra.mxu0 0.0
      %869 = vmatprep.subr.mxu0 0.0
      %870 = vmatpush1.msra.mxu0 0.0
      %871 = vmatprep.subr.mxu0 0.0
      %872 = vmatpush1.msra.mxu0 0.0
      %873 = vmatprep.subr.mxu0 0.0
      %874 = vmatpush1.msra.mxu0 0.0
      %875 = vmatprep.subr.mxu0 0.0
      %v876 = vand.u32 %v281, 4294901760
      %v877 = vsub.f32 %v281, %v876
      %v878 = vand.u32 %v877, 4294901760
      %v879 = vsub.f32 %v877, %v878
      %v880 = vand.u32 %v879, 4294901760
      %881 = vmatpush1.msra.mxu0 %v880
      %882 = vmatprep.subr.mxu0 0.0
      %883 = vmatpush2.msra.mxu0 0.0
      %884 = vmatprep.subr.mxu0 0.0
      %885 = vmatpush2.msra.mxu0 0.0
      %886 = vmatprep.subr.mxu0 0.0
      %887 = vmatpush2.msra.mxu0 0.0
      %888 = vmatprep.subr.mxu0 0.0
      %889 = vmatpush2.msra.mxu0 0.0
      %890 = vmatprep.subr.mxu0 0.0
      %891 = vmatpush2.msra.mxu0 0.0
      %892 = vmatprep.subr.mxu0 0.0
      %893 = vmatpush2.msra.mxu0 0.0
      %894 = vmatprep.subr.mxu0 0.0
      %895 = vmatpush2.msra.mxu0 0.0
      %896 = vmatprep.subr.mxu0 0.0
      %897 = vmatpush2.msra.mxu0 0.0
      %898 = vmatprep.subr.mxu0 0.0
      %899 = vmatpush2.msra.mxu0 0.0
      %900 = vmatprep.subr.mxu0 0.0
      %901 = vmatpush2.msra.mxu0 0.0
      %902 = vmatprep.subr.mxu0 0.0
      %903 = vmatpush2.msra.mxu0 0.0
      %904 = vmatprep.subr.mxu0 0.0
      %905 = vmatpush2.msra.mxu0 0.0
      %906 = vmatprep.subr.mxu0 0.0
      %907 = vmatpush2.msra.mxu0 0.0
      %908 = vmatprep.subr.mxu0 0.0
      %909 = vmatpush2.msra.mxu0 0.0
      %910 = vmatprep.subr.mxu0 0.0
      %911 = vmatpush2.msra.mxu0 0.0
      %912 = vmatprep.subr.mxu0 0.0
      %913 = vmatpush2.msra.mxu0 0.0
      %914 = vmatprep.mubr.f32.mxu0 0.0
      %v915 = vand.u32 %v767, 4294901760
      %916 = vmatmul.mubr.f32.gmra.mxu0 %v915
      %v917 = vpop.f32.mrf.mxu0
      %v918 = vadd.f32 %v842, %v917
      %v919 = vpop.f32.mrf.mxu0
      %920 = vdwg.mxu0
      %921 = vmatprep.subr.mxu0 0.0
      %922 = vmatpush1.msra.mxu0 0.0
      %923 = vmatprep.subr.mxu0 0.0
      %924 = vmatpush1.msra.mxu0 0.0
      %925 = vmatprep.subr.mxu0 0.0
      %926 = vmatpush1.msra.mxu0 0.0
      %927 = vmatprep.subr.mxu0 0.0
      %928 = vmatpush1.msra.mxu0 0.0
      %929 = vmatprep.subr.mxu0 0.0
      %930 = vmatpush1.msra.mxu0 0.0
      %931 = vmatprep.subr.mxu0 0.0
      %932 = vmatpush1.msra.mxu0 0.0
      %933 = vmatprep.subr.mxu0 0.0
      %934 = vmatpush1.msra.mxu0 0.0
      %935 = vmatprep.subr.mxu0 0.0
      %936 = vmatpush1.msra.mxu0 0.0
      %937 = vmatprep.subr.mxu0 0.0
      %938 = vmatpush1.msra.mxu0 0.0
      %939 = vmatprep.subr.mxu0 0.0
      %940 = vmatpush1.msra.mxu0 0.0
      %941 = vmatprep.subr.mxu0 0.0
      %942 = vmatpush1.msra.mxu0 0.0
      %943 = vmatprep.subr.mxu0 0.0
      %944 = vmatpush1.msra.mxu0 0.0
      %945 = vmatprep.subr.mxu0 0.0
      %946 = vmatpush1.msra.mxu0 0.0
      %947 = vmatprep.subr.mxu0 0.0
      %948 = vmatpush1.msra.mxu0 0.0
      %949 = vmatprep.subr.mxu0 0.0
      %950 = vmatpush1.msra.mxu0 0.0
      %951 = vmatprep.subr.mxu0 0.0
      %v952 = vand.u32 %v281, 4294901760
      %v953 = vsub.f32 %v281, %v952
      %954 = vmatpush1.msra.mxu0 %v953
      %955 = vmatprep.subr.mxu0 0.0
      %956 = vmatpush2.msra.mxu0 0.0
      %957 = vmatprep.subr.mxu0 0.0
      %958 = vmatpush2.msra.mxu0 0.0
      %959 = vmatprep.subr.mxu0 0.0
      %960 = vmatpush2.msra.mxu0 0.0
      %961 = vmatprep.subr.mxu0 0.0
      %962 = vmatpush2.msra.mxu0 0.0
      %963 = vmatprep.subr.mxu0 0.0
      %964 = vmatpush2.msra.mxu0 0.0
      %965 = vmatprep.subr.mxu0 0.0
      %966 = vmatpush2.msra.mxu0 0.0
      %967 = vmatprep.subr.mxu0 0.0
      %968 = vmatpush2.msra.mxu0 0.0
      %969 = vmatprep.subr.mxu0 0.0
      %970 = vmatpush2.msra.mxu0 0.0
      %971 = vmatprep.subr.mxu0 0.0
      %972 = vmatpush2.msra.mxu0 0.0
      %973 = vmatprep.subr.mxu0 0.0
      %974 = vmatpush2.msra.mxu0 0.0
      %975 = vmatprep.subr.mxu0 0.0
      %976 = vmatpush2.msra.mxu0 0.0
      %977 = vmatprep.subr.mxu0 0.0
      %978 = vmatpush2.msra.mxu0 0.0
      %979 = vmatprep.subr.mxu0 0.0
      %980 = vmatpush2.msra.mxu0 0.0
      %981 = vmatprep.subr.mxu0 0.0
      %982 = vmatpush2.msra.mxu0 0.0
      %983 = vmatprep.subr.mxu0 0.0
      %984 = vmatpush2.msra.mxu0 0.0
      %985 = vmatprep.subr.mxu0 0.0
      %986 = vmatpush2.msra.mxu0 0.0
      %987 = vmatprep.mubr.f32.mxu0 0.0
      %v988 = vand.u32 %v767, 4294901760
      %v989 = vsub.f32 %v767, %v988
      %990 = vmatmul.mubr.f32.gmra.mxu0 %v989
      %v991 = vpop.f32.mrf.mxu0
      %v992 = vadd.f32 %v918, %v991
      %v993 = vpop.f32.mrf.mxu0
      %994 = vdwg.mxu0
      %995 = vmatprep.subr.mxu0 0.0
      %996 = vmatpush1.msra.mxu0 0.0
      %997 = vmatprep.subr.mxu0 0.0
      %998 = vmatpush1.msra.mxu0 0.0
      %999 = vmatprep.subr.mxu0 0.0
      %1000 = vmatpush1.msra.mxu0 0.0
      %1001 = vmatprep.subr.mxu0 0.0
      %1002 = vmatpush1.msra.mxu0 0.0
      %1003 = vmatprep.subr.mxu0 0.0
      %1004 = vmatpush1.msra.mxu0 0.0
      %1005 = vmatprep.subr.mxu0 0.0
      %1006 = vmatpush1.msra.mxu0 0.0
      %1007 = vmatprep.subr.mxu0 0.0
      %1008 = vmatpush1.msra.mxu0 0.0
      %1009 = vmatprep.subr.mxu0 0.0
      %1010 = vmatpush1.msra.mxu0 0.0
      %1011 = vmatprep.subr.mxu0 0.0
      %1012 = vmatpush1.msra.mxu0 0.0
      %1013 = vmatprep.subr.mxu0 0.0
      %1014 = vmatpush1.msra.mxu0 0.0
      %1015 = vmatprep.subr.mxu0 0.0
      %1016 = vmatpush1.msra.mxu0 0.0
      %1017 = vmatprep.subr.mxu0 0.0
      %1018 = vmatpush1.msra.mxu0 0.0
      %1019 = vmatprep.subr.mxu0 0.0
      %1020 = vmatpush1.msra.mxu0 0.0
      %1021 = vmatprep.subr.mxu0 0.0
      %1022 = vmatpush1.msra.mxu0 0.0
      %1023 = vmatprep.subr.mxu0 0.0
      %1024 = vmatpush1.msra.mxu0 0.0
      %1025 = vmatprep.subr.mxu0 0.0
      %v1026 = vand.u32 %v281, 4294901760
      %1027 = vmatpush1.msra.mxu0 %v1026
      %1028 = vmatprep.subr.mxu0 0.0
      %1029 = vmatpush2.msra.mxu0 0.0
      %1030 = vmatprep.subr.mxu0 0.0
      %1031 = vmatpush2.msra.mxu0 0.0
      %1032 = vmatprep.subr.mxu0 0.0
      %1033 = vmatpush2.msra.mxu0 0.0
      %1034 = vmatprep.subr.mxu0 0.0
      %1035 = vmatpush2.msra.mxu0 0.0
      %1036 = vmatprep.subr.mxu0 0.0
      %1037 = vmatpush2.msra.mxu0 0.0
      %1038 = vmatprep.subr.mxu0 0.0
      %1039 = vmatpush2.msra.mxu0 0.0
      %1040 = vmatprep.subr.mxu0 0.0
      %1041 = vmatpush2.msra.mxu0 0.0
      %1042 = vmatprep.subr.mxu0 0.0
      %1043 = vmatpush2.msra.mxu0 0.0
      %1044 = vmatprep.subr.mxu0 0.0
      %1045 = vmatpush2.msra.mxu0 0.0
      %1046 = vmatprep.subr.mxu0 0.0
      %1047 = vmatpush2.msra.mxu0 0.0
      %1048 = vmatprep.subr.mxu0 0.0
      %1049 = vmatpush2.msra.mxu0 0.0
      %1050 = vmatprep.subr.mxu0 0.0
      %1051 = vmatpush2.msra.mxu0 0.0
      %1052 = vmatprep.subr.mxu0 0.0
      %1053 = vmatpush2.msra.mxu0 0.0
      %1054 = vmatprep.subr.mxu0 0.0
      %1055 = vmatpush2.msra.mxu0 0.0
      %1056 = vmatprep.subr.mxu0 0.0
      %1057 = vmatpush2.msra.mxu0 0.0
      %1058 = vmatprep.subr.mxu0 0.0
      %1059 = vmatpush2.msra.mxu0 0.0
      %1060 = vmatprep.mubr.f32.mxu0 0.0
      %v1061 = vand.u32 %v767, 4294901760
      %v1062 = vsub.f32 %v767, %v1061
      %v1063 = vand.u32 %v1062, 4294901760
      %1064 = vmatmul.mubr.f32.gmra.mxu0 %v1063
      %v1065 = vpop.f32.mrf.mxu0
      %v1066 = vadd.f32 %v992, %v1065
      %v1067 = vpop.f32.mrf.mxu0
      %1068 = vdwg.mxu0
      %1069 = vmatprep.subr.mxu0 0.0
      %1070 = vmatpush1.msra.mxu0 0.0
      %1071 = vmatprep.subr.mxu0 0.0
      %1072 = vmatpush1.msra.mxu0 0.0
      %1073 = vmatprep.subr.mxu0 0.0
      %1074 = vmatpush1.msra.mxu0 0.0
      %1075 = vmatprep.subr.mxu0 0.0
      %1076 = vmatpush1.msra.mxu0 0.0
      %1077 = vmatprep.subr.mxu0 0.0
      %1078 = vmatpush1.msra.mxu0 0.0
      %1079 = vmatprep.subr.mxu0 0.0
      %1080 = vmatpush1.msra.mxu0 0.0
      %1081 = vmatprep.subr.mxu0 0.0
      %1082 = vmatpush1.msra.mxu0 0.0
      %1083 = vmatprep.subr.mxu0 0.0
      %1084 = vmatpush1.msra.mxu0 0.0
      %1085 = vmatprep.subr.mxu0 0.0
      %1086 = vmatpush1.msra.mxu0 0.0
      %1087 = vmatprep.subr.mxu0 0.0
      %1088 = vmatpush1.msra.mxu0 0.0
      %1089 = vmatprep.subr.mxu0 0.0
      %1090 = vmatpush1.msra.mxu0 0.0
      %1091 = vmatprep.subr.mxu0 0.0
      %1092 = vmatpush1.msra.mxu0 0.0
      %1093 = vmatprep.subr.mxu0 0.0
      %1094 = vmatpush1.msra.mxu0 0.0
      %1095 = vmatprep.subr.mxu0 0.0
      %1096 = vmatpush1.msra.mxu0 0.0
      %1097 = vmatprep.subr.mxu0 0.0
      %1098 = vmatpush1.msra.mxu0 0.0
      %1099 = vmatprep.subr.mxu0 0.0
      %v1100 = vand.u32 %v281, 4294901760
      %v1101 = vsub.f32 %v281, %v1100
      %v1102 = vand.u32 %v1101, 4294901760
      %1103 = vmatpush1.msra.mxu0 %v1102
      %1104 = vmatprep.subr.mxu0 0.0
      %1105 = vmatpush2.msra.mxu0 0.0
      %1106 = vmatprep.subr.mxu0 0.0
      %1107 = vmatpush2.msra.mxu0 0.0
      %1108 = vmatprep.subr.mxu0 0.0
      %1109 = vmatpush2.msra.mxu0 0.0
      %1110 = vmatprep.subr.mxu0 0.0
      %1111 = vmatpush2.msra.mxu0 0.0
      %1112 = vmatprep.subr.mxu0 0.0
      %1113 = vmatpush2.msra.mxu0 0.0
      %1114 = vmatprep.subr.mxu0 0.0
      %1115 = vmatpush2.msra.mxu0 0.0
      %1116 = vmatprep.subr.mxu0 0.0
      %1117 = vmatpush2.msra.mxu0 0.0
      %1118 = vmatprep.subr.mxu0 0.0
      %1119 = vmatpush2.msra.mxu0 0.0
      %1120 = vmatprep.subr.mxu0 0.0
      %1121 = vmatpush2.msra.mxu0 0.0
      %1122 = vmatprep.subr.mxu0 0.0
      %1123 = vmatpush2.msra.mxu0 0.0
      %1124 = vmatprep.subr.mxu0 0.0
      %1125 = vmatpush2.msra.mxu0 0.0
      %1126 = vmatprep.subr.mxu0 0.0
      %1127 = vmatpush2.msra.mxu0 0.0
      %1128 = vmatprep.subr.mxu0 0.0
      %1129 = vmatpush2.msra.mxu0 0.0
      %1130 = vmatprep.subr.mxu0 0.0
      %1131 = vmatpush2.msra.mxu0 0.0
      %1132 = vmatprep.subr.mxu0 0.0
      %1133 = vmatpush2.msra.mxu0 0.0
      %1134 = vmatprep.subr.mxu0 0.0
      %1135 = vmatpush2.msra.mxu0 0.0
      %1136 = vmatprep.mubr.f32.mxu0 0.0
      %v1137 = vand.u32 %v767, 4294901760
      %1138 = vmatmul.mubr.f32.gmra.mxu0 %v1137
      %v1139 = vpop.f32.mrf.mxu0
      %v1140 = vadd.f32 %v1066, %v1139
      %v1141 = vpop.f32.mrf.mxu0
      %1142 = vdwg.mxu0
      %1143 = vmatprep.subr.mxu0 0.0
      %1144 = vmatpush1.msra.mxu0 0.0
      %1145 = vmatprep.subr.mxu0 0.0
      %1146 = vmatpush1.msra.mxu0 0.0
      %1147 = vmatprep.subr.mxu0 0.0
      %1148 = vmatpush1.msra.mxu0 0.0
      %1149 = vmatprep.subr.mxu0 0.0
      %1150 = vmatpush1.msra.mxu0 0.0
      %1151 = vmatprep.subr.mxu0 0.0
      %1152 = vmatpush1.msra.mxu0 0.0
      %1153 = vmatprep.subr.mxu0 0.0
      %1154 = vmatpush1.msra.mxu0 0.0
      %1155 = vmatprep.subr.mxu0 0.0
      %1156 = vmatpush1.msra.mxu0 0.0
      %1157 = vmatprep.subr.mxu0 0.0
      %1158 = vmatpush1.msra.mxu0 0.0
      %1159 = vmatprep.subr.mxu0 0.0
      %1160 = vmatpush1.msra.mxu0 0.0
      %1161 = vmatprep.subr.mxu0 0.0
      %1162 = vmatpush1.msra.mxu0 0.0
      %1163 = vmatprep.subr.mxu0 0.0
      %1164 = vmatpush1.msra.mxu0 0.0
      %1165 = vmatprep.subr.mxu0 0.0
      %1166 = vmatpush1.msra.mxu0 0.0
      %1167 = vmatprep.subr.mxu0 0.0
      %1168 = vmatpush1.msra.mxu0 0.0
      %1169 = vmatprep.subr.mxu0 0.0
      %1170 = vmatpush1.msra.mxu0 0.0
      %1171 = vmatprep.subr.mxu0 0.0
      %1172 = vmatpush1.msra.mxu0 0.0
      %1173 = vmatprep.subr.mxu0 0.0
      %v1174 = vand.u32 %v281, 4294901760
      %1175 = vmatpush1.msra.mxu0 %v1174
      %1176 = vmatprep.subr.mxu0 0.0
      %1177 = vmatpush2.msra.mxu0 0.0
      %1178 = vmatprep.subr.mxu0 0.0
      %1179 = vmatpush2.msra.mxu0 0.0
      %1180 = vmatprep.subr.mxu0 0.0
      %1181 = vmatpush2.msra.mxu0 0.0
      %1182 = vmatprep.subr.mxu0 0.0
      %1183 = vmatpush2.msra.mxu0 0.0
      %1184 = vmatprep.subr.mxu0 0.0
      %1185 = vmatpush2.msra.mxu0 0.0
      %1186 = vmatprep.subr.mxu0 0.0
      %1187 = vmatpush2.msra.mxu0 0.0
      %1188 = vmatprep.subr.mxu0 0.0
      %1189 = vmatpush2.msra.mxu0 0.0
      %1190 = vmatprep.subr.mxu0 0.0
      %1191 = vmatpush2.msra.mxu0 0.0
      %1192 = vmatprep.subr.mxu0 0.0
      %1193 = vmatpush2.msra.mxu0 0.0
      %1194 = vmatprep.subr.mxu0 0.0
      %1195 = vmatpush2.msra.mxu0 0.0
      %1196 = vmatprep.subr.mxu0 0.0
      %1197 = vmatpush2.msra.mxu0 0.0
      %1198 = vmatprep.subr.mxu0 0.0
      %1199 = vmatpush2.msra.mxu0 0.0
      %1200 = vmatprep.subr.mxu0 0.0
      %1201 = vmatpush2.msra.mxu0 0.0
      %1202 = vmatprep.subr.mxu0 0.0
      %1203 = vmatpush2.msra.mxu0 0.0
      %1204 = vmatprep.subr.mxu0 0.0
      %1205 = vmatpush2.msra.mxu0 0.0
      %1206 = vmatprep.subr.mxu0 0.0
      %1207 = vmatpush2.msra.mxu0 0.0
      %1208 = vmatprep.mubr.f32.mxu0 0.0
      %v1209 = vand.u32 %v767, 4294901760
      %1210 = vmatmul.mubr.f32.gmra.mxu0 %v1209
      %v1211 = vpop.f32.mrf.mxu0
      %v1212 = vadd.f32 %v1140, %v1211
      %v1213 = vpop.f32.mrf.mxu0
      %1214 = vdwg.mxu0
      %v1215 = vadd.f32 %v765, %v1212
      %1216 = vst.msk [vmem:[#allocation4] sm:$0xff] %vm282, %v1215
      %1217 = vst.msk [vmem:[#allocation2] sm:$0xff] %vm757, %v739
      %1218 = vrot.lane.b32.xlu0 %v279, 120
      %v1219 = vpop.permute.xlu0 %1218
      %1220 = vrot.lane.b32.xlu0 %v280, 120
      %v1221 = vpop.permute.xlu0 %1220
      %v1222 = vsel %vm282, %v1219, 0
      %v1224 = vsel %vm282, %v1221, 0
      %1226 = vmatprep.subr.mxu0 0.0
      %1227 = vmatpush1.xpose.msra.mxu0 0.0
      %1228 = vmatprep.subr.mxu0 0.0
      %1229 = vmatpush1.xpose.msra.mxu0 0.0
      %1230 = vmatprep.subr.mxu0 0.0
      %1231 = vmatpush1.xpose.msra.mxu0 0.0
      %1232 = vmatprep.subr.mxu0 0.0
      %1233 = vmatpush1.xpose.msra.mxu0 0.0
      %1234 = vmatprep.subr.mxu0 0.0
      %1235 = vmatpush1.xpose.msra.mxu0 0.0
      %1236 = vmatprep.subr.mxu0 0.0
      %1237 = vmatpush1.xpose.msra.mxu0 0.0
      %1238 = vmatprep.subr.mxu0 0.0
      %1239 = vmatpush1.xpose.msra.mxu0 0.0
      %1240 = vmatprep.subr.mxu0 0.0
      %1241 = vmatpush1.xpose.msra.mxu0 0.0
      %1242 = vmatprep.subr.mxu0 0.0
      %1243 = vmatpush1.xpose.msra.mxu0 0.0
      %1244 = vmatprep.subr.mxu0 0.0
      %1245 = vmatpush1.xpose.msra.mxu0 0.0
      %1246 = vmatprep.subr.mxu0 0.0
      %1247 = vmatpush1.xpose.msra.mxu0 0.0
      %1248 = vmatprep.subr.mxu0 0.0
      %1249 = vmatpush1.xpose.msra.mxu0 0.0
      %1250 = vmatprep.subr.mxu0 0.0
      %1251 = vmatpush1.xpose.msra.mxu0 0.0
      %1252 = vmatprep.subr.mxu0 0.0
      %1253 = vmatpush1.xpose.msra.mxu0 0.0
      %1254 = vmatprep.subr.mxu0 0.0
      %1255 = vmatpush1.xpose.msra.mxu0 0.0
      %1256 = vmatprep.subr.mxu0 0.0
      %v1257 = vand.u32 %v1224, 4294901760
      %1258 = vmatpush1.xpose.msra.mxu0 %v1257
      %1259 = vmatprep.subr.mxu0 0.0
      %1260 = vmatpush2.xpose.msra.mxu0 0.0
      %1261 = vmatprep.subr.mxu0 0.0
      %1262 = vmatpush2.xpose.msra.mxu0 0.0
      %1263 = vmatprep.subr.mxu0 0.0
      %1264 = vmatpush2.xpose.msra.mxu0 0.0
      %1265 = vmatprep.subr.mxu0 0.0
      %1266 = vmatpush2.xpose.msra.mxu0 0.0
      %1267 = vmatprep.subr.mxu0 0.0
      %1268 = vmatpush2.xpose.msra.mxu0 0.0
      %1269 = vmatprep.subr.mxu0 0.0
      %1270 = vmatpush2.xpose.msra.mxu0 0.0
      %1271 = vmatprep.subr.mxu0 0.0
      %1272 = vmatpush2.xpose.msra.mxu0 0.0
      %1273 = vmatprep.subr.mxu0 0.0
      %1274 = vmatpush2.xpose.msra.mxu0 0.0
      %1275 = vmatprep.subr.mxu0 0.0
      %1276 = vmatpush2.xpose.msra.mxu0 0.0
      %1277 = vmatprep.subr.mxu0 0.0
      %1278 = vmatpush2.xpose.msra.mxu0 0.0
      %1279 = vmatprep.subr.mxu0 0.0
      %1280 = vmatpush2.xpose.msra.mxu0 0.0
      %1281 = vmatprep.subr.mxu0 0.0
      %1282 = vmatpush2.xpose.msra.mxu0 0.0
      %1283 = vmatprep.subr.mxu0 0.0
      %1284 = vmatpush2.xpose.msra.mxu0 0.0
      %1285 = vmatprep.subr.mxu0 0.0
      %1286 = vmatpush2.xpose.msra.mxu0 0.0
      %1287 = vmatprep.subr.mxu0 0.0
      %1288 = vmatpush2.xpose.msra.mxu0 0.0
      %1289 = vmatprep.subr.mxu0 0.0
      %1290 = vmatpush2.xpose.msra.mxu0 0.0
      %1291 = vmatprep.mubr.f32.mxu0 0.0
      %v1292 = vand.u32 %v1222, 4294901760
      %v1293 = vsub.f32 %v1222, %v1292
      %v1294 = vand.u32 %v1293, 4294901760
      %v1295 = vsub.f32 %v1293, %v1294
      %v1296 = vand.u32 %v1295, 4294901760
      %1297 = vmatmul.mubr.f32.gmra.mxu0 %v1296
      %v1298 = vpop.f32.mrf.mxu0
      %v1299 = vadd.f32 0.0, %v1298
      %v1300 = vpop.f32.mrf.mxu0
      %1301 = vdwg.mxu0
      %1302 = vmatprep.subr.mxu0 0.0
      %1303 = vmatpush1.xpose.msra.mxu0 0.0
      %1304 = vmatprep.subr.mxu0 0.0
      %1305 = vmatpush1.xpose.msra.mxu0 0.0
      %1306 = vmatprep.subr.mxu0 0.0
      %1307 = vmatpush1.xpose.msra.mxu0 0.0
      %1308 = vmatprep.subr.mxu0 0.0
      %1309 = vmatpush1.xpose.msra.mxu0 0.0
      %1310 = vmatprep.subr.mxu0 0.0
      %1311 = vmatpush1.xpose.msra.mxu0 0.0
      %1312 = vmatprep.subr.mxu0 0.0
      %1313 = vmatpush1.xpose.msra.mxu0 0.0
      %1314 = vmatprep.subr.mxu0 0.0
      %1315 = vmatpush1.xpose.msra.mxu0 0.0
      %1316 = vmatprep.subr.mxu0 0.0
      %1317 = vmatpush1.xpose.msra.mxu0 0.0
      %1318 = vmatprep.subr.mxu0 0.0
      %1319 = vmatpush1.xpose.msra.mxu0 0.0
      %1320 = vmatprep.subr.mxu0 0.0
      %1321 = vmatpush1.xpose.msra.mxu0 0.0
      %1322 = vmatprep.subr.mxu0 0.0
      %1323 = vmatpush1.xpose.msra.mxu0 0.0
      %1324 = vmatprep.subr.mxu0 0.0
      %1325 = vmatpush1.xpose.msra.mxu0 0.0
      %1326 = vmatprep.subr.mxu0 0.0
      %1327 = vmatpush1.xpose.msra.mxu0 0.0
      %1328 = vmatprep.subr.mxu0 0.0
      %1329 = vmatpush1.xpose.msra.mxu0 0.0
      %1330 = vmatprep.subr.mxu0 0.0
      %1331 = vmatpush1.xpose.msra.mxu0 0.0
      %1332 = vmatprep.subr.mxu0 0.0
      %v1333 = vand.u32 %v1224, 4294901760
      %v1334 = vsub.f32 %v1224, %v1333
      %v1335 = vand.u32 %v1334, 4294901760
      %v1336 = vsub.f32 %v1334, %v1335
      %v1337 = vand.u32 %v1336, 4294901760
      %1338 = vmatpush1.xpose.msra.mxu0 %v1337
      %1339 = vmatprep.subr.mxu0 0.0
      %1340 = vmatpush2.xpose.msra.mxu0 0.0
      %1341 = vmatprep.subr.mxu0 0.0
      %1342 = vmatpush2.xpose.msra.mxu0 0.0
      %1343 = vmatprep.subr.mxu0 0.0
      %1344 = vmatpush2.xpose.msra.mxu0 0.0
      %1345 = vmatprep.subr.mxu0 0.0
      %1346 = vmatpush2.xpose.msra.mxu0 0.0
      %1347 = vmatprep.subr.mxu0 0.0
      %1348 = vmatpush2.xpose.msra.mxu0 0.0
      %1349 = vmatprep.subr.mxu0 0.0
      %1350 = vmatpush2.xpose.msra.mxu0 0.0
      %1351 = vmatprep.subr.mxu0 0.0
      %1352 = vmatpush2.xpose.msra.mxu0 0.0
      %1353 = vmatprep.subr.mxu0 0.0
      %1354 = vmatpush2.xpose.msra.mxu0 0.0
      %1355 = vmatprep.subr.mxu0 0.0
      %1356 = vmatpush2.xpose.msra.mxu0 0.0
      %1357 = vmatprep.subr.mxu0 0.0
      %1358 = vmatpush2.xpose.msra.mxu0 0.0
      %1359 = vmatprep.subr.mxu0 0.0
      %1360 = vmatpush2.xpose.msra.mxu0 0.0
      %1361 = vmatprep.subr.mxu0 0.0
      %1362 = vmatpush2.xpose.msra.mxu0 0.0
      %1363 = vmatprep.subr.mxu0 0.0
      %1364 = vmatpush2.xpose.msra.mxu0 0.0
      %1365 = vmatprep.subr.mxu0 0.0
      %1366 = vmatpush2.xpose.msra.mxu0 0.0
      %1367 = vmatprep.subr.mxu0 0.0
      %1368 = vmatpush2.xpose.msra.mxu0 0.0
      %1369 = vmatprep.subr.mxu0 0.0
      %1370 = vmatpush2.xpose.msra.mxu0 0.0
      %1371 = vmatprep.mubr.f32.mxu0 0.0
      %v1372 = vand.u32 %v1222, 4294901760
      %1373 = vmatmul.mubr.f32.gmra.mxu0 %v1372
      %v1374 = vpop.f32.mrf.mxu0
      %v1375 = vadd.f32 %v1299, %v1374
      %v1376 = vpop.f32.mrf.mxu0
      %1377 = vdwg.mxu0
      %1378 = vmatprep.subr.mxu0 0.0
      %1379 = vmatpush1.xpose.msra.mxu0 0.0
      %1380 = vmatprep.subr.mxu0 0.0
      %1381 = vmatpush1.xpose.msra.mxu0 0.0
      %1382 = vmatprep.subr.mxu0 0.0
      %1383 = vmatpush1.xpose.msra.mxu0 0.0
      %1384 = vmatprep.subr.mxu0 0.0
      %1385 = vmatpush1.xpose.msra.mxu0 0.0
      %1386 = vmatprep.subr.mxu0 0.0
      %1387 = vmatpush1.xpose.msra.mxu0 0.0
      %1388 = vmatprep.subr.mxu0 0.0
      %1389 = vmatpush1.xpose.msra.mxu0 0.0
      %1390 = vmatprep.subr.mxu0 0.0
      %1391 = vmatpush1.xpose.msra.mxu0 0.0
      %1392 = vmatprep.subr.mxu0 0.0
      %1393 = vmatpush1.xpose.msra.mxu0 0.0
      %1394 = vmatprep.subr.mxu0 0.0
      %1395 = vmatpush1.xpose.msra.mxu0 0.0
      %1396 = vmatprep.subr.mxu0 0.0
      %1397 = vmatpush1.xpose.msra.mxu0 0.0
      %1398 = vmatprep.subr.mxu0 0.0
      %1399 = vmatpush1.xpose.msra.mxu0 0.0
      %1400 = vmatprep.subr.mxu0 0.0
      %1401 = vmatpush1.xpose.msra.mxu0 0.0
      %1402 = vmatprep.subr.mxu0 0.0
      %1403 = vmatpush1.xpose.msra.mxu0 0.0
      %1404 = vmatprep.subr.mxu0 0.0
      %1405 = vmatpush1.xpose.msra.mxu0 0.0
      %1406 = vmatprep.subr.mxu0 0.0
      %1407 = vmatpush1.xpose.msra.mxu0 0.0
      %1408 = vmatprep.subr.mxu0 0.0
      %v1409 = vand.u32 %v1224, 4294901760
      %v1410 = vsub.f32 %v1224, %v1409
      %1411 = vmatpush1.xpose.msra.mxu0 %v1410
      %1412 = vmatprep.subr.mxu0 0.0
      %1413 = vmatpush2.xpose.msra.mxu0 0.0
      %1414 = vmatprep.subr.mxu0 0.0
      %1415 = vmatpush2.xpose.msra.mxu0 0.0
      %1416 = vmatprep.subr.mxu0 0.0
      %1417 = vmatpush2.xpose.msra.mxu0 0.0
      %1418 = vmatprep.subr.mxu0 0.0
      %1419 = vmatpush2.xpose.msra.mxu0 0.0
      %1420 = vmatprep.subr.mxu0 0.0
      %1421 = vmatpush2.xpose.msra.mxu0 0.0
      %1422 = vmatprep.subr.mxu0 0.0
      %1423 = vmatpush2.xpose.msra.mxu0 0.0
      %1424 = vmatprep.subr.mxu0 0.0
      %1425 = vmatpush2.xpose.msra.mxu0 0.0
      %1426 = vmatprep.subr.mxu0 0.0
      %1427 = vmatpush2.xpose.msra.mxu0 0.0
      %1428 = vmatprep.subr.mxu0 0.0
      %1429 = vmatpush2.xpose.msra.mxu0 0.0
      %1430 = vmatprep.subr.mxu0 0.0
      %1431 = vmatpush2.xpose.msra.mxu0 0.0
      %1432 = vmatprep.subr.mxu0 0.0
      %1433 = vmatpush2.xpose.msra.mxu0 0.0
      %1434 = vmatprep.subr.mxu0 0.0
      %1435 = vmatpush2.xpose.msra.mxu0 0.0
      %1436 = vmatprep.subr.mxu0 0.0
      %1437 = vmatpush2.xpose.msra.mxu0 0.0
      %1438 = vmatprep.subr.mxu0 0.0
      %1439 = vmatpush2.xpose.msra.mxu0 0.0
      %1440 = vmatprep.subr.mxu0 0.0
      %1441 = vmatpush2.xpose.msra.mxu0 0.0
      %1442 = vmatprep.subr.mxu0 0.0
      %1443 = vmatpush2.xpose.msra.mxu0 0.0
      %1444 = vmatprep.mubr.f32.mxu0 0.0
      %v1445 = vand.u32 %v1222, 4294901760
      %v1446 = vsub.f32 %v1222, %v1445
      %1447 = vmatmul.mubr.f32.gmra.mxu0 %v1446
      %v1448 = vpop.f32.mrf.mxu0
      %v1449 = vadd.f32 %v1375, %v1448
      %v1450 = vpop.f32.mrf.mxu0
      %1451 = vdwg.mxu0
      %1452 = vmatprep.subr.mxu0 0.0
      %1453 = vmatpush1.xpose.msra.mxu0 0.0
      %1454 = vmatprep.subr.mxu0 0.0
      %1455 = vmatpush1.xpose.msra.mxu0 0.0
      %1456 = vmatprep.subr.mxu0 0.0
      %1457 = vmatpush1.xpose.msra.mxu0 0.0
      %1458 = vmatprep.subr.mxu0 0.0
      %1459 = vmatpush1.xpose.msra.mxu0 0.0
      %1460 = vmatprep.subr.mxu0 0.0
      %1461 = vmatpush1.xpose.msra.mxu0 0.0
      %1462 = vmatprep.subr.mxu0 0.0
      %1463 = vmatpush1.xpose.msra.mxu0 0.0
      %1464 = vmatprep.subr.mxu0 0.0
      %1465 = vmatpush1.xpose.msra.mxu0 0.0
      %1466 = vmatprep.subr.mxu0 0.0
      %1467 = vmatpush1.xpose.msra.mxu0 0.0
      %1468 = vmatprep.subr.mxu0 0.0
      %1469 = vmatpush1.xpose.msra.mxu0 0.0
      %1470 = vmatprep.subr.mxu0 0.0
      %1471 = vmatpush1.xpose.msra.mxu0 0.0
      %1472 = vmatprep.subr.mxu0 0.0
      %1473 = vmatpush1.xpose.msra.mxu0 0.0
      %1474 = vmatprep.subr.mxu0 0.0
      %1475 = vmatpush1.xpose.msra.mxu0 0.0
      %1476 = vmatprep.subr.mxu0 0.0
      %1477 = vmatpush1.xpose.msra.mxu0 0.0
      %1478 = vmatprep.subr.mxu0 0.0
      %1479 = vmatpush1.xpose.msra.mxu0 0.0
      %1480 = vmatprep.subr.mxu0 0.0
      %1481 = vmatpush1.xpose.msra.mxu0 0.0
      %1482 = vmatprep.subr.mxu0 0.0
      %v1483 = vand.u32 %v1224, 4294901760
      %1484 = vmatpush1.xpose.msra.mxu0 %v1483
      %1485 = vmatprep.subr.mxu0 0.0
      %1486 = vmatpush2.xpose.msra.mxu0 0.0
      %1487 = vmatprep.subr.mxu0 0.0
      %1488 = vmatpush2.xpose.msra.mxu0 0.0
      %1489 = vmatprep.subr.mxu0 0.0
      %1490 = vmatpush2.xpose.msra.mxu0 0.0
      %1491 = vmatprep.subr.mxu0 0.0
      %1492 = vmatpush2.xpose.msra.mxu0 0.0
      %1493 = vmatprep.subr.mxu0 0.0
      %1494 = vmatpush2.xpose.msra.mxu0 0.0
      %1495 = vmatprep.subr.mxu0 0.0
      %1496 = vmatpush2.xpose.msra.mxu0 0.0
      %1497 = vmatprep.subr.mxu0 0.0
      %1498 = vmatpush2.xpose.msra.mxu0 0.0
      %1499 = vmatprep.subr.mxu0 0.0
      %1500 = vmatpush2.xpose.msra.mxu0 0.0
      %1501 = vmatprep.subr.mxu0 0.0
      %1502 = vmatpush2.xpose.msra.mxu0 0.0
      %1503 = vmatprep.subr.mxu0 0.0
      %1504 = vmatpush2.xpose.msra.mxu0 0.0
      %1505 = vmatprep.subr.mxu0 0.0
      %1506 = vmatpush2.xpose.msra.mxu0 0.0
      %1507 = vmatprep.subr.mxu0 0.0
      %1508 = vmatpush2.xpose.msra.mxu0 0.0
      %1509 = vmatprep.subr.mxu0 0.0
      %1510 = vmatpush2.xpose.msra.mxu0 0.0
      %1511 = vmatprep.subr.mxu0 0.0
      %1512 = vmatpush2.xpose.msra.mxu0 0.0
      %1513 = vmatprep.subr.mxu0 0.0
      %1514 = vmatpush2.xpose.msra.mxu0 0.0
      %1515 = vmatprep.subr.mxu0 0.0
      %1516 = vmatpush2.xpose.msra.mxu0 0.0
      %1517 = vmatprep.mubr.f32.mxu0 0.0
      %v1518 = vand.u32 %v1222, 4294901760
      %v1519 = vsub.f32 %v1222, %v1518
      %v1520 = vand.u32 %v1519, 4294901760
      %1521 = vmatmul.mubr.f32.gmra.mxu0 %v1520
      %v1522 = vpop.f32.mrf.mxu0
      %v1523 = vadd.f32 %v1449, %v1522
      %v1524 = vpop.f32.mrf.mxu0
      %1525 = vdwg.mxu0
      %1526 = vmatprep.subr.mxu0 0.0
      %1527 = vmatpush1.xpose.msra.mxu0 0.0
      %1528 = vmatprep.subr.mxu0 0.0
      %1529 = vmatpush1.xpose.msra.mxu0 0.0
      %1530 = vmatprep.subr.mxu0 0.0
      %1531 = vmatpush1.xpose.msra.mxu0 0.0
      %1532 = vmatprep.subr.mxu0 0.0
      %1533 = vmatpush1.xpose.msra.mxu0 0.0
      %1534 = vmatprep.subr.mxu0 0.0
      %1535 = vmatpush1.xpose.msra.mxu0 0.0
      %1536 = vmatprep.subr.mxu0 0.0
      %1537 = vmatpush1.xpose.msra.mxu0 0.0
      %1538 = vmatprep.subr.mxu0 0.0
      %1539 = vmatpush1.xpose.msra.mxu0 0.0
      %1540 = vmatprep.subr.mxu0 0.0
      %1541 = vmatpush1.xpose.msra.mxu0 0.0
      %1542 = vmatprep.subr.mxu0 0.0
      %1543 = vmatpush1.xpose.msra.mxu0 0.0
      %1544 = vmatprep.subr.mxu0 0.0
      %1545 = vmatpush1.xpose.msra.mxu0 0.0
      %1546 = vmatprep.subr.mxu0 0.0
      %1547 = vmatpush1.xpose.msra.mxu0 0.0
      %1548 = vmatprep.subr.mxu0 0.0
      %1549 = vmatpush1.xpose.msra.mxu0 0.0
      %1550 = vmatprep.subr.mxu0 0.0
      %1551 = vmatpush1.xpose.msra.mxu0 0.0
      %1552 = vmatprep.subr.mxu0 0.0
      %1553 = vmatpush1.xpose.msra.mxu0 0.0
      %1554 = vmatprep.subr.mxu0 0.0
      %1555 = vmatpush1.xpose.msra.mxu0 0.0
      %1556 = vmatprep.subr.mxu0 0.0
      %v1557 = vand.u32 %v1224, 4294901760
      %v1558 = vsub.f32 %v1224, %v1557
      %v1559 = vand.u32 %v1558, 4294901760
      %1560 = vmatpush1.xpose.msra.mxu0 %v1559
      %1561 = vmatprep.subr.mxu0 0.0
      %1562 = vmatpush2.xpose.msra.mxu0 0.0
      %1563 = vmatprep.subr.mxu0 0.0
      %1564 = vmatpush2.xpose.msra.mxu0 0.0
      %1565 = vmatprep.subr.mxu0 0.0
      %1566 = vmatpush2.xpose.msra.mxu0 0.0
      %1567 = vmatprep.subr.mxu0 0.0
      %1568 = vmatpush2.xpose.msra.mxu0 0.0
      %1569 = vmatprep.subr.mxu0 0.0
      %1570 = vmatpush2.xpose.msra.mxu0 0.0
      %1571 = vmatprep.subr.mxu0 0.0
      %1572 = vmatpush2.xpose.msra.mxu0 0.0
      %1573 = vmatprep.subr.mxu0 0.0
      %1574 = vmatpush2.xpose.msra.mxu0 0.0
      %1575 = vmatprep.subr.mxu0 0.0
      %1576 = vmatpush2.xpose.msra.mxu0 0.0
      %1577 = vmatprep.subr.mxu0 0.0
      %1578 = vmatpush2.xpose.msra.mxu0 0.0
      %1579 = vmatprep.subr.mxu0 0.0
      %1580 = vmatpush2.xpose.msra.mxu0 0.0
      %1581 = vmatprep.subr.mxu0 0.0
      %1582 = vmatpush2.xpose.msra.mxu0 0.0
      %1583 = vmatprep.subr.mxu0 0.0
      %1584 = vmatpush2.xpose.msra.mxu0 0.0
      %1585 = vmatprep.subr.mxu0 0.0
      %1586 = vmatpush2.xpose.msra.mxu0 0.0
      %1587 = vmatprep.subr.mxu0 0.0
      %1588 = vmatpush2.xpose.msra.mxu0 0.0
      %1589 = vmatprep.subr.mxu0 0.0
      %1590 = vmatpush2.xpose.msra.mxu0 0.0
      %1591 = vmatprep.subr.mxu0 0.0
      %1592 = vmatpush2.xpose.msra.mxu0 0.0
      %1593 = vmatprep.mubr.f32.mxu0 0.0
      %v1594 = vand.u32 %v1222, 4294901760
      %1595 = vmatmul.mubr.f32.gmra.mxu0 %v1594
      %v1596 = vpop.f32.mrf.mxu0
      %v1597 = vadd.f32 %v1523, %v1596
      %v1598 = vpop.f32.mrf.mxu0
      %1599 = vdwg.mxu0
      %1600 = vmatprep.subr.mxu0 0.0
      %1601 = vmatpush1.xpose.msra.mxu0 0.0
      %1602 = vmatprep.subr.mxu0 0.0
      %1603 = vmatpush1.xpose.msra.mxu0 0.0
      %1604 = vmatprep.subr.mxu0 0.0
      %1605 = vmatpush1.xpose.msra.mxu0 0.0
      %1606 = vmatprep.subr.mxu0 0.0
      %1607 = vmatpush1.xpose.msra.mxu0 0.0
      %1608 = vmatprep.subr.mxu0 0.0
      %1609 = vmatpush1.xpose.msra.mxu0 0.0
      %1610 = vmatprep.subr.mxu0 0.0
      %1611 = vmatpush1.xpose.msra.mxu0 0.0
      %1612 = vmatprep.subr.mxu0 0.0
      %1613 = vmatpush1.xpose.msra.mxu0 0.0
      %1614 = vmatprep.subr.mxu0 0.0
      %1615 = vmatpush1.xpose.msra.mxu0 0.0
      %1616 = vmatprep.subr.mxu0 0.0
      %1617 = vmatpush1.xpose.msra.mxu0 0.0
      %1618 = vmatprep.subr.mxu0 0.0
      %1619 = vmatpush1.xpose.msra.mxu0 0.0
      %1620 = vmatprep.subr.mxu0 0.0
      %1621 = vmatpush1.xpose.msra.mxu0 0.0
      %1622 = vmatprep.subr.mxu0 0.0
      %1623 = vmatpush1.xpose.msra.mxu0 0.0
      %1624 = vmatprep.subr.mxu0 0.0
      %1625 = vmatpush1.xpose.msra.mxu0 0.0
      %1626 = vmatprep.subr.mxu0 0.0
      %1627 = vmatpush1.xpose.msra.mxu0 0.0
      %1628 = vmatprep.subr.mxu0 0.0
      %1629 = vmatpush1.xpose.msra.mxu0 0.0
      %1630 = vmatprep.subr.mxu0 0.0
      %v1631 = vand.u32 %v1224, 4294901760
      %1632 = vmatpush1.xpose.msra.mxu0 %v1631
      %1633 = vmatprep.subr.mxu0 0.0
      %1634 = vmatpush2.xpose.msra.mxu0 0.0
      %1635 = vmatprep.subr.mxu0 0.0
      %1636 = vmatpush2.xpose.msra.mxu0 0.0
      %1637 = vmatprep.subr.mxu0 0.0
      %1638 = vmatpush2.xpose.msra.mxu0 0.0
      %1639 = vmatprep.subr.mxu0 0.0
      %1640 = vmatpush2.xpose.msra.mxu0 0.0
      %1641 = vmatprep.subr.mxu0 0.0
      %1642 = vmatpush2.xpose.msra.mxu0 0.0
      %1643 = vmatprep.subr.mxu0 0.0
      %1644 = vmatpush2.xpose.msra.mxu0 0.0
      %1645 = vmatprep.subr.mxu0 0.0
      %1646 = vmatpush2.xpose.msra.mxu0 0.0
      %1647 = vmatprep.subr.mxu0 0.0
      %1648 = vmatpush2.xpose.msra.mxu0 0.0
      %1649 = vmatprep.subr.mxu0 0.0
      %1650 = vmatpush2.xpose.msra.mxu0 0.0
      %1651 = vmatprep.subr.mxu0 0.0
      %1652 = vmatpush2.xpose.msra.mxu0 0.0
      %1653 = vmatprep.subr.mxu0 0.0
      %1654 = vmatpush2.xpose.msra.mxu0 0.0
      %1655 = vmatprep.subr.mxu0 0.0
      %1656 = vmatpush2.xpose.msra.mxu0 0.0
      %1657 = vmatprep.subr.mxu0 0.0
      %1658 = vmatpush2.xpose.msra.mxu0 0.0
      %1659 = vmatprep.subr.mxu0 0.0
      %1660 = vmatpush2.xpose.msra.mxu0 0.0
      %1661 = vmatprep.subr.mxu0 0.0
      %1662 = vmatpush2.xpose.msra.mxu0 0.0
      %1663 = vmatprep.subr.mxu0 0.0
      %1664 = vmatpush2.xpose.msra.mxu0 0.0
      %1665 = vmatprep.mubr.f32.mxu0 0.0
      %v1666 = vand.u32 %v1222, 4294901760
      %1667 = vmatmul.mubr.f32.gmra.mxu0 %v1666
      %v1668 = vpop.f32.mrf.mxu0
      %v1669 = vadd.f32 %v1597, %v1668
      %v1670 = vpop.f32.mrf.mxu0
      %1671 = vdwg.mxu0
      %s1672 = scalar_lea.vmem [#allocation2], 8
      %v1673 = vld [vmem:[%s1672] sm:$0xff]
      %v1674 = vsel %vm282, %v1669, -inf
      %1675 = vmax.xlane.f32.xlu0 %v1674
      %v1676 = vpop.xlane.xlu0 %1675
      %v1677 = vmax.f32 %v1673, %v1676
      %v1678 = vsub.f32 %v1673, %v1677
      %v1679 = vmul.f32 %v1678, 1.442695
      %v1680 = vpow.pop %v1679
      %1682 = vset.pattern.permute.xlu0 0
      %1683 = vperm.xlu0 %1682, %v1677
      %v1684 = vpop.permute.xlu0 %1683
      %v1686 = vsub.f32 %v1669, %v1684
      %v1687 = vmul.f32 %v1686, 1.442695
      %v1688 = vpow.pop %v1687
      %s1689 = scalar_lea.vmem [#allocation3], 8
      %v1690 = vld [vmem:[%s1689] sm:$0xff]
      %v1691 = vmul.f32 %v1680, %v1690
      %v1692 = vsel %vm282, %v1688, 0.0
      %1693 = vadd.xlane.f32.xlu0 %v1692
      %v1694 = vpop.xlane.xlu0 %1693
      %v1695 = vadd.f32 %v1691, %v1694
      %1696 = vst.msk [vmem:[%s1689] sm:$0xff] %vm757, %v1695
      %s1697 = scalar_lea.vmem [#allocation4], 8
      %v1698 = vld [vmem:[%s1697] sm:$0xff]
      %1700 = vset.pattern.permute.xlu0 0
      %1701 = vperm.xlu0 %1700, %v1680
      %v1702 = vpop.permute.xlu0 %1701
      %v1704 = vmul.f32 %v1702, %v1698
      %1706 = vrot.lane.b32.xlu0 %v281, 120
      %v1707 = vpop.permute.xlu0 %1706
      %v1710 = vsel %vm282, %v1688, 0
      %1712 = vmatprep.subr.mxu0 0.0
      %1713 = vmatpush1.msra.mxu0 0.0
      %1714 = vmatprep.subr.mxu0 0.0
      %1715 = vmatpush1.msra.mxu0 0.0
      %1716 = vmatprep.subr.mxu0 0.0
      %1717 = vmatpush1.msra.mxu0 0.0
      %1718 = vmatprep.subr.mxu0 0.0
      %1719 = vmatpush1.msra.mxu0 0.0
      %1720 = vmatprep.subr.mxu0 0.0
      %1721 = vmatpush1.msra.mxu0 0.0
      %1722 = vmatprep.subr.mxu0 0.0
      %1723 = vmatpush1.msra.mxu0 0.0
      %1724 = vmatprep.subr.mxu0 0.0
      %1725 = vmatpush1.msra.mxu0 0.0
      %1726 = vmatprep.subr.mxu0 0.0
      %1727 = vmatpush1.msra.mxu0 0.0
      %1728 = vmatprep.subr.mxu0 0.0
      %1729 = vmatpush1.msra.mxu0 0.0
      %1730 = vmatprep.subr.mxu0 0.0
      %1731 = vmatpush1.msra.mxu0 0.0
      %1732 = vmatprep.subr.mxu0 0.0
      %1733 = vmatpush1.msra.mxu0 0.0
      %1734 = vmatprep.subr.mxu0 0.0
      %1735 = vmatpush1.msra.mxu0 0.0
      %1736 = vmatprep.subr.mxu0 0.0
      %1737 = vmatpush1.msra.mxu0 0.0
      %1738 = vmatprep.subr.mxu0 0.0
      %1739 = vmatpush1.msra.mxu0 0.0
      %1740 = vmatprep.subr.mxu0 0.0
      %1741 = vmatpush1.msra.mxu0 0.0
      %1742 = vmatprep.subr.mxu0 0.0
      %v1743 = vand.u32 %v1707, 4294901760
      %1744 = vmatpush1.msra.mxu0 %v1743
      %1745 = vmatprep.subr.mxu0 0.0
      %1746 = vmatpush2.msra.mxu0 0.0
      %1747 = vmatprep.subr.mxu0 0.0
      %1748 = vmatpush2.msra.mxu0 0.0
      %1749 = vmatprep.subr.mxu0 0.0
      %1750 = vmatpush2.msra.mxu0 0.0
      %1751 = vmatprep.subr.mxu0 0.0
      %1752 = vmatpush2.msra.mxu0 0.0
      %1753 = vmatprep.subr.mxu0 0.0
      %1754 = vmatpush2.msra.mxu0 0.0
      %1755 = vmatprep.subr.mxu0 0.0
      %1756 = vmatpush2.msra.mxu0 0.0
      %1757 = vmatprep.subr.mxu0 0.0
      %1758 = vmatpush2.msra.mxu0 0.0
      %1759 = vmatprep.subr.mxu0 0.0
      %1760 = vmatpush2.msra.mxu0 0.0
      %1761 = vmatprep.subr.mxu0 0.0
      %1762 = vmatpush2.msra.mxu0 0.0
      %1763 = vmatprep.subr.mxu0 0.0
      %1764 = vmatpush2.msra.mxu0 0.0
      %1765 = vmatprep.subr.mxu0 0.0
      %1766 = vmatpush2.msra.mxu0 0.0
      %1767 = vmatprep.subr.mxu0 0.0
      %1768 = vmatpush2.msra.mxu0 0.0
      %1769 = vmatprep.subr.mxu0 0.0
      %1770 = vmatpush2.msra.mxu0 0.0
      %1771 = vmatprep.subr.mxu0 0.0
      %1772 = vmatpush2.msra.mxu0 0.0
      %1773 = vmatprep.subr.mxu0 0.0
      %1774 = vmatpush2.msra.mxu0 0.0
      %1775 = vmatprep.subr.mxu0 0.0
      %1776 = vmatpush2.msra.mxu0 0.0
      %1777 = vmatprep.mubr.f32.mxu0 0.0
      %v1778 = vand.u32 %v1710, 4294901760
      %v1779 = vsub.f32 %v1710, %v1778
      %v1780 = vand.u32 %v1779, 4294901760
      %v1781 = vsub.f32 %v1779, %v1780
      %v1782 = vand.u32 %v1781, 4294901760
      %1783 = vmatmul.mubr.f32.gmra.mxu0 %v1782
      %v1784 = vpop.f32.mrf.mxu0
      %v1785 = vadd.f32 0.0, %v1784
      %v1786 = vpop.f32.mrf.mxu0
      %1787 = vdwg.mxu0
      %1788 = vmatprep.subr.mxu0 0.0
      %1789 = vmatpush1.msra.mxu0 0.0
      %1790 = vmatprep.subr.mxu0 0.0
      %1791 = vmatpush1.msra.mxu0 0.0
      %1792 = vmatprep.subr.mxu0 0.0
      %1793 = vmatpush1.msra.mxu0 0.0
      %1794 = vmatprep.subr.mxu0 0.0
      %1795 = vmatpush1.msra.mxu0 0.0
      %1796 = vmatprep.subr.mxu0 0.0
      %1797 = vmatpush1.msra.mxu0 0.0
      %1798 = vmatprep.subr.mxu0 0.0
      %1799 = vmatpush1.msra.mxu0 0.0
      %1800 = vmatprep.subr.mxu0 0.0
      %1801 = vmatpush1.msra.mxu0 0.0
      %1802 = vmatprep.subr.mxu0 0.0
      %1803 = vmatpush1.msra.mxu0 0.0
      %1804 = vmatprep.subr.mxu0 0.0
      %1805 = vmatpush1.msra.mxu0 0.0
      %1806 = vmatprep.subr.mxu0 0.0
      %1807 = vmatpush1.msra.mxu0 0.0
      %1808 = vmatprep.subr.mxu0 0.0
      %1809 = vmatpush1.msra.mxu0 0.0
      %1810 = vmatprep.subr.mxu0 0.0
      %1811 = vmatpush1.msra.mxu0 0.0
      %1812 = vmatprep.subr.mxu0 0.0
      %1813 = vmatpush1.msra.mxu0 0.0
      %1814 = vmatprep.subr.mxu0 0.0
      %1815 = vmatpush1.msra.mxu0 0.0
      %1816 = vmatprep.subr.mxu0 0.0
      %1817 = vmatpush1.msra.mxu0 0.0
      %1818 = vmatprep.subr.mxu0 0.0
      %v1819 = vand.u32 %v1707, 4294901760
      %v1820 = vsub.f32 %v1707, %v1819
      %v1821 = vand.u32 %v1820, 4294901760
      %v1822 = vsub.f32 %v1820, %v1821
      %v1823 = vand.u32 %v1822, 4294901760
      %1824 = vmatpush1.msra.mxu0 %v1823
      %1825 = vmatprep.subr.mxu0 0.0
      %1826 = vmatpush2.msra.mxu0 0.0
      %1827 = vmatprep.subr.mxu0 0.0
      %1828 = vmatpush2.msra.mxu0 0.0
      %1829 = vmatprep.subr.mxu0 0.0
      %1830 = vmatpush2.msra.mxu0 0.0
      %1831 = vmatprep.subr.mxu0 0.0
      %1832 = vmatpush2.msra.mxu0 0.0
      %1833 = vmatprep.subr.mxu0 0.0
      %1834 = vmatpush2.msra.mxu0 0.0
      %1835 = vmatprep.subr.mxu0 0.0
      %1836 = vmatpush2.msra.mxu0 0.0
      %1837 = vmatprep.subr.mxu0 0.0
      %1838 = vmatpush2.msra.mxu0 0.0
      %1839 = vmatprep.subr.mxu0 0.0
      %1840 = vmatpush2.msra.mxu0 0.0
      %1841 = vmatprep.subr.mxu0 0.0
      %1842 = vmatpush2.msra.mxu0 0.0
      %1843 = vmatprep.subr.mxu0 0.0
      %1844 = vmatpush2.msra.mxu0 0.0
      %1845 = vmatprep.subr.mxu0 0.0
      %1846 = vmatpush2.msra.mxu0 0.0
      %1847 = vmatprep.subr.mxu0 0.0
      %1848 = vmatpush2.msra.mxu0 0.0
      %1849 = vmatprep.subr.mxu0 0.0
      %1850 = vmatpush2.msra.mxu0 0.0
      %1851 = vmatprep.subr.mxu0 0.0
      %1852 = vmatpush2.msra.mxu0 0.0
      %1853 = vmatprep.subr.mxu0 0.0
      %1854 = vmatpush2.msra.mxu0 0.0
      %1855 = vmatprep.subr.mxu0 0.0
      %1856 = vmatpush2.msra.mxu0 0.0
      %1857 = vmatprep.mubr.f32.mxu0 0.0
      %v1858 = vand.u32 %v1710, 4294901760
      %1859 = vmatmul.mubr.f32.gmra.mxu0 %v1858
      %v1860 = vpop.f32.mrf.mxu0
      %v1861 = vadd.f32 %v1785, %v1860
      %v1862 = vpop.f32.mrf.mxu0
      %1863 = vdwg.mxu0
      %1864 = vmatprep.subr.mxu0 0.0
      %1865 = vmatpush1.msra.mxu0 0.0
      %1866 = vmatprep.subr.mxu0 0.0
      %1867 = vmatpush1.msra.mxu0 0.0
      %1868 = vmatprep.subr.mxu0 0.0
      %1869 = vmatpush1.msra.mxu0 0.0
      %1870 = vmatprep.subr.mxu0 0.0
      %1871 = vmatpush1.msra.mxu0 0.0
      %1872 = vmatprep.subr.mxu0 0.0
      %1873 = vmatpush1.msra.mxu0 0.0
      %1874 = vmatprep.subr.mxu0 0.0
      %1875 = vmatpush1.msra.mxu0 0.0
      %1876 = vmatprep.subr.mxu0 0.0
      %1877 = vmatpush1.msra.mxu0 0.0
      %1878 = vmatprep.subr.mxu0 0.0
      %1879 = vmatpush1.msra.mxu0 0.0
      %1880 = vmatprep.subr.mxu0 0.0
      %1881 = vmatpush1.msra.mxu0 0.0
      %1882 = vmatprep.subr.mxu0 0.0
      %1883 = vmatpush1.msra.mxu0 0.0
      %1884 = vmatprep.subr.mxu0 0.0
      %1885 = vmatpush1.msra.mxu0 0.0
      %1886 = vmatprep.subr.mxu0 0.0
      %1887 = vmatpush1.msra.mxu0 0.0
      %1888 = vmatprep.subr.mxu0 0.0
      %1889 = vmatpush1.msra.mxu0 0.0
      %1890 = vmatprep.subr.mxu0 0.0
      %1891 = vmatpush1.msra.mxu0 0.0
      %1892 = vmatprep.subr.mxu0 0.0
      %1893 = vmatpush1.msra.mxu0 0.0
      %1894 = vmatprep.subr.mxu0 0.0
      %v1895 = vand.u32 %v1707, 4294901760
      %v1896 = vsub.f32 %v1707, %v1895
      %1897 = vmatpush1.msra.mxu0 %v1896
      %1898 = vmatprep.subr.mxu0 0.0
      %1899 = vmatpush2.msra.mxu0 0.0
      %1900 = vmatprep.subr.mxu0 0.0
      %1901 = vmatpush2.msra.mxu0 0.0
      %1902 = vmatprep.subr.mxu0 0.0
      %1903 = vmatpush2.msra.mxu0 0.0
      %1904 = vmatprep.subr.mxu0 0.0
      %1905 = vmatpush2.msra.mxu0 0.0
      %1906 = vmatprep.subr.mxu0 0.0
      %1907 = vmatpush2.msra.mxu0 0.0
      %1908 = vmatprep.subr.mxu0 0.0
      %1909 = vmatpush2.msra.mxu0 0.0
      %1910 = vmatprep.subr.mxu0 0.0
      %1911 = vmatpush2.msra.mxu0 0.0
      %1912 = vmatprep.subr.mxu0 0.0
      %1913 = vmatpush2.msra.mxu0 0.0
      %1914 = vmatprep.subr.mxu0 0.0
      %1915 = vmatpush2.msra.mxu0 0.0
      %1916 = vmatprep.subr.mxu0 0.0
      %1917 = vmatpush2.msra.mxu0 0.0
      %1918 = vmatprep.subr.mxu0 0.0
      %1919 = vmatpush2.msra.mxu0 0.0
      %1920 = vmatprep.subr.mxu0 0.0
      %1921 = vmatpush2.msra.mxu0 0.0
      %1922 = vmatprep.subr.mxu0 0.0
      %1923 = vmatpush2.msra.mxu0 0.0
      %1924 = vmatprep.subr.mxu0 0.0
      %1925 = vmatpush2.msra.mxu0 0.0
      %1926 = vmatprep.subr.mxu0 0.0
      %1927 = vmatpush2.msra.mxu0 0.0
      %1928 = vmatprep.subr.mxu0 0.0
      %1929 = vmatpush2.msra.mxu0 0.0
      %1930 = vmatprep.mubr.f32.mxu0 0.0
      %v1931 = vand.u32 %v1710, 4294901760
      %v1932 = vsub.f32 %v1710, %v1931
      %1933 = vmatmul.mubr.f32.gmra.mxu0 %v1932
      %v1934 = vpop.f32.mrf.mxu0
      %v1935 = vadd.f32 %v1861, %v1934
      %v1936 = vpop.f32.mrf.mxu0
      %1937 = vdwg.mxu0
      %1938 = vmatprep.subr.mxu0 0.0
      %1939 = vmatpush1.msra.mxu0 0.0
      %1940 = vmatprep.subr.mxu0 0.0
      %1941 = vmatpush1.msra.mxu0 0.0
      %1942 = vmatprep.subr.mxu0 0.0
      %1943 = vmatpush1.msra.mxu0 0.0
      %1944 = vmatprep.subr.mxu0 0.0
      %1945 = vmatpush1.msra.mxu0 0.0
      %1946 = vmatprep.subr.mxu0 0.0
      %1947 = vmatpush1.msra.mxu0 0.0
      %1948 = vmatprep.subr.mxu0 0.0
      %1949 = vmatpush1.msra.mxu0 0.0
      %1950 = vmatprep.subr.mxu0 0.0
      %1951 = vmatpush1.msra.mxu0 0.0
      %1952 = vmatprep.subr.mxu0 0.0
      %1953 = vmatpush1.msra.mxu0 0.0
      %1954 = vmatprep.subr.mxu0 0.0
      %1955 = vmatpush1.msra.mxu0 0.0
      %1956 = vmatprep.subr.mxu0 0.0
      %1957 = vmatpush1.msra.mxu0 0.0
      %1958 = vmatprep.subr.mxu0 0.0
      %1959 = vmatpush1.msra.mxu0 0.0
      %1960 = vmatprep.subr.mxu0 0.0
      %1961 = vmatpush1.msra.mxu0 0.0
      %1962 = vmatprep.subr.mxu0 0.0
      %1963 = vmatpush1.msra.mxu0 0.0
      %1964 = vmatprep.subr.mxu0 0.0
      %1965 = vmatpush1.msra.mxu0 0.0
      %1966 = vmatprep.subr.mxu0 0.0
      %1967 = vmatpush1.msra.mxu0 0.0
      %1968 = vmatprep.subr.mxu0 0.0
      %v1969 = vand.u32 %v1707, 4294901760
      %1970 = vmatpush1.msra.mxu0 %v1969
      %1971 = vmatprep.subr.mxu0 0.0
      %1972 = vmatpush2.msra.mxu0 0.0
      %1973 = vmatprep.subr.mxu0 0.0
      %1974 = vmatpush2.msra.mxu0 0.0
      %1975 = vmatprep.subr.mxu0 0.0
      %1976 = vmatpush2.msra.mxu0 0.0
      %1977 = vmatprep.subr.mxu0 0.0
      %1978 = vmatpush2.msra.mxu0 0.0
      %1979 = vmatprep.subr.mxu0 0.0
      %1980 = vmatpush2.msra.mxu0 0.0
      %1981 = vmatprep.subr.mxu0 0.0
      %1982 = vmatpush2.msra.mxu0 0.0
      %1983 = vmatprep.subr.mxu0 0.0
      %1984 = vmatpush2.msra.mxu0 0.0
      %1985 = vmatprep.subr.mxu0 0.0
      %1986 = vmatpush2.msra.mxu0 0.0
      %1987 = vmatprep.subr.mxu0 0.0
      %1988 = vmatpush2.msra.mxu0 0.0
      %1989 = vmatprep.subr.mxu0 0.0
      %1990 = vmatpush2.msra.mxu0 0.0
      %1991 = vmatprep.subr.mxu0 0.0
      %1992 = vmatpush2.msra.mxu0 0.0
      %1993 = vmatprep.subr.mxu0 0.0
      %1994 = vmatpush2.msra.mxu0 0.0
      %1995 = vmatprep.subr.mxu0 0.0
      %1996 = vmatpush2.msra.mxu0 0.0
      %1997 = vmatprep.subr.mxu0 0.0
      %1998 = vmatpush2.msra.mxu0 0.0
      %1999 = vmatprep.subr.mxu0 0.0
      %2000 = vmatpush2.msra.mxu0 0.0
      %2001 = vmatprep.subr.mxu0 0.0
      %2002 = vmatpush2.msra.mxu0 0.0
      %2003 = vmatprep.mubr.f32.mxu0 0.0
      %v2004 = vand.u32 %v1710, 4294901760
      %v2005 = vsub.f32 %v1710, %v2004
      %v2006 = vand.u32 %v2005, 4294901760
      %2007 = vmatmul.mubr.f32.gmra.mxu0 %v2006
      %v2008 = vpop.f32.mrf.mxu0
      %v2009 = vadd.f32 %v1935, %v2008
      %v2010 = vpop.f32.mrf.mxu0
      %2011 = vdwg.mxu0
      %2012 = vmatprep.subr.mxu0 0.0
      %2013 = vmatpush1.msra.mxu0 0.0
      %2014 = vmatprep.subr.mxu0 0.0
      %2015 = vmatpush1.msra.mxu0 0.0
      %2016 = vmatprep.subr.mxu0 0.0
      %2017 = vmatpush1.msra.mxu0 0.0
      %2018 = vmatprep.subr.mxu0 0.0
      %2019 = vmatpush1.msra.mxu0 0.0
      %2020 = vmatprep.subr.mxu0 0.0
      %2021 = vmatpush1.msra.mxu0 0.0
      %2022 = vmatprep.subr.mxu0 0.0
      %2023 = vmatpush1.msra.mxu0 0.0
      %2024 = vmatprep.subr.mxu0 0.0
      %2025 = vmatpush1.msra.mxu0 0.0
      %2026 = vmatprep.subr.mxu0 0.0
      %2027 = vmatpush1.msra.mxu0 0.0
      %2028 = vmatprep.subr.mxu0 0.0
      %2029 = vmatpush1.msra.mxu0 0.0
      %2030 = vmatprep.subr.mxu0 0.0
      %2031 = vmatpush1.msra.mxu0 0.0
      %2032 = vmatprep.subr.mxu0 0.0
      %2033 = vmatpush1.msra.mxu0 0.0
      %2034 = vmatprep.subr.mxu0 0.0
      %2035 = vmatpush1.msra.mxu0 0.0
      %2036 = vmatprep.subr.mxu0 0.0
      %2037 = vmatpush1.msra.mxu0 0.0
      %2038 = vmatprep.subr.mxu0 0.0
      %2039 = vmatpush1.msra.mxu0 0.0
      %2040 = vmatprep.subr.mxu0 0.0
      %2041 = vmatpush1.msra.mxu0 0.0
      %2042 = vmatprep.subr.mxu0 0.0
      %v2043 = vand.u32 %v1707, 4294901760
      %v2044 = vsub.f32 %v1707, %v2043
      %v2045 = vand.u32 %v2044, 4294901760
      %2046 = vmatpush1.msra.mxu0 %v2045
      %2047 = vmatprep.subr.mxu0 0.0
      %2048 = vmatpush2.msra.mxu0 0.0
      %2049 = vmatprep.subr.mxu0 0.0
      %2050 = vmatpush2.msra.mxu0 0.0
      %2051 = vmatprep.subr.mxu0 0.0
      %2052 = vmatpush2.msra.mxu0 0.0
      %2053 = vmatprep.subr.mxu0 0.0
      %2054 = vmatpush2.msra.mxu0 0.0
      %2055 = vmatprep.subr.mxu0 0.0
      %2056 = vmatpush2.msra.mxu0 0.0
      %2057 = vmatprep.subr.mxu0 0.0
      %2058 = vmatpush2.msra.mxu0 0.0
      %2059 = vmatprep.subr.mxu0 0.0
      %2060 = vmatpush2.msra.mxu0 0.0
      %2061 = vmatprep.subr.mxu0 0.0
      %2062 = vmatpush2.msra.mxu0 0.0
      %2063 = vmatprep.subr.mxu0 0.0
      %2064 = vmatpush2.msra.mxu0 0.0
      %2065 = vmatprep.subr.mxu0 0.0
      %2066 = vmatpush2.msra.mxu0 0.0
      %2067 = vmatprep.subr.mxu0 0.0
      %2068 = vmatpush2.msra.mxu0 0.0
      %2069 = vmatprep.subr.mxu0 0.0
      %2070 = vmatpush2.msra.mxu0 0.0
      %2071 = vmatprep.subr.mxu0 0.0
      %2072 = vmatpush2.msra.mxu0 0.0
      %2073 = vmatprep.subr.mxu0 0.0
      %2074 = vmatpush2.msra.mxu0 0.0
      %2075 = vmatprep.subr.mxu0 0.0
      %2076 = vmatpush2.msra.mxu0 0.0
      %2077 = vmatprep.subr.mxu0 0.0
      %2078 = vmatpush2.msra.mxu0 0.0
      %2079 = vmatprep.mubr.f32.mxu0 0.0
      %v2080 = vand.u32 %v1710, 4294901760
      %2081 = vmatmul.mubr.f32.gmra.mxu0 %v2080
      %v2082 = vpop.f32.mrf.mxu0
      %v2083 = vadd.f32 %v2009, %v2082
      %v2084 = vpop.f32.mrf.mxu0
      %2085 = vdwg.mxu0
      %2086 = vmatprep.subr.mxu0 0.0
      %2087 = vmatpush1.msra.mxu0 0.0
      %2088 = vmatprep.subr.mxu0 0.0
      %2089 = vmatpush1.msra.mxu0 0.0
      %2090 = vmatprep.subr.mxu0 0.0
      %2091 = vmatpush1.msra.mxu0 0.0
      %2092 = vmatprep.subr.mxu0 0.0
      %2093 = vmatpush1.msra.mxu0 0.0
      %2094 = vmatprep.subr.mxu0 0.0
      %2095 = vmatpush1.msra.mxu0 0.0
      %2096 = vmatprep.subr.mxu0 0.0
      %2097 = vmatpush1.msra.mxu0 0.0
      %2098 = vmatprep.subr.mxu0 0.0
      %2099 = vmatpush1.msra.mxu0 0.0
      %2100 = vmatprep.subr.mxu0 0.0
      %2101 = vmatpush1.msra.mxu0 0.0
      %2102 = vmatprep.subr.mxu0 0.0
      %2103 = vmatpush1.msra.mxu0 0.0
      %2104 = vmatprep.subr.mxu0 0.0
      %2105 = vmatpush1.msra.mxu0 0.0
      %2106 = vmatprep.subr.mxu0 0.0
      %2107 = vmatpush1.msra.mxu0 0.0
      %2108 = vmatprep.subr.mxu0 0.0
      %2109 = vmatpush1.msra.mxu0 0.0
      %2110 = vmatprep.subr.mxu0 0.0
      %2111 = vmatpush1.msra.mxu0 0.0
      %2112 = vmatprep.subr.mxu0 0.0
      %2113 = vmatpush1.msra.mxu0 0.0
      %2114 = vmatprep.subr.mxu0 0.0
      %2115 = vmatpush1.msra.mxu0 0.0
      %2116 = vmatprep.subr.mxu0 0.0
      %v2117 = vand.u32 %v1707, 4294901760
      %2118 = vmatpush1.msra.mxu0 %v2117
      %2119 = vmatprep.subr.mxu0 0.0
      %2120 = vmatpush2.msra.mxu0 0.0
      %2121 = vmatprep.subr.mxu0 0.0
      %2122 = vmatpush2.msra.mxu0 0.0
      %2123 = vmatprep.subr.mxu0 0.0
      %2124 = vmatpush2.msra.mxu0 0.0
      %2125 = vmatprep.subr.mxu0 0.0
      %2126 = vmatpush2.msra.mxu0 0.0
      %2127 = vmatprep.subr.mxu0 0.0
      %2128 = vmatpush2.msra.mxu0 0.0
      %2129 = vmatprep.subr.mxu0 0.0
      %2130 = vmatpush2.msra.mxu0 0.0
      %2131 = vmatprep.subr.mxu0 0.0
      %2132 = vmatpush2.msra.mxu0 0.0
      %2133 = vmatprep.subr.mxu0 0.0
      %2134 = vmatpush2.msra.mxu0 0.0
      %2135 = vmatprep.subr.mxu0 0.0
      %2136 = vmatpush2.msra.mxu0 0.0
      %2137 = vmatprep.subr.mxu0 0.0
      %2138 = vmatpush2.msra.mxu0 0.0
      %2139 = vmatprep.subr.mxu0 0.0
      %2140 = vmatpush2.msra.mxu0 0.0
      %2141 = vmatprep.subr.mxu0 0.0
      %2142 = vmatpush2.msra.mxu0 0.0
      %2143 = vmatprep.subr.mxu0 0.0
      %2144 = vmatpush2.msra.mxu0 0.0
      %2145 = vmatprep.subr.mxu0 0.0
      %2146 = vmatpush2.msra.mxu0 0.0
      %2147 = vmatprep.subr.mxu0 0.0
      %2148 = vmatpush2.msra.mxu0 0.0
      %2149 = vmatprep.subr.mxu0 0.0
      %2150 = vmatpush2.msra.mxu0 0.0
      %2151 = vmatprep.mubr.f32.mxu0 0.0
      %v2152 = vand.u32 %v1710, 4294901760
      %2153 = vmatmul.mubr.f32.gmra.mxu0 %v2152
      %v2154 = vpop.f32.mrf.mxu0
      %v2155 = vadd.f32 %v2083, %v2154
      %v2156 = vpop.f32.mrf.mxu0
      %2157 = vdwg.mxu0
      %v2158 = vadd.f32 %v1704, %v2155
      %2159 = vst.msk [vmem:[%s1697] sm:$0xff] %vm282, %v2158
      %2160 = vst.msk [vmem:[%s1672] sm:$0xff] %vm757, %v1677
      %2161 = vrot.lane.b32.xlu0 %v279, 112
      %v2162 = vpop.permute.xlu0 %2161
      %2163 = vrot.lane.b32.xlu0 %v280, 112
      %v2164 = vpop.permute.xlu0 %2163
      %v2165 = vsel %vm282, %v2162, 0
      %v2167 = vsel %vm282, %v2164, 0
      %2169 = vmatprep.subr.mxu0 0.0
      %2170 = vmatpush1.xpose.msra.mxu0 0.0
      %2171 = vmatprep.subr.mxu0 0.0
      %2172 = vmatpush1.xpose.msra.mxu0 0.0
      %2173 = vmatprep.subr.mxu0 0.0
      %2174 = vmatpush1.xpose.msra.mxu0 0.0
      %2175 = vmatprep.subr.mxu0 0.0
      %2176 = vmatpush1.xpose.msra.mxu0 0.0
      %2177 = vmatprep.subr.mxu0 0.0
      %2178 = vmatpush1.xpose.msra.mxu0 0.0
      %2179 = vmatprep.subr.mxu0 0.0
      %2180 = vmatpush1.xpose.msra.mxu0 0.0
      %2181 = vmatprep.subr.mxu0 0.0
      %2182 = vmatpush1.xpose.msra.mxu0 0.0
      %2183 = vmatprep.subr.mxu0 0.0
      %2184 = vmatpush1.xpose.msra.mxu0 0.0
      %2185 = vmatprep.subr.mxu0 0.0
      %2186 = vmatpush1.xpose.msra.mxu0 0.0
      %2187 = vmatprep.subr.mxu0 0.0
      %2188 = vmatpush1.xpose.msra.mxu0 0.0
      %2189 = vmatprep.subr.mxu0 0.0
      %2190 = vmatpush1.xpose.msra.mxu0 0.0
      %2191 = vmatprep.subr.mxu0 0.0
      %2192 = vmatpush1.xpose.msra.mxu0 0.0
      %2193 = vmatprep.subr.mxu0 0.0
      %2194 = vmatpush1.xpose.msra.mxu0 0.0
      %2195 = vmatprep.subr.mxu0 0.0
      %2196 = vmatpush1.xpose.msra.mxu0 0.0
      %2197 = vmatprep.subr.mxu0 0.0
      %2198 = vmatpush1.xpose.msra.mxu0 0.0
      %2199 = vmatprep.subr.mxu0 0.0
      %v2200 = vand.u32 %v2167, 4294901760
      %2201 = vmatpush1.xpose.msra.mxu0 %v2200
      %2202 = vmatprep.subr.mxu0 0.0
      %2203 = vmatpush2.xpose.msra.mxu0 0.0
      %2204 = vmatprep.subr.mxu0 0.0
      %2205 = vmatpush2.xpose.msra.mxu0 0.0
      %2206 = vmatprep.subr.mxu0 0.0
      %2207 = vmatpush2.xpose.msra.mxu0 0.0
      %2208 = vmatprep.subr.mxu0 0.0
      %2209 = vmatpush2.xpose.msra.mxu0 0.0
      %2210 = vmatprep.subr.mxu0 0.0
      %2211 = vmatpush2.xpose.msra.mxu0 0.0
      %2212 = vmatprep.subr.mxu0 0.0
      %2213 = vmatpush2.xpose.msra.mxu0 0.0
      %2214 = vmatprep.subr.mxu0 0.0
      %2215 = vmatpush2.xpose.msra.mxu0 0.0
      %2216 = vmatprep.subr.mxu0 0.0
      %2217 = vmatpush2.xpose.msra.mxu0 0.0
      %2218 = vmatprep.subr.mxu0 0.0
      %2219 = vmatpush2.xpose.msra.mxu0 0.0
      %2220 = vmatprep.subr.mxu0 0.0
      %2221 = vmatpush2.xpose.msra.mxu0 0.0
      %2222 = vmatprep.subr.mxu0 0.0
      %2223 = vmatpush2.xpose.msra.mxu0 0.0
      %2224 = vmatprep.subr.mxu0 0.0
      %2225 = vmatpush2.xpose.msra.mxu0 0.0
      %2226 = vmatprep.subr.mxu0 0.0
      %2227 = vmatpush2.xpose.msra.mxu0 0.0
      %2228 = vmatprep.subr.mxu0 0.0
      %2229 = vmatpush2.xpose.msra.mxu0 0.0
      %2230 = vmatprep.subr.mxu0 0.0
      %2231 = vmatpush2.xpose.msra.mxu0 0.0
      %2232 = vmatprep.subr.mxu0 0.0
      %2233 = vmatpush2.xpose.msra.mxu0 0.0
      %2234 = vmatprep.mubr.f32.mxu0 0.0
      %v2235 = vand.u32 %v2165, 4294901760
      %v2236 = vsub.f32 %v2165, %v2235
      %v2237 = vand.u32 %v2236, 4294901760
      %v2238 = vsub.f32 %v2236, %v2237
      %v2239 = vand.u32 %v2238, 4294901760
      %2240 = vmatmul.mubr.f32.gmra.mxu0 %v2239
      %v2241 = vpop.f32.mrf.mxu0
      %v2242 = vadd.f32 0.0, %v2241
      %v2243 = vpop.f32.mrf.mxu0
      %2244 = vdwg.mxu0
      %2245 = vmatprep.subr.mxu0 0.0
      %2246 = vmatpush1.xpose.msra.mxu0 0.0
      %2247 = vmatprep.subr.mxu0 0.0
      %2248 = vmatpush1.xpose.msra.mxu0 0.0
      %2249 = vmatprep.subr.mxu0 0.0
      %2250 = vmatpush1.xpose.msra.mxu0 0.0
      %2251 = vmatprep.subr.mxu0 0.0
      %2252 = vmatpush1.xpose.msra.mxu0 0.0
      %2253 = vmatprep.subr.mxu0 0.0
      %2254 = vmatpush1.xpose.msra.mxu0 0.0
      %2255 = vmatprep.subr.mxu0 0.0
      %2256 = vmatpush1.xpose.msra.mxu0 0.0
      %2257 = vmatprep.subr.mxu0 0.0
      %2258 = vmatpush1.xpose.msra.mxu0 0.0
      %2259 = vmatprep.subr.mxu0 0.0
      %2260 = vmatpush1.xpose.msra.mxu0 0.0
      %2261 = vmatprep.subr.mxu0 0.0
      %2262 = vmatpush1.xpose.msra.mxu0 0.0
      %2263 = vmatprep.subr.mxu0 0.0
      %2264 = vmatpush1.xpose.msra.mxu0 0.0
      %2265 = vmatprep.subr.mxu0 0.0
      %2266 = vmatpush1.xpose.msra.mxu0 0.0
      %2267 = vmatprep.subr.mxu0 0.0
      %2268 = vmatpush1.xpose.msra.mxu0 0.0
      %2269 = vmatprep.subr.mxu0 0.0
      %2270 = vmatpush1.xpose.msra.mxu0 0.0
      %2271 = vmatprep.subr.mxu0 0.0
      %2272 = vmatpush1.xpose.msra.mxu0 0.0
      %2273 = vmatprep.subr.mxu0 0.0
      %2274 = vmatpush1.xpose.msra.mxu0 0.0
      %2275 = vmatprep.subr.mxu0 0.0
      %v2276 = vand.u32 %v2167, 4294901760
      %v2277 = vsub.f32 %v2167, %v2276
      %v2278 = vand.u32 %v2277, 4294901760
      %v2279 = vsub.f32 %v2277, %v2278
      %v2280 = vand.u32 %v2279, 4294901760
      %2281 = vmatpush1.xpose.msra.mxu0 %v2280
      %2282 = vmatprep.subr.mxu0 0.0
      %2283 = vmatpush2.xpose.msra.mxu0 0.0
      %2284 = vmatprep.subr.mxu0 0.0
      %2285 = vmatpush2.xpose.msra.mxu0 0.0
      %2286 = vmatprep.subr.mxu0 0.0
      %2287 = vmatpush2.xpose.msra.mxu0 0.0
      %2288 = vmatprep.subr.mxu0 0.0
      %2289 = vmatpush2.xpose.msra.mxu0 0.0
      %2290 = vmatprep.subr.mxu0 0.0
      %2291 = vmatpush2.xpose.msra.mxu0 0.0
      %2292 = vmatprep.subr.mxu0 0.0
      %2293 = vmatpush2.xpose.msra.mxu0 0.0
      %2294 = vmatprep.subr.mxu0 0.0
      %2295 = vmatpush2.xpose.msra.mxu0 0.0
      %2296 = vmatprep.subr.mxu0 0.0
      %2297 = vmatpush2.xpose.msra.mxu0 0.0
      %2298 = vmatprep.subr.mxu0 0.0
      %2299 = vmatpush2.xpose.msra.mxu0 0.0
      %2300 = vmatprep.subr.mxu0 0.0
      %2301 = vmatpush2.xpose.msra.mxu0 0.0
      %2302 = vmatprep.subr.mxu0 0.0
      %2303 = vmatpush2.xpose.msra.mxu0 0.0
      %2304 = vmatprep.subr.mxu0 0.0
      %2305 = vmatpush2.xpose.msra.mxu0 0.0
      %2306 = vmatprep.subr.mxu0 0.0
      %2307 = vmatpush2.xpose.msra.mxu0 0.0
      %2308 = vmatprep.subr.mxu0 0.0
      %2309 = vmatpush2.xpose.msra.mxu0 0.0
      %2310 = vmatprep.subr.mxu0 0.0
      %2311 = vmatpush2.xpose.msra.mxu0 0.0
      %2312 = vmatprep.subr.mxu0 0.0
      %2313 = vmatpush2.xpose.msra.mxu0 0.0
      %2314 = vmatprep.mubr.f32.mxu0 0.0
      %v2315 = vand.u32 %v2165, 4294901760
      %2316 = vmatmul.mubr.f32.gmra.mxu0 %v2315
      %v2317 = vpop.f32.mrf.mxu0
      %v2318 = vadd.f32 %v2242, %v2317
      %v2319 = vpop.f32.mrf.mxu0
      %2320 = vdwg.mxu0
      %2321 = vmatprep.subr.mxu0 0.0
      %2322 = vmatpush1.xpose.msra.mxu0 0.0
      %2323 = vmatprep.subr.mxu0 0.0
      %2324 = vmatpush1.xpose.msra.mxu0 0.0
      %2325 = vmatprep.subr.mxu0 0.0
      %2326 = vmatpush1.xpose.msra.mxu0 0.0
      %2327 = vmatprep.subr.mxu0 0.0
      %2328 = vmatpush1.xpose.msra.mxu0 0.0
      %2329 = vmatprep.subr.mxu0 0.0
      %2330 = vmatpush1.xpose.msra.mxu0 0.0
      %2331 = vmatprep.subr.mxu0 0.0
      %2332 = vmatpush1.xpose.msra.mxu0 0.0
      %2333 = vmatprep.subr.mxu0 0.0
      %2334 = vmatpush1.xpose.msra.mxu0 0.0
      %2335 = vmatprep.subr.mxu0 0.0
      %2336 = vmatpush1.xpose.msra.mxu0 0.0
      %2337 = vmatprep.subr.mxu0 0.0
      %2338 = vmatpush1.xpose.msra.mxu0 0.0
      %2339 = vmatprep.subr.mxu0 0.0
      %2340 = vmatpush1.xpose.msra.mxu0 0.0
      %2341 = vmatprep.subr.mxu0 0.0
      %2342 = vmatpush1.xpose.msra.mxu0 0.0
      %2343 = vmatprep.subr.mxu0 0.0
      %2344 = vmatpush1.xpose.msra.mxu0 0.0
      %2345 = vmatprep.subr.mxu0 0.0
      %2346 = vmatpush1.xpose.msra.mxu0 0.0
      %2347 = vmatprep.subr.mxu0 0.0
      %2348 = vmatpush1.xpose.msra.mxu0 0.0
      %2349 = vmatprep.subr.mxu0 0.0
      %2350 = vmatpush1.xpose.msra.mxu0 0.0
      %2351 = vmatprep.subr.mxu0 0.0
      %v2352 = vand.u32 %v2167, 4294901760
      %v2353 = vsub.f32 %v2167, %v2352
      %2354 = vmatpush1.xpose.msra.mxu0 %v2353
      %2355 = vmatprep.subr.mxu0 0.0
      %2356 = vmatpush2.xpose.msra.mxu0 0.0
      %2357 = vmatprep.subr.mxu0 0.0
      %2358 = vmatpush2.xpose.msra.mxu0 0.0
      %2359 = vmatprep.subr.mxu0 0.0
      %2360 = vmatpush2.xpose.msra.mxu0 0.0
      %2361 = vmatprep.subr.mxu0 0.0
      %2362 = vmatpush2.xpose.msra.mxu0 0.0
      %2363 = vmatprep.subr.mxu0 0.0
      %2364 = vmatpush2.xpose.msra.mxu0 0.0
      %2365 = vmatprep.subr.mxu0 0.0
      %2366 = vmatpush2.xpose.msra.mxu0 0.0
      %2367 = vmatprep.subr.mxu0 0.0
      %2368 = vmatpush2.xpose.msra.mxu0 0.0
      %2369 = vmatprep.subr.mxu0 0.0
      %2370 = vmatpush2.xpose.msra.mxu0 0.0
      %2371 = vmatprep.subr.mxu0 0.0
      %2372 = vmatpush2.xpose.msra.mxu0 0.0
      %2373 = vmatprep.subr.mxu0 0.0
      %2374 = vmatpush2.xpose.msra.mxu0 0.0
      %2375 = vmatprep.subr.mxu0 0.0
      %2376 = vmatpush2.xpose.msra.mxu0 0.0
      %2377 = vmatprep.subr.mxu0 0.0
      %2378 = vmatpush2.xpose.msra.mxu0 0.0
      %2379 = vmatprep.subr.mxu0 0.0
      %2380 = vmatpush2.xpose.msra.mxu0 0.0
      %2381 = vmatprep.subr.mxu0 0.0
      %2382 = vmatpush2.xpose.msra.mxu0 0.0
      %2383 = vmatprep.subr.mxu0 0.0
      %2384 = vmatpush2.xpose.msra.mxu0 0.0
      %2385 = vmatprep.subr.mxu0 0.0
      %2386 = vmatpush2.xpose.msra.mxu0 0.0
      %2387 = vmatprep.mubr.f32.mxu0 0.0
      %v2388 = vand.u32 %v2165, 4294901760
      %v2389 = vsub.f32 %v2165, %v2388
      %2390 = vmatmul.mubr.f32.gmra.mxu0 %v2389
      %v2391 = vpop.f32.mrf.mxu0
      %v2392 = vadd.f32 %v2318, %v2391
      %v2393 = vpop.f32.mrf.mxu0
      %2394 = vdwg.mxu0
      %2395 = vmatprep.subr.mxu0 0.0
      %2396 = vmatpush1.xpose.msra.mxu0 0.0
      %2397 = vmatprep.subr.mxu0 0.0
      %2398 = vmatpush1.xpose.msra.mxu0 0.0
      %2399 = vmatprep.subr.mxu0 0.0
      %2400 = vmatpush1.xpose.msra.mxu0 0.0
      %2401 = vmatprep.subr.mxu0 0.0
      %2402 = vmatpush1.xpose.msra.mxu0 0.0
      %2403 = vmatprep.subr.mxu0 0.0
      %2404 = vmatpush1.xpose.msra.mxu0 0.0
      %2405 = vmatprep.subr.mxu0 0.0
      %2406 = vmatpush1.xpose.msra.mxu0 0.0
      %2407 = vmatprep.subr.mxu0 0.0
      %2408 = vmatpush1.xpose.msra.mxu0 0.0
      %2409 = vmatprep.subr.mxu0 0.0
      %2410 = vmatpush1.xpose.msra.mxu0 0.0
      %2411 = vmatprep.subr.mxu0 0.0
      %2412 = vmatpush1.xpose.msra.mxu0 0.0
      %2413 = vmatprep.subr.mxu0 0.0
      %2414 = vmatpush1.xpose.msra.mxu0 0.0
      %2415 = vmatprep.subr.mxu0 0.0
      %2416 = vmatpush1.xpose.msra.mxu0 0.0
      %2417 = vmatprep.subr.mxu0 0.0
      %2418 = vmatpush1.xpose.msra.mxu0 0.0
      %2419 = vmatprep.subr.mxu0 0.0
      %2420 = vmatpush1.xpose.msra.mxu0 0.0
      %2421 = vmatprep.subr.mxu0 0.0
      %2422 = vmatpush1.xpose.msra.mxu0 0.0
      %2423 = vmatprep.subr.mxu0 0.0
      %2424 = vmatpush1.xpose.msra.mxu0 0.0
      %2425 = vmatprep.subr.mxu0 0.0
      %v2426 = vand.u32 %v2167, 4294901760
      %2427 = vmatpush1.xpose.msra.mxu0 %v2426
      %2428 = vmatprep.subr.mxu0 0.0
      %2429 = vmatpush2.xpose.msra.mxu0 0.0
      %2430 = vmatprep.subr.mxu0 0.0
      %2431 = vmatpush2.xpose.msra.mxu0 0.0
      %2432 = vmatprep.subr.mxu0 0.0
      %2433 = vmatpush2.xpose.msra.mxu0 0.0
      %2434 = vmatprep.subr.mxu0 0.0
      %2435 = vmatpush2.xpose.msra.mxu0 0.0
      %2436 = vmatprep.subr.mxu0 0.0
      %2437 = vmatpush2.xpose.msra.mxu0 0.0
      %2438 = vmatprep.subr.mxu0 0.0
      %2439 = vmatpush2.xpose.msra.mxu0 0.0
      %2440 = vmatprep.subr.mxu0 0.0
      %2441 = vmatpush2.xpose.msra.mxu0 0.0
      %2442 = vmatprep.subr.mxu0 0.0
      %2443 = vmatpush2.xpose.msra.mxu0 0.0
      %2444 = vmatprep.subr.mxu0 0.0
      %2445 = vmatpush2.xpose.msra.mxu0 0.0
      %2446 = vmatprep.subr.mxu0 0.0
      %2447 = vmatpush2.xpose.msra.mxu0 0.0
      %2448 = vmatprep.subr.mxu0 0.0
      %2449 = vmatpush2.xpose.msra.mxu0 0.0
      %2450 = vmatprep.subr.mxu0 0.0
      %2451 = vmatpush2.xpose.msra.mxu0 0.0
      %2452 = vmatprep.subr.mxu0 0.0
      %2453 = vmatpush2.xpose.msra.mxu0 0.0
      %2454 = vmatprep.subr.mxu0 0.0
      %2455 = vmatpush2.xpose.msra.mxu0 0.0
      %2456 = vmatprep.subr.mxu0 0.0
      %2457 = vmatpush2.xpose.msra.mxu0 0.0
      %2458 = vmatprep.subr.mxu0 0.0
      %2459 = vmatpush2.xpose.msra.mxu0 0.0
      %2460 = vmatprep.mubr.f32.mxu0 0.0
      %v2461 = vand.u32 %v2165, 4294901760
      %v2462 = vsub.f32 %v2165, %v2461
      %v2463 = vand.u32 %v2462, 4294901760
      %2464 = vmatmul.mubr.f32.gmra.mxu0 %v2463
      %v2465 = vpop.f32.mrf.mxu0
      %v2466 = vadd.f32 %v2392, %v2465
      %v2467 = vpop.f32.mrf.mxu0
      %2468 = vdwg.mxu0
      %2469 = vmatprep.subr.mxu0 0.0
      %2470 = vmatpush1.xpose.msra.mxu0 0.0
      %2471 = vmatprep.subr.mxu0 0.0
      %2472 = vmatpush1.xpose.msra.mxu0 0.0
      %2473 = vmatprep.subr.mxu0 0.0
      %2474 = vmatpush1.xpose.msra.mxu0 0.0
      %2475 = vmatprep.subr.mxu0 0.0
      %2476 = vmatpush1.xpose.msra.mxu0 0.0
      %2477 = vmatprep.subr.mxu0 0.0
      %2478 = vmatpush1.xpose.msra.mxu0 0.0
      %2479 = vmatprep.subr.mxu0 0.0
      %2480 = vmatpush1.xpose.msra.mxu0 0.0
      %2481 = vmatprep.subr.mxu0 0.0
      %2482 = vmatpush1.xpose.msra.mxu0 0.0
      %2483 = vmatprep.subr.mxu0 0.0
      %2484 = vmatpush1.xpose.msra.mxu0 0.0
      %2485 = vmatprep.subr.mxu0 0.0
      %2486 = vmatpush1.xpose.msra.mxu0 0.0
      %2487 = vmatprep.subr.mxu0 0.0
      %2488 = vmatpush1.xpose.msra.mxu0 0.0
      %2489 = vmatprep.subr.mxu0 0.0
      %2490 = vmatpush1.xpose.msra.mxu0 0.0
      %2491 = vmatprep.subr.mxu0 0.0
      %2492 = vmatpush1.xpose.msra.mxu0 0.0
      %2493 = vmatprep.subr.mxu0 0.0
      %2494 = vmatpush1.xpose.msra.mxu0 0.0
      %2495 = vmatprep.subr.mxu0 0.0
      %2496 = vmatpush1.xpose.msra.mxu0 0.0
      %2497 = vmatprep.subr.mxu0 0.0
      %2498 = vmatpush1.xpose.msra.mxu0 0.0
      %2499 = vmatprep.subr.mxu0 0.0
      %v2500 = vand.u32 %v2167, 4294901760
      %v2501 = vsub.f32 %v2167, %v2500
      %v2502 = vand.u32 %v2501, 4294901760
      %2503 = vmatpush1.xpose.msra.mxu0 %v2502
      %2504 = vmatprep.subr.mxu0 0.0
      %2505 = vmatpush2.xpose.msra.mxu0 0.0
      %2506 = vmatprep.subr.mxu0 0.0
      %2507 = vmatpush2.xpose.msra.mxu0 0.0
      %2508 = vmatprep.subr.mxu0 0.0
      %2509 = vmatpush2.xpose.msra.mxu0 0.0
      %2510 = vmatprep.subr.mxu0 0.0
      %2511 = vmatpush2.xpose.msra.mxu0 0.0
      %2512 = vmatprep.subr.mxu0 0.0
      %2513 = vmatpush2.xpose.msra.mxu0 0.0
      %2514 = vmatprep.subr.mxu0 0.0
      %2515 = vmatpush2.xpose.msra.mxu0 0.0
      %2516 = vmatprep.subr.mxu0 0.0
      %2517 = vmatpush2.xpose.msra.mxu0 0.0
      %2518 = vmatprep.subr.mxu0 0.0
      %2519 = vmatpush2.xpose.msra.mxu0 0.0
      %2520 = vmatprep.subr.mxu0 0.0
      %2521 = vmatpush2.xpose.msra.mxu0 0.0
      %2522 = vmatprep.subr.mxu0 0.0
      %2523 = vmatpush2.xpose.msra.mxu0 0.0
      %2524 = vmatprep.subr.mxu0 0.0
      %2525 = vmatpush2.xpose.msra.mxu0 0.0
      %2526 = vmatprep.subr.mxu0 0.0
      %2527 = vmatpush2.xpose.msra.mxu0 0.0
      %2528 = vmatprep.subr.mxu0 0.0
      %2529 = vmatpush2.xpose.msra.mxu0 0.0
      %2530 = vmatprep.subr.mxu0 0.0
      %2531 = vmatpush2.xpose.msra.mxu0 0.0
      %2532 = vmatprep.subr.mxu0 0.0
      %2533 = vmatpush2.xpose.msra.mxu0 0.0
      %2534 = vmatprep.subr.mxu0 0.0
      %2535 = vmatpush2.xpose.msra.mxu0 0.0
      %2536 = vmatprep.mubr.f32.mxu0 0.0
      %v2537 = vand.u32 %v2165, 4294901760
      %2538 = vmatmul.mubr.f32.gmra.mxu0 %v2537
      %v2539 = vpop.f32.mrf.mxu0
      %v2540 = vadd.f32 %v2466, %v2539
      %v2541 = vpop.f32.mrf.mxu0
      %2542 = vdwg.mxu0
      %2543 = vmatprep.subr.mxu0 0.0
      %2544 = vmatpush1.xpose.msra.mxu0 0.0
      %2545 = vmatprep.subr.mxu0 0.0
      %2546 = vmatpush1.xpose.msra.mxu0 0.0
      %2547 = vmatprep.subr.mxu0 0.0
      %2548 = vmatpush1.xpose.msra.mxu0 0.0
      %2549 = vmatprep.subr.mxu0 0.0
      %2550 = vmatpush1.xpose.msra.mxu0 0.0
      %2551 = vmatprep.subr.mxu0 0.0
      %2552 = vmatpush1.xpose.msra.mxu0 0.0
      %2553 = vmatprep.subr.mxu0 0.0
      %2554 = vmatpush1.xpose.msra.mxu0 0.0
      %2555 = vmatprep.subr.mxu0 0.0
      %2556 = vmatpush1.xpose.msra.mxu0 0.0
      %2557 = vmatprep.subr.mxu0 0.0
      %2558 = vmatpush1.xpose.msra.mxu0 0.0
      %2559 = vmatprep.subr.mxu0 0.0
      %2560 = vmatpush1.xpose.msra.mxu0 0.0
      %2561 = vmatprep.subr.mxu0 0.0
      %2562 = vmatpush1.xpose.msra.mxu0 0.0
      %2563 = vmatprep.subr.mxu0 0.0
      %2564 = vmatpush1.xpose.msra.mxu0 0.0
      %2565 = vmatprep.subr.mxu0 0.0
      %2566 = vmatpush1.xpose.msra.mxu0 0.0
      %2567 = vmatprep.subr.mxu0 0.0
      %2568 = vmatpush1.xpose.msra.mxu0 0.0
      %2569 = vmatprep.subr.mxu0 0.0
      %2570 = vmatpush1.xpose.msra.mxu0 0.0
      %2571 = vmatprep.subr.mxu0 0.0
      %2572 = vmatpush1.xpose.msra.mxu0 0.0
      %2573 = vmatprep.subr.mxu0 0.0
      %v2574 = vand.u32 %v2167, 4294901760
      %2575 = vmatpush1.xpose.msra.mxu0 %v2574
      %2576 = vmatprep.subr.mxu0 0.0
      %2577 = vmatpush2.xpose.msra.mxu0 0.0
      %2578 = vmatprep.subr.mxu0 0.0
      %2579 = vmatpush2.xpose.msra.mxu0 0.0
      %2580 = vmatprep.subr.mxu0 0.0
      %2581 = vmatpush2.xpose.msra.mxu0 0.0
      %2582 = vmatprep.subr.mxu0 0.0
      %2583 = vmatpush2.xpose.msra.mxu0 0.0
      %2584 = vmatprep.subr.mxu0 0.0
      %2585 = vmatpush2.xpose.msra.mxu0 0.0
      %2586 = vmatprep.subr.mxu0 0.0
      %2587 = vmatpush2.xpose.msra.mxu0 0.0
      %2588 = vmatprep.subr.mxu0 0.0
      %2589 = vmatpush2.xpose.msra.mxu0 0.0
      %2590 = vmatprep.subr.mxu0 0.0
      %2591 = vmatpush2.xpose.msra.mxu0 0.0
      %2592 = vmatprep.subr.mxu0 0.0
      %2593 = vmatpush2.xpose.msra.mxu0 0.0
      %2594 = vmatprep.subr.mxu0 0.0
      %2595 = vmatpush2.xpose.msra.mxu0 0.0
      %2596 = vmatprep.subr.mxu0 0.0
      %2597 = vmatpush2.xpose.msra.mxu0 0.0
      %2598 = vmatprep.subr.mxu0 0.0
      %2599 = vmatpush2.xpose.msra.mxu0 0.0
      %2600 = vmatprep.subr.mxu0 0.0
      %2601 = vmatpush2.xpose.msra.mxu0 0.0
      %2602 = vmatprep.subr.mxu0 0.0
      %2603 = vmatpush2.xpose.msra.mxu0 0.0
      %2604 = vmatprep.subr.mxu0 0.0
      %2605 = vmatpush2.xpose.msra.mxu0 0.0
      %2606 = vmatprep.subr.mxu0 0.0
      %2607 = vmatpush2.xpose.msra.mxu0 0.0
      %2608 = vmatprep.mubr.f32.mxu0 0.0
      %v2609 = vand.u32 %v2165, 4294901760
      %2610 = vmatmul.mubr.f32.gmra.mxu0 %v2609
      %v2611 = vpop.f32.mrf.mxu0
      %v2612 = vadd.f32 %v2540, %v2611
      %v2613 = vpop.f32.mrf.mxu0
      %2614 = vdwg.mxu0
      %s2615 = scalar_lea.vmem [#allocation2], 16
      %v2616 = vld [vmem:[%s2615] sm:$0xff]
      %v2617 = vsel %vm282, %v2612, -inf
      %2618 = vmax.xlane.f32.xlu0 %v2617
      %v2619 = vpop.xlane.xlu0 %2618
      %v2620 = vmax.f32 %v2616, %v2619
      %v2621 = vsub.f32 %v2616, %v2620
      %v2622 = vmul.f32 %v2621, 1.442695
      %v2623 = vpow.pop %v2622
      %2625 = vset.pattern.permute.xlu0 0
      %2626 = vperm.xlu0 %2625, %v2620
      %v2627 = vpop.permute.xlu0 %2626
      %v2629 = vsub.f32 %v2612, %v2627
      %v2630 = vmul.f32 %v2629, 1.442695
      %v2631 = vpow.pop %v2630
      %s2632 = scalar_lea.vmem [#allocation3], 16
      %v2633 = vld [vmem:[%s2632] sm:$0xff]
      %v2634 = vmul.f32 %v2623, %v2633
      %v2635 = vsel %vm282, %v2631, 0.0
      %2636 = vadd.xlane.f32.xlu0 %v2635
      %v2637 = vpop.xlane.xlu0 %2636
      %v2638 = vadd.f32 %v2634, %v2637
      %2639 = vst.msk [vmem:[%s2632] sm:$0xff] %vm757, %v2638
      %s2640 = scalar_lea.vmem [#allocation4], 16
      %v2641 = vld [vmem:[%s2640] sm:$0xff]
      %2643 = vset.pattern.permute.xlu0 0
      %2644 = vperm.xlu0 %2643, %v2623
      %v2645 = vpop.permute.xlu0 %2644
      %v2647 = vmul.f32 %v2645, %v2641
      %2648 = vrot.lane.b32.xlu0 %v281, 112
      %v2649 = vpop.permute.xlu0 %2648
      %v2652 = vsel %vm282, %v2631, 0
      %2654 = vmatprep.subr.mxu0 0.0
      %2655 = vmatpush1.msra.mxu0 0.0
      %2656 = vmatprep.subr.mxu0 0.0
      %2657 = vmatpush1.msra.mxu0 0.0
      %2658 = vmatprep.subr.mxu0 0.0
      %2659 = vmatpush1.msra.mxu0 0.0
      %2660 = vmatprep.subr.mxu0 0.0
      %2661 = vmatpush1.msra.mxu0 0.0
      %2662 = vmatprep.subr.mxu0 0.0
      %2663 = vmatpush1.msra.mxu0 0.0
      %2664 = vmatprep.subr.mxu0 0.0
      %2665 = vmatpush1.msra.mxu0 0.0
      %2666 = vmatprep.subr.mxu0 0.0
      %2667 = vmatpush1.msra.mxu0 0.0
      %2668 = vmatprep.subr.mxu0 0.0
      %2669 = vmatpush1.msra.mxu0 0.0
      %2670 = vmatprep.subr.mxu0 0.0
      %2671 = vmatpush1.msra.mxu0 0.0
      %2672 = vmatprep.subr.mxu0 0.0
      %2673 = vmatpush1.msra.mxu0 0.0
      %2674 = vmatprep.subr.mxu0 0.0
      %2675 = vmatpush1.msra.mxu0 0.0
      %2676 = vmatprep.subr.mxu0 0.0
      %2677 = vmatpush1.msra.mxu0 0.0
      %2678 = vmatprep.subr.mxu0 0.0
      %2679 = vmatpush1.msra.mxu0 0.0
      %2680 = vmatprep.subr.mxu0 0.0
      %2681 = vmatpush1.msra.mxu0 0.0
      %2682 = vmatprep.subr.mxu0 0.0
      %2683 = vmatpush1.msra.mxu0 0.0
      %2684 = vmatprep.subr.mxu0 0.0
      %v2685 = vand.u32 %v2649, 4294901760
      %2686 = vmatpush1.msra.mxu0 %v2685
      %2687 = vmatprep.subr.mxu0 0.0
      %2688 = vmatpush2.msra.mxu0 0.0
      %2689 = vmatprep.subr.mxu0 0.0
      %2690 = vmatpush2.msra.mxu0 0.0
      %2691 = vmatprep.subr.mxu0 0.0
      %2692 = vmatpush2.msra.mxu0 0.0
      %2693 = vmatprep.subr.mxu0 0.0
      %2694 = vmatpush2.msra.mxu0 0.0
      %2695 = vmatprep.subr.mxu0 0.0
      %2696 = vmatpush2.msra.mxu0 0.0
      %2697 = vmatprep.subr.mxu0 0.0
      %2698 = vmatpush2.msra.mxu0 0.0
      %2699 = vmatprep.subr.mxu0 0.0
      %2700 = vmatpush2.msra.mxu0 0.0
      %2701 = vmatprep.subr.mxu0 0.0
      %2702 = vmatpush2.msra.mxu0 0.0
      %2703 = vmatprep.subr.mxu0 0.0
      %2704 = vmatpush2.msra.mxu0 0.0
      %2705 = vmatprep.subr.mxu0 0.0
      %2706 = vmatpush2.msra.mxu0 0.0
      %2707 = vmatprep.subr.mxu0 0.0
      %2708 = vmatpush2.msra.mxu0 0.0
      %2709 = vmatprep.subr.mxu0 0.0
      %2710 = vmatpush2.msra.mxu0 0.0
      %2711 = vmatprep.subr.mxu0 0.0
      %2712 = vmatpush2.msra.mxu0 0.0
      %2713 = vmatprep.subr.mxu0 0.0
      %2714 = vmatpush2.msra.mxu0 0.0
      %2715 = vmatprep.subr.mxu0 0.0
      %2716 = vmatpush2.msra.mxu0 0.0
      %2717 = vmatprep.subr.mxu0 0.0
      %2718 = vmatpush2.msra.mxu0 0.0
      %2719 = vmatprep.mubr.f32.mxu0 0.0
      %v2720 = vand.u32 %v2652, 4294901760
      %v2721 = vsub.f32 %v2652, %v2720
      %v2722 = vand.u32 %v2721, 4294901760
      %v2723 = vsub.f32 %v2721, %v2722
      %v2724 = vand.u32 %v2723, 4294901760
      %2725 = vmatmul.mubr.f32.gmra.mxu0 %v2724
      %v2726 = vpop.f32.mrf.mxu0
      %v2727 = vadd.f32 0.0, %v2726
      %v2728 = vpop.f32.mrf.mxu0
      %2729 = vdwg.mxu0
      %2730 = vmatprep.subr.mxu0 0.0
      %2731 = vmatpush1.msra.mxu0 0.0
      %2732 = vmatprep.subr.mxu0 0.0
      %2733 = vmatpush1.msra.mxu0 0.0
      %2734 = vmatprep.subr.mxu0 0.0
      %2735 = vmatpush1.msra.mxu0 0.0
      %2736 = vmatprep.subr.mxu0 0.0
      %2737 = vmatpush1.msra.mxu0 0.0
      %2738 = vmatprep.subr.mxu0 0.0
      %2739 = vmatpush1.msra.mxu0 0.0
      %2740 = vmatprep.subr.mxu0 0.0
      %2741 = vmatpush1.msra.mxu0 0.0
      %2742 = vmatprep.subr.mxu0 0.0
      %2743 = vmatpush1.msra.mxu0 0.0
      %2744 = vmatprep.subr.mxu0 0.0
      %2745 = vmatpush1.msra.mxu0 0.0
      %2746 = vmatprep.subr.mxu0 0.0
      %2747 = vmatpush1.msra.mxu0 0.0
      %2748 = vmatprep.subr.mxu0 0.0
      %2749 = vmatpush1.msra.mxu0 0.0
      %2750 = vmatprep.subr.mxu0 0.0
      %2751 = vmatpush1.msra.mxu0 0.0
      %2752 = vmatprep.subr.mxu0 0.0
      %2753 = vmatpush1.msra.mxu0 0.0
      %2754 = vmatprep.subr.mxu0 0.0
      %2755 = vmatpush1.msra.mxu0 0.0
      %2756 = vmatprep.subr.mxu0 0.0
      %2757 = vmatpush1.msra.mxu0 0.0
      %2758 = vmatprep.subr.mxu0 0.0
      %2759 = vmatpush1.msra.mxu0 0.0
      %2760 = vmatprep.subr.mxu0 0.0
      %v2761 = vand.u32 %v2649, 4294901760
      %v2762 = vsub.f32 %v2649, %v2761
      %v2763 = vand.u32 %v2762, 4294901760
      %v2764 = vsub.f32 %v2762, %v2763
      %v2765 = vand.u32 %v2764, 4294901760
      %2766 = vmatpush1.msra.mxu0 %v2765
      %2767 = vmatprep.subr.mxu0 0.0
      %2768 = vmatpush2.msra.mxu0 0.0
      %2769 = vmatprep.subr.mxu0 0.0
      %2770 = vmatpush2.msra.mxu0 0.0
      %2771 = vmatprep.subr.mxu0 0.0
      %2772 = vmatpush2.msra.mxu0 0.0
      %2773 = vmatprep.subr.mxu0 0.0
      %2774 = vmatpush2.msra.mxu0 0.0
      %2775 = vmatprep.subr.mxu0 0.0
      %2776 = vmatpush2.msra.mxu0 0.0
      %2777 = vmatprep.subr.mxu0 0.0
      %2778 = vmatpush2.msra.mxu0 0.0
      %2779 = vmatprep.subr.mxu0 0.0
      %2780 = vmatpush2.msra.mxu0 0.0
      %2781 = vmatprep.subr.mxu0 0.0
      %2782 = vmatpush2.msra.mxu0 0.0
      %2783 = vmatprep.subr.mxu0 0.0
      %2784 = vmatpush2.msra.mxu0 0.0
      %2785 = vmatprep.subr.mxu0 0.0
      %2786 = vmatpush2.msra.mxu0 0.0
      %2787 = vmatprep.subr.mxu0 0.0
      %2788 = vmatpush2.msra.mxu0 0.0
      %2789 = vmatprep.subr.mxu0 0.0
      %2790 = vmatpush2.msra.mxu0 0.0
      %2791 = vmatprep.subr.mxu0 0.0
      %2792 = vmatpush2.msra.mxu0 0.0
      %2793 = vmatprep.subr.mxu0 0.0
      %2794 = vmatpush2.msra.mxu0 0.0
      %2795 = vmatprep.subr.mxu0 0.0
      %2796 = vmatpush2.msra.mxu0 0.0
      %2797 = vmatprep.subr.mxu0 0.0
      %2798 = vmatpush2.msra.mxu0 0.0
      %2799 = vmatprep.mubr.f32.mxu0 0.0
      %v2800 = vand.u32 %v2652, 4294901760
      %2801 = vmatmul.mubr.f32.gmra.mxu0 %v2800
      %v2802 = vpop.f32.mrf.mxu0
      %v2803 = vadd.f32 %v2727, %v2802
      %v2804 = vpop.f32.mrf.mxu0
      %2805 = vdwg.mxu0
      %2806 = vmatprep.subr.mxu0 0.0
      %2807 = vmatpush1.msra.mxu0 0.0
      %2808 = vmatprep.subr.mxu0 0.0
      %2809 = vmatpush1.msra.mxu0 0.0
      %2810 = vmatprep.subr.mxu0 0.0
      %2811 = vmatpush1.msra.mxu0 0.0
      %2812 = vmatprep.subr.mxu0 0.0
      %2813 = vmatpush1.msra.mxu0 0.0
      %2814 = vmatprep.subr.mxu0 0.0
      %2815 = vmatpush1.msra.mxu0 0.0
      %2816 = vmatprep.subr.mxu0 0.0
      %2817 = vmatpush1.msra.mxu0 0.0
      %2818 = vmatprep.subr.mxu0 0.0
      %2819 = vmatpush1.msra.mxu0 0.0
      %2820 = vmatprep.subr.mxu0 0.0
      %2821 = vmatpush1.msra.mxu0 0.0
      %2822 = vmatprep.subr.mxu0 0.0
      %2823 = vmatpush1.msra.mxu0 0.0
      %2824 = vmatprep.subr.mxu0 0.0
      %2825 = vmatpush1.msra.mxu0 0.0
      %2826 = vmatprep.subr.mxu0 0.0
      %2827 = vmatpush1.msra.mxu0 0.0
      %2828 = vmatprep.subr.mxu0 0.0
      %2829 = vmatpush1.msra.mxu0 0.0
      %2830 = vmatprep.subr.mxu0 0.0
      %2831 = vmatpush1.msra.mxu0 0.0
      %2832 = vmatprep.subr.mxu0 0.0
      %2833 = vmatpush1.msra.mxu0 0.0
      %2834 = vmatprep.subr.mxu0 0.0
      %2835 = vmatpush1.msra.mxu0 0.0
      %2836 = vmatprep.subr.mxu0 0.0
      %v2837 = vand.u32 %v2649, 4294901760
      %v2838 = vsub.f32 %v2649, %v2837
      %2839 = vmatpush1.msra.mxu0 %v2838
      %2840 = vmatprep.subr.mxu0 0.0
      %2841 = vmatpush2.msra.mxu0 0.0
      %2842 = vmatprep.subr.mxu0 0.0
      %2843 = vmatpush2.msra.mxu0 0.0
      %2844 = vmatprep.subr.mxu0 0.0
      %2845 = vmatpush2.msra.mxu0 0.0
      %2846 = vmatprep.subr.mxu0 0.0
      %2847 = vmatpush2.msra.mxu0 0.0
      %2848 = vmatprep.subr.mxu0 0.0
      %2849 = vmatpush2.msra.mxu0 0.0
      %2850 = vmatprep.subr.mxu0 0.0
      %2851 = vmatpush2.msra.mxu0 0.0
      %2852 = vmatprep.subr.mxu0 0.0
      %2853 = vmatpush2.msra.mxu0 0.0
      %2854 = vmatprep.subr.mxu0 0.0
      %2855 = vmatpush2.msra.mxu0 0.0
      %2856 = vmatprep.subr.mxu0 0.0
      %2857 = vmatpush2.msra.mxu0 0.0
      %2858 = vmatprep.subr.mxu0 0.0
      %2859 = vmatpush2.msra.mxu0 0.0
      %2860 = vmatprep.subr.mxu0 0.0
      %2861 = vmatpush2.msra.mxu0 0.0
      %2862 = vmatprep.subr.mxu0 0.0
      %2863 = vmatpush2.msra.mxu0 0.0
      %2864 = vmatprep.subr.mxu0 0.0
      %2865 = vmatpush2.msra.mxu0 0.0
      %2866 = vmatprep.subr.mxu0 0.0
      %2867 = vmatpush2.msra.mxu0 0.0
      %2868 = vmatprep.subr.mxu0 0.0
      %2869 = vmatpush2.msra.mxu0 0.0
      %2870 = vmatprep.subr.mxu0 0.0
      %2871 = vmatpush2.msra.mxu0 0.0
      %2872 = vmatprep.mubr.f32.mxu0 0.0
      %v2873 = vand.u32 %v2652, 4294901760
      %v2874 = vsub.f32 %v2652, %v2873
      %2875 = vmatmul.mubr.f32.gmra.mxu0 %v2874
      %v2876 = vpop.f32.mrf.mxu0
      %v2877 = vadd.f32 %v2803, %v2876
      %v2878 = vpop.f32.mrf.mxu0
      %2879 = vdwg.mxu0
      %2880 = vmatprep.subr.mxu0 0.0
      %2881 = vmatpush1.msra.mxu0 0.0
      %2882 = vmatprep.subr.mxu0 0.0
      %2883 = vmatpush1.msra.mxu0 0.0
      %2884 = vmatprep.subr.mxu0 0.0
      %2885 = vmatpush1.msra.mxu0 0.0
      %2886 = vmatprep.subr.mxu0 0.0
      %2887 = vmatpush1.msra.mxu0 0.0
      %2888 = vmatprep.subr.mxu0 0.0
      %2889 = vmatpush1.msra.mxu0 0.0
      %2890 = vmatprep.subr.mxu0 0.0
      %2891 = vmatpush1.msra.mxu0 0.0
      %2892 = vmatprep.subr.mxu0 0.0
      %2893 = vmatpush1.msra.mxu0 0.0
      %2894 = vmatprep.subr.mxu0 0.0
      %2895 = vmatpush1.msra.mxu0 0.0
      %2896 = vmatprep.subr.mxu0 0.0
      %2897 = vmatpush1.msra.mxu0 0.0
      %2898 = vmatprep.subr.mxu0 0.0
      %2899 = vmatpush1.msra.mxu0 0.0
      %2900 = vmatprep.subr.mxu0 0.0
      %2901 = vmatpush1.msra.mxu0 0.0
      %2902 = vmatprep.subr.mxu0 0.0
      %2903 = vmatpush1.msra.mxu0 0.0
      %2904 = vmatprep.subr.mxu0 0.0
      %2905 = vmatpush1.msra.mxu0 0.0
      %2906 = vmatprep.subr.mxu0 0.0
      %2907 = vmatpush1.msra.mxu0 0.0
      %2908 = vmatprep.subr.mxu0 0.0
      %2909 = vmatpush1.msra.mxu0 0.0
      %2910 = vmatprep.subr.mxu0 0.0
      %v2911 = vand.u32 %v2649, 4294901760
      %2912 = vmatpush1.msra.mxu0 %v2911
      %2913 = vmatprep.subr.mxu0 0.0
      %2914 = vmatpush2.msra.mxu0 0.0
      %2915 = vmatprep.subr.mxu0 0.0
      %2916 = vmatpush2.msra.mxu0 0.0
      %2917 = vmatprep.subr.mxu0 0.0
      %2918 = vmatpush2.msra.mxu0 0.0
      %2919 = vmatprep.subr.mxu0 0.0
      %2920 = vmatpush2.msra.mxu0 0.0
      %2921 = vmatprep.subr.mxu0 0.0
      %2922 = vmatpush2.msra.mxu0 0.0
      %2923 = vmatprep.subr.mxu0 0.0
      %2924 = vmatpush2.msra.mxu0 0.0
      %2925 = vmatprep.subr.mxu0 0.0
      %2926 = vmatpush2.msra.mxu0 0.0
      %2927 = vmatprep.subr.mxu0 0.0
      %2928 = vmatpush2.msra.mxu0 0.0
      %2929 = vmatprep.subr.mxu0 0.0
      %2930 = vmatpush2.msra.mxu0 0.0
      %2931 = vmatprep.subr.mxu0 0.0
      %2932 = vmatpush2.msra.mxu0 0.0
      %2933 = vmatprep.subr.mxu0 0.0
      %2934 = vmatpush2.msra.mxu0 0.0
      %2935 = vmatprep.subr.mxu0 0.0
      %2936 = vmatpush2.msra.mxu0 0.0
      %2937 = vmatprep.subr.mxu0 0.0
      %2938 = vmatpush2.msra.mxu0 0.0
      %2939 = vmatprep.subr.mxu0 0.0
      %2940 = vmatpush2.msra.mxu0 0.0
      %2941 = vmatprep.subr.mxu0 0.0
      %2942 = vmatpush2.msra.mxu0 0.0
      %2943 = vmatprep.subr.mxu0 0.0
      %2944 = vmatpush2.msra.mxu0 0.0
      %2945 = vmatprep.mubr.f32.mxu0 0.0
      %v2946 = vand.u32 %v2652, 4294901760
      %v2947 = vsub.f32 %v2652, %v2946
      %v2948 = vand.u32 %v2947, 4294901760
      %2949 = vmatmul.mubr.f32.gmra.mxu0 %v2948
      %v2950 = vpop.f32.mrf.mxu0
      %v2951 = vadd.f32 %v2877, %v2950
      %v2952 = vpop.f32.mrf.mxu0
      %2953 = vdwg.mxu0
      %2954 = vmatprep.subr.mxu0 0.0
      %2955 = vmatpush1.msra.mxu0 0.0
      %2956 = vmatprep.subr.mxu0 0.0
      %2957 = vmatpush1.msra.mxu0 0.0
      %2958 = vmatprep.subr.mxu0 0.0
      %2959 = vmatpush1.msra.mxu0 0.0
      %2960 = vmatprep.subr.mxu0 0.0
      %2961 = vmatpush1.msra.mxu0 0.0
      %2962 = vmatprep.subr.mxu0 0.0
      %2963 = vmatpush1.msra.mxu0 0.0
      %2964 = vmatprep.subr.mxu0 0.0
      %2965 = vmatpush1.msra.mxu0 0.0
      %2966 = vmatprep.subr.mxu0 0.0
      %2967 = vmatpush1.msra.mxu0 0.0
      %2968 = vmatprep.subr.mxu0 0.0
      %2969 = vmatpush1.msra.mxu0 0.0
      %2970 = vmatprep.subr.mxu0 0.0
      %2971 = vmatpush1.msra.mxu0 0.0
      %2972 = vmatprep.subr.mxu0 0.0
      %2973 = vmatpush1.msra.mxu0 0.0
      %2974 = vmatprep.subr.mxu0 0.0
      %2975 = vmatpush1.msra.mxu0 0.0
      %2976 = vmatprep.subr.mxu0 0.0
      %2977 = vmatpush1.msra.mxu0 0.0
      %2978 = vmatprep.subr.mxu0 0.0
      %2979 = vmatpush1.msra.mxu0 0.0
      %2980 = vmatprep.subr.mxu0 0.0
      %2981 = vmatpush1.msra.mxu0 0.0
      %2982 = vmatprep.subr.mxu0 0.0
      %2983 = vmatpush1.msra.mxu0 0.0
      %2984 = vmatprep.subr.mxu0 0.0
      %v2985 = vand.u32 %v2649, 4294901760
      %v2986 = vsub.f32 %v2649, %v2985
      %v2987 = vand.u32 %v2986, 4294901760
      %2988 = vmatpush1.msra.mxu0 %v2987
      %2989 = vmatprep.subr.mxu0 0.0
      %2990 = vmatpush2.msra.mxu0 0.0
      %2991 = vmatprep.subr.mxu0 0.0
      %2992 = vmatpush2.msra.mxu0 0.0
      %2993 = vmatprep.subr.mxu0 0.0
      %2994 = vmatpush2.msra.mxu0 0.0
      %2995 = vmatprep.subr.mxu0 0.0
      %2996 = vmatpush2.msra.mxu0 0.0
      %2997 = vmatprep.subr.mxu0 0.0
      %2998 = vmatpush2.msra.mxu0 0.0
      %2999 = vmatprep.subr.mxu0 0.0
      %3000 = vmatpush2.msra.mxu0 0.0
      %3001 = vmatprep.subr.mxu0 0.0
      %3002 = vmatpush2.msra.mxu0 0.0
      %3003 = vmatprep.subr.mxu0 0.0
      %3004 = vmatpush2.msra.mxu0 0.0
      %3005 = vmatprep.subr.mxu0 0.0
      %3006 = vmatpush2.msra.mxu0 0.0
      %3007 = vmatprep.subr.mxu0 0.0
      %3008 = vmatpush2.msra.mxu0 0.0
      %3009 = vmatprep.subr.mxu0 0.0
      %3010 = vmatpush2.msra.mxu0 0.0
      %3011 = vmatprep.subr.mxu0 0.0
      %3012 = vmatpush2.msra.mxu0 0.0
      %3013 = vmatprep.subr.mxu0 0.0
      %3014 = vmatpush2.msra.mxu0 0.0
      %3015 = vmatprep.subr.mxu0 0.0
      %3016 = vmatpush2.msra.mxu0 0.0
      %3017 = vmatprep.subr.mxu0 0.0
      %3018 = vmatpush2.msra.mxu0 0.0
      %3019 = vmatprep.subr.mxu0 0.0
      %3020 = vmatpush2.msra.mxu0 0.0
      %3021 = vmatprep.mubr.f32.mxu0 0.0
      %v3022 = vand.u32 %v2652, 4294901760
      %3023 = vmatmul.mubr.f32.gmra.mxu0 %v3022
      %v3024 = vpop.f32.mrf.mxu0
      %v3025 = vadd.f32 %v2951, %v3024
      %v3026 = vpop.f32.mrf.mxu0
      %3027 = vdwg.mxu0
      %3028 = vmatprep.subr.mxu0 0.0
      %3029 = vmatpush1.msra.mxu0 0.0
      %3030 = vmatprep.subr.mxu0 0.0
      %3031 = vmatpush1.msra.mxu0 0.0
      %3032 = vmatprep.subr.mxu0 0.0
      %3033 = vmatpush1.msra.mxu0 0.0
      %3034 = vmatprep.subr.mxu0 0.0
      %3035 = vmatpush1.msra.mxu0 0.0
      %3036 = vmatprep.subr.mxu0 0.0
      %3037 = vmatpush1.msra.mxu0 0.0
      %3038 = vmatprep.subr.mxu0 0.0
      %3039 = vmatpush1.msra.mxu0 0.0
      %3040 = vmatprep.subr.mxu0 0.0
      %3041 = vmatpush1.msra.mxu0 0.0
      %3042 = vmatprep.subr.mxu0 0.0
      %3043 = vmatpush1.msra.mxu0 0.0
      %3044 = vmatprep.subr.mxu0 0.0
      %3045 = vmatpush1.msra.mxu0 0.0
      %3046 = vmatprep.subr.mxu0 0.0
      %3047 = vmatpush1.msra.mxu0 0.0
      %3048 = vmatprep.subr.mxu0 0.0
      %3049 = vmatpush1.msra.mxu0 0.0
      %3050 = vmatprep.subr.mxu0 0.0
      %3051 = vmatpush1.msra.mxu0 0.0
      %3052 = vmatprep.subr.mxu0 0.0
      %3053 = vmatpush1.msra.mxu0 0.0
      %3054 = vmatprep.subr.mxu0 0.0
      %3055 = vmatpush1.msra.mxu0 0.0
      %3056 = vmatprep.subr.mxu0 0.0
      %3057 = vmatpush1.msra.mxu0 0.0
      %3058 = vmatprep.subr.mxu0 0.0
      %v3059 = vand.u32 %v2649, 4294901760
      %3060 = vmatpush1.msra.mxu0 %v3059
      %3061 = vmatprep.subr.mxu0 0.0
      %3062 = vmatpush2.msra.mxu0 0.0
      %3063 = vmatprep.subr.mxu0 0.0
      %3064 = vmatpush2.msra.mxu0 0.0
      %3065 = vmatprep.subr.mxu0 0.0
      %3066 = vmatpush2.msra.mxu0 0.0
      %3067 = vmatprep.subr.mxu0 0.0
      %3068 = vmatpush2.msra.mxu0 0.0
      %3069 = vmatprep.subr.mxu0 0.0
      %3070 = vmatpush2.msra.mxu0 0.0
      %3071 = vmatprep.subr.mxu0 0.0
      %3072 = vmatpush2.msra.mxu0 0.0
      %3073 = vmatprep.subr.mxu0 0.0
      %3074 = vmatpush2.msra.mxu0 0.0
      %3075 = vmatprep.subr.mxu0 0.0
      %3076 = vmatpush2.msra.mxu0 0.0
      %3077 = vmatprep.subr.mxu0 0.0
      %3078 = vmatpush2.msra.mxu0 0.0
      %3079 = vmatprep.subr.mxu0 0.0
      %3080 = vmatpush2.msra.mxu0 0.0
      %3081 = vmatprep.subr.mxu0 0.0
      %3082 = vmatpush2.msra.mxu0 0.0
      %3083 = vmatprep.subr.mxu0 0.0
      %3084 = vmatpush2.msra.mxu0 0.0
      %3085 = vmatprep.subr.mxu0 0.0
      %3086 = vmatpush2.msra.mxu0 0.0
      %3087 = vmatprep.subr.mxu0 0.0
      %3088 = vmatpush2.msra.mxu0 0.0
      %3089 = vmatprep.subr.mxu0 0.0
      %3090 = vmatpush2.msra.mxu0 0.0
      %3091 = vmatprep.subr.mxu0 0.0
      %3092 = vmatpush2.msra.mxu0 0.0
      %3093 = vmatprep.mubr.f32.mxu0 0.0
      %v3094 = vand.u32 %v2652, 4294901760
      %3095 = vmatmul.mubr.f32.gmra.mxu0 %v3094
      %v3096 = vpop.f32.mrf.mxu0
      %v3097 = vadd.f32 %v3025, %v3096
      %v3098 = vpop.f32.mrf.mxu0
      %3099 = vdwg.mxu0
      %v3100 = vadd.f32 %v2647, %v3097
      %3101 = vst.msk [vmem:[%s2640] sm:$0xff] %vm282, %v3100
      %3102 = vst.msk [vmem:[%s2615] sm:$0xff] %vm757, %v2620
      %3103 = vrot.lane.b32.xlu0 %v279, 104
      %v3104 = vpop.permute.xlu0 %3103
      %3105 = vrot.lane.b32.xlu0 %v280, 104
      %v3106 = vpop.permute.xlu0 %3105
      %v3107 = vsel %vm282, %v3104, 0
      %v3109 = vsel %vm282, %v3106, 0
      %3111 = vmatprep.subr.mxu0 0.0
      %3112 = vmatpush1.xpose.msra.mxu0 0.0
      %3113 = vmatprep.subr.mxu0 0.0
      %3114 = vmatpush1.xpose.msra.mxu0 0.0
      %3115 = vmatprep.subr.mxu0 0.0
      %3116 = vmatpush1.xpose.msra.mxu0 0.0
      %3117 = vmatprep.subr.mxu0 0.0
      %3118 = vmatpush1.xpose.msra.mxu0 0.0
      %3119 = vmatprep.subr.mxu0 0.0
      %3120 = vmatpush1.xpose.msra.mxu0 0.0
      %3121 = vmatprep.subr.mxu0 0.0
      %3122 = vmatpush1.xpose.msra.mxu0 0.0
      %3123 = vmatprep.subr.mxu0 0.0
      %3124 = vmatpush1.xpose.msra.mxu0 0.0
      %3125 = vmatprep.subr.mxu0 0.0
      %3126 = vmatpush1.xpose.msra.mxu0 0.0
      %3127 = vmatprep.subr.mxu0 0.0
      %3128 = vmatpush1.xpose.msra.mxu0 0.0
      %3129 = vmatprep.subr.mxu0 0.0
      %3130 = vmatpush1.xpose.msra.mxu0 0.0
      %3131 = vmatprep.subr.mxu0 0.0
      %3132 = vmatpush1.xpose.msra.mxu0 0.0
      %3133 = vmatprep.subr.mxu0 0.0
      %3134 = vmatpush1.xpose.msra.mxu0 0.0
      %3135 = vmatprep.subr.mxu0 0.0
      %3136 = vmatpush1.xpose.msra.mxu0 0.0
      %3137 = vmatprep.subr.mxu0 0.0
      %3138 = vmatpush1.xpose.msra.mxu0 0.0
      %3139 = vmatprep.subr.mxu0 0.0
      %3140 = vmatpush1.xpose.msra.mxu0 0.0
      %3141 = vmatprep.subr.mxu0 0.0
      %v3142 = vand.u32 %v3109, 4294901760
      %3143 = vmatpush1.xpose.msra.mxu0 %v3142
      %3144 = vmatprep.subr.mxu0 0.0
      %3145 = vmatpush2.xpose.msra.mxu0 0.0
      %3146 = vmatprep.subr.mxu0 0.0
      %3147 = vmatpush2.xpose.msra.mxu0 0.0
      %3148 = vmatprep.subr.mxu0 0.0
      %3149 = vmatpush2.xpose.msra.mxu0 0.0
      %3150 = vmatprep.subr.mxu0 0.0
      %3151 = vmatpush2.xpose.msra.mxu0 0.0
      %3152 = vmatprep.subr.mxu0 0.0
      %3153 = vmatpush2.xpose.msra.mxu0 0.0
      %3154 = vmatprep.subr.mxu0 0.0
      %3155 = vmatpush2.xpose.msra.mxu0 0.0
      %3156 = vmatprep.subr.mxu0 0.0
      %3157 = vmatpush2.xpose.msra.mxu0 0.0
      %3158 = vmatprep.subr.mxu0 0.0
      %3159 = vmatpush2.xpose.msra.mxu0 0.0
      %3160 = vmatprep.subr.mxu0 0.0
      %3161 = vmatpush2.xpose.msra.mxu0 0.0
      %3162 = vmatprep.subr.mxu0 0.0
      %3163 = vmatpush2.xpose.msra.mxu0 0.0
      %3164 = vmatprep.subr.mxu0 0.0
      %3165 = vmatpush2.xpose.msra.mxu0 0.0
      %3166 = vmatprep.subr.mxu0 0.0
      %3167 = vmatpush2.xpose.msra.mxu0 0.0
      %3168 = vmatprep.subr.mxu0 0.0
      %3169 = vmatpush2.xpose.msra.mxu0 0.0
      %3170 = vmatprep.subr.mxu0 0.0
      %3171 = vmatpush2.xpose.msra.mxu0 0.0
      %3172 = vmatprep.subr.mxu0 0.0
      %3173 = vmatpush2.xpose.msra.mxu0 0.0
      %3174 = vmatprep.subr.mxu0 0.0
      %3175 = vmatpush2.xpose.msra.mxu0 0.0
      %3176 = vmatprep.mubr.f32.mxu0 0.0
      %v3177 = vand.u32 %v3107, 4294901760
      %v3178 = vsub.f32 %v3107, %v3177
      %v3179 = vand.u32 %v3178, 4294901760
      %v3180 = vsub.f32 %v3178, %v3179
      %v3181 = vand.u32 %v3180, 4294901760
      %3182 = vmatmul.mubr.f32.gmra.mxu0 %v3181
      %v3183 = vpop.f32.mrf.mxu0
      %v3184 = vadd.f32 0.0, %v3183
      %v3185 = vpop.f32.mrf.mxu0
      %3186 = vdwg.mxu0
      %3187 = vmatprep.subr.mxu0 0.0
      %3188 = vmatpush1.xpose.msra.mxu0 0.0
      %3189 = vmatprep.subr.mxu0 0.0
      %3190 = vmatpush1.xpose.msra.mxu0 0.0
      %3191 = vmatprep.subr.mxu0 0.0
      %3192 = vmatpush1.xpose.msra.mxu0 0.0
      %3193 = vmatprep.subr.mxu0 0.0
      %3194 = vmatpush1.xpose.msra.mxu0 0.0
      %3195 = vmatprep.subr.mxu0 0.0
      %3196 = vmatpush1.xpose.msra.mxu0 0.0
      %3197 = vmatprep.subr.mxu0 0.0
      %3198 = vmatpush1.xpose.msra.mxu0 0.0
      %3199 = vmatprep.subr.mxu0 0.0
      %3200 = vmatpush1.xpose.msra.mxu0 0.0
      %3201 = vmatprep.subr.mxu0 0.0
      %3202 = vmatpush1.xpose.msra.mxu0 0.0
      %3203 = vmatprep.subr.mxu0 0.0
      %3204 = vmatpush1.xpose.msra.mxu0 0.0
      %3205 = vmatprep.subr.mxu0 0.0
      %3206 = vmatpush1.xpose.msra.mxu0 0.0
      %3207 = vmatprep.subr.mxu0 0.0
      %3208 = vmatpush1.xpose.msra.mxu0 0.0
      %3209 = vmatprep.subr.mxu0 0.0
      %3210 = vmatpush1.xpose.msra.mxu0 0.0
      %3211 = vmatprep.subr.mxu0 0.0
      %3212 = vmatpush1.xpose.msra.mxu0 0.0
      %3213 = vmatprep.subr.mxu0 0.0
      %3214 = vmatpush1.xpose.msra.mxu0 0.0
      %3215 = vmatprep.subr.mxu0 0.0
      %3216 = vmatpush1.xpose.msra.mxu0 0.0
      %3217 = vmatprep.subr.mxu0 0.0
      %v3218 = vand.u32 %v3109, 4294901760
      %v3219 = vsub.f32 %v3109, %v3218
      %v3220 = vand.u32 %v3219, 4294901760
      %v3221 = vsub.f32 %v3219, %v3220
      %v3222 = vand.u32 %v3221, 4294901760
      %3223 = vmatpush1.xpose.msra.mxu0 %v3222
      %3224 = vmatprep.subr.mxu0 0.0
      %3225 = vmatpush2.xpose.msra.mxu0 0.0
      %3226 = vmatprep.subr.mxu0 0.0
      %3227 = vmatpush2.xpose.msra.mxu0 0.0
      %3228 = vmatprep.subr.mxu0 0.0
      %3229 = vmatpush2.xpose.msra.mxu0 0.0
      %3230 = vmatprep.subr.mxu0 0.0
      %3231 = vmatpush2.xpose.msra.mxu0 0.0
      %3232 = vmatprep.subr.mxu0 0.0
      %3233 = vmatpush2.xpose.msra.mxu0 0.0
      %3234 = vmatprep.subr.mxu0 0.0
      %3235 = vmatpush2.xpose.msra.mxu0 0.0
      %3236 = vmatprep.subr.mxu0 0.0
      %3237 = vmatpush2.xpose.msra.mxu0 0.0
      %3238 = vmatprep.subr.mxu0 0.0
      %3239 = vmatpush2.xpose.msra.mxu0 0.0
      %3240 = vmatprep.subr.mxu0 0.0
      %3241 = vmatpush2.xpose.msra.mxu0 0.0
      %3242 = vmatprep.subr.mxu0 0.0
      %3243 = vmatpush2.xpose.msra.mxu0 0.0
      %3244 = vmatprep.subr.mxu0 0.0
      %3245 = vmatpush2.xpose.msra.mxu0 0.0
      %3246 = vmatprep.subr.mxu0 0.0
      %3247 = vmatpush2.xpose.msra.mxu0 0.0
      %3248 = vmatprep.subr.mxu0 0.0
      %3249 = vmatpush2.xpose.msra.mxu0 0.0
      %3250 = vmatprep.subr.mxu0 0.0
      %3251 = vmatpush2.xpose.msra.mxu0 0.0
      %3252 = vmatprep.subr.mxu0 0.0
      %3253 = vmatpush2.xpose.msra.mxu0 0.0
      %3254 = vmatprep.subr.mxu0 0.0
      %3255 = vmatpush2.xpose.msra.mxu0 0.0
      %3256 = vmatprep.mubr.f32.mxu0 0.0
      %v3257 = vand.u32 %v3107, 4294901760
      %3258 = vmatmul.mubr.f32.gmra.mxu0 %v3257
      %v3259 = vpop.f32.mrf.mxu0
      %v3260 = vadd.f32 %v3184, %v3259
      %v3261 = vpop.f32.mrf.mxu0
      %3262 = vdwg.mxu0
      %3263 = vmatprep.subr.mxu0 0.0
      %3264 = vmatpush1.xpose.msra.mxu0 0.0
      %3265 = vmatprep.subr.mxu0 0.0
      %3266 = vmatpush1.xpose.msra.mxu0 0.0
      %3267 = vmatprep.subr.mxu0 0.0
      %3268 = vmatpush1.xpose.msra.mxu0 0.0
      %3269 = vmatprep.subr.mxu0 0.0
      %3270 = vmatpush1.xpose.msra.mxu0 0.0
      %3271 = vmatprep.subr.mxu0 0.0
      %3272 = vmatpush1.xpose.msra.mxu0 0.0
      %3273 = vmatprep.subr.mxu0 0.0
      %3274 = vmatpush1.xpose.msra.mxu0 0.0
      %3275 = vmatprep.subr.mxu0 0.0
      %3276 = vmatpush1.xpose.msra.mxu0 0.0
      %3277 = vmatprep.subr.mxu0 0.0
      %3278 = vmatpush1.xpose.msra.mxu0 0.0
      %3279 = vmatprep.subr.mxu0 0.0
      %3280 = vmatpush1.xpose.msra.mxu0 0.0
      %3281 = vmatprep.subr.mxu0 0.0
      %3282 = vmatpush1.xpose.msra.mxu0 0.0
      %3283 = vmatprep.subr.mxu0 0.0
      %3284 = vmatpush1.xpose.msra.mxu0 0.0
      %3285 = vmatprep.subr.mxu0 0.0
      %3286 = vmatpush1.xpose.msra.mxu0 0.0
      %3287 = vmatprep.subr.mxu0 0.0
      %3288 = vmatpush1.xpose.msra.mxu0 0.0
      %3289 = vmatprep.subr.mxu0 0.0
      %3290 = vmatpush1.xpose.msra.mxu0 0.0
      %3291 = vmatprep.subr.mxu0 0.0
      %3292 = vmatpush1.xpose.msra.mxu0 0.0
      %3293 = vmatprep.subr.mxu0 0.0
      %v3294 = vand.u32 %v3109, 4294901760
      %v3295 = vsub.f32 %v3109, %v3294
      %3296 = vmatpush1.xpose.msra.mxu0 %v3295
      %3297 = vmatprep.subr.mxu0 0.0
      %3298 = vmatpush2.xpose.msra.mxu0 0.0
      %3299 = vmatprep.subr.mxu0 0.0
      %3300 = vmatpush2.xpose.msra.mxu0 0.0
      %3301 = vmatprep.subr.mxu0 0.0
      %3302 = vmatpush2.xpose.msra.mxu0 0.0
      %3303 = vmatprep.subr.mxu0 0.0
      %3304 = vmatpush2.xpose.msra.mxu0 0.0
      %3305 = vmatprep.subr.mxu0 0.0
      %3306 = vmatpush2.xpose.msra.mxu0 0.0
      %3307 = vmatprep.subr.mxu0 0.0
      %3308 = vmatpush2.xpose.msra.mxu0 0.0
      %3309 = vmatprep.subr.mxu0 0.0
      %3310 = vmatpush2.xpose.msra.mxu0 0.0
      %3311 = vmatprep.subr.mxu0 0.0
      %3312 = vmatpush2.xpose.msra.mxu0 0.0
      %3313 = vmatprep.subr.mxu0 0.0
      %3314 = vmatpush2.xpose.msra.mxu0 0.0
      %3315 = vmatprep.subr.mxu0 0.0
      %3316 = vmatpush2.xpose.msra.mxu0 0.0
      %3317 = vmatprep.subr.mxu0 0.0
      %3318 = vmatpush2.xpose.msra.mxu0 0.0
      %3319 = vmatprep.subr.mxu0 0.0
      %3320 = vmatpush2.xpose.msra.mxu0 0.0
      %3321 = vmatprep.subr.mxu0 0.0
      %3322 = vmatpush2.xpose.msra.mxu0 0.0
      %3323 = vmatprep.subr.mxu0 0.0
      %3324 = vmatpush2.xpose.msra.mxu0 0.0
      %3325 = vmatprep.subr.mxu0 0.0
      %3326 = vmatpush2.xpose.msra.mxu0 0.0
      %3327 = vmatprep.subr.mxu0 0.0
      %3328 = vmatpush2.xpose.msra.mxu0 0.0
      %3329 = vmatprep.mubr.f32.mxu0 0.0
      %v3330 = vand.u32 %v3107, 4294901760
      %v3331 = vsub.f32 %v3107, %v3330
      %3332 = vmatmul.mubr.f32.gmra.mxu0 %v3331
      %v3333 = vpop.f32.mrf.mxu0
      %v3334 = vadd.f32 %v3260, %v3333
      %v3335 = vpop.f32.mrf.mxu0
      %3336 = vdwg.mxu0
      %3337 = vmatprep.subr.mxu0 0.0
      %3338 = vmatpush1.xpose.msra.mxu0 0.0
      %3339 = vmatprep.subr.mxu0 0.0
      %3340 = vmatpush1.xpose.msra.mxu0 0.0
      %3341 = vmatprep.subr.mxu0 0.0
      %3342 = vmatpush1.xpose.msra.mxu0 0.0
      %3343 = vmatprep.subr.mxu0 0.0
      %3344 = vmatpush1.xpose.msra.mxu0 0.0
      %3345 = vmatprep.subr.mxu0 0.0
      %3346 = vmatpush1.xpose.msra.mxu0 0.0
      %3347 = vmatprep.subr.mxu0 0.0
      %3348 = vmatpush1.xpose.msra.mxu0 0.0
      %3349 = vmatprep.subr.mxu0 0.0
      %3350 = vmatpush1.xpose.msra.mxu0 0.0
      %3351 = vmatprep.subr.mxu0 0.0
      %3352 = vmatpush1.xpose.msra.mxu0 0.0
      %3353 = vmatprep.subr.mxu0 0.0
      %3354 = vmatpush1.xpose.msra.mxu0 0.0
      %3355 = vmatprep.subr.mxu0 0.0
      %3356 = vmatpush1.xpose.msra.mxu0 0.0
      %3357 = vmatprep.subr.mxu0 0.0
      %3358 = vmatpush1.xpose.msra.mxu0 0.0
      %3359 = vmatprep.subr.mxu0 0.0
      %3360 = vmatpush1.xpose.msra.mxu0 0.0
      %3361 = vmatprep.subr.mxu0 0.0
      %3362 = vmatpush1.xpose.msra.mxu0 0.0
      %3363 = vmatprep.subr.mxu0 0.0
      %3364 = vmatpush1.xpose.msra.mxu0 0.0
      %3365 = vmatprep.subr.mxu0 0.0
      %3366 = vmatpush1.xpose.msra.mxu0 0.0
      %3367 = vmatprep.subr.mxu0 0.0
      %v3368 = vand.u32 %v3109, 4294901760
      %3369 = vmatpush1.xpose.msra.mxu0 %v3368
      %3370 = vmatprep.subr.mxu0 0.0
      %3371 = vmatpush2.xpose.msra.mxu0 0.0
      %3372 = vmatprep.subr.mxu0 0.0
      %3373 = vmatpush2.xpose.msra.mxu0 0.0
      %3374 = vmatprep.subr.mxu0 0.0
      %3375 = vmatpush2.xpose.msra.mxu0 0.0
      %3376 = vmatprep.subr.mxu0 0.0
      %3377 = vmatpush2.xpose.msra.mxu0 0.0
      %3378 = vmatprep.subr.mxu0 0.0
      %3379 = vmatpush2.xpose.msra.mxu0 0.0
      %3380 = vmatprep.subr.mxu0 0.0
      %3381 = vmatpush2.xpose.msra.mxu0 0.0
      %3382 = vmatprep.subr.mxu0 0.0
      %3383 = vmatpush2.xpose.msra.mxu0 0.0
      %3384 = vmatprep.subr.mxu0 0.0
      %3385 = vmatpush2.xpose.msra.mxu0 0.0
      %3386 = vmatprep.subr.mxu0 0.0
      %3387 = vmatpush2.xpose.msra.mxu0 0.0
      %3388 = vmatprep.subr.mxu0 0.0
      %3389 = vmatpush2.xpose.msra.mxu0 0.0
      %3390 = vmatprep.subr.mxu0 0.0
      %3391 = vmatpush2.xpose.msra.mxu0 0.0
      %3392 = vmatprep.subr.mxu0 0.0
      %3393 = vmatpush2.xpose.msra.mxu0 0.0
      %3394 = vmatprep.subr.mxu0 0.0
      %3395 = vmatpush2.xpose.msra.mxu0 0.0
      %3396 = vmatprep.subr.mxu0 0.0
      %3397 = vmatpush2.xpose.msra.mxu0 0.0
      %3398 = vmatprep.subr.mxu0 0.0
      %3399 = vmatpush2.xpose.msra.mxu0 0.0
      %3400 = vmatprep.subr.mxu0 0.0
      %3401 = vmatpush2.xpose.msra.mxu0 0.0
      %3402 = vmatprep.mubr.f32.mxu0 0.0
      %v3403 = vand.u32 %v3107, 4294901760
      %v3404 = vsub.f32 %v3107, %v3403
      %v3405 = vand.u32 %v3404, 4294901760
      %3406 = vmatmul.mubr.f32.gmra.mxu0 %v3405
      %v3407 = vpop.f32.mrf.mxu0
      %v3408 = vadd.f32 %v3334, %v3407
      %v3409 = vpop.f32.mrf.mxu0
      %3410 = vdwg.mxu0
      %3411 = vmatprep.subr.mxu0 0.0
      %3412 = vmatpush1.xpose.msra.mxu0 0.0
      %3413 = vmatprep.subr.mxu0 0.0
      %3414 = vmatpush1.xpose.msra.mxu0 0.0
      %3415 = vmatprep.subr.mxu0 0.0
      %3416 = vmatpush1.xpose.msra.mxu0 0.0
      %3417 = vmatprep.subr.mxu0 0.0
      %3418 = vmatpush1.xpose.msra.mxu0 0.0
      %3419 = vmatprep.subr.mxu0 0.0
      %3420 = vmatpush1.xpose.msra.mxu0 0.0
      %3421 = vmatprep.subr.mxu0 0.0
      %3422 = vmatpush1.xpose.msra.mxu0 0.0
      %3423 = vmatprep.subr.mxu0 0.0
      %3424 = vmatpush1.xpose.msra.mxu0 0.0
      %3425 = vmatprep.subr.mxu0 0.0
      %3426 = vmatpush1.xpose.msra.mxu0 0.0
      %3427 = vmatprep.subr.mxu0 0.0
      %3428 = vmatpush1.xpose.msra.mxu0 0.0
      %3429 = vmatprep.subr.mxu0 0.0
      %3430 = vmatpush1.xpose.msra.mxu0 0.0
      %3431 = vmatprep.subr.mxu0 0.0
      %3432 = vmatpush1.xpose.msra.mxu0 0.0
      %3433 = vmatprep.subr.mxu0 0.0
      %3434 = vmatpush1.xpose.msra.mxu0 0.0
      %3435 = vmatprep.subr.mxu0 0.0
      %3436 = vmatpush1.xpose.msra.mxu0 0.0
      %3437 = vmatprep.subr.mxu0 0.0
      %3438 = vmatpush1.xpose.msra.mxu0 0.0
      %3439 = vmatprep.subr.mxu0 0.0
      %3440 = vmatpush1.xpose.msra.mxu0 0.0
      %3441 = vmatprep.subr.mxu0 0.0
      %v3442 = vand.u32 %v3109, 4294901760
      %v3443 = vsub.f32 %v3109, %v3442
      %v3444 = vand.u32 %v3443, 4294901760
      %3445 = vmatpush1.xpose.msra.mxu0 %v3444
      %3446 = vmatprep.subr.mxu0 0.0
      %3447 = vmatpush2.xpose.msra.mxu0 0.0
      %3448 = vmatprep.subr.mxu0 0.0
      %3449 = vmatpush2.xpose.msra.mxu0 0.0
      %3450 = vmatprep.subr.mxu0 0.0
      %3451 = vmatpush2.xpose.msra.mxu0 0.0
      %3452 = vmatprep.subr.mxu0 0.0
      %3453 = vmatpush2.xpose.msra.mxu0 0.0
      %3454 = vmatprep.subr.mxu0 0.0
      %3455 = vmatpush2.xpose.msra.mxu0 0.0
      %3456 = vmatprep.subr.mxu0 0.0
      %3457 = vmatpush2.xpose.msra.mxu0 0.0
      %3458 = vmatprep.subr.mxu0 0.0
      %3459 = vmatpush2.xpose.msra.mxu0 0.0
      %3460 = vmatprep.subr.mxu0 0.0
      %3461 = vmatpush2.xpose.msra.mxu0 0.0
      %3462 = vmatprep.subr.mxu0 0.0
      %3463 = vmatpush2.xpose.msra.mxu0 0.0
      %3464 = vmatprep.subr.mxu0 0.0
      %3465 = vmatpush2.xpose.msra.mxu0 0.0
      %3466 = vmatprep.subr.mxu0 0.0
      %3467 = vmatpush2.xpose.msra.mxu0 0.0
      %3468 = vmatprep.subr.mxu0 0.0
      %3469 = vmatpush2.xpose.msra.mxu0 0.0
      %3470 = vmatprep.subr.mxu0 0.0
      %3471 = vmatpush2.xpose.msra.mxu0 0.0
      %3472 = vmatprep.subr.mxu0 0.0
      %3473 = vmatpush2.xpose.msra.mxu0 0.0
      %3474 = vmatprep.subr.mxu0 0.0
      %3475 = vmatpush2.xpose.msra.mxu0 0.0
      %3476 = vmatprep.subr.mxu0 0.0
      %3477 = vmatpush2.xpose.msra.mxu0 0.0
      %3478 = vmatprep.mubr.f32.mxu0 0.0
      %v3479 = vand.u32 %v3107, 4294901760
      %3480 = vmatmul.mubr.f32.gmra.mxu0 %v3479
      %v3481 = vpop.f32.mrf.mxu0
      %v3482 = vadd.f32 %v3408, %v3481
      %v3483 = vpop.f32.mrf.mxu0
      %3484 = vdwg.mxu0
      %3485 = vmatprep.subr.mxu0 0.0
      %3486 = vmatpush1.xpose.msra.mxu0 0.0
      %3487 = vmatprep.subr.mxu0 0.0
      %3488 = vmatpush1.xpose.msra.mxu0 0.0
      %3489 = vmatprep.subr.mxu0 0.0
      %3490 = vmatpush1.xpose.msra.mxu0 0.0
      %3491 = vmatprep.subr.mxu0 0.0
      %3492 = vmatpush1.xpose.msra.mxu0 0.0
      %3493 = vmatprep.subr.mxu0 0.0
      %3494 = vmatpush1.xpose.msra.mxu0 0.0
      %3495 = vmatprep.subr.mxu0 0.0
      %3496 = vmatpush1.xpose.msra.mxu0 0.0
      %3497 = vmatprep.subr.mxu0 0.0
      %3498 = vmatpush1.xpose.msra.mxu0 0.0
      %3499 = vmatprep.subr.mxu0 0.0
      %3500 = vmatpush1.xpose.msra.mxu0 0.0
      %3501 = vmatprep.subr.mxu0 0.0
      %3502 = vmatpush1.xpose.msra.mxu0 0.0
      %3503 = vmatprep.subr.mxu0 0.0
      %3504 = vmatpush1.xpose.msra.mxu0 0.0
      %3505 = vmatprep.subr.mxu0 0.0
      %3506 = vmatpush1.xpose.msra.mxu0 0.0
      %3507 = vmatprep.subr.mxu0 0.0
      %3508 = vmatpush1.xpose.msra.mxu0 0.0
      %3509 = vmatprep.subr.mxu0 0.0
      %3510 = vmatpush1.xpose.msra.mxu0 0.0
      %3511 = vmatprep.subr.mxu0 0.0
      %3512 = vmatpush1.xpose.msra.mxu0 0.0
      %3513 = vmatprep.subr.mxu0 0.0
      %3514 = vmatpush1.xpose.msra.mxu0 0.0
      %3515 = vmatprep.subr.mxu0 0.0
      %v3516 = vand.u32 %v3109, 4294901760
      %3517 = vmatpush1.xpose.msra.mxu0 %v3516
      %3518 = vmatprep.subr.mxu0 0.0
      %3519 = vmatpush2.xpose.msra.mxu0 0.0
      %3520 = vmatprep.subr.mxu0 0.0
      %3521 = vmatpush2.xpose.msra.mxu0 0.0
      %3522 = vmatprep.subr.mxu0 0.0
      %3523 = vmatpush2.xpose.msra.mxu0 0.0
      %3524 = vmatprep.subr.mxu0 0.0
      %3525 = vmatpush2.xpose.msra.mxu0 0.0
      %3526 = vmatprep.subr.mxu0 0.0
      %3527 = vmatpush2.xpose.msra.mxu0 0.0
      %3528 = vmatprep.subr.mxu0 0.0
      %3529 = vmatpush2.xpose.msra.mxu0 0.0
      %3530 = vmatprep.subr.mxu0 0.0
      %3531 = vmatpush2.xpose.msra.mxu0 0.0
      %3532 = vmatprep.subr.mxu0 0.0
      %3533 = vmatpush2.xpose.msra.mxu0 0.0
      %3534 = vmatprep.subr.mxu0 0.0
      %3535 = vmatpush2.xpose.msra.mxu0 0.0
      %3536 = vmatprep.subr.mxu0 0.0
      %3537 = vmatpush2.xpose.msra.mxu0 0.0
      %3538 = vmatprep.subr.mxu0 0.0
      %3539 = vmatpush2.xpose.msra.mxu0 0.0
      %3540 = vmatprep.subr.mxu0 0.0
      %3541 = vmatpush2.xpose.msra.mxu0 0.0
      %3542 = vmatprep.subr.mxu0 0.0
      %3543 = vmatpush2.xpose.msra.mxu0 0.0
      %3544 = vmatprep.subr.mxu0 0.0
      %3545 = vmatpush2.xpose.msra.mxu0 0.0
      %3546 = vmatprep.subr.mxu0 0.0
      %3547 = vmatpush2.xpose.msra.mxu0 0.0
      %3548 = vmatprep.subr.mxu0 0.0
      %3549 = vmatpush2.xpose.msra.mxu0 0.0
      %3550 = vmatprep.mubr.f32.mxu0 0.0
      %v3551 = vand.u32 %v3107, 4294901760
      %3552 = vmatmul.mubr.f32.gmra.mxu0 %v3551
      %v3553 = vpop.f32.mrf.mxu0
      %v3554 = vadd.f32 %v3482, %v3553
      %v3555 = vpop.f32.mrf.mxu0
      %3556 = vdwg.mxu0
      %s3557 = scalar_lea.vmem [#allocation2], 24
      %v3558 = vld [vmem:[%s3557] sm:$0xff]
      %v3559 = vsel %vm282, %v3554, -inf
      %3560 = vmax.xlane.f32.xlu0 %v3559
      %v3561 = vpop.xlane.xlu0 %3560
      %v3562 = vmax.f32 %v3558, %v3561
      %v3563 = vsub.f32 %v3558, %v3562
      %v3564 = vmul.f32 %v3563, 1.442695
      %v3565 = vpow.pop %v3564
      %3567 = vset.pattern.permute.xlu0 0
      %3568 = vperm.xlu0 %3567, %v3562
      %v3569 = vpop.permute.xlu0 %3568
      %v3571 = vsub.f32 %v3554, %v3569
      %v3572 = vmul.f32 %v3571, 1.442695
      %v3573 = vpow.pop %v3572
      %s3574 = scalar_lea.vmem [#allocation3], 24
      %v3575 = vld [vmem:[%s3574] sm:$0xff]
      %v3576 = vmul.f32 %v3565, %v3575
      %v3577 = vsel %vm282, %v3573, 0.0
      %3578 = vadd.xlane.f32.xlu0 %v3577
      %v3579 = vpop.xlane.xlu0 %3578
      %v3580 = vadd.f32 %v3576, %v3579
      %3581 = vst.msk [vmem:[%s3574] sm:$0xff] %vm757, %v3580
      %s3582 = scalar_lea.vmem [#allocation4], 24
      %v3583 = vld [vmem:[%s3582] sm:$0xff]
      %3585 = vset.pattern.permute.xlu0 0
      %3586 = vperm.xlu0 %3585, %v3565
      %v3587 = vpop.permute.xlu0 %3586
      %v3589 = vmul.f32 %v3587, %v3583
      %3590 = vrot.lane.b32.xlu0 %v281, 104
      %v3591 = vpop.permute.xlu0 %3590
      %v3594 = vsel %vm282, %v3573, 0
      %3596 = vmatprep.subr.mxu0 0.0
      %3597 = vmatpush1.msra.mxu0 0.0
      %3598 = vmatprep.subr.mxu0 0.0
      %3599 = vmatpush1.msra.mxu0 0.0
      %3600 = vmatprep.subr.mxu0 0.0
      %3601 = vmatpush1.msra.mxu0 0.0
      %3602 = vmatprep.subr.mxu0 0.0
      %3603 = vmatpush1.msra.mxu0 0.0
      %3604 = vmatprep.subr.mxu0 0.0
      %3605 = vmatpush1.msra.mxu0 0.0
      %3606 = vmatprep.subr.mxu0 0.0
      %3607 = vmatpush1.msra.mxu0 0.0
      %3608 = vmatprep.subr.mxu0 0.0
      %3609 = vmatpush1.msra.mxu0 0.0
      %3610 = vmatprep.subr.mxu0 0.0
      %3611 = vmatpush1.msra.mxu0 0.0
      %3612 = vmatprep.subr.mxu0 0.0
      %3613 = vmatpush1.msra.mxu0 0.0
      %3614 = vmatprep.subr.mxu0 0.0
      %3615 = vmatpush1.msra.mxu0 0.0
      %3616 = vmatprep.subr.mxu0 0.0
      %3617 = vmatpush1.msra.mxu0 0.0
      %3618 = vmatprep.subr.mxu0 0.0
      %3619 = vmatpush1.msra.mxu0 0.0
      %3620 = vmatprep.subr.mxu0 0.0
      %3621 = vmatpush1.msra.mxu0 0.0
      %3622 = vmatprep.subr.mxu0 0.0
      %3623 = vmatpush1.msra.mxu0 0.0
      %3624 = vmatprep.subr.mxu0 0.0
      %3625 = vmatpush1.msra.mxu0 0.0
      %3626 = vmatprep.subr.mxu0 0.0
      %v3627 = vand.u32 %v3591, 4294901760
      %3628 = vmatpush1.msra.mxu0 %v3627
      %3629 = vmatprep.subr.mxu0 0.0
      %3630 = vmatpush2.msra.mxu0 0.0
      %3631 = vmatprep.subr.mxu0 0.0
      %3632 = vmatpush2.msra.mxu0 0.0
      %3633 = vmatprep.subr.mxu0 0.0
      %3634 = vmatpush2.msra.mxu0 0.0
      %3635 = vmatprep.subr.mxu0 0.0
      %3636 = vmatpush2.msra.mxu0 0.0
      %3637 = vmatprep.subr.mxu0 0.0
      %3638 = vmatpush2.msra.mxu0 0.0
      %3639 = vmatprep.subr.mxu0 0.0
      %3640 = vmatpush2.msra.mxu0 0.0
      %3641 = vmatprep.subr.mxu0 0.0
      %3642 = vmatpush2.msra.mxu0 0.0
      %3643 = vmatprep.subr.mxu0 0.0
      %3644 = vmatpush2.msra.mxu0 0.0
      %3645 = vmatprep.subr.mxu0 0.0
      %3646 = vmatpush2.msra.mxu0 0.0
      %3647 = vmatprep.subr.mxu0 0.0
      %3648 = vmatpush2.msra.mxu0 0.0
      %3649 = vmatprep.subr.mxu0 0.0
      %3650 = vmatpush2.msra.mxu0 0.0
      %3651 = vmatprep.subr.mxu0 0.0
      %3652 = vmatpush2.msra.mxu0 0.0
      %3653 = vmatprep.subr.mxu0 0.0
      %3654 = vmatpush2.msra.mxu0 0.0
      %3655 = vmatprep.subr.mxu0 0.0
      %3656 = vmatpush2.msra.mxu0 0.0
      %3657 = vmatprep.subr.mxu0 0.0
      %3658 = vmatpush2.msra.mxu0 0.0
      %3659 = vmatprep.subr.mxu0 0.0
      %3660 = vmatpush2.msra.mxu0 0.0
      %3661 = vmatprep.mubr.f32.mxu0 0.0
      %v3662 = vand.u32 %v3594, 4294901760
      %v3663 = vsub.f32 %v3594, %v3662
      %v3664 = vand.u32 %v3663, 4294901760
      %v3665 = vsub.f32 %v3663, %v3664
      %v3666 = vand.u32 %v3665, 4294901760
      %3667 = vmatmul.mubr.f32.gmra.mxu0 %v3666
      %v3668 = vpop.f32.mrf.mxu0
      %v3669 = vadd.f32 0.0, %v3668
      %v3670 = vpop.f32.mrf.mxu0
      %3671 = vdwg.mxu0
      %3672 = vmatprep.subr.mxu0 0.0
      %3673 = vmatpush1.msra.mxu0 0.0
      %3674 = vmatprep.subr.mxu0 0.0
      %3675 = vmatpush1.msra.mxu0 0.0
      %3676 = vmatprep.subr.mxu0 0.0
      %3677 = vmatpush1.msra.mxu0 0.0
      %3678 = vmatprep.subr.mxu0 0.0
      %3679 = vmatpush1.msra.mxu0 0.0
      %3680 = vmatprep.subr.mxu0 0.0
      %3681 = vmatpush1.msra.mxu0 0.0
      %3682 = vmatprep.subr.mxu0 0.0
      %3683 = vmatpush1.msra.mxu0 0.0
      %3684 = vmatprep.subr.mxu0 0.0
      %3685 = vmatpush1.msra.mxu0 0.0
      %3686 = vmatprep.subr.mxu0 0.0
      %3687 = vmatpush1.msra.mxu0 0.0
      %3688 = vmatprep.subr.mxu0 0.0
      %3689 = vmatpush1.msra.mxu0 0.0
      %3690 = vmatprep.subr.mxu0 0.0
      %3691 = vmatpush1.msra.mxu0 0.0
      %3692 = vmatprep.subr.mxu0 0.0
      %3693 = vmatpush1.msra.mxu0 0.0
      %3694 = vmatprep.subr.mxu0 0.0
      %3695 = vmatpush1.msra.mxu0 0.0
      %3696 = vmatprep.subr.mxu0 0.0
      %3697 = vmatpush1.msra.mxu0 0.0
      %3698 = vmatprep.subr.mxu0 0.0
      %3699 = vmatpush1.msra.mxu0 0.0
      %3700 = vmatprep.subr.mxu0 0.0
      %3701 = vmatpush1.msra.mxu0 0.0
      %3702 = vmatprep.subr.mxu0 0.0
      %v3703 = vand.u32 %v3591, 4294901760
      %v3704 = vsub.f32 %v3591, %v3703
      %v3705 = vand.u32 %v3704, 4294901760
      %v3706 = vsub.f32 %v3704, %v3705
      %v3707 = vand.u32 %v3706, 4294901760
      %3708 = vmatpush1.msra.mxu0 %v3707
      %3709 = vmatprep.subr.mxu0 0.0
      %3710 = vmatpush2.msra.mxu0 0.0
      %3711 = vmatprep.subr.mxu0 0.0
      %3712 = vmatpush2.msra.mxu0 0.0
      %3713 = vmatprep.subr.mxu0 0.0
      %3714 = vmatpush2.msra.mxu0 0.0
      %3715 = vmatprep.subr.mxu0 0.0
      %3716 = vmatpush2.msra.mxu0 0.0
      %3717 = vmatprep.subr.mxu0 0.0
      %3718 = vmatpush2.msra.mxu0 0.0
      %3719 = vmatprep.subr.mxu0 0.0
      %3720 = vmatpush2.msra.mxu0 0.0
      %3721 = vmatprep.subr.mxu0 0.0
      %3722 = vmatpush2.msra.mxu0 0.0
      %3723 = vmatprep.subr.mxu0 0.0
      %3724 = vmatpush2.msra.mxu0 0.0
      %3725 = vmatprep.subr.mxu0 0.0
      %3726 = vmatpush2.msra.mxu0 0.0
      %3727 = vmatprep.subr.mxu0 0.0
      %3728 = vmatpush2.msra.mxu0 0.0
      %3729 = vmatprep.subr.mxu0 0.0
      %3730 = vmatpush2.msra.mxu0 0.0
      %3731 = vmatprep.subr.mxu0 0.0
      %3732 = vmatpush2.msra.mxu0 0.0
      %3733 = vmatprep.subr.mxu0 0.0
      %3734 = vmatpush2.msra.mxu0 0.0
      %3735 = vmatprep.subr.mxu0 0.0
      %3736 = vmatpush2.msra.mxu0 0.0
      %3737 = vmatprep.subr.mxu0 0.0
      %3738 = vmatpush2.msra.mxu0 0.0
      %3739 = vmatprep.subr.mxu0 0.0
      %3740 = vmatpush2.msra.mxu0 0.0
      %3741 = vmatprep.mubr.f32.mxu0 0.0
      %v3742 = vand.u32 %v3594, 4294901760
      %3743 = vmatmul.mubr.f32.gmra.mxu0 %v3742
      %v3744 = vpop.f32.mrf.mxu0
      %v3745 = vadd.f32 %v3669, %v3744
      %v3746 = vpop.f32.mrf.mxu0
      %3747 = vdwg.mxu0
      %3748 = vmatprep.subr.mxu0 0.0
      %3749 = vmatpush1.msra.mxu0 0.0
      %3750 = vmatprep.subr.mxu0 0.0
      %3751 = vmatpush1.msra.mxu0 0.0
      %3752 = vmatprep.subr.mxu0 0.0
      %3753 = vmatpush1.msra.mxu0 0.0
      %3754 = vmatprep.subr.mxu0 0.0
      %3755 = vmatpush1.msra.mxu0 0.0
      %3756 = vmatprep.subr.mxu0 0.0
      %3757 = vmatpush1.msra.mxu0 0.0
      %3758 = vmatprep.subr.mxu0 0.0
      %3759 = vmatpush1.msra.mxu0 0.0
      %3760 = vmatprep.subr.mxu0 0.0
      %3761 = vmatpush1.msra.mxu0 0.0
      %3762 = vmatprep.subr.mxu0 0.0
      %3763 = vmatpush1.msra.mxu0 0.0
      %3764 = vmatprep.subr.mxu0 0.0
      %3765 = vmatpush1.msra.mxu0 0.0
      %3766 = vmatprep.subr.mxu0 0.0
      %3767 = vmatpush1.msra.mxu0 0.0
      %3768 = vmatprep.subr.mxu0 0.0
      %3769 = vmatpush1.msra.mxu0 0.0
      %3770 = vmatprep.subr.mxu0 0.0
      %3771 = vmatpush1.msra.mxu0 0.0
      %3772 = vmatprep.subr.mxu0 0.0
      %3773 = vmatpush1.msra.mxu0 0.0
      %3774 = vmatprep.subr.mxu0 0.0
      %3775 = vmatpush1.msra.mxu0 0.0
      %3776 = vmatprep.subr.mxu0 0.0
      %3777 = vmatpush1.msra.mxu0 0.0
      %3778 = vmatprep.subr.mxu0 0.0
      %v3779 = vand.u32 %v3591, 4294901760
      %v3780 = vsub.f32 %v3591, %v3779
      %3781 = vmatpush1.msra.mxu0 %v3780
      %3782 = vmatprep.subr.mxu0 0.0
      %3783 = vmatpush2.msra.mxu0 0.0
      %3784 = vmatprep.subr.mxu0 0.0
      %3785 = vmatpush2.msra.mxu0 0.0
      %3786 = vmatprep.subr.mxu0 0.0
      %3787 = vmatpush2.msra.mxu0 0.0
      %3788 = vmatprep.subr.mxu0 0.0
      %3789 = vmatpush2.msra.mxu0 0.0
      %3790 = vmatprep.subr.mxu0 0.0
      %3791 = vmatpush2.msra.mxu0 0.0
      %3792 = vmatprep.subr.mxu0 0.0
      %3793 = vmatpush2.msra.mxu0 0.0
      %3794 = vmatprep.subr.mxu0 0.0
      %3795 = vmatpush2.msra.mxu0 0.0
      %3796 = vmatprep.subr.mxu0 0.0
      %3797 = vmatpush2.msra.mxu0 0.0
      %3798 = vmatprep.subr.mxu0 0.0
      %3799 = vmatpush2.msra.mxu0 0.0
      %3800 = vmatprep.subr.mxu0 0.0
      %3801 = vmatpush2.msra.mxu0 0.0
      %3802 = vmatprep.subr.mxu0 0.0
      %3803 = vmatpush2.msra.mxu0 0.0
      %3804 = vmatprep.subr.mxu0 0.0
      %3805 = vmatpush2.msra.mxu0 0.0
      %3806 = vmatprep.subr.mxu0 0.0
      %3807 = vmatpush2.msra.mxu0 0.0
      %3808 = vmatprep.subr.mxu0 0.0
      %3809 = vmatpush2.msra.mxu0 0.0
      %3810 = vmatprep.subr.mxu0 0.0
      %3811 = vmatpush2.msra.mxu0 0.0
      %3812 = vmatprep.subr.mxu0 0.0
      %3813 = vmatpush2.msra.mxu0 0.0
      %3814 = vmatprep.mubr.f32.mxu0 0.0
      %v3815 = vand.u32 %v3594, 4294901760
      %v3816 = vsub.f32 %v3594, %v3815
      %3817 = vmatmul.mubr.f32.gmra.mxu0 %v3816
      %v3818 = vpop.f32.mrf.mxu0
      %v3819 = vadd.f32 %v3745, %v3818
      %v3820 = vpop.f32.mrf.mxu0
      %3821 = vdwg.mxu0
      %3822 = vmatprep.subr.mxu0 0.0
      %3823 = vmatpush1.msra.mxu0 0.0
      %3824 = vmatprep.subr.mxu0 0.0
      %3825 = vmatpush1.msra.mxu0 0.0
      %3826 = vmatprep.subr.mxu0 0.0
      %3827 = vmatpush1.msra.mxu0 0.0
      %3828 = vmatprep.subr.mxu0 0.0
      %3829 = vmatpush1.msra.mxu0 0.0
      %3830 = vmatprep.subr.mxu0 0.0
      %3831 = vmatpush1.msra.mxu0 0.0
      %3832 = vmatprep.subr.mxu0 0.0
      %3833 = vmatpush1.msra.mxu0 0.0
      %3834 = vmatprep.subr.mxu0 0.0
      %3835 = vmatpush1.msra.mxu0 0.0
      %3836 = vmatprep.subr.mxu0 0.0
      %3837 = vmatpush1.msra.mxu0 0.0
      %3838 = vmatprep.subr.mxu0 0.0
      %3839 = vmatpush1.msra.mxu0 0.0
      %3840 = vmatprep.subr.mxu0 0.0
      %3841 = vmatpush1.msra.mxu0 0.0
      %3842 = vmatprep.subr.mxu0 0.0
      %3843 = vmatpush1.msra.mxu0 0.0
      %3844 = vmatprep.subr.mxu0 0.0
      %3845 = vmatpush1.msra.mxu0 0.0
      %3846 = vmatprep.subr.mxu0 0.0
      %3847 = vmatpush1.msra.mxu0 0.0
      %3848 = vmatprep.subr.mxu0 0.0
      %3849 = vmatpush1.msra.mxu0 0.0
      %3850 = vmatprep.subr.mxu0 0.0
      %3851 = vmatpush1.msra.mxu0 0.0
      %3852 = vmatprep.subr.mxu0 0.0
      %v3853 = vand.u32 %v3591, 4294901760
      %3854 = vmatpush1.msra.mxu0 %v3853
      %3855 = vmatprep.subr.mxu0 0.0
      %3856 = vmatpush2.msra.mxu0 0.0
      %3857 = vmatprep.subr.mxu0 0.0
      %3858 = vmatpush2.msra.mxu0 0.0
      %3859 = vmatprep.subr.mxu0 0.0
      %3860 = vmatpush2.msra.mxu0 0.0
      %3861 = vmatprep.subr.mxu0 0.0
      %3862 = vmatpush2.msra.mxu0 0.0
      %3863 = vmatprep.subr.mxu0 0.0
      %3864 = vmatpush2.msra.mxu0 0.0
      %3865 = vmatprep.subr.mxu0 0.0
      %3866 = vmatpush2.msra.mxu0 0.0
      %3867 = vmatprep.subr.mxu0 0.0
      %3868 = vmatpush2.msra.mxu0 0.0
      %3869 = vmatprep.subr.mxu0 0.0
      %3870 = vmatpush2.msra.mxu0 0.0
      %3871 = vmatprep.subr.mxu0 0.0
      %3872 = vmatpush2.msra.mxu0 0.0
      %3873 = vmatprep.subr.mxu0 0.0
      %3874 = vmatpush2.msra.mxu0 0.0
      %3875 = vmatprep.subr.mxu0 0.0
      %3876 = vmatpush2.msra.mxu0 0.0
      %3877 = vmatprep.subr.mxu0 0.0
      %3878 = vmatpush2.msra.mxu0 0.0
      %3879 = vmatprep.subr.mxu0 0.0
      %3880 = vmatpush2.msra.mxu0 0.0
      %3881 = vmatprep.subr.mxu0 0.0
      %3882 = vmatpush2.msra.mxu0 0.0
      %3883 = vmatprep.subr.mxu0 0.0
      %3884 = vmatpush2.msra.mxu0 0.0
      %3885 = vmatprep.subr.mxu0 0.0
      %3886 = vmatpush2.msra.mxu0 0.0
      %3887 = vmatprep.mubr.f32.mxu0 0.0
      %v3888 = vand.u32 %v3594, 4294901760
      %v3889 = vsub.f32 %v3594, %v3888
      %v3890 = vand.u32 %v3889, 4294901760
      %3891 = vmatmul.mubr.f32.gmra.mxu0 %v3890
      %v3892 = vpop.f32.mrf.mxu0
      %v3893 = vadd.f32 %v3819, %v3892
      %v3894 = vpop.f32.mrf.mxu0
      %3895 = vdwg.mxu0
      %3896 = vmatprep.subr.mxu0 0.0
      %3897 = vmatpush1.msra.mxu0 0.0
      %3898 = vmatprep.subr.mxu0 0.0
      %3899 = vmatpush1.msra.mxu0 0.0
      %3900 = vmatprep.subr.mxu0 0.0
      %3901 = vmatpush1.msra.mxu0 0.0
      %3902 = vmatprep.subr.mxu0 0.0
      %3903 = vmatpush1.msra.mxu0 0.0
      %3904 = vmatprep.subr.mxu0 0.0
      %3905 = vmatpush1.msra.mxu0 0.0
      %3906 = vmatprep.subr.mxu0 0.0
      %3907 = vmatpush1.msra.mxu0 0.0
      %3908 = vmatprep.subr.mxu0 0.0
      %3909 = vmatpush1.msra.mxu0 0.0
      %3910 = vmatprep.subr.mxu0 0.0
      %3911 = vmatpush1.msra.mxu0 0.0
      %3912 = vmatprep.subr.mxu0 0.0
      %3913 = vmatpush1.msra.mxu0 0.0
      %3914 = vmatprep.subr.mxu0 0.0
      %3915 = vmatpush1.msra.mxu0 0.0
      %3916 = vmatprep.subr.mxu0 0.0
      %3917 = vmatpush1.msra.mxu0 0.0
      %3918 = vmatprep.subr.mxu0 0.0
      %3919 = vmatpush1.msra.mxu0 0.0
      %3920 = vmatprep.subr.mxu0 0.0
      %3921 = vmatpush1.msra.mxu0 0.0
      %3922 = vmatprep.subr.mxu0 0.0
      %3923 = vmatpush1.msra.mxu0 0.0
      %3924 = vmatprep.subr.mxu0 0.0
      %3925 = vmatpush1.msra.mxu0 0.0
      %3926 = vmatprep.subr.mxu0 0.0
      %v3927 = vand.u32 %v3591, 4294901760
      %v3928 = vsub.f32 %v3591, %v3927
      %v3929 = vand.u32 %v3928, 4294901760
      %3930 = vmatpush1.msra.mxu0 %v3929
      %3931 = vmatprep.subr.mxu0 0.0
      %3932 = vmatpush2.msra.mxu0 0.0
      %3933 = vmatprep.subr.mxu0 0.0
      %3934 = vmatpush2.msra.mxu0 0.0
      %3935 = vmatprep.subr.mxu0 0.0
      %3936 = vmatpush2.msra.mxu0 0.0
      %3937 = vmatprep.subr.mxu0 0.0
      %3938 = vmatpush2.msra.mxu0 0.0
      %3939 = vmatprep.subr.mxu0 0.0
      %3940 = vmatpush2.msra.mxu0 0.0
      %3941 = vmatprep.subr.mxu0 0.0
      %3942 = vmatpush2.msra.mxu0 0.0
      %3943 = vmatprep.subr.mxu0 0.0
      %3944 = vmatpush2.msra.mxu0 0.0
      %3945 = vmatprep.subr.mxu0 0.0
      %3946 = vmatpush2.msra.mxu0 0.0
      %3947 = vmatprep.subr.mxu0 0.0
      %3948 = vmatpush2.msra.mxu0 0.0
      %3949 = vmatprep.subr.mxu0 0.0
      %3950 = vmatpush2.msra.mxu0 0.0
      %3951 = vmatprep.subr.mxu0 0.0
      %3952 = vmatpush2.msra.mxu0 0.0
      %3953 = vmatprep.subr.mxu0 0.0
      %3954 = vmatpush2.msra.mxu0 0.0
      %3955 = vmatprep.subr.mxu0 0.0
      %3956 = vmatpush2.msra.mxu0 0.0
      %3957 = vmatprep.subr.mxu0 0.0
      %3958 = vmatpush2.msra.mxu0 0.0
      %3959 = vmatprep.subr.mxu0 0.0
      %3960 = vmatpush2.msra.mxu0 0.0
      %3961 = vmatprep.subr.mxu0 0.0
      %3962 = vmatpush2.msra.mxu0 0.0
      %3963 = vmatprep.mubr.f32.mxu0 0.0
      %v3964 = vand.u32 %v3594, 4294901760
      %3965 = vmatmul.mubr.f32.gmra.mxu0 %v3964
      %v3966 = vpop.f32.mrf.mxu0
      %v3967 = vadd.f32 %v3893, %v3966
      %v3968 = vpop.f32.mrf.mxu0
      %3969 = vdwg.mxu0
      %3970 = vmatprep.subr.mxu0 0.0
      %3971 = vmatpush1.msra.mxu0 0.0
      %3972 = vmatprep.subr.mxu0 0.0
      %3973 = vmatpush1.msra.mxu0 0.0
      %3974 = vmatprep.subr.mxu0 0.0
      %3975 = vmatpush1.msra.mxu0 0.0
      %3976 = vmatprep.subr.mxu0 0.0
      %3977 = vmatpush1.msra.mxu0 0.0
      %3978 = vmatprep.subr.mxu0 0.0
      %3979 = vmatpush1.msra.mxu0 0.0
      %3980 = vmatprep.subr.mxu0 0.0
      %3981 = vmatpush1.msra.mxu0 0.0
      %3982 = vmatprep.subr.mxu0 0.0
      %3983 = vmatpush1.msra.mxu0 0.0
      %3984 = vmatprep.subr.mxu0 0.0
      %3985 = vmatpush1.msra.mxu0 0.0
      %3986 = vmatprep.subr.mxu0 0.0
      %3987 = vmatpush1.msra.mxu0 0.0
      %3988 = vmatprep.subr.mxu0 0.0
      %3989 = vmatpush1.msra.mxu0 0.0
      %3990 = vmatprep.subr.mxu0 0.0
      %3991 = vmatpush1.msra.mxu0 0.0
      %3992 = vmatprep.subr.mxu0 0.0
      %3993 = vmatpush1.msra.mxu0 0.0
      %3994 = vmatprep.subr.mxu0 0.0
      %3995 = vmatpush1.msra.mxu0 0.0
      %3996 = vmatprep.subr.mxu0 0.0
      %3997 = vmatpush1.msra.mxu0 0.0
      %3998 = vmatprep.subr.mxu0 0.0
      %3999 = vmatpush1.msra.mxu0 0.0
      %4000 = vmatprep.subr.mxu0 0.0
      %v4001 = vand.u32 %v3591, 4294901760
      %4002 = vmatpush1.msra.mxu0 %v4001
      %4003 = vmatprep.subr.mxu0 0.0
      %4004 = vmatpush2.msra.mxu0 0.0
      %4005 = vmatprep.subr.mxu0 0.0
      %4006 = vmatpush2.msra.mxu0 0.0
      %4007 = vmatprep.subr.mxu0 0.0
      %4008 = vmatpush2.msra.mxu0 0.0
      %4009 = vmatprep.subr.mxu0 0.0
      %4010 = vmatpush2.msra.mxu0 0.0
      %4011 = vmatprep.subr.mxu0 0.0
      %4012 = vmatpush2.msra.mxu0 0.0
      %4013 = vmatprep.subr.mxu0 0.0
      %4014 = vmatpush2.msra.mxu0 0.0
      %4015 = vmatprep.subr.mxu0 0.0
      %4016 = vmatpush2.msra.mxu0 0.0
      %4017 = vmatprep.subr.mxu0 0.0
      %4018 = vmatpush2.msra.mxu0 0.0
      %4019 = vmatprep.subr.mxu0 0.0
      %4020 = vmatpush2.msra.mxu0 0.0
      %4021 = vmatprep.subr.mxu0 0.0
      %4022 = vmatpush2.msra.mxu0 0.0
      %4023 = vmatprep.subr.mxu0 0.0
      %4024 = vmatpush2.msra.mxu0 0.0
      %4025 = vmatprep.subr.mxu0 0.0
      %4026 = vmatpush2.msra.mxu0 0.0
      %4027 = vmatprep.subr.mxu0 0.0
      %4028 = vmatpush2.msra.mxu0 0.0
      %4029 = vmatprep.subr.mxu0 0.0
      %4030 = vmatpush2.msra.mxu0 0.0
      %4031 = vmatprep.subr.mxu0 0.0
      %4032 = vmatpush2.msra.mxu0 0.0
      %4033 = vmatprep.subr.mxu0 0.0
      %4034 = vmatpush2.msra.mxu0 0.0
      %4035 = vmatprep.mubr.f32.mxu0 0.0
      %v4036 = vand.u32 %v3594, 4294901760
      %4037 = vmatmul.mubr.f32.gmra.mxu0 %v4036
      %v4038 = vpop.f32.mrf.mxu0
      %v4039 = vadd.f32 %v3967, %v4038
      %v4040 = vpop.f32.mrf.mxu0
      %4041 = vdwg.mxu0
      %v4042 = vadd.f32 %v3589, %v4039
      %4043 = vst.msk [vmem:[%s3582] sm:$0xff] %vm282, %v4042
      %4044 = vst.msk [vmem:[%s3557] sm:$0xff] %vm757, %v3562
      // Predicated region
      $region37: #{full_attention_full_t2v.2} parent=31 // pred_check
        %p4045 = pneg %p260
      $region38: #{full_attention_full_t2v.2} parent=31 // pred_check_branch
        %4047 = sbr.rel (%p4045) target = $region40
      $region39: #{full_attention_full_t2v.2} parent=31 // pred_region
        %v4048 = vld [vmem:[#allocation3] sm:$0xff]
        %v4049 = vrcp.pop %v4048
        %v4050 = vmul.f32 %v4048, %v4049
        %v4051 = vsub.f32 2.0, %v4050
        %v4052 = vmul.f32 %v4049, %v4051
        %v4053 = vld [vmem:[#allocation4] sm:$0xff]
        %4055 = vset.pattern.permute.xlu0 0
        %4056 = vperm.xlu0 %4055, %v4052
        %v4057 = vpop.permute.xlu0 %4056
        %v4059 = vmul.f32 %v4053, %v4057
        %v4060 = vld [vmem:[%s1689] sm:$0xff]
        %v4061 = vrcp.pop %v4060
        %v4062 = vmul.f32 %v4060, %v4061
        %v4063 = vsub.f32 2.0, %v4062
        %v4064 = vmul.f32 %v4061, %v4063
        %v4065 = vld [vmem:[%s1697] sm:$0xff]
        %4067 = vset.pattern.permute.xlu0 0
        %4068 = vperm.xlu0 %4067, %v4064
        %v4069 = vpop.permute.xlu0 %4068
        %v4071 = vmul.f32 %v4065, %v4069
        %v4072 = vld [vmem:[%s2632] sm:$0xff]
        %v4073 = vrcp.pop %v4072
        %v4074 = vmul.f32 %v4072, %v4073
        %v4075 = vsub.f32 2.0, %v4074
        %v4076 = vmul.f32 %v4073, %v4075
        %v4077 = vld [vmem:[%s2640] sm:$0xff]
        %4079 = vset.pattern.permute.xlu0 0
        %4080 = vperm.xlu0 %4079, %v4076
        %v4081 = vpop.permute.xlu0 %4080
        %v4083 = vmul.f32 %v4077, %v4081
        %v4084 = vld [vmem:[%s3574] sm:$0xff]
        %v4085 = vrcp.pop %v4084
        %v4086 = vmul.f32 %v4084, %v4085
        %v4087 = vsub.f32 2.0, %v4086
        %v4088 = vmul.f32 %v4085, %v4087
        %v4089 = vld [vmem:[%s3582] sm:$0xff]
        %4091 = vset.pattern.permute.xlu0 0
        %4092 = vperm.xlu0 %4091, %v4088
        %v4093 = vpop.permute.xlu0 %4092
        %v4095 = vmul.f32 %v4089, %v4093
        %4097 = vrot.lane.b32.xlu0 %v4071, 8
        %v4098 = vpop.permute.xlu0 %4097
        %4101 = vrot.lane.b32.xlu0 %v4083, 16
        %v4102 = vpop.permute.xlu0 %4101
        %4105 = vrot.lane.b32.xlu0 %v4095, 24
        %v4106 = vpop.permute.xlu0 %4105
        %v4108 = vsel %vm282, %v4059, %v4098
        %vm4109 = vcmask 130048
        %v4110 = vsel %vm4109, %v4108, %v4102
        %vm4111 = vcmask 195584
        %v4112 = vsel %vm4111, %v4110, %v4106
        %vm4113 = vcmask 261120
        %4114 = vst.msk [vmem:[%s259] sm:$0xff] %vm4113, %v4112
      $region40: #{full_attention_full_t2v.2} parent=31 // pred_fallthru
        _
      %p4115 = scmp.lt.s32.totalorder %s19, 1
      %s4116 = scalar_select %p4115, %s19, 1
      %p4117 = scmp.lt.s32.totalorder %s20, 0
      %s4118 = scalar_select %p4117, %s20, 0
      %s4119 = sadd.s32 %s4118, %s4116
      %s4120 = smul.addr %s4119, 8
      %s4121 = scalar_lea.vmem %s3, %s4120
      // Predicated region
      $region41: #{full_attention_full_t2v.2} parent=31 // pred_check
        %p4122 = pneg %p137
      $region42: #{full_attention_full_t2v.2} parent=31 // pred_check_branch
        %4124 = sbr.rel (%p4122) target = $region44
      $region43: #{full_attention_full_t2v.2} parent=31 // pred_region
        _
      $region44: #{full_attention_full_t2v.2} parent=31 // pred_fallthru
        _
    $region32: #{full_attention_full_t2v.2} parent=5 // pred_fallthru
      _
    %p4125 = scmp.le.s32.totalorder 2, %s9
    // Predicated region
    $region45: #{full_attention_full_t2v.2} parent=5 // pred_check
      %p4126 = pneg %p4125
    $region46: #{full_attention_full_t2v.2} parent=5 // pred_check_branch
      %4128 = sbr.rel (%p4126) target = $region48
    $region47: #{full_attention_full_t2v.2} parent=5 // pred_region
      %s4129 = ssub.s32 %s9, 2
      // Predicated region
      $region49: #{full_attention_full_t2v.2} parent=47 // pred_check
        %p4130 = pneg %p143
      $region50: #{full_attention_full_t2v.2} parent=47 // pred_check_branch
        %4132 = sbr.rel (%p4130) target = $region52
      $region51: #{full_attention_full_t2v.2} parent=47 // pred_region
        %p4133 = scmp.lt.s32.totalorder %s22, 1
        %s4134 = scalar_select %p4133, %s22, 1
        %p4135 = scmp.lt.s32.totalorder %s23, 0
        %s4136 = scalar_select %p4135, %s23, 0
        %s4137 = sadd.s32 %s4136, %s4134
        %s4138 = smul.addr %s4137, 8
        %s4139 = scalar_lea.vmem %s3, %s4138
      $region52: #{full_attention_full_t2v.2} parent=47 // pred_fallthru
        _
    $region48: #{full_attention_full_t2v.2} parent=5 // pred_fallthru
      _
  $region6: #{full_attention_full_t2v.2} parent=0 // loop_footer
    %s13 = sadd.s32 1, %s9
  $region7: #{full_attention_full_t2v.2} parent=0 // loop_footer_branch
    %8 = sbr.rel target = $region3
  $region8: #{full_attention_full_t2v.2} parent=0 // loop_exit
    _

</llo_original>
